<compile_context>
chip_gen: v7x
topology: tpu7x:2x2x1
jax: 0.10.0
libtpu: 0.0.40
codegen_flags: <defaults>
</compile_context>

<pallas_src>
import functools
import numpy as np
import jax
import jax.numpy as jnp
from jax.experimental import pallas as pl
from jax.experimental.pallas import tpu as pltpu

LEAKY_RELU_GAIN = float(np.sqrt(2.0 / (1.0 + 0.2 ** 2)))
ROOT_2 = 1.41421  # exactly the constant used by the PyTorch module


def _leaky_relu(x):
    return jnp.where(x > 0, x, 0.2 * x)


def _residual_block_kernel(x_ref, w1_ref, b1_ref, w2_ref, b2_ref,
                           w3_ref, b3_ref, out_ref, xpad, y1pad, pool_sc,
                           *, B, H, W, cin, cout):
    Hp, Wp = H + 2, W + 2
    Ho, Wo = H // 2, W // 2
    M = B * H * W
    mxu_dtype = w1_ref.dtype              # bf16 (default) or f32; accumulation is f32

    # ---- stage the input block into a zero-bordered padded scratch ----
    # Re-zero only the 1-wide border each step; the interior is fully overwritten.
    # (Zeroing once at program_id==0 is not megacore-safe with "parallel" batch
    #  semantics on a multi-TensorCore chip.)
    zrow = jnp.zeros((B, 1, Wp, cin), jnp.float32)
    zcol = jnp.zeros((B, Hp, 1, cin), jnp.float32)

    def zero_border(ref):
        ref[:, pl.ds(0, 1), :, :] = zrow
        ref[:, pl.ds(Hp - 1, 1), :, :] = zrow
        ref[:, :, pl.ds(0, 1), :] = zcol
        ref[:, :, pl.ds(Wp - 1, 1), :] = zcol

    zero_border(xpad)
    xpad[:, pl.ds(1, H), pl.ds(1, W), :] = x_ref[...]

    def tap(ref, dy, dx):
        # Direct Ref slice (no full padded-block materialization); cast per patch.
        return ref[:, pl.ds(dy, H), pl.ds(dx, W), :].reshape(M, cin).astype(mxu_dtype)

    # ---- conv_1: 3x3, cin -> cin (Weight_Scaling folded into w1 in the wrapper) ----
    acc1 = jnp.zeros((M, cin), jnp.float32)
    for dy in range(3):
        for dx in range(3):
            acc1 = acc1 + jnp.dot(tap(xpad, dy, dx), w1_ref[dy * 3 + dx],
                                  preferred_element_type=jnp.float32)
    y1 = _leaky_relu(acc1 + b1_ref[...])  # LeakyReLU(0.2), f32

    # ---- skip path: 1x1 conv (cin -> cout); center tap == the unpadded block ----
    t = jnp.dot(tap(xpad, 1, 1), w3_ref[...],
                preferred_element_type=jnp.float32) + b3_ref[...]

    # ---- stage y1 into its own zero-bordered padded scratch for conv_2 ----
    zero_border(y1pad)
    y1pad[:, pl.ds(1, H), pl.ds(1, W), :] = y1.reshape(B, H, W, cin)

    # ---- conv_2: 3x3, cin -> cout (Weight_Scaling folded into w2) ----
    acc2 = jnp.zeros((M, cout), jnp.float32)
    for dy in range(3):
        for dx in range(3):
            acc2 = acc2 + jnp.dot(tap(y1pad, dy, dx), w2_ref[dy * 3 + dx],
                                  preferred_element_type=jnp.float32)
    y2 = _leaky_relu(acc2 + b2_ref[...])

    # ---- avg_pool2d(2,2) of (y2 + t), then /ROOT_2 (pooling is linear) ----
    # H-pair sum on values first, then stage only the half-size array for the
    # stride-2 sublane reduction along W.  Scale 0.25 (mean) and 1/ROOT_2 merged.
    s = (y2 + t).reshape(B, Ho, 2, W, cout)
    pool_sc[...] = (s[:, :, 0] + s[:, :, 1]).reshape(B * Ho, W, cout)
    pooled = (pool_sc[:, pl.ds(0, Wo, stride=2), :]
              + pool_sc[:, pl.ds(1, Wo, stride=2), :]) * (0.25 / ROOT_2)
    # TODO(synk): lane-dense flattened out block when cout % 128 != 0 (masked vst.msk
    # otherwise); needs a sublane->lane relayout of `pooled` that lowers reliably.
    out_ref[...] = pooled.reshape(out_ref.shape).astype(out_ref.dtype)


def _vmem_capacity_bytes():
    try:
        return int(pltpu.get_tpu_info().vmem_capacity_bytes)
    except Exception:
        return 64 * 1024 * 1024           # conservative fallback: v7x per-core VMEM


def residual_block_forward(x_nchw, params, *, mxu_dtype=jnp.bfloat16):
    """x_nchw: (N, Cin, H, W) f32 -> (N, Cout, H//2, W//2) f32."""
    w1, b1, w2, b2, w3, b3 = params                     # HWIO conv weights
    N, cin, H, W = x_nchw.shape
    cout = w2.shape[-1]
    Hp, Wp = H + 2, W + 2
    Ho, Wo = H // 2, W // 2
    assert H % 2 == 0 and W % 2 == 0, "ResidualBlock requires even spatial dims"

    ws1 = LEAKY_RELU_GAIN / np.sqrt(cin * 9)            # conv_1 / conv_2 scaling
    ws3 = 1.0 / np.sqrt(cin * 9)                        # skip-path scaling (gain=1)

    x_nhwc = jnp.transpose(x_nchw, (0, 2, 3, 1)).astype(jnp.float32)

    # Fold the Weight_Scaling constants into the conv weights (NOT the biases),
    # and cast the MXU operands once here.
    w1k = (w1 * ws1).reshape(9, cin, cin).astype(mxu_dtype)
    w2k = (w2 * ws1).reshape(9, cin, cout).astype(mxu_dtype)
    w3k = (w3 * ws3).reshape(cin, cout).astype(mxu_dtype)
    b1k = b1.reshape(1, cin).astype(jnp.float32)
    b2k = b2.reshape(1, cout).astype(jnp.float32)
    b3k = b3.reshape(1, cout).astype(jnp.float32)

    # ---- VMEM-budget-driven choice of B (images per grid step) ----
    cap = _vmem_capacity_bytes()
    budget = int(cap * 0.55)                            # working-set target
    vmem_limit = min(int(cap * 0.75), 100 * 1024 * 1024)
    mxu_bytes = jnp.dtype(mxu_dtype).itemsize

    def step_bytes(b):
        m = b * H * W
        return (2 * b * H * W * cin * 4                 # input block (double-buffered)
                + 2 * b * Ho * Wo * cout * 4            # output block (double-buffered)
                + 2 * b * Hp * Wp * cin * 4             # xpad + y1pad scratches
                + b * Ho * W * cout * 4                 # pooling staging scratch
                + 4 * m * (cin + cout) * 4              # traced intermediates
                + (9 * cin * (cin + cout) + cin * cout) * mxu_bytes)   # weights

    # Largest divisor of N whose working set fits the budget, keeping the grid at
    # >= 2 steps when possible (v7x megacore sharding + pipeline overlap).
    B = 1
    for d in range(1, N + 1):
        if N % d != 0 or step_bytes(d) > budget:
            continue
        if N // d < 2 and N > 1:
            continue
        B = d

    kernel = functools.partial(_residual_block_kernel,
                               B=B, H=H, W=W, cin=cin, cout=cout)

    def full(shape):
        return pl.BlockSpec(shape, lambda n, _r=len(shape): (0,) * _r)

    out = pl.pallas_call(
        kernel,
        out_shape=jax.ShapeDtypeStruct((N, Ho, Wo, cout), jnp.float32),
        grid_spec=pltpu.PrefetchScalarGridSpec(
            num_scalar_prefetch=0,
            grid=(N // B,),
            in_specs=[
                pl.BlockSpec((B, H, W, cin), lambda n: (n, 0, 0, 0)),
                full((9, cin, cin)),
                full((1, cin)),
                full((9, cin, cout)),
                full((1, cout)),
                full((cin, cout)),
                full((1, cout)),
            ],
            out_specs=pl.BlockSpec((B, Ho, Wo, cout), lambda n: (n, 0, 0, 0)),
            scratch_shapes=[
                pltpu.VMEM((B, Hp, Wp, cin), jnp.float32),   # zero-bordered input
                pltpu.VMEM((B, Hp, Wp, cin), jnp.float32),   # zero-bordered y1
                pltpu.VMEM((B * Ho, W, cout), jnp.float32),  # pooling staging
            ],
        ),
        compiler_params=pltpu.CompilerParams(
            dimension_semantics=("parallel",),        # batch axis: megacore-shardable
            vmem_limit_bytes=vmem_limit,
        ),
    )(x_nhwc, w1k, b1k, w2k, b2k, w3k, b3k)

    return jnp.transpose(out, (0, 3, 1, 2))           # back to NCHW


def reference_forward(x_nchw, params):
    """Pure-JAX reference of ResidualBlock.forward (for validation)."""
    w1, b1, w2, b2, w3, b3 = params
    cin = x_nchw.shape[1]
    ws1 = LEAKY_RELU_GAIN / np.sqrt(cin * 9)
    ws3 = 1.0 / np.sqrt(cin * 9)
    x = jnp.transpose(x_nchw, (0, 2, 3, 1))

    def conv(x, w, b, pad):
        y = jax.lax.conv_general_dilated(x, w, (1, 1), [(pad, pad), (pad, pad)],
                                         dimension_numbers=("NHWC", "HWIO", "NHWC"))
        return y + b

    def pool(x):
        n, h, w, c = x.shape
        return x.reshape(n, h // 2, 2, w // 2, 2, c).mean(axis=(2, 4))

    m = _leaky_relu(conv(x * ws1, w1, b1, 1))
    m = _leaky_relu(conv(m * ws1, w2, b2, 1))
    m = pool(m)
    t = pool(conv(x * ws3, w3, b3, 0))
    out = (m + t) / ROOT_2
    return jnp.transpose(out, (0, 3, 1, 2))


if __name__ == "__main__":
    N, cin, cout, H, W = 2, 4, 8, 16, 16
    key = jax.random.PRNGKey(0)
    ks = jax.random.split(key, 7)
    x = jax.random.normal(ks[0], (N, cin, H, W), jnp.float32)
    # deterministic synthetic parameters (Conv2d weight shapes from __init__, HWIO layout)
    w1 = jax.random.normal(ks[1], (3, 3, cin, cin), jnp.float32) * 0.1
    b1 = jax.random.normal(ks[2], (cin,), jnp.float32) * 0.1
    w2 = jax.random.normal(ks[3], (3, 3, cin, cout), jnp.float32) * 0.1
    b2 = jax.random.normal(ks[4], (cout,), jnp.float32) * 0.1
    w3 = jax.random.normal(ks[5], (1, 1, cin, cout), jnp.float32) * 0.1
    b3 = jax.random.normal(ks[6], (cout,), jnp.float32) * 0.1
    params = (w1, b1, w2, b2, w3, b3)

    ref = jax.block_until_ready(reference_forward(x, params))

    # f32-operand variant: tight check against the reference.
    out_f32 = jax.block_until_ready(
        residual_block_forward(x, params, mxu_dtype=jnp.float32))
    assert out_f32.shape == (N, cout, H // 2, W // 2), out_f32.shape
    np.testing.assert_allclose(np.asarray(out_f32), np.asarray(ref),
                               rtol=2e-4, atol=2e-4)

    # default (bf16 MXU operands, f32 accumulation): looser tolerance.
    out_bf16 = jax.block_until_ready(residual_block_forward(x, params))
    assert out_bf16.shape == (N, cout, H // 2, W // 2), out_bf16.shape
    np.testing.assert_allclose(np.asarray(out_bf16), np.asarray(ref),
                               rtol=2e-2, atol=2e-2)

    print("KERNEL_OK")
</pallas_src>

<mosaic_0001>
module attributes {stable_mosaic.version = 11 : i64} {
  func.func @_residual_block_kernel(%arg0: i32, %arg1: memref<1x16x16x4xf32, #tpu.memory_space<vmem>>, %arg2: memref<9x4x4xf32, #tpu.memory_space<vmem>>, %arg3: memref<1x4xf32, #tpu.memory_space<vmem>>, %arg4: memref<9x4x8xf32, #tpu.memory_space<vmem>>, %arg5: memref<1x8xf32, #tpu.memory_space<vmem>>, %arg6: memref<4x8xf32, #tpu.memory_space<vmem>>, %arg7: memref<1x8xf32, #tpu.memory_space<vmem>>, %arg8: memref<1x8x8x8xf32, #tpu.memory_space<vmem>>, %arg9: memref<1x18x18x4xf32, #tpu.memory_space<vmem>>, %arg10: memref<1x18x18x4xf32, #tpu.memory_space<vmem>>, %arg11: memref<8x16x8xf32, #tpu.memory_space<vmem>>) attributes {dimension_semantics = [#tpu.dimension_semantics<parallel>], iteration_bounds = array<i64: 2>, scalar_prefetch = 0 : i64, scratch_operands = 3 : i64, tpu.core_type = #tpu.core_type<tc>, window_params = [{transform_indices = @transform_0, window_bounds = array<i64: 1, 16, 16, 4>}, {pipeline_mode = #tpu.pipeline_mode<synchronous>, transform_indices = @transform_1, window_bounds = array<i64: 9, 4, 4>}, {pipeline_mode = #tpu.pipeline_mode<synchronous>, transform_indices = @transform_2, window_bounds = array<i64: 1, 4>}, {pipeline_mode = #tpu.pipeline_mode<synchronous>, transform_indices = @transform_3, window_bounds = array<i64: 9, 4, 8>}, {pipeline_mode = #tpu.pipeline_mode<synchronous>, transform_indices = @transform_4, window_bounds = array<i64: 1, 8>}, {pipeline_mode = #tpu.pipeline_mode<synchronous>, transform_indices = @transform_5, window_bounds = array<i64: 4, 8>}, {pipeline_mode = #tpu.pipeline_mode<synchronous>, transform_indices = @transform_6, window_bounds = array<i64: 1, 8>}, {transform_indices = @transform_7, window_bounds = array<i64: 1, 8, 8, 8>}]} {
    %cst = arith.constant 0.000000e+00 : f32
    %0 = vector.broadcast %cst : f32 to vector<1x1x18x4xf32>
    %cst_0 = arith.constant 0.000000e+00 : f32
    %1 = vector.broadcast %cst_0 : f32 to vector<1x18x1x4xf32>
    %c0 = arith.constant 0 : index
    %c0_1 = arith.constant 0 : index
    %c0_2 = arith.constant 0 : index
    %c0_3 = arith.constant 0 : index
    %2 = vector.load %arg9[%c0, %c0_1, %c0_2, %c0_3] : memref<1x18x18x4xf32, #tpu.memory_space<vmem>>, vector<1x1x18x4xf32>
    tpu.vector_store %arg9[%c0, %c0_1, %c0_2, %c0_3], %0 {strides = array<i32>} : memref<1x18x18x4xf32, #tpu.memory_space<vmem>>, vector<1x1x18x4xf32>,
    %c0_4 = arith.constant 0 : index
    %c17 = arith.constant 17 : index
    %c0_5 = arith.constant 0 : index
    %c0_6 = arith.constant 0 : index
    %3 = vector.load %arg9[%c0_4, %c17, %c0_5, %c0_6] : memref<1x18x18x4xf32, #tpu.memory_space<vmem>>, vector<1x1x18x4xf32>
    tpu.vector_store %arg9[%c0_4, %c17, %c0_5, %c0_6], %0 {strides = array<i32>} : memref<1x18x18x4xf32, #tpu.memory_space<vmem>>, vector<1x1x18x4xf32>,
    %c0_7 = arith.constant 0 : index
    %c0_8 = arith.constant 0 : index
    %c0_9 = arith.constant 0 : index
    %c0_10 = arith.constant 0 : index
    %4 = vector.load %arg9[%c0_7, %c0_8, %c0_9, %c0_10] : memref<1x18x18x4xf32, #tpu.memory_space<vmem>>, vector<1x18x1x4xf32>
    tpu.vector_store %arg9[%c0_7, %c0_8, %c0_9, %c0_10], %1 {strides = array<i32>} : memref<1x18x18x4xf32, #tpu.memory_space<vmem>>, vector<1x18x1x4xf32>,
    %c0_11 = arith.constant 0 : index
    %c0_12 = arith.constant 0 : index
    %c17_13 = arith.constant 17 : index
    %c0_14 = arith.constant 0 : index
    %5 = vector.load %arg9[%c0_11, %c0_12, %c17_13, %c0_14] : memref<1x18x18x4xf32, #tpu.memory_space<vmem>>, vector<1x18x1x4xf32>
    tpu.vector_store %arg9[%c0_11, %c0_12, %c17_13, %c0_14], %1 {strides = array<i32>} : memref<1x18x18x4xf32, #tpu.memory_space<vmem>>, vector<1x18x1x4xf32>,
    %c0_15 = arith.constant 0 : index
    %c0_16 = arith.constant 0 : index
    %c0_17 = arith.constant 0 : index
    %c0_18 = arith.constant 0 : index
    %6 = vector.load %arg1[%c0_15, %c0_16, %c0_17, %c0_18] : memref<1x16x16x4xf32, #tpu.memory_space<vmem>>, vector<1x16x16x4xf32>
    %c0_19 = arith.constant 0 : index
    %c1 = arith.constant 1 : index
    %c1_20 = arith.constant 1 : index
    %c0_21 = arith.constant 0 : index
    %7 = vector.load %arg9[%c0_19, %c1, %c1_20, %c0_21] : memref<1x18x18x4xf32, #tpu.memory_space<vmem>>, vector<1x16x16x4xf32>
    tpu.vector_store %arg9[%c0_19, %c1, %c1_20, %c0_21], %6 {strides = array<i32>} : memref<1x18x18x4xf32, #tpu.memory_space<vmem>>, vector<1x16x16x4xf32>,
    %cst_22 = arith.constant 0.000000e+00 : f32
    %8 = vector.broadcast %cst_22 : f32 to vector<256x4xf32>
    %c0_23 = arith.constant 0 : index
    %c0_24 = arith.constant 0 : index
    %c0_25 = arith.constant 0 : index
    %c0_26 = arith.constant 0 : index
    %9 = vector.load %arg9[%c0_23, %c0_24, %c0_25, %c0_26] : memref<1x18x18x4xf32, #tpu.memory_space<vmem>>, vector<1x16x16x4xf32>
    %10 = vector.shape_cast %9 : vector<1x16x16x4xf32> to vector<256x4xf32>
    %c0_27 = arith.constant 0 : index
    %c0_28 = arith.constant 0 : index
    %c0_29 = arith.constant 0 : index
    %11 = vector.load %arg2[%c0_27, %c0_28, %c0_29] : memref<9x4x4xf32, #tpu.memory_space<vmem>>, vector<1x4x4xf32>
    %12 = vector.shape_cast %11 : vector<1x4x4xf32> to vector<4x4xf32>
    %cst_30 = arith.constant dense<0.000000e+00> : vector<256x4xf32>
    %13 = tpu.matmul %10, %12, %cst_30 {dimension_numbers = #tpu.dot_dimension_numbers<[1], [0], [0], [1], [0, 0, 1, 1], [], []>} : vector<256x4xf32>, vector<4x4xf32>, vector<256x4xf32> -> vector<256x4xf32>
    %14 = arith.addf %8, %13 : vector<256x4xf32>
    %c0_31 = arith.constant 0 : index
    %c0_32 = arith.constant 0 : index
    %c1_33 = arith.constant 1 : index
    %c0_34 = arith.constant 0 : index
    %15 = vector.load %arg9[%c0_31, %c0_32, %c1_33, %c0_34] : memref<1x18x18x4xf32, #tpu.memory_space<vmem>>, vector<1x16x16x4xf32>
    %16 = vector.shape_cast %15 : vector<1x16x16x4xf32> to vector<256x4xf32>
    %c1_35 = arith.constant 1 : index
    %c0_36 = arith.constant 0 : index
    %c0_37 = arith.constant 0 : index
    %17 = vector.load %arg2[%c1_35, %c0_36, %c0_37] : memref<9x4x4xf32, #tpu.memory_space<vmem>>, vector<1x4x4xf32>
    %18 = vector.shape_cast %17 : vector<1x4x4xf32> to vector<4x4xf32>
    %cst_38 = arith.constant dense<0.000000e+00> : vector<256x4xf32>
    %19 = tpu.matmul %16, %18, %cst_38 {dimension_numbers = #tpu.dot_dimension_numbers<[1], [0], [0], [1], [0, 0, 1, 1], [], []>} : vector<256x4xf32>, vector<4x4xf32>, vector<256x4xf32> -> vector<256x4xf32>
    %20 = arith.addf %14, %19 : vector<256x4xf32>
    %c0_39 = arith.constant 0 : index
    %c0_40 = arith.constant 0 : index
    %c2 = arith.constant 2 : index
    %c0_41 = arith.constant 0 : index
    %21 = vector.load %arg9[%c0_39, %c0_40, %c2, %c0_41] : memref<1x18x18x4xf32, #tpu.memory_space<vmem>>, vector<1x16x16x4xf32>
    %22 = vector.shape_cast %21 : vector<1x16x16x4xf32> to vector<256x4xf32>
    %c2_42 = arith.constant 2 : index
    %c0_43 = arith.constant 0 : index
    %c0_44 = arith.constant 0 : index
    %23 = vector.load %arg2[%c2_42, %c0_43, %c0_44] : memref<9x4x4xf32, #tpu.memory_space<vmem>>, vector<1x4x4xf32>
    %24 = vector.shape_cast %23 : vector<1x4x4xf32> to vector<4x4xf32>
    %cst_45 = arith.constant dense<0.000000e+00> : vector<256x4xf32>
    %25 = tpu.matmul %22, %24, %cst_45 {dimension_numbers = #tpu.dot_dimension_numbers<[1], [0], [0], [1], [0, 0, 1, 1], [], []>} : vector<256x4xf32>, vector<4x4xf32>, vector<256x4xf32> -> vector<256x4xf32>
    %26 = arith.addf %20, %25 : vector<256x4xf32>
    %c0_46 = arith.constant 0 : index
    %c1_47 = arith.constant 1 : index
    %c0_48 = arith.constant 0 : index
    %c0_49 = arith.constant 0 : index
    %27 = vector.load %arg9[%c0_46, %c1_47, %c0_48, %c0_49] : memref<1x18x18x4xf32, #tpu.memory_space<vmem>>, vector<1x16x16x4xf32>
    %28 = vector.shape_cast %27 : vector<1x16x16x4xf32> to vector<256x4xf32>
    %c3 = arith.constant 3 : index
    %c0_50 = arith.constant 0 : index
    %c0_51 = arith.constant 0 : index
    %29 = vector.load %arg2[%c3, %c0_50, %c0_51] : memref<9x4x4xf32, #tpu.memory_space<vmem>>, vector<1x4x4xf32>
    %30 = vector.shape_cast %29 : vector<1x4x4xf32> to vector<4x4xf32>
    %cst_52 = arith.constant dense<0.000000e+00> : vector<256x4xf32>
    %31 = tpu.matmul %28, %30, %cst_52 {dimension_numbers = #tpu.dot_dimension_numbers<[1], [0], [0], [1], [0, 0, 1, 1], [], []>} : vector<256x4xf32>, vector<4x4xf32>, vector<256x4xf32> -> vector<256x4xf32>
    %32 = arith.addf %26, %31 : vector<256x4xf32>
    %c0_53 = arith.constant 0 : index
    %c1_54 = arith.constant 1 : index
    %c1_55 = arith.constant 1 : index
    %c0_56 = arith.constant 0 : index
    %33 = vector.load %arg9[%c0_53, %c1_54, %c1_55, %c0_56] : memref<1x18x18x4xf32, #tpu.memory_space<vmem>>, vector<1x16x16x4xf32>
    %34 = vector.shape_cast %33 : vector<1x16x16x4xf32> to vector<256x4xf32>
    %c4 = arith.constant 4 : index
    %c0_57 = arith.constant 0 : index
    %c0_58 = arith.constant 0 : index
    %35 = vector.load %arg2[%c4, %c0_57, %c0_58] : memref<9x4x4xf32, #tpu.memory_space<vmem>>, vector<1x4x4xf32>
    %36 = vector.shape_cast %35 : vector<1x4x4xf32> to vector<4x4xf32>
    %cst_59 = arith.constant dense<0.000000e+00> : vector<256x4xf32>
    %37 = tpu.matmul %34, %36, %cst_59 {dimension_numbers = #tpu.dot_dimension_numbers<[1], [0], [0], [1], [0, 0, 1, 1], [], []>} : vector<256x4xf32>, vector<4x4xf32>, vector<256x4xf32> -> vector<256x4xf32>
    %38 = arith.addf %32, %37 : vector<256x4xf32>
    %c0_60 = arith.constant 0 : index
    %c1_61 = arith.constant 1 : index
    %c2_62 = arith.constant 2 : index
    %c0_63 = arith.constant 0 : index
    %39 = vector.load %arg9[%c0_60, %c1_61, %c2_62, %c0_63] : memref<1x18x18x4xf32, #tpu.memory_space<vmem>>, vector<1x16x16x4xf32>
    %40 = vector.shape_cast %39 : vector<1x16x16x4xf32> to vector<256x4xf32>
    %c5 = arith.constant 5 : index
    %c0_64 = arith.constant 0 : index
    %c0_65 = arith.constant 0 : index
    %41 = vector.load %arg2[%c5, %c0_64, %c0_65] : memref<9x4x4xf32, #tpu.memory_space<vmem>>, vector<1x4x4xf32>
    %42 = vector.shape_cast %41 : vector<1x4x4xf32> to vector<4x4xf32>
    %cst_66 = arith.constant dense<0.000000e+00> : vector<256x4xf32>
    %43 = tpu.matmul %40, %42, %cst_66 {dimension_numbers = #tpu.dot_dimension_numbers<[1], [0], [0], [1], [0, 0, 1, 1], [], []>} : vector<256x4xf32>, vector<4x4xf32>, vector<256x4xf32> -> vector<256x4xf32>
    %44 = arith.addf %38, %43 : vector<256x4xf32>
    %c0_67 = arith.constant 0 : index
    %c2_68 = arith.constant 2 : index
    %c0_69 = arith.constant 0 : index
    %c0_70 = arith.constant 0 : index
    %45 = vector.load %arg9[%c0_67, %c2_68, %c0_69, %c0_70] : memref<1x18x18x4xf32, #tpu.memory_space<vmem>>, vector<1x16x16x4xf32>
    %46 = vector.shape_cast %45 : vector<1x16x16x4xf32> to vector<256x4xf32>
    %c6 = arith.constant 6 : index
    %c0_71 = arith.constant 0 : index
    %c0_72 = arith.constant 0 : index
    %47 = vector.load %arg2[%c6, %c0_71, %c0_72] : memref<9x4x4xf32, #tpu.memory_space<vmem>>, vector<1x4x4xf32>
    %48 = vector.shape_cast %47 : vector<1x4x4xf32> to vector<4x4xf32>
    %cst_73 = arith.constant dense<0.000000e+00> : vector<256x4xf32>
    %49 = tpu.matmul %46, %48, %cst_73 {dimension_numbers = #tpu.dot_dimension_numbers<[1], [0], [0], [1], [0, 0, 1, 1], [], []>} : vector<256x4xf32>, vector<4x4xf32>, vector<256x4xf32> -> vector<256x4xf32>
    %50 = arith.addf %44, %49 : vector<256x4xf32>
    %c0_74 = arith.constant 0 : index
    %c2_75 = arith.constant 2 : index
    %c1_76 = arith.constant 1 : index
    %c0_77 = arith.constant 0 : index
    %51 = vector.load %arg9[%c0_74, %c2_75, %c1_76, %c0_77] : memref<1x18x18x4xf32, #tpu.memory_space<vmem>>, vector<1x16x16x4xf32>
    %52 = vector.shape_cast %51 : vector<1x16x16x4xf32> to vector<256x4xf32>
    %c7 = arith.constant 7 : index
    %c0_78 = arith.constant 0 : index
    %c0_79 = arith.constant 0 : index
    %53 = vector.load %arg2[%c7, %c0_78, %c0_79] : memref<9x4x4xf32, #tpu.memory_space<vmem>>, vector<1x4x4xf32>
    %54 = vector.shape_cast %53 : vector<1x4x4xf32> to vector<4x4xf32>
    %cst_80 = arith.constant dense<0.000000e+00> : vector<256x4xf32>
    %55 = tpu.matmul %52, %54, %cst_80 {dimension_numbers = #tpu.dot_dimension_numbers<[1], [0], [0], [1], [0, 0, 1, 1], [], []>} : vector<256x4xf32>, vector<4x4xf32>, vector<256x4xf32> -> vector<256x4xf32>
    %56 = arith.addf %50, %55 : vector<256x4xf32>
    %c0_81 = arith.constant 0 : index
    %c2_82 = arith.constant 2 : index
    %c2_83 = arith.constant 2 : index
    %c0_84 = arith.constant 0 : index
    %57 = vector.load %arg9[%c0_81, %c2_82, %c2_83, %c0_84] : memref<1x18x18x4xf32, #tpu.memory_space<vmem>>, vector<1x16x16x4xf32>
    %58 = vector.shape_cast %57 : vector<1x16x16x4xf32> to vector<256x4xf32>
    %c8 = arith.constant 8 : index
    %c0_85 = arith.constant 0 : index
    %c0_86 = arith.constant 0 : index
    %59 = vector.load %arg2[%c8, %c0_85, %c0_86] : memref<9x4x4xf32, #tpu.memory_space<vmem>>, vector<1x4x4xf32>
    %60 = vector.shape_cast %59 : vector<1x4x4xf32> to vector<4x4xf32>
    %cst_87 = arith.constant dense<0.000000e+00> : vector<256x4xf32>
    %61 = tpu.matmul %58, %60, %cst_87 {dimension_numbers = #tpu.dot_dimension_numbers<[1], [0], [0], [1], [0, 0, 1, 1], [], []>} : vector<256x4xf32>, vector<4x4xf32>, vector<256x4xf32> -> vector<256x4xf32>
    %62 = arith.addf %56, %61 : vector<256x4xf32>
    %c0_88 = arith.constant 0 : index
    %c0_89 = arith.constant 0 : index
    %63 = vector.load %arg3[%c0_88, %c0_89] : memref<1x4xf32, #tpu.memory_space<vmem>>, vector<1x4xf32>
    %64 = vector.broadcast %63 : vector<1x4xf32> to vector<256x4xf32>
    %65 = arith.addf %62, %64 : vector<256x4xf32>
    %cst_90 = arith.constant 0.000000e+00 : f32
    %66 = vector.broadcast %cst_90 : f32 to vector<256x4xf32>
    %67 = arith.cmpf ogt, %65, %66 : vector<256x4xf32>
    %cst_91 = arith.constant 2.000000e-01 : f32
    %68 = vector.broadcast %cst_91 : f32 to vector<256x4xf32>
    %69 = arith.mulf %68, %65 : vector<256x4xf32>
    %70 = arith.select %67, %65, %69 : vector<256x4xi1>, vector<256x4xf32>
    %c0_92 = arith.constant 0 : index
    %c1_93 = arith.constant 1 : index
    %c1_94 = arith.constant 1 : index
    %c0_95 = arith.constant 0 : index
    %71 = vector.load %arg9[%c0_92, %c1_93, %c1_94, %c0_95] : memref<1x18x18x4xf32, #tpu.memory_space<vmem>>, vector<1x16x16x4xf32>
    %72 = vector.shape_cast %71 : vector<1x16x16x4xf32> to vector<256x4xf32>
    %c0_96 = arith.constant 0 : index
    %c0_97 = arith.constant 0 : index
    %73 = vector.load %arg6[%c0_96, %c0_97] : memref<4x8xf32, #tpu.memory_space<vmem>>, vector<4x8xf32>
    %cst_98 = arith.constant dense<0.000000e+00> : vector<256x8xf32>
    %74 = tpu.matmul %72, %73, %cst_98 {dimension_numbers = #tpu.dot_dimension_numbers<[1], [0], [0], [1], [0, 0, 1, 1], [], []>} : vector<256x4xf32>, vector<4x8xf32>, vector<256x8xf32> -> vector<256x8xf32>
    %c0_99 = arith.constant 0 : index
    %c0_100 = arith.constant 0 : index
    %75 = vector.load %arg7[%c0_99, %c0_100] : memref<1x8xf32, #tpu.memory_space<vmem>>, vector<1x8xf32>
    %76 = vector.broadcast %75 : vector<1x8xf32> to vector<256x8xf32>
    %77 = arith.addf %74, %76 : vector<256x8xf32>
    %c0_101 = arith.constant 0 : index
    %c0_102 = arith.constant 0 : index
    %c0_103 = arith.constant 0 : index
    %c0_104 = arith.constant 0 : index
    %78 = vector.load %arg10[%c0_101, %c0_102, %c0_103, %c0_104] : memref<1x18x18x4xf32, #tpu.memory_space<vmem>>, vector<1x1x18x4xf32>
    tpu.vector_store %arg10[%c0_101, %c0_102, %c0_103, %c0_104], %0 {strides = array<i32>} : memref<1x18x18x4xf32, #tpu.memory_space<vmem>>, vector<1x1x18x4xf32>,
    %c0_105 = arith.constant 0 : index
    %c17_106 = arith.constant 17 : index
    %c0_107 = arith.constant 0 : index
    %c0_108 = arith.constant 0 : index
    %79 = vector.load %arg10[%c0_105, %c17_106, %c0_107, %c0_108] : memref<1x18x18x4xf32, #tpu.memory_space<vmem>>, vector<1x1x18x4xf32>
    tpu.vector_store %arg10[%c0_105, %c17_106, %c0_107, %c0_108], %0 {strides = array<i32>} : memref<1x18x18x4xf32, #tpu.memory_space<vmem>>, vector<1x1x18x4xf32>,
    %c0_109 = arith.constant 0 : index
    %c0_110 = arith.constant 0 : index
    %c0_111 = arith.constant 0 : index
    %c0_112 = arith.constant 0 : index
    %80 = vector.load %arg10[%c0_109, %c0_110, %c0_111, %c0_112] : memref<1x18x18x4xf32, #tpu.memory_space<vmem>>, vector<1x18x1x4xf32>
    tpu.vector_store %arg10[%c0_109, %c0_110, %c0_111, %c0_112], %1 {strides = array<i32>} : memref<1x18x18x4xf32, #tpu.memory_space<vmem>>, vector<1x18x1x4xf32>,
    %c0_113 = arith.constant 0 : index
    %c0_114 = arith.constant 0 : index
    %c17_115 = arith.constant 17 : index
    %c0_116 = arith.constant 0 : index
    %81 = vector.load %arg10[%c0_113, %c0_114, %c17_115, %c0_116] : memref<1x18x18x4xf32, #tpu.memory_space<vmem>>, vector<1x18x1x4xf32>
    tpu.vector_store %arg10[%c0_113, %c0_114, %c17_115, %c0_116], %1 {strides = array<i32>} : memref<1x18x18x4xf32, #tpu.memory_space<vmem>>, vector<1x18x1x4xf32>,
    %82 = vector.shape_cast %70 : vector<256x4xf32> to vector<1x16x16x4xf32>
    %c0_117 = arith.constant 0 : index
    %c1_118 = arith.constant 1 : index
    %c1_119 = arith.constant 1 : index
    %c0_120 = arith.constant 0 : index
    %83 = vector.load %arg10[%c0_117, %c1_118, %c1_119, %c0_120] : memref<1x18x18x4xf32, #tpu.memory_space<vmem>>, vector<1x16x16x4xf32>
    tpu.vector_store %arg10[%c0_117, %c1_118, %c1_119, %c0_120], %82 {strides = array<i32>} : memref<1x18x18x4xf32, #tpu.memory_space<vmem>>, vector<1x16x16x4xf32>,
    %cst_121 = arith.constant 0.000000e+00 : f32
    %84 = vector.broadcast %cst_121 : f32 to vector<256x8xf32>
    %c0_122 = arith.constant 0 : index
    %c0_123 = arith.constant 0 : index
    %c0_124 = arith.constant 0 : index
    %c0_125 = arith.constant 0 : index
    %85 = vector.load %arg10[%c0_122, %c0_123, %c0_124, %c0_125] : memref<1x18x18x4xf32, #tpu.memory_space<vmem>>, vector<1x16x16x4xf32>
    %86 = vector.shape_cast %85 : vector<1x16x16x4xf32> to vector<256x4xf32>
    %c0_126 = arith.constant 0 : index
    %c0_127 = arith.constant 0 : index
    %c0_128 = arith.constant 0 : index
    %87 = vector.load %arg4[%c0_126, %c0_127, %c0_128] : memref<9x4x8xf32, #tpu.memory_space<vmem>>, vector<1x4x8xf32>
    %88 = vector.shape_cast %87 : vector<1x4x8xf32> to vector<4x8xf32>
    %cst_129 = arith.constant dense<0.000000e+00> : vector<256x8xf32>
    %89 = tpu.matmul %86, %88, %cst_129 {dimension_numbers = #tpu.dot_dimension_numbers<[1], [0], [0], [1], [0, 0, 1, 1], [], []>} : vector<256x4xf32>, vector<4x8xf32>, vector<256x8xf32> -> vector<256x8xf32>
    %90 = arith.addf %84, %89 : vector<256x8xf32>
    %c0_130 = arith.constant 0 : index
    %c0_131 = arith.constant 0 : index
    %c1_132 = arith.constant 1 : index
    %c0_133 = arith.constant 0 : index
    %91 = vector.load %arg10[%c0_130, %c0_131, %c1_132, %c0_133] : memref<1x18x18x4xf32, #tpu.memory_space<vmem>>, vector<1x16x16x4xf32>
    %92 = vector.shape_cast %91 : vector<1x16x16x4xf32> to vector<256x4xf32>
    %c1_134 = arith.constant 1 : index
    %c0_135 = arith.constant 0 : index
    %c0_136 = arith.constant 0 : index
    %93 = vector.load %arg4[%c1_134, %c0_135, %c0_136] : memref<9x4x8xf32, #tpu.memory_space<vmem>>, vector<1x4x8xf32>
    %94 = vector.shape_cast %93 : vector<1x4x8xf32> to vector<4x8xf32>
    %cst_137 = arith.constant dense<0.000000e+00> : vector<256x8xf32>
    %95 = tpu.matmul %92, %94, %cst_137 {dimension_numbers = #tpu.dot_dimension_numbers<[1], [0], [0], [1], [0, 0, 1, 1], [], []>} : vector<256x4xf32>, vector<4x8xf32>, vector<256x8xf32> -> vector<256x8xf32>
    %96 = arith.addf %90, %95 : vector<256x8xf32>
    %c0_138 = arith.constant 0 : index
    %c0_139 = arith.constant 0 : index
    %c2_140 = arith.constant 2 : index
    %c0_141 = arith.constant 0 : index
    %97 = vector.load %arg10[%c0_138, %c0_139, %c2_140, %c0_141] : memref<1x18x18x4xf32, #tpu.memory_space<vmem>>, vector<1x16x16x4xf32>
    %98 = vector.shape_cast %97 : vector<1x16x16x4xf32> to vector<256x4xf32>
    %c2_142 = arith.constant 2 : index
    %c0_143 = arith.constant 0 : index
    %c0_144 = arith.constant 0 : index
    %99 = vector.load %arg4[%c2_142, %c0_143, %c0_144] : memref<9x4x8xf32, #tpu.memory_space<vmem>>, vector<1x4x8xf32>
    %100 = vector.shape_cast %99 : vector<1x4x8xf32> to vector<4x8xf32>
    %cst_145 = arith.constant dense<0.000000e+00> : vector<256x8xf32>
    %101 = tpu.matmul %98, %100, %cst_145 {dimension_numbers = #tpu.dot_dimension_numbers<[1], [0], [0], [1], [0, 0, 1, 1], [], []>} : vector<256x4xf32>, vector<4x8xf32>, vector<256x8xf32> -> vector<256x8xf32>
    %102 = arith.addf %96, %101 : vector<256x8xf32>
    %c0_146 = arith.constant 0 : index
    %c1_147 = arith.constant 1 : index
    %c0_148 = arith.constant 0 : index
    %c0_149 = arith.constant 0 : index
    %103 = vector.load %arg10[%c0_146, %c1_147, %c0_148, %c0_149] : memref<1x18x18x4xf32, #tpu.memory_space<vmem>>, vector<1x16x16x4xf32>
    %104 = vector.shape_cast %103 : vector<1x16x16x4xf32> to vector<256x4xf32>
    %c3_150 = arith.constant 3 : index
    %c0_151 = arith.constant 0 : index
    %c0_152 = arith.constant 0 : index
    %105 = vector.load %arg4[%c3_150, %c0_151, %c0_152] : memref<9x4x8xf32, #tpu.memory_space<vmem>>, vector<1x4x8xf32>
    %106 = vector.shape_cast %105 : vector<1x4x8xf32> to vector<4x8xf32>
    %cst_153 = arith.constant dense<0.000000e+00> : vector<256x8xf32>
    %107 = tpu.matmul %104, %106, %cst_153 {dimension_numbers = #tpu.dot_dimension_numbers<[1], [0], [0], [1], [0, 0, 1, 1], [], []>} : vector<256x4xf32>, vector<4x8xf32>, vector<256x8xf32> -> vector<256x8xf32>
    %108 = arith.addf %102, %107 : vector<256x8xf32>
    %c0_154 = arith.constant 0 : index
    %c1_155 = arith.constant 1 : index
    %c1_156 = arith.constant 1 : index
    %c0_157 = arith.constant 0 : index
    %109 = vector.load %arg10[%c0_154, %c1_155, %c1_156, %c0_157] : memref<1x18x18x4xf32, #tpu.memory_space<vmem>>, vector<1x16x16x4xf32>
    %110 = vector.shape_cast %109 : vector<1x16x16x4xf32> to vector<256x4xf32>
    %c4_158 = arith.constant 4 : index
    %c0_159 = arith.constant 0 : index
    %c0_160 = arith.constant 0 : index
    %111 = vector.load %arg4[%c4_158, %c0_159, %c0_160] : memref<9x4x8xf32, #tpu.memory_space<vmem>>, vector<1x4x8xf32>
    %112 = vector.shape_cast %111 : vector<1x4x8xf32> to vector<4x8xf32>
    %cst_161 = arith.constant dense<0.000000e+00> : vector<256x8xf32>
    %113 = tpu.matmul %110, %112, %cst_161 {dimension_numbers = #tpu.dot_dimension_numbers<[1], [0], [0], [1], [0, 0, 1, 1], [], []>} : vector<256x4xf32>, vector<4x8xf32>, vector<256x8xf32> -> vector<256x8xf32>
    %114 = arith.addf %108, %113 : vector<256x8xf32>
    %c0_162 = arith.constant 0 : index
    %c1_163 = arith.constant 1 : index
    %c2_164 = arith.constant 2 : index
    %c0_165 = arith.constant 0 : index
    %115 = vector.load %arg10[%c0_162, %c1_163, %c2_164, %c0_165] : memref<1x18x18x4xf32, #tpu.memory_space<vmem>>, vector<1x16x16x4xf32>
    %116 = vector.shape_cast %115 : vector<1x16x16x4xf32> to vector<256x4xf32>
    %c5_166 = arith.constant 5 : index
    %c0_167 = arith.constant 0 : index
    %c0_168 = arith.constant 0 : index
    %117 = vector.load %arg4[%c5_166, %c0_167, %c0_168] : memref<9x4x8xf32, #tpu.memory_space<vmem>>, vector<1x4x8xf32>
    %118 = vector.shape_cast %117 : vector<1x4x8xf32> to vector<4x8xf32>
    %cst_169 = arith.constant dense<0.000000e+00> : vector<256x8xf32>
    %119 = tpu.matmul %116, %118, %cst_169 {dimension_numbers = #tpu.dot_dimension_numbers<[1], [0], [0], [1], [0, 0, 1, 1], [], []>} : vector<256x4xf32>, vector<4x8xf32>, vector<256x8xf32> -> vector<256x8xf32>
    %120 = arith.addf %114, %119 : vector<256x8xf32>
    %c0_170 = arith.constant 0 : index
    %c2_171 = arith.constant 2 : index
    %c0_172 = arith.constant 0 : index
    %c0_173 = arith.constant 0 : index
    %121 = vector.load %arg10[%c0_170, %c2_171, %c0_172, %c0_173] : memref<1x18x18x4xf32, #tpu.memory_space<vmem>>, vector<1x16x16x4xf32>
    %122 = vector.shape_cast %121 : vector<1x16x16x4xf32> to vector<256x4xf32>
    %c6_174 = arith.constant 6 : index
    %c0_175 = arith.constant 0 : index
    %c0_176 = arith.constant 0 : index
    %123 = vector.load %arg4[%c6_174, %c0_175, %c0_176] : memref<9x4x8xf32, #tpu.memory_space<vmem>>, vector<1x4x8xf32>
    %124 = vector.shape_cast %123 : vector<1x4x8xf32> to vector<4x8xf32>
    %cst_177 = arith.constant dense<0.000000e+00> : vector<256x8xf32>
    %125 = tpu.matmul %122, %124, %cst_177 {dimension_numbers = #tpu.dot_dimension_numbers<[1], [0], [0], [1], [0, 0, 1, 1], [], []>} : vector<256x4xf32>, vector<4x8xf32>, vector<256x8xf32> -> vector<256x8xf32>
    %126 = arith.addf %120, %125 : vector<256x8xf32>
    %c0_178 = arith.constant 0 : index
    %c2_179 = arith.constant 2 : index
    %c1_180 = arith.constant 1 : index
    %c0_181 = arith.constant 0 : index
    %127 = vector.load %arg10[%c0_178, %c2_179, %c1_180, %c0_181] : memref<1x18x18x4xf32, #tpu.memory_space<vmem>>, vector<1x16x16x4xf32>
    %128 = vector.shape_cast %127 : vector<1x16x16x4xf32> to vector<256x4xf32>
    %c7_182 = arith.constant 7 : index
    %c0_183 = arith.constant 0 : index
    %c0_184 = arith.constant 0 : index
    %129 = vector.load %arg4[%c7_182, %c0_183, %c0_184] : memref<9x4x8xf32, #tpu.memory_space<vmem>>, vector<1x4x8xf32>
    %130 = vector.shape_cast %129 : vector<1x4x8xf32> to vector<4x8xf32>
    %cst_185 = arith.constant dense<0.000000e+00> : vector<256x8xf32>
    %131 = tpu.matmul %128, %130, %cst_185 {dimension_numbers = #tpu.dot_dimension_numbers<[1], [0], [0], [1], [0, 0, 1, 1], [], []>} : vector<256x4xf32>, vector<4x8xf32>, vector<256x8xf32> -> vector<256x8xf32>
    %132 = arith.addf %126, %131 : vector<256x8xf32>
    %c0_186 = arith.constant 0 : index
    %c2_187 = arith.constant 2 : index
    %c2_188 = arith.constant 2 : index
    %c0_189 = arith.constant 0 : index
    %133 = vector.load %arg10[%c0_186, %c2_187, %c2_188, %c0_189] : memref<1x18x18x4xf32, #tpu.memory_space<vmem>>, vector<1x16x16x4xf32>
    %134 = vector.shape_cast %133 : vector<1x16x16x4xf32> to vector<256x4xf32>
    %c8_190 = arith.constant 8 : index
    %c0_191 = arith.constant 0 : index
    %c0_192 = arith.constant 0 : index
    %135 = vector.load %arg4[%c8_190, %c0_191, %c0_192] : memref<9x4x8xf32, #tpu.memory_space<vmem>>, vector<1x4x8xf32>
    %136 = vector.shape_cast %135 : vector<1x4x8xf32> to vector<4x8xf32>
    %cst_193 = arith.constant dense<0.000000e+00> : vector<256x8xf32>
    %137 = tpu.matmul %134, %136, %cst_193 {dimension_numbers = #tpu.dot_dimension_numbers<[1], [0], [0], [1], [0, 0, 1, 1], [], []>} : vector<256x4xf32>, vector<4x8xf32>, vector<256x8xf32> -> vector<256x8xf32>
    %138 = arith.addf %132, %137 : vector<256x8xf32>
    %c0_194 = arith.constant 0 : index
    %c0_195 = arith.constant 0 : index
    %139 = vector.load %arg5[%c0_194, %c0_195] : memref<1x8xf32, #tpu.memory_space<vmem>>, vector<1x8xf32>
    %140 = vector.broadcast %139 : vector<1x8xf32> to vector<256x8xf32>
    %141 = arith.addf %138, %140 : vector<256x8xf32>
    %cst_196 = arith.constant 0.000000e+00 : f32
    %142 = vector.broadcast %cst_196 : f32 to vector<256x8xf32>
    %143 = arith.cmpf ogt, %141, %142 : vector<256x8xf32>
    %cst_197 = arith.constant 2.000000e-01 : f32
    %144 = vector.broadcast %cst_197 : f32 to vector<256x8xf32>
    %145 = arith.mulf %144, %141 : vector<256x8xf32>
    %146 = arith.select %143, %141, %145 : vector<256x8xi1>, vector<256x8xf32>
    %147 = arith.addf %146, %77 : vector<256x8xf32>
    %148 = vector.shape_cast %147 : vector<256x8xf32> to vector<1x8x2x16x8xf32>
    %149 = vector.extract_strided_slice %148 {offsets = [0, 0, 0, 0, 0], sizes = [1, 8, 1, 16, 8], strides = [1, 1, 1, 1, 1]} : vector<1x8x2x16x8xf32> to vector<1x8x1x16x8xf32>
    %150 = vector.shape_cast %149 : vector<1x8x1x16x8xf32> to vector<1x8x16x8xf32>
    %151 = vector.extract_strided_slice %148 {offsets = [0, 0, 1, 0, 0], sizes = [1, 8, 1, 16, 8], strides = [1, 1, 1, 1, 1]} : vector<1x8x2x16x8xf32> to vector<1x8x1x16x8xf32>
    %152 = vector.shape_cast %151 : vector<1x8x1x16x8xf32> to vector<1x8x16x8xf32>
    %153 = arith.addf %150, %152 : vector<1x8x16x8xf32>
    %154 = vector.shape_cast %153 : vector<1x8x16x8xf32> to vector<8x16x8xf32>
    %c0_198 = arith.constant 0 : index
    %c0_199 = arith.constant 0 : index
    %c0_200 = arith.constant 0 : index
    %155 = vector.load %arg11[%c0_198, %c0_199, %c0_200] : memref<8x16x8xf32, #tpu.memory_space<vmem>>, vector<8x16x8xf32>
    tpu.vector_store %arg11[%c0_198, %c0_199, %c0_200], %154 {strides = array<i32>} : memref<8x16x8xf32, #tpu.memory_space<vmem>>, vector<8x16x8xf32>,
    %c0_201 = arith.constant 0 : index
    %c0_202 = arith.constant 0 : index
    %c0_203 = arith.constant 0 : index
    %156 = tpu.strided_load %arg11[%c0_201, %c0_202, %c0_203] {strides = array<i32: 1, 2, 1>} : memref<8x16x8xf32, #tpu.memory_space<vmem>>, vector<8x8x8xf32>
    %c0_204 = arith.constant 0 : index
    %c1_205 = arith.constant 1 : index
    %c0_206 = arith.constant 0 : index
    %157 = tpu.strided_load %arg11[%c0_204, %c1_205, %c0_206] {strides = array<i32: 1, 2, 1>} : memref<8x16x8xf32, #tpu.memory_space<vmem>>, vector<8x8x8xf32>
    %158 = arith.addf %156, %157 : vector<8x8x8xf32>
    %cst_207 = arith.constant 0.176777139 : f32
    %159 = vector.broadcast %cst_207 : f32 to vector<8x8x8xf32>
    %160 = arith.mulf %158, %159 : vector<8x8x8xf32>
    %161 = vector.shape_cast %160 : vector<8x8x8xf32> to vector<1x8x8x8xf32>
    %c0_208 = arith.constant 0 : index
    %c0_209 = arith.constant 0 : index
    %c0_210 = arith.constant 0 : index
    %c0_211 = arith.constant 0 : index
    %162 = vector.load %arg8[%c0_208, %c0_209, %c0_210, %c0_211] : memref<1x8x8x8xf32, #tpu.memory_space<vmem>>, vector<1x8x8x8xf32>
    tpu.vector_store %arg8[%c0_208, %c0_209, %c0_210, %c0_211], %161 {strides = array<i32>} : memref<1x8x8x8xf32, #tpu.memory_space<vmem>>, vector<1x8x8x8xf32>,
    return
  }
  func.func @transform_0(%arg0: i32) -> (i32, i32, i32, i32) {
    %c0_i32 = arith.constant 0 : i32
    %c0_i32_0 = arith.constant 0 : i32
    %c0_i32_1 = arith.constant 0 : i32
    %c0_i32_2 = arith.constant 0 : i32
    return %arg0, %c0_i32, %c0_i32_0, %c0_i32_1 : i32, i32, i32, i32
  }
  func.func @transform_1(%arg0: i32) -> (i32, i32, i32) {
    %c0_i32 = arith.constant 0 : i32
    %c0_i32_0 = arith.constant 0 : i32
    %c0_i32_1 = arith.constant 0 : i32
    %c0_i32_2 = arith.constant 0 : i32
    return %c0_i32, %c0_i32_0, %c0_i32_1 : i32, i32, i32
  }
  func.func @transform_2(%arg0: i32) -> (i32, i32) {
    %c0_i32 = arith.constant 0 : i32
    %c0_i32_0 = arith.constant 0 : i32
    %c0_i32_1 = arith.constant 0 : i32
    return %c0_i32, %c0_i32_0 : i32, i32
  }
  func.func @transform_3(%arg0: i32) -> (i32, i32, i32) {
    %c0_i32 = arith.constant 0 : i32
    %c0_i32_0 = arith.constant 0 : i32
    %c0_i32_1 = arith.constant 0 : i32
    %c0_i32_2 = arith.constant 0 : i32
    return %c0_i32, %c0_i32_0, %c0_i32_1 : i32, i32, i32
  }
  func.func @transform_4(%arg0: i32) -> (i32, i32) {
    %c0_i32 = arith.constant 0 : i32
    %c0_i32_0 = arith.constant 0 : i32
    %c0_i32_1 = arith.constant 0 : i32
    return %c0_i32, %c0_i32_0 : i32, i32
  }
  func.func @transform_5(%arg0: i32) -> (i32, i32) {
    %c0_i32 = arith.constant 0 : i32
    %c0_i32_0 = arith.constant 0 : i32
    %c0_i32_1 = arith.constant 0 : i32
    return %c0_i32, %c0_i32_0 : i32, i32
  }
  func.func @transform_6(%arg0: i32) -> (i32, i32) {
    %c0_i32 = arith.constant 0 : i32
    %c0_i32_0 = arith.constant 0 : i32
    %c0_i32_1 = arith.constant 0 : i32
    return %c0_i32, %c0_i32_0 : i32, i32
  }
  func.func @transform_7(%arg0: i32) -> (i32, i32, i32, i32) {
    %c0_i32 = arith.constant 0 : i32
    %c0_i32_0 = arith.constant 0 : i32
    %c0_i32_1 = arith.constant 0 : i32
    %c0_i32_2 = arith.constant 0 : i32
    return %arg0, %c0_i32, %c0_i32_0, %c0_i32_1 : i32, i32, i32, i32
  }
}

</mosaic_0001>

<llo_original>
// kernel: tpu_custom_call.1
$region0: #{tpu_custom_call.1}
  #allocation0 [shape = 'u32[]', space=smem, size = 0x4, offset = 0x4, fixed_abs, tag = 'smem constant byte address 0x4 - core index']
  #allocation1 [shape = 'u32[144,128]{1,0:T(1,128)}', space=vmem, size = 0x12000, scoped, tag = 'internal scratch']
  #allocation2 [shape = 'f32[1,18,18,4]{3,2,1,0:T(8,128)}', space=vmem, size = 0x36000, scoped, tag = 'scratch operand']
  #allocation3 [shape = 'f32[1,18,18,4]{3,2,1,0:T(8,128)}', space=vmem, size = 0x36000, scoped, tag = 'scratch operand']
  #allocation4 [shape = 'f32[8,16,8]{2,1,0:T(8,128)}', space=vmem, size = 0x10000, scoped, tag = 'scratch operand']
  %s0 = inlined_call_operand.vmem [shape: f32[2,16,16,4], index: 0, kind: input, shape index: {}]
  %s1 = inlined_call_operand.vmem [shape: f32[9,4,4], index: 1, kind: input, shape index: {}]
  %s2 = inlined_call_operand.vmem [shape: f32[1,4], index: 2, kind: input, shape index: {}]
  %s3 = inlined_call_operand.vmem [shape: f32[9,4,8], index: 3, kind: input, shape index: {}]
  %s4 = inlined_call_operand.vmem [shape: f32[1,8], index: 4, kind: input, shape index: {}]
  %s5 = inlined_call_operand.vmem [shape: f32[4,8], index: 5, kind: input, shape index: {}]
  %s6 = inlined_call_operand.vmem [shape: f32[1,8], index: 6, kind: input, shape index: {}]
  %s7 = inlined_call_operand.hbm [shape: f32[2,8,8,8], index: 7, kind: output, shape index: {}]
  %s8 = sld [smem:[#allocation0]]
  $region61: #{tpu_custom_call.1} parent=0
    _
  %s10 = ssub.s32 1, %s8
  %s11 = scalar_select 0, %s10, %s8
  $region1: #{tpu_custom_call.1} parent=0
    #allocation5 [shape = 'u8[65536]{0}', space=vmem, size = 0x10000, scoped, tag = 'output window, operand 0']
    #allocation6 [shape = 's32[2]{0}', space=sflag, size = 0x8, scoped, tag = 'scoped memory for tpu_custom_call.1']
    %12 = vsyncpa [#allocation6], 0
    %s13 = scalar_lea.sflag [#allocation6], 1
    %14 = vsyncpa %s13, 0
    loop: start=0, step=1, limit=4
    $region2: #{tpu_custom_call.1} parent=1 // loop_pre_header
      _
    $region3: #{tpu_custom_call.1} parent=1 // loop_header
      %s16 = sphi 0, %s20
      %p17 = scmp.ge.s32.totalorder %s16, 4
      %s26 = sphi 0, %s28
      %s29 = sphi 0, %s26
      %s30 = sphi 0, %s29
      %s46 = sphi 0, %s30
      %s50 = sphi 0, %s50
      %s52 = sphi 0, %s50
      %s53 = sphi 0, %s52
      %s67 = sphi 0, %s53
      %s71 = sphi 0, %s71
      %s73 = sphi 0, %s71
      %s74 = sphi 0, %s73
      %s88 = sphi 0, %s74
      %s92 = sphi 0, %s92
      %s94 = sphi 0, %s92
      %s95 = sphi 0, %s94
      %s109 = sphi 0, %s95
      %s113 = sphi 0, %s113
      %s115 = sphi 0, %s113
      %s116 = sphi 0, %s115
      %s130 = sphi 0, %s116
      %s134 = sphi 0, %s134
      %s136 = sphi 0, %s134
      %s137 = sphi 0, %s136
      %s151 = sphi 0, %s137
      %s155 = sphi 0, %s155
      %s157 = sphi 0, %s155
      %s158 = sphi 0, %s157
      %s172 = sphi 0, %s158
      %s178 = sphi 0, %s180
      %s181 = sphi 0, %s178
      %s182 = sphi 0, %s181
      %s198 = sphi 0, %s182
    $region4: #{tpu_custom_call.1} parent=1 // loop_header_branch
      %19 = sbr.rel (%p17) target = $region8
    $region5: #{tpu_custom_call.1} parent=1 // loop_body
      %s21 = ssub.s32 %s16, 1
      %s22 = ssub.s32 %s16, 2
      %s23 = sadd.s32 %s16, 1
      %s24 = ssub.s32 %s16, %s23
      %p25 = scmp.eq.s32.totalorder %s24, 0
      %s27 = sadd.s32 %s26, 1
      %s28 = scalar_select %p25, %s26, %s27
      %p31 = pneg %p25
      %p32 = scmp.eq.s32.totalorder %s16, 1
      %p33 = por %p31, %p32
      %p34 = scmp.ne.s32.totalorder %s26, %s29
      %p35 = scmp.eq.s32.totalorder %s16, 0
      %p36 = por %p34, %p35
      %p37 = scmp.ne.s32.totalorder %s26, %s29
      %p38 = scmp.eq.s32.totalorder %s21, 1
      %p39 = por %p37, %p38
      %p40 = scmp.ne.s32.totalorder %s29, %s30
      %p41 = scmp.eq.s32.totalorder %s21, 0
      %p42 = por %p40, %p41
      %p43 = scmp.ne.s32.totalorder %s29, %s30
      %p44 = scmp.eq.s32.totalorder %s22, 1
      %p45 = por %p43, %p44
      %p47 = scmp.ne.s32.totalorder %s30, %s46
      %p48 = scmp.eq.s32.totalorder %s22, 0
      %p49 = por %p47, %p48
      %s51 = sadd.s32 %s50, 1
      %p54 = scmp.eq.s32.totalorder %s16, 1
      %p55 = scmp.ne.s32.totalorder %s50, %s52
      %p56 = scmp.eq.s32.totalorder %s16, 0
      %p57 = por %p55, %p56
      %p58 = scmp.ne.s32.totalorder %s50, %s52
      %p59 = scmp.eq.s32.totalorder %s21, 1
      %p60 = por %p58, %p59
      %p61 = scmp.ne.s32.totalorder %s52, %s53
      %p62 = scmp.eq.s32.totalorder %s21, 0
      %p63 = por %p61, %p62
      %p64 = scmp.ne.s32.totalorder %s52, %s53
      %p65 = scmp.eq.s32.totalorder %s22, 1
      %p66 = por %p64, %p65
      %p68 = scmp.ne.s32.totalorder %s53, %s67
      %p69 = scmp.eq.s32.totalorder %s22, 0
      %p70 = por %p68, %p69
      %s72 = sadd.s32 %s71, 1
      %p75 = scmp.eq.s32.totalorder %s16, 1
      %p76 = scmp.ne.s32.totalorder %s71, %s73
      %p77 = scmp.eq.s32.totalorder %s16, 0
      %p78 = por %p76, %p77
      %p79 = scmp.ne.s32.totalorder %s71, %s73
      %p80 = scmp.eq.s32.totalorder %s21, 1
      %p81 = por %p79, %p80
      %p82 = scmp.ne.s32.totalorder %s73, %s74
      %p83 = scmp.eq.s32.totalorder %s21, 0
      %p84 = por %p82, %p83
      %p85 = scmp.ne.s32.totalorder %s73, %s74
      %p86 = scmp.eq.s32.totalorder %s22, 1
      %p87 = por %p85, %p86
      %p89 = scmp.ne.s32.totalorder %s74, %s88
      %p90 = scmp.eq.s32.totalorder %s22, 0
      %p91 = por %p89, %p90
      %s93 = sadd.s32 %s92, 1
      %p96 = scmp.eq.s32.totalorder %s16, 1
      %p97 = scmp.ne.s32.totalorder %s92, %s94
      %p98 = scmp.eq.s32.totalorder %s16, 0
      %p99 = por %p97, %p98
      %p100 = scmp.ne.s32.totalorder %s92, %s94
      %p101 = scmp.eq.s32.totalorder %s21, 1
      %p102 = por %p100, %p101
      %p103 = scmp.ne.s32.totalorder %s94, %s95
      %p104 = scmp.eq.s32.totalorder %s21, 0
      %p105 = por %p103, %p104
      %p106 = scmp.ne.s32.totalorder %s94, %s95
      %p107 = scmp.eq.s32.totalorder %s22, 1
      %p108 = por %p106, %p107
      %p110 = scmp.ne.s32.totalorder %s95, %s109
      %p111 = scmp.eq.s32.totalorder %s22, 0
      %p112 = por %p110, %p111
      %s114 = sadd.s32 %s113, 1
      %p117 = scmp.eq.s32.totalorder %s16, 1
      %p118 = scmp.ne.s32.totalorder %s113, %s115
      %p119 = scmp.eq.s32.totalorder %s16, 0
      %p120 = por %p118, %p119
      %p121 = scmp.ne.s32.totalorder %s113, %s115
      %p122 = scmp.eq.s32.totalorder %s21, 1
      %p123 = por %p121, %p122
      %p124 = scmp.ne.s32.totalorder %s115, %s116
      %p125 = scmp.eq.s32.totalorder %s21, 0
      %p126 = por %p124, %p125
      %p127 = scmp.ne.s32.totalorder %s115, %s116
      %p128 = scmp.eq.s32.totalorder %s22, 1
      %p129 = por %p127, %p128
      %p131 = scmp.ne.s32.totalorder %s116, %s130
      %p132 = scmp.eq.s32.totalorder %s22, 0
      %p133 = por %p131, %p132
      %s135 = sadd.s32 %s134, 1
      %p138 = scmp.eq.s32.totalorder %s16, 1
      %p139 = scmp.ne.s32.totalorder %s134, %s136
      %p140 = scmp.eq.s32.totalorder %s16, 0
      %p141 = por %p139, %p140
      %p142 = scmp.ne.s32.totalorder %s134, %s136
      %p143 = scmp.eq.s32.totalorder %s21, 1
      %p144 = por %p142, %p143
      %p145 = scmp.ne.s32.totalorder %s136, %s137
      %p146 = scmp.eq.s32.totalorder %s21, 0
      %p147 = por %p145, %p146
      %p148 = scmp.ne.s32.totalorder %s136, %s137
      %p149 = scmp.eq.s32.totalorder %s22, 1
      %p150 = por %p148, %p149
      %p152 = scmp.ne.s32.totalorder %s137, %s151
      %p153 = scmp.eq.s32.totalorder %s22, 0
      %p154 = por %p152, %p153
      %s156 = sadd.s32 %s155, 1
      %p159 = scmp.eq.s32.totalorder %s16, 1
      %p160 = scmp.ne.s32.totalorder %s155, %s157
      %p161 = scmp.eq.s32.totalorder %s16, 0
      %p162 = por %p160, %p161
      %p163 = scmp.ne.s32.totalorder %s155, %s157
      %p164 = scmp.eq.s32.totalorder %s21, 1
      %p165 = por %p163, %p164
      %p166 = scmp.ne.s32.totalorder %s157, %s158
      %p167 = scmp.eq.s32.totalorder %s21, 0
      %p168 = por %p166, %p167
      %p169 = scmp.ne.s32.totalorder %s157, %s158
      %p170 = scmp.eq.s32.totalorder %s22, 1
      %p171 = por %p169, %p170
      %p173 = scmp.ne.s32.totalorder %s158, %s172
      %p174 = scmp.eq.s32.totalorder %s22, 0
      %p175 = por %p173, %p174
      %s176 = ssub.s32 %s16, %s23
      %p177 = scmp.eq.s32.totalorder %s176, 0
      %s179 = sadd.s32 %s178, 1
      %s180 = scalar_select %p177, %s178, %s179
      %p183 = pneg %p177
      %p184 = scmp.eq.s32.totalorder %s16, 1
      %p185 = por %p183, %p184
      %p186 = scmp.ne.s32.totalorder %s178, %s181
      %p187 = scmp.eq.s32.totalorder %s16, 0
      %p188 = por %p186, %p187
      %p189 = scmp.ne.s32.totalorder %s178, %s181
      %p190 = scmp.eq.s32.totalorder %s21, 1
      %p191 = por %p189, %p190
      %p192 = scmp.ne.s32.totalorder %s181, %s182
      %p193 = scmp.eq.s32.totalorder %s21, 0
      %p194 = por %p192, %p193
      %p195 = scmp.ne.s32.totalorder %s181, %s182
      %p196 = scmp.eq.s32.totalorder %s22, 1
      %p197 = por %p195, %p196
      %p199 = scmp.ne.s32.totalorder %s182, %s198
      %p200 = scmp.eq.s32.totalorder %s22, 0
      %p201 = por %p199, %p200
      %p202 = scmp.le.s32.totalorder 1, %s16
      %p203 = scmp.lt.s32.totalorder %s16, 3
      %p204 = pnand %p202, %p203
      %p205 = pneg %p204
      // Predicated region
      $region9: #{tpu_custom_call.1} parent=5 // pred_check
        _
      $region10: #{tpu_custom_call.1} parent=5 // pred_check_branch
        %207 = sbr.rel (%p204) target = $region12
      $region11: #{tpu_custom_call.1} parent=5 // pred_region
        %s208 = ssub.s32 %s16, 1
        // Predicated region
        $region13: #{tpu_custom_call.1} parent=11 // pred_check
          %p209 = pneg %p63
        $region14: #{tpu_custom_call.1} parent=11 // pred_check_branch
          %211 = sbr.rel (%p209) target = $region16
        $region15: #{tpu_custom_call.1} parent=11 // pred_region
          _
        $region16: #{tpu_custom_call.1} parent=11 // pred_fallthru
          _
        // Predicated region
        $region17: #{tpu_custom_call.1} parent=11 // pred_check
          %p212 = pneg %p84
        $region18: #{tpu_custom_call.1} parent=11 // pred_check_branch
          %214 = sbr.rel (%p212) target = $region20
        $region19: #{tpu_custom_call.1} parent=11 // pred_region
          _
        $region20: #{tpu_custom_call.1} parent=11 // pred_fallthru
          _
        // Predicated region
        $region21: #{tpu_custom_call.1} parent=11 // pred_check
          %p215 = pneg %p105
        $region22: #{tpu_custom_call.1} parent=11 // pred_check_branch
          %217 = sbr.rel (%p215) target = $region24
        $region23: #{tpu_custom_call.1} parent=11 // pred_region
          _
        $region24: #{tpu_custom_call.1} parent=11 // pred_fallthru
          _
        // Predicated region
        $region25: #{tpu_custom_call.1} parent=11 // pred_check
          %p218 = pneg %p126
        $region26: #{tpu_custom_call.1} parent=11 // pred_check_branch
          %220 = sbr.rel (%p218) target = $region28
        $region27: #{tpu_custom_call.1} parent=11 // pred_region
          _
        $region28: #{tpu_custom_call.1} parent=11 // pred_fallthru
          _
        // Predicated region
        $region29: #{tpu_custom_call.1} parent=11 // pred_check
          %p221 = pneg %p147
        $region30: #{tpu_custom_call.1} parent=11 // pred_check_branch
          %223 = sbr.rel (%p221) target = $region32
        $region31: #{tpu_custom_call.1} parent=11 // pred_region
          _
        $region32: #{tpu_custom_call.1} parent=11 // pred_fallthru
          _
        // Predicated region
        $region33: #{tpu_custom_call.1} parent=11 // pred_check
          %p224 = pneg %p168
        $region34: #{tpu_custom_call.1} parent=11 // pred_check_branch
          %226 = sbr.rel (%p224) target = $region36
        $region35: #{tpu_custom_call.1} parent=11 // pred_region
          _
        $region36: #{tpu_custom_call.1} parent=11 // pred_fallthru
          _
      $region12: #{tpu_custom_call.1} parent=5 // pred_fallthru
        _
      %p227 = scmp.lt.s32.totalorder %s16, 2
      // Predicated region
      $region37: #{tpu_custom_call.1} parent=5 // pred_check
        %p228 = pneg %p227
      $region38: #{tpu_custom_call.1} parent=5 // pred_check_branch
        %230 = sbr.rel (%p228) target = $region40
      $region39: #{tpu_custom_call.1} parent=5 // pred_region
        // Predicated region
        $region41: #{tpu_custom_call.1} parent=39 // pred_check
          %p231 = pneg %p36
        $region42: #{tpu_custom_call.1} parent=39 // pred_check_branch
          %233 = sbr.rel (%p231) target = $region44
        $region43: #{tpu_custom_call.1} parent=39 // pred_region
          %p234 = scmp.lt.s32.totalorder %s16, 1
          %s235 = scalar_select %p234, %s16, 1
          %s236 = smul.addr %s235, 32
          %s237 = smul.addr %s236, 8
          %s238 = scalar_lea.vmem %s0, %s237
        $region44: #{tpu_custom_call.1} parent=39 // pred_fallthru
          _
      $region40: #{tpu_custom_call.1} parent=5 // pred_fallthru
        _
      %p239 = scmp.le.s32.totalorder 1, %s16
      %p240 = scmp.lt.s32.totalorder %s16, 3
      %p241 = pnand %p239, %p240
      %p242 = pneg %p241
      // Predicated region
      $region45: #{tpu_custom_call.1} parent=5 // pred_check
        _
      $region46: #{tpu_custom_call.1} parent=5 // pred_check_branch
        %244 = sbr.rel (%p241) target = $region48
      $region47: #{tpu_custom_call.1} parent=5 // pred_region
        %s245 = ssub.s32 %s16, 1
        %p246 = scmp.lt.s32.totalorder %s21, 1
        %s247 = scalar_select %p246, %s21, 1
        %s248 = smul.addr %s247, 32
        %s249 = smul.addr %s248, 8
        %s250 = scalar_lea.vmem %s0, %s249
        %p251 = pneg %p42
        %p252 = pneg %p39
        %p253 = pneg %p63
        %p254 = pneg %p60
        %p255 = pneg %p84
        %p256 = pneg %p81
        %p257 = pneg %p105
        %p258 = pneg %p102
        %p259 = pneg %p126
        %p260 = pneg %p123
        %p261 = pneg %p147
        %p262 = pneg %p144
        %p263 = pneg %p168
        %p264 = pneg %p165
        %p265 = pneg %p194
        %p266 = pneg %p191
        %s267 = sand.u32 %s181, 1
        %s268 = scalar_lea.sflag [#allocation6], %s267
        %s269 = sand.u32 %s181, 1
        %s270 = smul.addr %s269, 64
        %s271 = scalar_lea.vmem [#allocation5], %s270
        %p272 = scmp.lt.s32.totalorder %s21, 1
        %s273 = scalar_select %p272, %s21, 1
        %s274 = smul.addr %s273, 32
        %s275 = smul.addr %s274, 8
        %s276 = scalar_lea.vmem %s0, %s275
        %vm277 = vcmask 31744
        %278 = vst.msk [vmem:[#allocation2] sm:$0xff] %vm277, 0.0
        %279 = vst.msk [vmem:[#allocation2 + $0x8] sm:$0xff] %vm277, 0.0
        %vm280 = vcmask 25600
        %281 = vst.msk [vmem:[#allocation2 + $0x10] sm:$0x3] %vm280, 0.0
        %s282 = scalar_lea.vmem [#allocation2], 408
        %283 = vst.msk [vmem:[%s282] sm:$0xff] %vm277, 0.0
        %284 = vst.msk [vmem:[%s282 + $0x8] sm:$0xff] %vm277, 0.0
        %285 = vst.msk [vmem:[%s282 + $0x10] sm:$0x3] %vm280, 0.0
        %vm286 = vcmask 24576
        %287 = vst.msk [vmem:[#allocation2] sm:$0x1] %vm286, 0.0
        %288 = vst.msk [vmem:[#allocation2 + $0x18] sm:$0x1] %vm286, 0.0
        %289 = vst.msk [vmem:[#allocation2 + $0x30] sm:$0x1] %vm286, 0.0
        %290 = vst.msk [vmem:[#allocation2 + $0x48] sm:$0x1] %vm286, 0.0
        %291 = vst.msk [vmem:[#allocation2 + $0x60] sm:$0x1] %vm286, 0.0
        %292 = vst.msk [vmem:[#allocation2 + $0x78] sm:$0x1] %vm286, 0.0
        %293 = vst.msk [vmem:[#allocation2 + $0x90] sm:$0x1] %vm286, 0.0
        %294 = vst.msk [vmem:[#allocation2 + $0xa8] sm:$0x1] %vm286, 0.0
        %295 = vst.msk [vmem:[#allocation2 + $0xc0] sm:$0x1] %vm286, 0.0
        %296 = vst.msk [vmem:[#allocation2 + $0xd8] sm:$0x1] %vm286, 0.0
        %297 = vst.msk [vmem:[#allocation2 + $0xf0] sm:$0x1] %vm286, 0.0
        %298 = vst.msk [vmem:[#allocation2 + $0x108] sm:$0x1] %vm286, 0.0
        %299 = vst.msk [vmem:[#allocation2 + $0x120] sm:$0x1] %vm286, 0.0
        %300 = vst.msk [vmem:[#allocation2 + $0x138] sm:$0x1] %vm286, 0.0
        %301 = vst.msk [vmem:[#allocation2 + $0x150] sm:$0x1] %vm286, 0.0
        %302 = vst.msk [vmem:[#allocation2 + $0x168] sm:$0x1] %vm286, 0.0
        %303 = vst.msk [vmem:[#allocation2 + $0x180] sm:$0x1] %vm286, 0.0
        %304 = vst.msk [vmem:[#allocation2 + $0x198] sm:$0x1] %vm286, 0.0
        %305 = vst.msk [vmem:[#allocation2 + $0x11] sm:$0x1] %vm286, 0.0
        %306 = vst.msk [vmem:[#allocation2 + $0x29] sm:$0x1] %vm286, 0.0
        %307 = vst.msk [vmem:[#allocation2 + $0x41] sm:$0x1] %vm286, 0.0
        %308 = vst.msk [vmem:[#allocation2 + $0x59] sm:$0x1] %vm286, 0.0
        %309 = vst.msk [vmem:[#allocation2 + $0x71] sm:$0x1] %vm286, 0.0
        %310 = vst.msk [vmem:[#allocation2 + $0x89] sm:$0x1] %vm286, 0.0
        %311 = vst.msk [vmem:[#allocation2 + $0xa1] sm:$0x1] %vm286, 0.0
        %312 = vst.msk [vmem:[#allocation2 + $0xb9] sm:$0x1] %vm286, 0.0
        %313 = vst.msk [vmem:[#allocation2 + $0xd1] sm:$0x1] %vm286, 0.0
        %314 = vst.msk [vmem:[#allocation2 + $0xe9] sm:$0x1] %vm286, 0.0
        %315 = vst.msk [vmem:[#allocation2 + $0x101] sm:$0x1] %vm286, 0.0
        %316 = vst.msk [vmem:[#allocation2 + $0x119] sm:$0x1] %vm286, 0.0
        %317 = vst.msk [vmem:[#allocation2 + $0x131] sm:$0x1] %vm286, 0.0
        %318 = vst.msk [vmem:[#allocation2 + $0x149] sm:$0x1] %vm286, 0.0
        %319 = vst.msk [vmem:[#allocation2 + $0x161] sm:$0x1] %vm286, 0.0
        %320 = vst.msk [vmem:[#allocation2 + $0x179] sm:$0x1] %vm286, 0.0
        %321 = vst.msk [vmem:[#allocation2 + $0x191] sm:$0x1] %vm286, 0.0
        %322 = vst.msk [vmem:[#allocation2 + $0x1a9] sm:$0x1] %vm286, 0.0
        %v323 = vld [vmem:[%s276] sm:$0xff]
        %v324 = vld [vmem:[%s276 + $0x8] sm:$0xff]
        %v325 = vld [vmem:[%s276 + $0x10] sm:$0xff]
        %v326 = vld [vmem:[%s276 + $0x18] sm:$0xff]
        %v327 = vld [vmem:[%s276 + $0x20] sm:$0xff]
        %v328 = vld [vmem:[%s276 + $0x28] sm:$0xff]
        %v329 = vld [vmem:[%s276 + $0x30] sm:$0xff]
        %v330 = vld [vmem:[%s276 + $0x38] sm:$0xff]
        %v331 = vld [vmem:[%s276 + $0x40] sm:$0xff]
        %v332 = vld [vmem:[%s276 + $0x48] sm:$0xff]
        %v333 = vld [vmem:[%s276 + $0x50] sm:$0xff]
        %v334 = vld [vmem:[%s276 + $0x58] sm:$0xff]
        %v335 = vld [vmem:[%s276 + $0x60] sm:$0xff]
        %v336 = vld [vmem:[%s276 + $0x68] sm:$0xff]
        %v337 = vld [vmem:[%s276 + $0x70] sm:$0xff]
        %v338 = vld [vmem:[%s276 + $0x78] sm:$0xff]
        %v339 = vld [vmem:[%s276 + $0x80] sm:$0xff]
        %v340 = vld [vmem:[%s276 + $0x88] sm:$0xff]
        %v341 = vld [vmem:[%s276 + $0x90] sm:$0xff]
        %v342 = vld [vmem:[%s276 + $0x98] sm:$0xff]
        %v343 = vld [vmem:[%s276 + $0xa0] sm:$0xff]
        %v344 = vld [vmem:[%s276 + $0xa8] sm:$0xff]
        %v345 = vld [vmem:[%s276 + $0xb0] sm:$0xff]
        %v346 = vld [vmem:[%s276 + $0xb8] sm:$0xff]
        %v347 = vld [vmem:[%s276 + $0xc0] sm:$0xff]
        %v348 = vld [vmem:[%s276 + $0xc8] sm:$0xff]
        %v349 = vld [vmem:[%s276 + $0xd0] sm:$0xff]
        %v350 = vld [vmem:[%s276 + $0xd8] sm:$0xff]
        %v351 = vld [vmem:[%s276 + $0xe0] sm:$0xff]
        %v352 = vld [vmem:[%s276 + $0xe8] sm:$0xff]
        %v353 = vld [vmem:[%s276 + $0xf0] sm:$0xff]
        %v354 = vld [vmem:[%s276 + $0xf8] sm:$0xff]
        %s355 = scalar_lea.vmem [#allocation2], 24
        %356 = vst.msk [vmem:[%s355 + $0x1] sm:$0xff] %vm277, %v323
        %357 = vst.msk [vmem:[%s355 + $0x9] sm:$0xff] %vm277, %v324
        %358 = vst.msk [vmem:[%s355 + $0x19] sm:$0xff] %vm277, %v325
        %359 = vst.msk [vmem:[%s355 + $0x21] sm:$0xff] %vm277, %v326
        %360 = vst.msk [vmem:[%s355 + $0x31] sm:$0xff] %vm277, %v327
        %361 = vst.msk [vmem:[%s355 + $0x39] sm:$0xff] %vm277, %v328
        %362 = vst.msk [vmem:[%s355 + $0x49] sm:$0xff] %vm277, %v329
        %363 = vst.msk [vmem:[%s355 + $0x51] sm:$0xff] %vm277, %v330
        %364 = vst.msk [vmem:[%s355 + $0x61] sm:$0xff] %vm277, %v331
        %365 = vst.msk [vmem:[%s355 + $0x69] sm:$0xff] %vm277, %v332
        %366 = vst.msk [vmem:[%s355 + $0x79] sm:$0xff] %vm277, %v333
        %367 = vst.msk [vmem:[%s355 + $0x81] sm:$0xff] %vm277, %v334
        %368 = vst.msk [vmem:[%s355 + $0x91] sm:$0xff] %vm277, %v335
        %369 = vst.msk [vmem:[%s355 + $0x99] sm:$0xff] %vm277, %v336
        %370 = vst.msk [vmem:[%s355 + $0xa9] sm:$0xff] %vm277, %v337
        %371 = vst.msk [vmem:[%s355 + $0xb1] sm:$0xff] %vm277, %v338
        %372 = vst.msk [vmem:[%s355 + $0xc1] sm:$0xff] %vm277, %v339
        %373 = vst.msk [vmem:[%s355 + $0xc9] sm:$0xff] %vm277, %v340
        %374 = vst.msk [vmem:[%s355 + $0xd9] sm:$0xff] %vm277, %v341
        %375 = vst.msk [vmem:[%s355 + $0xe1] sm:$0xff] %vm277, %v342
        %376 = vst.msk [vmem:[%s355 + $0xf1] sm:$0xff] %vm277, %v343
        %377 = vst.msk [vmem:[%s355 + $0xf9] sm:$0xff] %vm277, %v344
        %378 = vst.msk [vmem:[%s355 + $0x109] sm:$0xff] %vm277, %v345
        %379 = vst.msk [vmem:[%s355 + $0x111] sm:$0xff] %vm277, %v346
        %380 = vst.msk [vmem:[%s355 + $0x121] sm:$0xff] %vm277, %v347
        %381 = vst.msk [vmem:[%s355 + $0x129] sm:$0xff] %vm277, %v348
        %382 = vst.msk [vmem:[%s355 + $0x139] sm:$0xff] %vm277, %v349
        %383 = vst.msk [vmem:[%s355 + $0x141] sm:$0xff] %vm277, %v350
        %384 = vst.msk [vmem:[%s355 + $0x151] sm:$0xff] %vm277, %v351
        %385 = vst.msk [vmem:[%s355 + $0x159] sm:$0xff] %vm277, %v352
        %386 = vst.msk [vmem:[%s355 + $0x169] sm:$0xff] %vm277, %v353
        %387 = vst.msk [vmem:[%s355 + $0x171] sm:$0xff] %vm277, %v354
        %v388 = vld [vmem:[#allocation2] sm:$0xff]
        %v389 = vld [vmem:[#allocation2 + $0x8] sm:$0xff]
        %v390 = vld [vmem:[#allocation2 + $0x18] sm:$0xff]
        %v391 = vld [vmem:[#allocation2 + $0x20] sm:$0xff]
        %v392 = vld [vmem:[#allocation2 + $0x30] sm:$0xff]
        %v393 = vld [vmem:[#allocation2 + $0x38] sm:$0xff]
        %v394 = vld [vmem:[#allocation2 + $0x48] sm:$0xff]
        %v395 = vld [vmem:[#allocation2 + $0x50] sm:$0xff]
        %v396 = vld [vmem:[#allocation2 + $0x60] sm:$0xff]
        %v397 = vld [vmem:[#allocation2 + $0x68] sm:$0xff]
        %v398 = vld [vmem:[#allocation2 + $0x78] sm:$0xff]
        %v399 = vld [vmem:[#allocation2 + $0x80] sm:$0xff]
        %v400 = vld [vmem:[#allocation2 + $0x90] sm:$0xff]
        %v401 = vld [vmem:[#allocation2 + $0x98] sm:$0xff]
        %v402 = vld [vmem:[#allocation2 + $0xa8] sm:$0xff]
        %v403 = vld [vmem:[#allocation2 + $0xb0] sm:$0xff]
        %v404 = vld [vmem:[#allocation2 + $0xc0] sm:$0xff]
        %v405 = vld [vmem:[#allocation2 + $0xc8] sm:$0xff]
        %v406 = vld [vmem:[#allocation2 + $0xd8] sm:$0xff]
        %v407 = vld [vmem:[#allocation2 + $0xe0] sm:$0xff]
        %v408 = vld [vmem:[#allocation2 + $0xf0] sm:$0xff]
        %v409 = vld [vmem:[#allocation2 + $0xf8] sm:$0xff]
        %v410 = vld [vmem:[#allocation2 + $0x108] sm:$0xff]
        %v411 = vld [vmem:[#allocation2 + $0x110] sm:$0xff]
        %v412 = vld [vmem:[#allocation2 + $0x120] sm:$0xff]
        %v413 = vld [vmem:[#allocation2 + $0x128] sm:$0xff]
        %v414 = vld [vmem:[#allocation2 + $0x138] sm:$0xff]
        %v415 = vld [vmem:[#allocation2 + $0x140] sm:$0xff]
        %v416 = vld [vmem:[#allocation2 + $0x150] sm:$0xff]
        %v417 = vld [vmem:[#allocation2 + $0x158] sm:$0xff]
        %v418 = vld [vmem:[#allocation2 + $0x168] sm:$0xff]
        %v419 = vld [vmem:[#allocation2 + $0x170] sm:$0xff]
        %v420 = vld [vmem:[%s1] sm:$0xf]
        %v421 = vld [vmem:[#allocation2 + $0x1] sm:$0xff]
        %v422 = vld [vmem:[#allocation2 + $0x9] sm:$0xff]
        %v423 = vld [vmem:[#allocation2 + $0x19] sm:$0xff]
        %v424 = vld [vmem:[#allocation2 + $0x21] sm:$0xff]
        %v425 = vld [vmem:[#allocation2 + $0x31] sm:$0xff]
        %v426 = vld [vmem:[#allocation2 + $0x39] sm:$0xff]
        %v427 = vld [vmem:[#allocation2 + $0x49] sm:$0xff]
        %v428 = vld [vmem:[#allocation2 + $0x51] sm:$0xff]
        %v429 = vld [vmem:[#allocation2 + $0x61] sm:$0xff]
        %v430 = vld [vmem:[#allocation2 + $0x69] sm:$0xff]
        %v431 = vld [vmem:[#allocation2 + $0x79] sm:$0xff]
        %v432 = vld [vmem:[#allocation2 + $0x81] sm:$0xff]
        %v433 = vld [vmem:[#allocation2 + $0x91] sm:$0xff]
        %v434 = vld [vmem:[#allocation2 + $0x99] sm:$0xff]
        %v435 = vld [vmem:[#allocation2 + $0xa9] sm:$0xff]
        %v436 = vld [vmem:[#allocation2 + $0xb1] sm:$0xff]
        %v437 = vld [vmem:[#allocation2 + $0xc1] sm:$0xff]
        %v438 = vld [vmem:[#allocation2 + $0xc9] sm:$0xff]
        %v439 = vld [vmem:[#allocation2 + $0xd9] sm:$0xff]
        %v440 = vld [vmem:[#allocation2 + $0xe1] sm:$0xff]
        %v441 = vld [vmem:[#allocation2 + $0xf1] sm:$0xff]
        %v442 = vld [vmem:[#allocation2 + $0xf9] sm:$0xff]
        %v443 = vld [vmem:[#allocation2 + $0x109] sm:$0xff]
        %v444 = vld [vmem:[#allocation2 + $0x111] sm:$0xff]
        %v445 = vld [vmem:[#allocation2 + $0x121] sm:$0xff]
        %v446 = vld [vmem:[#allocation2 + $0x129] sm:$0xff]
        %v447 = vld [vmem:[#allocation2 + $0x139] sm:$0xff]
        %v448 = vld [vmem:[#allocation2 + $0x141] sm:$0xff]
        %v449 = vld [vmem:[#allocation2 + $0x151] sm:$0xff]
        %v450 = vld [vmem:[#allocation2 + $0x159] sm:$0xff]
        %v451 = vld [vmem:[#allocation2 + $0x169] sm:$0xff]
        %v452 = vld [vmem:[#allocation2 + $0x171] sm:$0xff]
        %s453 = scalar_lea.vmem %s1, 4
        %v454 = vld [vmem:[%s453] sm:$0xf]
        %v456 = vsel %vm277, %v421, 0
        %v459 = vsel %vm277, %v422, 0
        %v462 = vsel %vm277, %v423, 0
        %v465 = vsel %vm277, %v424, 0
        %v468 = vsel %vm277, %v425, 0
        %v471 = vsel %vm277, %v426, 0
        %v474 = vsel %vm277, %v427, 0
        %v477 = vsel %vm277, %v428, 0
        %v480 = vsel %vm277, %v429, 0
        %v483 = vsel %vm277, %v430, 0
        %v486 = vsel %vm277, %v431, 0
        %v489 = vsel %vm277, %v432, 0
        %v492 = vsel %vm277, %v433, 0
        %v495 = vsel %vm277, %v434, 0
        %v498 = vsel %vm277, %v435, 0
        %v501 = vsel %vm277, %v436, 0
        %v504 = vsel %vm277, %v437, 0
        %v507 = vsel %vm277, %v438, 0
        %v510 = vsel %vm277, %v439, 0
        %v513 = vsel %vm277, %v440, 0
        %v516 = vsel %vm277, %v441, 0
        %v519 = vsel %vm277, %v442, 0
        %v522 = vsel %vm277, %v443, 0
        %v525 = vsel %vm277, %v444, 0
        %v528 = vsel %vm277, %v445, 0
        %v531 = vsel %vm277, %v446, 0
        %v534 = vsel %vm277, %v447, 0
        %v537 = vsel %vm277, %v448, 0
        %v540 = vsel %vm277, %v449, 0
        %v543 = vsel %vm277, %v450, 0
        %v546 = vsel %vm277, %v451, 0
        %v549 = vsel %vm277, %v452, 0
        %vm551 = vcmask 1043456
        %v553 = vsel %vm551, %v454, 0
        %555 = vmatprep.subr.mxu0 0.0
        %556 = vmatpush1.msra.mxu0 %v553
        %557 = vmatprep.subr.mxu0 0.0
        %558 = vmatpush1.msra.mxu0 0.0
        %559 = vmatprep.subr.mxu0 0.0
        %560 = vmatpush1.msra.mxu0 0.0
        %561 = vmatprep.subr.mxu0 0.0
        %562 = vmatpush1.msra.mxu0 0.0
        %563 = vmatprep.subr.mxu0 0.0
        %564 = vmatpush1.msra.mxu0 0.0
        %565 = vmatprep.subr.mxu0 0.0
        %566 = vmatpush1.msra.mxu0 0.0
        %567 = vmatprep.subr.mxu0 0.0
        %568 = vmatpush1.msra.mxu0 0.0
        %569 = vmatprep.subr.mxu0 0.0
        %570 = vmatpush1.msra.mxu0 0.0
        %571 = vmatprep.subr.mxu0 0.0
        %572 = vmatpush1.msra.mxu0 0.0
        %573 = vmatprep.subr.mxu0 0.0
        %574 = vmatpush1.msra.mxu0 0.0
        %575 = vmatprep.subr.mxu0 0.0
        %576 = vmatpush1.msra.mxu0 0.0
        %577 = vmatprep.subr.mxu0 0.0
        %578 = vmatpush1.msra.mxu0 0.0
        %579 = vmatprep.subr.mxu0 0.0
        %580 = vmatpush1.msra.mxu0 0.0
        %581 = vmatprep.subr.mxu0 0.0
        %582 = vmatpush1.msra.mxu0 0.0
        %583 = vmatprep.subr.mxu0 0.0
        %584 = vmatpush1.msra.mxu0 0.0
        %585 = vmatprep.subr.mxu0 0.0
        %586 = vmatpush1.msra.mxu0 0.0
        %587 = vmatprep.subr.mxu0 0.0
        %588 = vmatpush1.msra.mxu0 0.0
        %589 = vmatprep.subr.mxu0 0.0
        %590 = vmatpush1.msra.mxu0 0.0
        %591 = vmatprep.subr.mxu0 0.0
        %592 = vmatpush1.msra.mxu0 0.0
        %593 = vmatprep.subr.mxu0 0.0
        %594 = vmatpush1.msra.mxu0 0.0
        %595 = vmatprep.subr.mxu0 0.0
        %596 = vmatpush1.msra.mxu0 0.0
        %597 = vmatprep.subr.mxu0 0.0
        %598 = vmatpush1.msra.mxu0 0.0
        %599 = vmatprep.subr.mxu0 0.0
        %600 = vmatpush1.msra.mxu0 0.0
        %601 = vmatprep.subr.mxu0 0.0
        %602 = vmatpush1.msra.mxu0 0.0
        %603 = vmatprep.subr.mxu0 0.0
        %604 = vmatpush1.msra.mxu0 0.0
        %605 = vmatprep.subr.mxu0 0.0
        %606 = vmatpush1.msra.mxu0 0.0
        %607 = vmatprep.subr.mxu0 0.0
        %608 = vmatpush1.msra.mxu0 0.0
        %609 = vmatprep.subr.mxu0 0.0
        %610 = vmatpush1.msra.mxu0 0.0
        %611 = vmatprep.subr.mxu0 0.0
        %612 = vmatpush1.msra.mxu0 0.0
        %613 = vmatprep.subr.mxu0 0.0
        %614 = vmatpush1.msra.mxu0 0.0
        %615 = vmatprep.subr.mxu0 0.0
        %616 = vmatpush1.msra.mxu0 0.0
        %617 = vmatprep.subr.mxu0 0.0
        %618 = vmatpush1.msra.mxu0 0.0
        %619 = vmatprep.mubr.f32.mxu0 0.0
        %620 = vmatmul.mubr.f32.gmra.mrb[0].mxu0 %v456
        %v621 = vpop.f32.mrb[0].mxu0
        %v622 = vadd.f32 0.0, %v621
        %v623 = vpop.f32.mrb[0].mxu0
        %624 = vmatprep.mubr.f32.mxu0 0.0
        %625 = vmatmul.mubr.f32.gmra.mrb[0].mxu0 %v459
        %v626 = vpop.f32.mrb[0].mxu0
        %v627 = vadd.f32 0.0, %v626
        %v628 = vpop.f32.mrb[0].mxu0
        %629 = vmatprep.mubr.f32.mxu0 0.0
        %630 = vmatmul.mubr.f32.gmra.mrb[0].mxu0 %v462
        %v631 = vpop.f32.mrb[0].mxu0
        %v632 = vadd.f32 0.0, %v631
        %v633 = vpop.f32.mrb[0].mxu0
        %634 = vmatprep.mubr.f32.mxu0 0.0
        %635 = vmatmul.mubr.f32.gmra.mrb[0].mxu0 %v465
        %v636 = vpop.f32.mrb[0].mxu0
        %v637 = vadd.f32 0.0, %v636
        %v638 = vpop.f32.mrb[0].mxu0
        %639 = vmatprep.mubr.f32.mxu0 0.0
        %640 = vmatmul.mubr.f32.gmra.mrb[0].mxu0 %v468
        %v641 = vpop.f32.mrb[0].mxu0
        %v642 = vadd.f32 0.0, %v641
        %v643 = vpop.f32.mrb[0].mxu0
        %644 = vmatprep.mubr.f32.mxu0 0.0
        %645 = vmatmul.mubr.f32.gmra.mrb[0].mxu0 %v471
        %v646 = vpop.f32.mrb[0].mxu0
        %v647 = vadd.f32 0.0, %v646
        %v648 = vpop.f32.mrb[0].mxu0
        %649 = vmatprep.mubr.f32.mxu0 0.0
        %650 = vmatmul.mubr.f32.gmra.mrb[0].mxu0 %v474
        %v651 = vpop.f32.mrb[0].mxu0
        %v652 = vadd.f32 0.0, %v651
        %v653 = vpop.f32.mrb[0].mxu0
        %654 = vmatprep.mubr.f32.mxu0 0.0
        %655 = vmatmul.mubr.f32.gmra.mrb[0].mxu0 %v477
        %v656 = vpop.f32.mrb[0].mxu0
        %v657 = vadd.f32 0.0, %v656
        %v658 = vpop.f32.mrb[0].mxu0
        %659 = vmatprep.mubr.f32.mxu0 0.0
        %660 = vmatmul.mubr.f32.gmra.mrb[0].mxu0 %v480
        %v661 = vpop.f32.mrb[0].mxu0
        %v662 = vadd.f32 0.0, %v661
        %v663 = vpop.f32.mrb[0].mxu0
        %664 = vmatprep.mubr.f32.mxu0 0.0
        %665 = vmatmul.mubr.f32.gmra.mrb[0].mxu0 %v483
        %v666 = vpop.f32.mrb[0].mxu0
        %v667 = vadd.f32 0.0, %v666
        %v668 = vpop.f32.mrb[0].mxu0
        %669 = vmatprep.mubr.f32.mxu0 0.0
        %670 = vmatmul.mubr.f32.gmra.mrb[0].mxu0 %v486
        %v671 = vpop.f32.mrb[0].mxu0
        %v672 = vadd.f32 0.0, %v671
        %v673 = vpop.f32.mrb[0].mxu0
        %674 = vmatprep.mubr.f32.mxu0 0.0
        %675 = vmatmul.mubr.f32.gmra.mrb[0].mxu0 %v489
        %v676 = vpop.f32.mrb[0].mxu0
        %v677 = vadd.f32 0.0, %v676
        %v678 = vpop.f32.mrb[0].mxu0
        %679 = vmatprep.mubr.f32.mxu0 0.0
        %680 = vmatmul.mubr.f32.gmra.mrb[0].mxu0 %v492
        %v681 = vpop.f32.mrb[0].mxu0
        %v682 = vadd.f32 0.0, %v681
        %v683 = vpop.f32.mrb[0].mxu0
        %684 = vmatprep.mubr.f32.mxu0 0.0
        %685 = vmatmul.mubr.f32.gmra.mrb[0].mxu0 %v495
        %v686 = vpop.f32.mrb[0].mxu0
        %v687 = vadd.f32 0.0, %v686
        %v688 = vpop.f32.mrb[0].mxu0
        %689 = vmatprep.mubr.f32.mxu0 0.0
        %690 = vmatmul.mubr.f32.gmra.mrb[0].mxu0 %v498
        %v691 = vpop.f32.mrb[0].mxu0
        %v692 = vadd.f32 0.0, %v691
        %v693 = vpop.f32.mrb[0].mxu0
        %694 = vmatprep.mubr.f32.mxu0 0.0
        %695 = vmatmul.mubr.f32.gmra.mrb[0].mxu0 %v501
        %v696 = vpop.f32.mrb[0].mxu0
        %v697 = vadd.f32 0.0, %v696
        %v698 = vpop.f32.mrb[0].mxu0
        %699 = vmatprep.mubr.f32.mxu0 0.0
        %700 = vmatmul.mubr.f32.gmra.mrb[0].mxu0 %v504
        %v701 = vpop.f32.mrb[0].mxu0
        %v702 = vadd.f32 0.0, %v701
        %v703 = vpop.f32.mrb[0].mxu0
        %704 = vmatprep.mubr.f32.mxu0 0.0
        %705 = vmatmul.mubr.f32.gmra.mrb[0].mxu0 %v507
        %v706 = vpop.f32.mrb[0].mxu0
        %v707 = vadd.f32 0.0, %v706
        %v708 = vpop.f32.mrb[0].mxu0
        %709 = vmatprep.mubr.f32.mxu0 0.0
        %710 = vmatmul.mubr.f32.gmra.mrb[0].mxu0 %v510
        %v711 = vpop.f32.mrb[0].mxu0
        %v712 = vadd.f32 0.0, %v711
        %v713 = vpop.f32.mrb[0].mxu0
        %714 = vmatprep.mubr.f32.mxu0 0.0
        %715 = vmatmul.mubr.f32.gmra.mrb[0].mxu0 %v513
        %v716 = vpop.f32.mrb[0].mxu0
        %v717 = vadd.f32 0.0, %v716
        %v718 = vpop.f32.mrb[0].mxu0
        %719 = vmatprep.mubr.f32.mxu0 0.0
        %720 = vmatmul.mubr.f32.gmra.mrb[0].mxu0 %v516
        %v721 = vpop.f32.mrb[0].mxu0
        %v722 = vadd.f32 0.0, %v721
        %v723 = vpop.f32.mrb[0].mxu0
        %724 = vmatprep.mubr.f32.mxu0 0.0
        %725 = vmatmul.mubr.f32.gmra.mrb[0].mxu0 %v519
        %v726 = vpop.f32.mrb[0].mxu0
        %v727 = vadd.f32 0.0, %v726
        %v728 = vpop.f32.mrb[0].mxu0
        %729 = vmatprep.mubr.f32.mxu0 0.0
        %730 = vmatmul.mubr.f32.gmra.mrb[0].mxu0 %v522
        %v731 = vpop.f32.mrb[0].mxu0
        %v732 = vadd.f32 0.0, %v731
        %v733 = vpop.f32.mrb[0].mxu0
        %734 = vmatprep.mubr.f32.mxu0 0.0
        %735 = vmatmul.mubr.f32.gmra.mrb[0].mxu0 %v525
        %v736 = vpop.f32.mrb[0].mxu0
        %v737 = vadd.f32 0.0, %v736
        %v738 = vpop.f32.mrb[0].mxu0
        %739 = vmatprep.mubr.f32.mxu0 0.0
        %740 = vmatmul.mubr.f32.gmra.mrb[0].mxu0 %v528
        %v741 = vpop.f32.mrb[0].mxu0
        %v742 = vadd.f32 0.0, %v741
        %v743 = vpop.f32.mrb[0].mxu0
        %744 = vmatprep.mubr.f32.mxu0 0.0
        %745 = vmatmul.mubr.f32.gmra.mrb[0].mxu0 %v531
        %v746 = vpop.f32.mrb[0].mxu0
        %v747 = vadd.f32 0.0, %v746
        %v748 = vpop.f32.mrb[0].mxu0
        %749 = vmatprep.mubr.f32.mxu0 0.0
        %750 = vmatmul.mubr.f32.gmra.mrb[0].mxu0 %v534
        %v751 = vpop.f32.mrb[0].mxu0
        %v752 = vadd.f32 0.0, %v751
        %v753 = vpop.f32.mrb[0].mxu0
        %754 = vmatprep.mubr.f32.mxu0 0.0
        %755 = vmatmul.mubr.f32.gmra.mrb[0].mxu0 %v537
        %v756 = vpop.f32.mrb[0].mxu0
        %v757 = vadd.f32 0.0, %v756
        %v758 = vpop.f32.mrb[0].mxu0
        %759 = vmatprep.mubr.f32.mxu0 0.0
        %760 = vmatmul.mubr.f32.gmra.mrb[0].mxu0 %v540
        %v761 = vpop.f32.mrb[0].mxu0
        %v762 = vadd.f32 0.0, %v761
        %v763 = vpop.f32.mrb[0].mxu0
        %764 = vmatprep.mubr.f32.mxu0 0.0
        %765 = vmatmul.mubr.f32.gmra.mrb[0].mxu0 %v543
        %v766 = vpop.f32.mrb[0].mxu0
        %v767 = vadd.f32 0.0, %v766
        %v768 = vpop.f32.mrb[0].mxu0
        %769 = vmatprep.mubr.f32.mxu0 0.0
        %770 = vmatmul.mubr.f32.gmra.mrb[0].mxu0 %v546
        %v771 = vpop.f32.mrb[0].mxu0
        %v772 = vadd.f32 0.0, %v771
        %v773 = vpop.f32.mrb[0].mxu0
        %774 = vmatprep.mubr.f32.mxu0 0.0
        %775 = vmatmul.mubr.f32.gmra.mrb[0].mxu0 %v549
        %v776 = vpop.f32.mrb[0].mxu0
        %v777 = vadd.f32 0.0, %v776
        %v778 = vpop.f32.mrb[0].mxu0
        %779 = vdwg.mxu0
        %v781 = vsel %vm277, %v388, 0
        %v784 = vsel %vm277, %v389, 0
        %v787 = vsel %vm277, %v390, 0
        %v790 = vsel %vm277, %v391, 0
        %v793 = vsel %vm277, %v392, 0
        %v796 = vsel %vm277, %v393, 0
        %v799 = vsel %vm277, %v394, 0
        %v802 = vsel %vm277, %v395, 0
        %v805 = vsel %vm277, %v396, 0
        %v808 = vsel %vm277, %v397, 0
        %v811 = vsel %vm277, %v398, 0
        %v814 = vsel %vm277, %v399, 0
        %v817 = vsel %vm277, %v400, 0
        %v820 = vsel %vm277, %v401, 0
        %v823 = vsel %vm277, %v402, 0
        %v826 = vsel %vm277, %v403, 0
        %v829 = vsel %vm277, %v404, 0
        %v832 = vsel %vm277, %v405, 0
        %v835 = vsel %vm277, %v406, 0
        %v838 = vsel %vm277, %v407, 0
        %v841 = vsel %vm277, %v408, 0
        %v844 = vsel %vm277, %v409, 0
        %v847 = vsel %vm277, %v410, 0
        %v850 = vsel %vm277, %v411, 0
        %v853 = vsel %vm277, %v412, 0
        %v856 = vsel %vm277, %v413, 0
        %v859 = vsel %vm277, %v414, 0
        %v862 = vsel %vm277, %v415, 0
        %v865 = vsel %vm277, %v416, 0
        %v868 = vsel %vm277, %v417, 0
        %v871 = vsel %vm277, %v418, 0
        %v874 = vsel %vm277, %v419, 0
        %v877 = vsel %vm551, %v420, 0
        %879 = vmatprep.subr.mxu0 0.0
        %880 = vmatpush1.msra.mxu0 %v877
        %881 = vmatprep.subr.mxu0 0.0
        %882 = vmatpush1.msra.mxu0 0.0
        %883 = vmatprep.subr.mxu0 0.0
        %884 = vmatpush1.msra.mxu0 0.0
        %885 = vmatprep.subr.mxu0 0.0
        %886 = vmatpush1.msra.mxu0 0.0
        %887 = vmatprep.subr.mxu0 0.0
        %888 = vmatpush1.msra.mxu0 0.0
        %889 = vmatprep.subr.mxu0 0.0
        %890 = vmatpush1.msra.mxu0 0.0
        %891 = vmatprep.subr.mxu0 0.0
        %892 = vmatpush1.msra.mxu0 0.0
        %893 = vmatprep.subr.mxu0 0.0
        %894 = vmatpush1.msra.mxu0 0.0
        %895 = vmatprep.subr.mxu0 0.0
        %896 = vmatpush1.msra.mxu0 0.0
        %897 = vmatprep.subr.mxu0 0.0
        %898 = vmatpush1.msra.mxu0 0.0
        %899 = vmatprep.subr.mxu0 0.0
        %900 = vmatpush1.msra.mxu0 0.0
        %901 = vmatprep.subr.mxu0 0.0
        %902 = vmatpush1.msra.mxu0 0.0
        %903 = vmatprep.subr.mxu0 0.0
        %904 = vmatpush1.msra.mxu0 0.0
        %905 = vmatprep.subr.mxu0 0.0
        %906 = vmatpush1.msra.mxu0 0.0
        %907 = vmatprep.subr.mxu0 0.0
        %908 = vmatpush1.msra.mxu0 0.0
        %909 = vmatprep.subr.mxu0 0.0
        %910 = vmatpush1.msra.mxu0 0.0
        %911 = vmatprep.subr.mxu0 0.0
        %912 = vmatpush1.msra.mxu0 0.0
        %913 = vmatprep.subr.mxu0 0.0
        %914 = vmatpush1.msra.mxu0 0.0
        %915 = vmatprep.subr.mxu0 0.0
        %916 = vmatpush1.msra.mxu0 0.0
        %917 = vmatprep.subr.mxu0 0.0
        %918 = vmatpush1.msra.mxu0 0.0
        %919 = vmatprep.subr.mxu0 0.0
        %920 = vmatpush1.msra.mxu0 0.0
        %921 = vmatprep.subr.mxu0 0.0
        %922 = vmatpush1.msra.mxu0 0.0
        %923 = vmatprep.subr.mxu0 0.0
        %924 = vmatpush1.msra.mxu0 0.0
        %925 = vmatprep.subr.mxu0 0.0
        %926 = vmatpush1.msra.mxu0 0.0
        %927 = vmatprep.subr.mxu0 0.0
        %928 = vmatpush1.msra.mxu0 0.0
        %929 = vmatprep.subr.mxu0 0.0
        %930 = vmatpush1.msra.mxu0 0.0
        %931 = vmatprep.subr.mxu0 0.0
        %932 = vmatpush1.msra.mxu0 0.0
        %933 = vmatprep.subr.mxu0 0.0
        %934 = vmatpush1.msra.mxu0 0.0
        %935 = vmatprep.subr.mxu0 0.0
        %936 = vmatpush1.msra.mxu0 0.0
        %937 = vmatprep.subr.mxu0 0.0
        %938 = vmatpush1.msra.mxu0 0.0
        %939 = vmatprep.subr.mxu0 0.0
        %940 = vmatpush1.msra.mxu0 0.0
        %941 = vmatprep.subr.mxu0 0.0
        %942 = vmatpush1.msra.mxu0 0.0
        %943 = vmatprep.mubr.f32.mxu0 0.0
        %944 = vmatmul.mubr.f32.gmra.mrb[0].mxu0 %v781
        %v945 = vpop.f32.mrb[0].mxu0
        %v946 = vadd.f32 %v622, %v945
        %v947 = vpop.f32.mrb[0].mxu0
        %948 = vmatprep.mubr.f32.mxu0 0.0
        %949 = vmatmul.mubr.f32.gmra.mrb[0].mxu0 %v784
        %v950 = vpop.f32.mrb[0].mxu0
        %v951 = vadd.f32 %v627, %v950
        %v952 = vpop.f32.mrb[0].mxu0
        %953 = vmatprep.mubr.f32.mxu0 0.0
        %954 = vmatmul.mubr.f32.gmra.mrb[0].mxu0 %v787
        %v955 = vpop.f32.mrb[0].mxu0
        %v956 = vadd.f32 %v632, %v955
        %v957 = vpop.f32.mrb[0].mxu0
        %958 = vmatprep.mubr.f32.mxu0 0.0
        %959 = vmatmul.mubr.f32.gmra.mrb[0].mxu0 %v790
        %v960 = vpop.f32.mrb[0].mxu0
        %v961 = vadd.f32 %v637, %v960
        %v962 = vpop.f32.mrb[0].mxu0
        %963 = vmatprep.mubr.f32.mxu0 0.0
        %964 = vmatmul.mubr.f32.gmra.mrb[0].mxu0 %v793
        %v965 = vpop.f32.mrb[0].mxu0
        %v966 = vadd.f32 %v642, %v965
        %v967 = vpop.f32.mrb[0].mxu0
        %968 = vmatprep.mubr.f32.mxu0 0.0
        %969 = vmatmul.mubr.f32.gmra.mrb[0].mxu0 %v796
        %v970 = vpop.f32.mrb[0].mxu0
        %v971 = vadd.f32 %v647, %v970
        %v972 = vpop.f32.mrb[0].mxu0
        %973 = vmatprep.mubr.f32.mxu0 0.0
        %974 = vmatmul.mubr.f32.gmra.mrb[0].mxu0 %v799
        %v975 = vpop.f32.mrb[0].mxu0
        %v976 = vadd.f32 %v652, %v975
        %v977 = vpop.f32.mrb[0].mxu0
        %978 = vmatprep.mubr.f32.mxu0 0.0
        %979 = vmatmul.mubr.f32.gmra.mrb[0].mxu0 %v802
        %v980 = vpop.f32.mrb[0].mxu0
        %v981 = vadd.f32 %v657, %v980
        %v982 = vpop.f32.mrb[0].mxu0
        %983 = vmatprep.mubr.f32.mxu0 0.0
        %984 = vmatmul.mubr.f32.gmra.mrb[0].mxu0 %v805
        %v985 = vpop.f32.mrb[0].mxu0
        %v986 = vadd.f32 %v662, %v985
        %v987 = vpop.f32.mrb[0].mxu0
        %988 = vmatprep.mubr.f32.mxu0 0.0
        %989 = vmatmul.mubr.f32.gmra.mrb[0].mxu0 %v808
        %v990 = vpop.f32.mrb[0].mxu0
        %v991 = vadd.f32 %v667, %v990
        %v992 = vpop.f32.mrb[0].mxu0
        %993 = vmatprep.mubr.f32.mxu0 0.0
        %994 = vmatmul.mubr.f32.gmra.mrb[0].mxu0 %v811
        %v995 = vpop.f32.mrb[0].mxu0
        %v996 = vadd.f32 %v672, %v995
        %v997 = vpop.f32.mrb[0].mxu0
        %998 = vmatprep.mubr.f32.mxu0 0.0
        %999 = vmatmul.mubr.f32.gmra.mrb[0].mxu0 %v814
        %v1000 = vpop.f32.mrb[0].mxu0
        %v1001 = vadd.f32 %v677, %v1000
        %v1002 = vpop.f32.mrb[0].mxu0
        %1003 = vmatprep.mubr.f32.mxu0 0.0
        %1004 = vmatmul.mubr.f32.gmra.mrb[0].mxu0 %v817
        %v1005 = vpop.f32.mrb[0].mxu0
        %v1006 = vadd.f32 %v682, %v1005
        %v1007 = vpop.f32.mrb[0].mxu0
        %1008 = vmatprep.mubr.f32.mxu0 0.0
        %1009 = vmatmul.mubr.f32.gmra.mrb[0].mxu0 %v820
        %v1010 = vpop.f32.mrb[0].mxu0
        %v1011 = vadd.f32 %v687, %v1010
        %v1012 = vpop.f32.mrb[0].mxu0
        %1013 = vmatprep.mubr.f32.mxu0 0.0
        %1014 = vmatmul.mubr.f32.gmra.mrb[0].mxu0 %v823
        %v1015 = vpop.f32.mrb[0].mxu0
        %v1016 = vadd.f32 %v692, %v1015
        %v1017 = vpop.f32.mrb[0].mxu0
        %1018 = vmatprep.mubr.f32.mxu0 0.0
        %1019 = vmatmul.mubr.f32.gmra.mrb[0].mxu0 %v826
        %v1020 = vpop.f32.mrb[0].mxu0
        %v1021 = vadd.f32 %v697, %v1020
        %v1022 = vpop.f32.mrb[0].mxu0
        %1023 = vmatprep.mubr.f32.mxu0 0.0
        %1024 = vmatmul.mubr.f32.gmra.mrb[0].mxu0 %v829
        %v1025 = vpop.f32.mrb[0].mxu0
        %v1026 = vadd.f32 %v702, %v1025
        %v1027 = vpop.f32.mrb[0].mxu0
        %1028 = vmatprep.mubr.f32.mxu0 0.0
        %1029 = vmatmul.mubr.f32.gmra.mrb[0].mxu0 %v832
        %v1030 = vpop.f32.mrb[0].mxu0
        %v1031 = vadd.f32 %v707, %v1030
        %v1032 = vpop.f32.mrb[0].mxu0
        %1033 = vmatprep.mubr.f32.mxu0 0.0
        %1034 = vmatmul.mubr.f32.gmra.mrb[0].mxu0 %v835
        %v1035 = vpop.f32.mrb[0].mxu0
        %v1036 = vadd.f32 %v712, %v1035
        %v1037 = vpop.f32.mrb[0].mxu0
        %1038 = vmatprep.mubr.f32.mxu0 0.0
        %1039 = vmatmul.mubr.f32.gmra.mrb[0].mxu0 %v838
        %v1040 = vpop.f32.mrb[0].mxu0
        %v1041 = vadd.f32 %v717, %v1040
        %v1042 = vpop.f32.mrb[0].mxu0
        %1043 = vmatprep.mubr.f32.mxu0 0.0
        %1044 = vmatmul.mubr.f32.gmra.mrb[0].mxu0 %v841
        %v1045 = vpop.f32.mrb[0].mxu0
        %v1046 = vadd.f32 %v722, %v1045
        %v1047 = vpop.f32.mrb[0].mxu0
        %1048 = vmatprep.mubr.f32.mxu0 0.0
        %1049 = vmatmul.mubr.f32.gmra.mrb[0].mxu0 %v844
        %v1050 = vpop.f32.mrb[0].mxu0
        %v1051 = vadd.f32 %v727, %v1050
        %v1052 = vpop.f32.mrb[0].mxu0
        %1053 = vmatprep.mubr.f32.mxu0 0.0
        %1054 = vmatmul.mubr.f32.gmra.mrb[0].mxu0 %v847
        %v1055 = vpop.f32.mrb[0].mxu0
        %v1056 = vadd.f32 %v732, %v1055
        %v1057 = vpop.f32.mrb[0].mxu0
        %1058 = vmatprep.mubr.f32.mxu0 0.0
        %1059 = vmatmul.mubr.f32.gmra.mrb[0].mxu0 %v850
        %v1060 = vpop.f32.mrb[0].mxu0
        %v1061 = vadd.f32 %v737, %v1060
        %v1062 = vpop.f32.mrb[0].mxu0
        %1063 = vmatprep.mubr.f32.mxu0 0.0
        %1064 = vmatmul.mubr.f32.gmra.mrb[0].mxu0 %v853
        %v1065 = vpop.f32.mrb[0].mxu0
        %v1066 = vadd.f32 %v742, %v1065
        %v1067 = vpop.f32.mrb[0].mxu0
        %1068 = vmatprep.mubr.f32.mxu0 0.0
        %1069 = vmatmul.mubr.f32.gmra.mrb[0].mxu0 %v856
        %v1070 = vpop.f32.mrb[0].mxu0
        %v1071 = vadd.f32 %v747, %v1070
        %v1072 = vpop.f32.mrb[0].mxu0
        %1073 = vmatprep.mubr.f32.mxu0 0.0
        %1074 = vmatmul.mubr.f32.gmra.mrb[0].mxu0 %v859
        %v1075 = vpop.f32.mrb[0].mxu0
        %v1076 = vadd.f32 %v752, %v1075
        %v1077 = vpop.f32.mrb[0].mxu0
        %1078 = vmatprep.mubr.f32.mxu0 0.0
        %1079 = vmatmul.mubr.f32.gmra.mrb[0].mxu0 %v862
        %v1080 = vpop.f32.mrb[0].mxu0
        %v1081 = vadd.f32 %v757, %v1080
        %v1082 = vpop.f32.mrb[0].mxu0
        %1083 = vmatprep.mubr.f32.mxu0 0.0
        %1084 = vmatmul.mubr.f32.gmra.mrb[0].mxu0 %v865
        %v1085 = vpop.f32.mrb[0].mxu0
        %v1086 = vadd.f32 %v762, %v1085
        %v1087 = vpop.f32.mrb[0].mxu0
        %1088 = vmatprep.mubr.f32.mxu0 0.0
        %1089 = vmatmul.mubr.f32.gmra.mrb[0].mxu0 %v868
        %v1090 = vpop.f32.mrb[0].mxu0
        %v1091 = vadd.f32 %v767, %v1090
        %v1092 = vpop.f32.mrb[0].mxu0
        %1093 = vmatprep.mubr.f32.mxu0 0.0
        %1094 = vmatmul.mubr.f32.gmra.mrb[0].mxu0 %v871
        %v1095 = vpop.f32.mrb[0].mxu0
        %v1096 = vadd.f32 %v772, %v1095
        %v1097 = vpop.f32.mrb[0].mxu0
        %1098 = vmatprep.mubr.f32.mxu0 0.0
        %1099 = vmatmul.mubr.f32.gmra.mrb[0].mxu0 %v874
        %v1100 = vpop.f32.mrb[0].mxu0
        %v1101 = vadd.f32 %v777, %v1100
        %v1102 = vpop.f32.mrb[0].mxu0
        %1103 = vdwg.mxu0
        %v1104 = vld [vmem:[#allocation2 + $0x2] sm:$0xff]
        %v1105 = vld [vmem:[#allocation2 + $0xa] sm:$0xff]
        %v1106 = vld [vmem:[#allocation2 + $0x1a] sm:$0xff]
        %v1107 = vld [vmem:[#allocation2 + $0x22] sm:$0xff]
        %v1108 = vld [vmem:[#allocation2 + $0x32] sm:$0xff]
        %v1109 = vld [vmem:[#allocation2 + $0x3a] sm:$0xff]
        %v1110 = vld [vmem:[#allocation2 + $0x4a] sm:$0xff]
        %v1111 = vld [vmem:[#allocation2 + $0x52] sm:$0xff]
        %v1112 = vld [vmem:[#allocation2 + $0x62] sm:$0xff]
        %v1113 = vld [vmem:[#allocation2 + $0x6a] sm:$0xff]
        %v1114 = vld [vmem:[#allocation2 + $0x7a] sm:$0xff]
        %v1115 = vld [vmem:[#allocation2 + $0x82] sm:$0xff]
        %v1116 = vld [vmem:[#allocation2 + $0x92] sm:$0xff]
        %v1117 = vld [vmem:[#allocation2 + $0x9a] sm:$0xff]
        %v1118 = vld [vmem:[#allocation2 + $0xaa] sm:$0xff]
        %v1119 = vld [vmem:[#allocation2 + $0xb2] sm:$0xff]
        %v1120 = vld [vmem:[#allocation2 + $0xc2] sm:$0xff]
        %v1121 = vld [vmem:[#allocation2 + $0xca] sm:$0xff]
        %v1122 = vld [vmem:[#allocation2 + $0xda] sm:$0xff]
        %v1123 = vld [vmem:[#allocation2 + $0xe2] sm:$0xff]
        %v1124 = vld [vmem:[#allocation2 + $0xf2] sm:$0xff]
        %v1125 = vld [vmem:[#allocation2 + $0xfa] sm:$0xff]
        %v1126 = vld [vmem:[#allocation2 + $0x10a] sm:$0xff]
        %v1127 = vld [vmem:[#allocation2 + $0x112] sm:$0xff]
        %v1128 = vld [vmem:[#allocation2 + $0x122] sm:$0xff]
        %v1129 = vld [vmem:[#allocation2 + $0x12a] sm:$0xff]
        %v1130 = vld [vmem:[#allocation2 + $0x13a] sm:$0xff]
        %v1131 = vld [vmem:[#allocation2 + $0x142] sm:$0xff]
        %v1132 = vld [vmem:[#allocation2 + $0x152] sm:$0xff]
        %v1133 = vld [vmem:[#allocation2 + $0x15a] sm:$0xff]
        %v1134 = vld [vmem:[#allocation2 + $0x16a] sm:$0xff]
        %v1135 = vld [vmem:[#allocation2 + $0x172] sm:$0xff]
        %s1136 = scalar_lea.vmem %s1, 8
        %v1137 = vld [vmem:[%s1136] sm:$0xf]
        %v1139 = vsel %vm277, %v1104, 0
        %v1142 = vsel %vm277, %v1105, 0
        %v1145 = vsel %vm277, %v1106, 0
        %v1148 = vsel %vm277, %v1107, 0
        %v1151 = vsel %vm277, %v1108, 0
        %v1154 = vsel %vm277, %v1109, 0
        %v1157 = vsel %vm277, %v1110, 0
        %v1160 = vsel %vm277, %v1111, 0
        %v1163 = vsel %vm277, %v1112, 0
        %v1166 = vsel %vm277, %v1113, 0
        %v1169 = vsel %vm277, %v1114, 0
        %v1172 = vsel %vm277, %v1115, 0
        %v1175 = vsel %vm277, %v1116, 0
        %v1178 = vsel %vm277, %v1117, 0
        %v1181 = vsel %vm277, %v1118, 0
        %v1184 = vsel %vm277, %v1119, 0
        %v1187 = vsel %vm277, %v1120, 0
        %v1190 = vsel %vm277, %v1121, 0
        %v1193 = vsel %vm277, %v1122, 0
        %v1196 = vsel %vm277, %v1123, 0
        %v1199 = vsel %vm277, %v1124, 0
        %v1202 = vsel %vm277, %v1125, 0
        %v1205 = vsel %vm277, %v1126, 0
        %v1208 = vsel %vm277, %v1127, 0
        %v1211 = vsel %vm277, %v1128, 0
        %v1214 = vsel %vm277, %v1129, 0
        %v1217 = vsel %vm277, %v1130, 0
        %v1220 = vsel %vm277, %v1131, 0
        %v1223 = vsel %vm277, %v1132, 0
        %v1226 = vsel %vm277, %v1133, 0
        %v1229 = vsel %vm277, %v1134, 0
        %v1232 = vsel %vm277, %v1135, 0
        %v1235 = vsel %vm551, %v1137, 0
        %1237 = vmatprep.subr.mxu0 0.0
        %1238 = vmatpush1.msra.mxu0 %v1235
        %1239 = vmatprep.subr.mxu0 0.0
        %1240 = vmatpush1.msra.mxu0 0.0
        %1241 = vmatprep.subr.mxu0 0.0
        %1242 = vmatpush1.msra.mxu0 0.0
        %1243 = vmatprep.subr.mxu0 0.0
        %1244 = vmatpush1.msra.mxu0 0.0
        %1245 = vmatprep.subr.mxu0 0.0
        %1246 = vmatpush1.msra.mxu0 0.0
        %1247 = vmatprep.subr.mxu0 0.0
        %1248 = vmatpush1.msra.mxu0 0.0
        %1249 = vmatprep.subr.mxu0 0.0
        %1250 = vmatpush1.msra.mxu0 0.0
        %1251 = vmatprep.subr.mxu0 0.0
        %1252 = vmatpush1.msra.mxu0 0.0
        %1253 = vmatprep.subr.mxu0 0.0
        %1254 = vmatpush1.msra.mxu0 0.0
        %1255 = vmatprep.subr.mxu0 0.0
        %1256 = vmatpush1.msra.mxu0 0.0
        %1257 = vmatprep.subr.mxu0 0.0
        %1258 = vmatpush1.msra.mxu0 0.0
        %1259 = vmatprep.subr.mxu0 0.0
        %1260 = vmatpush1.msra.mxu0 0.0
        %1261 = vmatprep.subr.mxu0 0.0
        %1262 = vmatpush1.msra.mxu0 0.0
        %1263 = vmatprep.subr.mxu0 0.0
        %1264 = vmatpush1.msra.mxu0 0.0
        %1265 = vmatprep.subr.mxu0 0.0
        %1266 = vmatpush1.msra.mxu0 0.0
        %1267 = vmatprep.subr.mxu0 0.0
        %1268 = vmatpush1.msra.mxu0 0.0
        %1269 = vmatprep.subr.mxu0 0.0
        %1270 = vmatpush1.msra.mxu0 0.0
        %1271 = vmatprep.subr.mxu0 0.0
        %1272 = vmatpush1.msra.mxu0 0.0
        %1273 = vmatprep.subr.mxu0 0.0
        %1274 = vmatpush1.msra.mxu0 0.0
        %1275 = vmatprep.subr.mxu0 0.0
        %1276 = vmatpush1.msra.mxu0 0.0
        %1277 = vmatprep.subr.mxu0 0.0
        %1278 = vmatpush1.msra.mxu0 0.0
        %1279 = vmatprep.subr.mxu0 0.0
        %1280 = vmatpush1.msra.mxu0 0.0
        %1281 = vmatprep.subr.mxu0 0.0
        %1282 = vmatpush1.msra.mxu0 0.0
        %1283 = vmatprep.subr.mxu0 0.0
        %1284 = vmatpush1.msra.mxu0 0.0
        %1285 = vmatprep.subr.mxu0 0.0
        %1286 = vmatpush1.msra.mxu0 0.0
        %1287 = vmatprep.subr.mxu0 0.0
        %1288 = vmatpush1.msra.mxu0 0.0
        %1289 = vmatprep.subr.mxu0 0.0
        %1290 = vmatpush1.msra.mxu0 0.0
        %1291 = vmatprep.subr.mxu0 0.0
        %1292 = vmatpush1.msra.mxu0 0.0
        %1293 = vmatprep.subr.mxu0 0.0
        %1294 = vmatpush1.msra.mxu0 0.0
        %1295 = vmatprep.subr.mxu0 0.0
        %1296 = vmatpush1.msra.mxu0 0.0
        %1297 = vmatprep.subr.mxu0 0.0
        %1298 = vmatpush1.msra.mxu0 0.0
        %1299 = vmatprep.subr.mxu0 0.0
        %1300 = vmatpush1.msra.mxu0 0.0
        %1301 = vmatprep.mubr.f32.mxu0 0.0
        %1302 = vmatmul.mubr.f32.gmra.mrb[0].mxu0 %v1139
        %v1303 = vpop.f32.mrb[0].mxu0
        %v1304 = vadd.f32 0.0, %v1303
        %v1305 = vpop.f32.mrb[0].mxu0
        %1306 = vmatprep.mubr.f32.mxu0 0.0
        %1307 = vmatmul.mubr.f32.gmra.mrb[0].mxu0 %v1142
        %v1308 = vpop.f32.mrb[0].mxu0
        %v1309 = vadd.f32 0.0, %v1308
        %v1310 = vpop.f32.mrb[0].mxu0
        %1311 = vmatprep.mubr.f32.mxu0 0.0
        %1312 = vmatmul.mubr.f32.gmra.mrb[0].mxu0 %v1145
        %v1313 = vpop.f32.mrb[0].mxu0
        %v1314 = vadd.f32 0.0, %v1313
        %v1315 = vpop.f32.mrb[0].mxu0
        %1316 = vmatprep.mubr.f32.mxu0 0.0
        %1317 = vmatmul.mubr.f32.gmra.mrb[0].mxu0 %v1148
        %v1318 = vpop.f32.mrb[0].mxu0
        %v1319 = vadd.f32 0.0, %v1318
        %v1320 = vpop.f32.mrb[0].mxu0
        %1321 = vmatprep.mubr.f32.mxu0 0.0
        %1322 = vmatmul.mubr.f32.gmra.mrb[0].mxu0 %v1151
        %v1323 = vpop.f32.mrb[0].mxu0
        %v1324 = vadd.f32 0.0, %v1323
        %v1325 = vpop.f32.mrb[0].mxu0
        %1326 = vmatprep.mubr.f32.mxu0 0.0
        %1327 = vmatmul.mubr.f32.gmra.mrb[0].mxu0 %v1154
        %v1328 = vpop.f32.mrb[0].mxu0
        %v1329 = vadd.f32 0.0, %v1328
        %v1330 = vpop.f32.mrb[0].mxu0
        %1331 = vmatprep.mubr.f32.mxu0 0.0
        %1332 = vmatmul.mubr.f32.gmra.mrb[0].mxu0 %v1157
        %v1333 = vpop.f32.mrb[0].mxu0
        %v1334 = vadd.f32 0.0, %v1333
        %v1335 = vpop.f32.mrb[0].mxu0
        %1336 = vmatprep.mubr.f32.mxu0 0.0
        %1337 = vmatmul.mubr.f32.gmra.mrb[0].mxu0 %v1160
        %v1338 = vpop.f32.mrb[0].mxu0
        %v1339 = vadd.f32 0.0, %v1338
        %v1340 = vpop.f32.mrb[0].mxu0
        %1341 = vmatprep.mubr.f32.mxu0 0.0
        %1342 = vmatmul.mubr.f32.gmra.mrb[0].mxu0 %v1163
        %v1343 = vpop.f32.mrb[0].mxu0
        %v1344 = vadd.f32 0.0, %v1343
        %v1345 = vpop.f32.mrb[0].mxu0
        %1346 = vmatprep.mubr.f32.mxu0 0.0
        %1347 = vmatmul.mubr.f32.gmra.mrb[0].mxu0 %v1166
        %v1348 = vpop.f32.mrb[0].mxu0
        %v1349 = vadd.f32 0.0, %v1348
        %v1350 = vpop.f32.mrb[0].mxu0
        %1351 = vmatprep.mubr.f32.mxu0 0.0
        %1352 = vmatmul.mubr.f32.gmra.mrb[0].mxu0 %v1169
        %v1353 = vpop.f32.mrb[0].mxu0
        %v1354 = vadd.f32 0.0, %v1353
        %v1355 = vpop.f32.mrb[0].mxu0
        %1356 = vmatprep.mubr.f32.mxu0 0.0
        %1357 = vmatmul.mubr.f32.gmra.mrb[0].mxu0 %v1172
        %v1358 = vpop.f32.mrb[0].mxu0
        %v1359 = vadd.f32 0.0, %v1358
        %v1360 = vpop.f32.mrb[0].mxu0
        %1361 = vmatprep.mubr.f32.mxu0 0.0
        %1362 = vmatmul.mubr.f32.gmra.mrb[0].mxu0 %v1175
        %v1363 = vpop.f32.mrb[0].mxu0
        %v1364 = vadd.f32 0.0, %v1363
        %v1365 = vpop.f32.mrb[0].mxu0
        %1366 = vmatprep.mubr.f32.mxu0 0.0
        %1367 = vmatmul.mubr.f32.gmra.mrb[0].mxu0 %v1178
        %v1368 = vpop.f32.mrb[0].mxu0
        %v1369 = vadd.f32 0.0, %v1368
        %v1370 = vpop.f32.mrb[0].mxu0
        %1371 = vmatprep.mubr.f32.mxu0 0.0
        %1372 = vmatmul.mubr.f32.gmra.mrb[0].mxu0 %v1181
        %v1373 = vpop.f32.mrb[0].mxu0
        %v1374 = vadd.f32 0.0, %v1373
        %v1375 = vpop.f32.mrb[0].mxu0
        %1376 = vmatprep.mubr.f32.mxu0 0.0
        %1377 = vmatmul.mubr.f32.gmra.mrb[0].mxu0 %v1184
        %v1378 = vpop.f32.mrb[0].mxu0
        %v1379 = vadd.f32 0.0, %v1378
        %v1380 = vpop.f32.mrb[0].mxu0
        %1381 = vmatprep.mubr.f32.mxu0 0.0
        %1382 = vmatmul.mubr.f32.gmra.mrb[0].mxu0 %v1187
        %v1383 = vpop.f32.mrb[0].mxu0
        %v1384 = vadd.f32 0.0, %v1383
        %v1385 = vpop.f32.mrb[0].mxu0
        %1386 = vmatprep.mubr.f32.mxu0 0.0
        %1387 = vmatmul.mubr.f32.gmra.mrb[0].mxu0 %v1190
        %v1388 = vpop.f32.mrb[0].mxu0
        %v1389 = vadd.f32 0.0, %v1388
        %v1390 = vpop.f32.mrb[0].mxu0
        %1391 = vmatprep.mubr.f32.mxu0 0.0
        %1392 = vmatmul.mubr.f32.gmra.mrb[0].mxu0 %v1193
        %v1393 = vpop.f32.mrb[0].mxu0
        %v1394 = vadd.f32 0.0, %v1393
        %v1395 = vpop.f32.mrb[0].mxu0
        %1396 = vmatprep.mubr.f32.mxu0 0.0
        %1397 = vmatmul.mubr.f32.gmra.mrb[0].mxu0 %v1196
        %v1398 = vpop.f32.mrb[0].mxu0
        %v1399 = vadd.f32 0.0, %v1398
        %v1400 = vpop.f32.mrb[0].mxu0
        %1401 = vmatprep.mubr.f32.mxu0 0.0
        %1402 = vmatmul.mubr.f32.gmra.mrb[0].mxu0 %v1199
        %v1403 = vpop.f32.mrb[0].mxu0
        %v1404 = vadd.f32 0.0, %v1403
        %v1405 = vpop.f32.mrb[0].mxu0
        %1406 = vmatprep.mubr.f32.mxu0 0.0
        %1407 = vmatmul.mubr.f32.gmra.mrb[0].mxu0 %v1202
        %v1408 = vpop.f32.mrb[0].mxu0
        %v1409 = vadd.f32 0.0, %v1408
        %v1410 = vpop.f32.mrb[0].mxu0
        %1411 = vmatprep.mubr.f32.mxu0 0.0
        %1412 = vmatmul.mubr.f32.gmra.mrb[0].mxu0 %v1205
        %v1413 = vpop.f32.mrb[0].mxu0
        %v1414 = vadd.f32 0.0, %v1413
        %v1415 = vpop.f32.mrb[0].mxu0
        %1416 = vmatprep.mubr.f32.mxu0 0.0
        %1417 = vmatmul.mubr.f32.gmra.mrb[0].mxu0 %v1208
        %v1418 = vpop.f32.mrb[0].mxu0
        %v1419 = vadd.f32 0.0, %v1418
        %v1420 = vpop.f32.mrb[0].mxu0
        %1421 = vmatprep.mubr.f32.mxu0 0.0
        %1422 = vmatmul.mubr.f32.gmra.mrb[0].mxu0 %v1211
        %v1423 = vpop.f32.mrb[0].mxu0
        %v1424 = vadd.f32 0.0, %v1423
        %v1425 = vpop.f32.mrb[0].mxu0
        %1426 = vmatprep.mubr.f32.mxu0 0.0
        %1427 = vmatmul.mubr.f32.gmra.mrb[0].mxu0 %v1214
        %v1428 = vpop.f32.mrb[0].mxu0
        %v1429 = vadd.f32 0.0, %v1428
        %v1430 = vpop.f32.mrb[0].mxu0
        %1431 = vmatprep.mubr.f32.mxu0 0.0
        %1432 = vmatmul.mubr.f32.gmra.mrb[0].mxu0 %v1217
        %v1433 = vpop.f32.mrb[0].mxu0
        %v1434 = vadd.f32 0.0, %v1433
        %v1435 = vpop.f32.mrb[0].mxu0
        %1436 = vmatprep.mubr.f32.mxu0 0.0
        %1437 = vmatmul.mubr.f32.gmra.mrb[0].mxu0 %v1220
        %v1438 = vpop.f32.mrb[0].mxu0
        %v1439 = vadd.f32 0.0, %v1438
        %v1440 = vpop.f32.mrb[0].mxu0
        %1441 = vmatprep.mubr.f32.mxu0 0.0
        %1442 = vmatmul.mubr.f32.gmra.mrb[0].mxu0 %v1223
        %v1443 = vpop.f32.mrb[0].mxu0
        %v1444 = vadd.f32 0.0, %v1443
        %v1445 = vpop.f32.mrb[0].mxu0
        %1446 = vmatprep.mubr.f32.mxu0 0.0
        %1447 = vmatmul.mubr.f32.gmra.mrb[0].mxu0 %v1226
        %v1448 = vpop.f32.mrb[0].mxu0
        %v1449 = vadd.f32 0.0, %v1448
        %v1450 = vpop.f32.mrb[0].mxu0
        %1451 = vmatprep.mubr.f32.mxu0 0.0
        %1452 = vmatmul.mubr.f32.gmra.mrb[0].mxu0 %v1229
        %v1453 = vpop.f32.mrb[0].mxu0
        %v1454 = vadd.f32 0.0, %v1453
        %v1455 = vpop.f32.mrb[0].mxu0
        %1456 = vmatprep.mubr.f32.mxu0 0.0
        %1457 = vmatmul.mubr.f32.gmra.mrb[0].mxu0 %v1232
        %v1458 = vpop.f32.mrb[0].mxu0
        %v1459 = vadd.f32 0.0, %v1458
        %v1460 = vpop.f32.mrb[0].mxu0
        %1461 = vdwg.mxu0
        %v1462 = vadd.f32 %v946, %v1304
        %v1463 = vadd.f32 %v951, %v1309
        %v1464 = vadd.f32 %v956, %v1314
        %v1465 = vadd.f32 %v961, %v1319
        %v1466 = vadd.f32 %v966, %v1324
        %v1467 = vadd.f32 %v971, %v1329
        %v1468 = vadd.f32 %v976, %v1334
        %v1469 = vadd.f32 %v981, %v1339
        %v1470 = vadd.f32 %v986, %v1344
        %v1471 = vadd.f32 %v991, %v1349
        %v1472 = vadd.f32 %v996, %v1354
        %v1473 = vadd.f32 %v1001, %v1359
        %v1474 = vadd.f32 %v1006, %v1364
        %v1475 = vadd.f32 %v1011, %v1369
        %v1476 = vadd.f32 %v1016, %v1374
        %v1477 = vadd.f32 %v1021, %v1379
        %v1478 = vadd.f32 %v1026, %v1384
        %v1479 = vadd.f32 %v1031, %v1389
        %v1480 = vadd.f32 %v1036, %v1394
        %v1481 = vadd.f32 %v1041, %v1399
        %v1482 = vadd.f32 %v1046, %v1404
        %v1483 = vadd.f32 %v1051, %v1409
        %v1484 = vadd.f32 %v1056, %v1414
        %v1485 = vadd.f32 %v1061, %v1419
        %v1486 = vadd.f32 %v1066, %v1424
        %v1487 = vadd.f32 %v1071, %v1429
        %v1488 = vadd.f32 %v1076, %v1434
        %v1489 = vadd.f32 %v1081, %v1439
        %v1490 = vadd.f32 %v1086, %v1444
        %v1491 = vadd.f32 %v1091, %v1449
        %v1492 = vadd.f32 %v1096, %v1454
        %v1493 = vadd.f32 %v1101, %v1459
        %v1494 = vld [vmem:[%s355] sm:$0xff]
        %v1495 = vld [vmem:[%s355 + $0x8] sm:$0xff]
        %v1496 = vld [vmem:[%s355 + $0x18] sm:$0xff]
        %v1497 = vld [vmem:[%s355 + $0x20] sm:$0xff]
        %v1498 = vld [vmem:[%s355 + $0x30] sm:$0xff]
        %v1499 = vld [vmem:[%s355 + $0x38] sm:$0xff]
        %v1500 = vld [vmem:[%s355 + $0x48] sm:$0xff]
        %v1501 = vld [vmem:[%s355 + $0x50] sm:$0xff]
        %v1502 = vld [vmem:[%s355 + $0x60] sm:$0xff]
        %v1503 = vld [vmem:[%s355 + $0x68] sm:$0xff]
        %v1504 = vld [vmem:[%s355 + $0x78] sm:$0xff]
        %v1505 = vld [vmem:[%s355 + $0x80] sm:$0xff]
        %v1506 = vld [vmem:[%s355 + $0x90] sm:$0xff]
        %v1507 = vld [vmem:[%s355 + $0x98] sm:$0xff]
        %v1508 = vld [vmem:[%s355 + $0xa8] sm:$0xff]
        %v1509 = vld [vmem:[%s355 + $0xb0] sm:$0xff]
        %v1510 = vld [vmem:[%s355 + $0xc0] sm:$0xff]
        %v1511 = vld [vmem:[%s355 + $0xc8] sm:$0xff]
        %v1512 = vld [vmem:[%s355 + $0xd8] sm:$0xff]
        %v1513 = vld [vmem:[%s355 + $0xe0] sm:$0xff]
        %v1514 = vld [vmem:[%s355 + $0xf0] sm:$0xff]
        %v1515 = vld [vmem:[%s355 + $0xf8] sm:$0xff]
        %v1516 = vld [vmem:[%s355 + $0x108] sm:$0xff]
        %v1517 = vld [vmem:[%s355 + $0x110] sm:$0xff]
        %v1518 = vld [vmem:[%s355 + $0x120] sm:$0xff]
        %v1519 = vld [vmem:[%s355 + $0x128] sm:$0xff]
        %v1520 = vld [vmem:[%s355 + $0x138] sm:$0xff]
        %v1521 = vld [vmem:[%s355 + $0x140] sm:$0xff]
        %v1522 = vld [vmem:[%s355 + $0x150] sm:$0xff]
        %v1523 = vld [vmem:[%s355 + $0x158] sm:$0xff]
        %v1524 = vld [vmem:[%s355 + $0x168] sm:$0xff]
        %v1525 = vld [vmem:[%s355 + $0x170] sm:$0xff]
        %s1526 = scalar_lea.vmem %s1, 12
        %v1527 = vld [vmem:[%s1526] sm:$0xf]
        %v1529 = vsel %vm277, %v1494, 0
        %v1532 = vsel %vm277, %v1495, 0
        %v1535 = vsel %vm277, %v1496, 0
        %v1538 = vsel %vm277, %v1497, 0
        %v1541 = vsel %vm277, %v1498, 0
        %v1544 = vsel %vm277, %v1499, 0
        %v1547 = vsel %vm277, %v1500, 0
        %v1550 = vsel %vm277, %v1501, 0
        %v1553 = vsel %vm277, %v1502, 0
        %v1556 = vsel %vm277, %v1503, 0
        %v1559 = vsel %vm277, %v1504, 0
        %v1562 = vsel %vm277, %v1505, 0
        %v1565 = vsel %vm277, %v1506, 0
        %v1568 = vsel %vm277, %v1507, 0
        %v1571 = vsel %vm277, %v1508, 0
        %v1574 = vsel %vm277, %v1509, 0
        %v1577 = vsel %vm277, %v1510, 0
        %v1580 = vsel %vm277, %v1511, 0
        %v1583 = vsel %vm277, %v1512, 0
        %v1586 = vsel %vm277, %v1513, 0
        %v1589 = vsel %vm277, %v1514, 0
        %v1592 = vsel %vm277, %v1515, 0
        %v1595 = vsel %vm277, %v1516, 0
        %v1598 = vsel %vm277, %v1517, 0
        %v1601 = vsel %vm277, %v1518, 0
        %v1604 = vsel %vm277, %v1519, 0
        %v1607 = vsel %vm277, %v1520, 0
        %v1610 = vsel %vm277, %v1521, 0
        %v1613 = vsel %vm277, %v1522, 0
        %v1616 = vsel %vm277, %v1523, 0
        %v1619 = vsel %vm277, %v1524, 0
        %v1622 = vsel %vm277, %v1525, 0
        %v1625 = vsel %vm551, %v1527, 0
        %1627 = vmatprep.subr.mxu0 0.0
        %1628 = vmatpush1.msra.mxu0 %v1625
        %1629 = vmatprep.subr.mxu0 0.0
        %1630 = vmatpush1.msra.mxu0 0.0
        %1631 = vmatprep.subr.mxu0 0.0
        %1632 = vmatpush1.msra.mxu0 0.0
        %1633 = vmatprep.subr.mxu0 0.0
        %1634 = vmatpush1.msra.mxu0 0.0
        %1635 = vmatprep.subr.mxu0 0.0
        %1636 = vmatpush1.msra.mxu0 0.0
        %1637 = vmatprep.subr.mxu0 0.0
        %1638 = vmatpush1.msra.mxu0 0.0
        %1639 = vmatprep.subr.mxu0 0.0
        %1640 = vmatpush1.msra.mxu0 0.0
        %1641 = vmatprep.subr.mxu0 0.0
        %1642 = vmatpush1.msra.mxu0 0.0
        %1643 = vmatprep.subr.mxu0 0.0
        %1644 = vmatpush1.msra.mxu0 0.0
        %1645 = vmatprep.subr.mxu0 0.0
        %1646 = vmatpush1.msra.mxu0 0.0
        %1647 = vmatprep.subr.mxu0 0.0
        %1648 = vmatpush1.msra.mxu0 0.0
        %1649 = vmatprep.subr.mxu0 0.0
        %1650 = vmatpush1.msra.mxu0 0.0
        %1651 = vmatprep.subr.mxu0 0.0
        %1652 = vmatpush1.msra.mxu0 0.0
        %1653 = vmatprep.subr.mxu0 0.0
        %1654 = vmatpush1.msra.mxu0 0.0
        %1655 = vmatprep.subr.mxu0 0.0
        %1656 = vmatpush1.msra.mxu0 0.0
        %1657 = vmatprep.subr.mxu0 0.0
        %1658 = vmatpush1.msra.mxu0 0.0
        %1659 = vmatprep.subr.mxu0 0.0
        %1660 = vmatpush1.msra.mxu0 0.0
        %1661 = vmatprep.subr.mxu0 0.0
        %1662 = vmatpush1.msra.mxu0 0.0
        %1663 = vmatprep.subr.mxu0 0.0
        %1664 = vmatpush1.msra.mxu0 0.0
        %1665 = vmatprep.subr.mxu0 0.0
        %1666 = vmatpush1.msra.mxu0 0.0
        %1667 = vmatprep.subr.mxu0 0.0
        %1668 = vmatpush1.msra.mxu0 0.0
        %1669 = vmatprep.subr.mxu0 0.0
        %1670 = vmatpush1.msra.mxu0 0.0
        %1671 = vmatprep.subr.mxu0 0.0
        %1672 = vmatpush1.msra.mxu0 0.0
        %1673 = vmatprep.subr.mxu0 0.0
        %1674 = vmatpush1.msra.mxu0 0.0
        %1675 = vmatprep.subr.mxu0 0.0
        %1676 = vmatpush1.msra.mxu0 0.0
        %1677 = vmatprep.subr.mxu0 0.0
        %1678 = vmatpush1.msra.mxu0 0.0
        %1679 = vmatprep.subr.mxu0 0.0
        %1680 = vmatpush1.msra.mxu0 0.0
        %1681 = vmatprep.subr.mxu0 0.0
        %1682 = vmatpush1.msra.mxu0 0.0
        %1683 = vmatprep.subr.mxu0 0.0
        %1684 = vmatpush1.msra.mxu0 0.0
        %1685 = vmatprep.subr.mxu0 0.0
        %1686 = vmatpush1.msra.mxu0 0.0
        %1687 = vmatprep.subr.mxu0 0.0
        %1688 = vmatpush1.msra.mxu0 0.0
        %1689 = vmatprep.subr.mxu0 0.0
        %1690 = vmatpush1.msra.mxu0 0.0
        %1691 = vmatprep.mubr.f32.mxu0 0.0
        %1692 = vmatmul.mubr.f32.gmra.mrb[0].mxu0 %v1529
        %v1693 = vpop.f32.mrb[0].mxu0
        %v1694 = vadd.f32 0.0, %v1693
        %v1695 = vpop.f32.mrb[0].mxu0
        %1696 = vmatprep.mubr.f32.mxu0 0.0
        %1697 = vmatmul.mubr.f32.gmra.mrb[0].mxu0 %v1532
        %v1698 = vpop.f32.mrb[0].mxu0
        %v1699 = vadd.f32 0.0, %v1698
        %v1700 = vpop.f32.mrb[0].mxu0
        %1701 = vmatprep.mubr.f32.mxu0 0.0
        %1702 = vmatmul.mubr.f32.gmra.mrb[0].mxu0 %v1535
        %v1703 = vpop.f32.mrb[0].mxu0
        %v1704 = vadd.f32 0.0, %v1703
        %v1705 = vpop.f32.mrb[0].mxu0
        %1706 = vmatprep.mubr.f32.mxu0 0.0
        %1707 = vmatmul.mubr.f32.gmra.mrb[0].mxu0 %v1538
        %v1708 = vpop.f32.mrb[0].mxu0
        %v1709 = vadd.f32 0.0, %v1708
        %v1710 = vpop.f32.mrb[0].mxu0
        %1711 = vmatprep.mubr.f32.mxu0 0.0
        %1712 = vmatmul.mubr.f32.gmra.mrb[0].mxu0 %v1541
        %v1713 = vpop.f32.mrb[0].mxu0
        %v1714 = vadd.f32 0.0, %v1713
        %v1715 = vpop.f32.mrb[0].mxu0
        %1716 = vmatprep.mubr.f32.mxu0 0.0
        %1717 = vmatmul.mubr.f32.gmra.mrb[0].mxu0 %v1544
        %v1718 = vpop.f32.mrb[0].mxu0
        %v1719 = vadd.f32 0.0, %v1718
        %v1720 = vpop.f32.mrb[0].mxu0
        %1721 = vmatprep.mubr.f32.mxu0 0.0
        %1722 = vmatmul.mubr.f32.gmra.mrb[0].mxu0 %v1547
        %v1723 = vpop.f32.mrb[0].mxu0
        %v1724 = vadd.f32 0.0, %v1723
        %v1725 = vpop.f32.mrb[0].mxu0
        %1726 = vmatprep.mubr.f32.mxu0 0.0
        %1727 = vmatmul.mubr.f32.gmra.mrb[0].mxu0 %v1550
        %v1728 = vpop.f32.mrb[0].mxu0
        %v1729 = vadd.f32 0.0, %v1728
        %v1730 = vpop.f32.mrb[0].mxu0
        %1731 = vmatprep.mubr.f32.mxu0 0.0
        %1732 = vmatmul.mubr.f32.gmra.mrb[0].mxu0 %v1553
        %v1733 = vpop.f32.mrb[0].mxu0
        %v1734 = vadd.f32 0.0, %v1733
        %v1735 = vpop.f32.mrb[0].mxu0
        %1736 = vmatprep.mubr.f32.mxu0 0.0
        %1737 = vmatmul.mubr.f32.gmra.mrb[0].mxu0 %v1556
        %v1738 = vpop.f32.mrb[0].mxu0
        %v1739 = vadd.f32 0.0, %v1738
        %v1740 = vpop.f32.mrb[0].mxu0
        %1741 = vmatprep.mubr.f32.mxu0 0.0
        %1742 = vmatmul.mubr.f32.gmra.mrb[0].mxu0 %v1559
        %v1743 = vpop.f32.mrb[0].mxu0
        %v1744 = vadd.f32 0.0, %v1743
        %v1745 = vpop.f32.mrb[0].mxu0
        %1746 = vmatprep.mubr.f32.mxu0 0.0
        %1747 = vmatmul.mubr.f32.gmra.mrb[0].mxu0 %v1562
        %v1748 = vpop.f32.mrb[0].mxu0
        %v1749 = vadd.f32 0.0, %v1748
        %v1750 = vpop.f32.mrb[0].mxu0
        %1751 = vmatprep.mubr.f32.mxu0 0.0
        %1752 = vmatmul.mubr.f32.gmra.mrb[0].mxu0 %v1565
        %v1753 = vpop.f32.mrb[0].mxu0
        %v1754 = vadd.f32 0.0, %v1753
        %v1755 = vpop.f32.mrb[0].mxu0
        %1756 = vmatprep.mubr.f32.mxu0 0.0
        %1757 = vmatmul.mubr.f32.gmra.mrb[0].mxu0 %v1568
        %v1758 = vpop.f32.mrb[0].mxu0
        %v1759 = vadd.f32 0.0, %v1758
        %v1760 = vpop.f32.mrb[0].mxu0
        %1761 = vmatprep.mubr.f32.mxu0 0.0
        %1762 = vmatmul.mubr.f32.gmra.mrb[0].mxu0 %v1571
        %v1763 = vpop.f32.mrb[0].mxu0
        %v1764 = vadd.f32 0.0, %v1763
        %v1765 = vpop.f32.mrb[0].mxu0
        %1766 = vmatprep.mubr.f32.mxu0 0.0
        %1767 = vmatmul.mubr.f32.gmra.mrb[0].mxu0 %v1574
        %v1768 = vpop.f32.mrb[0].mxu0
        %v1769 = vadd.f32 0.0, %v1768
        %v1770 = vpop.f32.mrb[0].mxu0
        %1771 = vmatprep.mubr.f32.mxu0 0.0
        %1772 = vmatmul.mubr.f32.gmra.mrb[0].mxu0 %v1577
        %v1773 = vpop.f32.mrb[0].mxu0
        %v1774 = vadd.f32 0.0, %v1773
        %v1775 = vpop.f32.mrb[0].mxu0
        %1776 = vmatprep.mubr.f32.mxu0 0.0
        %1777 = vmatmul.mubr.f32.gmra.mrb[0].mxu0 %v1580
        %v1778 = vpop.f32.mrb[0].mxu0
        %v1779 = vadd.f32 0.0, %v1778
        %v1780 = vpop.f32.mrb[0].mxu0
        %1781 = vmatprep.mubr.f32.mxu0 0.0
        %1782 = vmatmul.mubr.f32.gmra.mrb[0].mxu0 %v1583
        %v1783 = vpop.f32.mrb[0].mxu0
        %v1784 = vadd.f32 0.0, %v1783
        %v1785 = vpop.f32.mrb[0].mxu0
        %1786 = vmatprep.mubr.f32.mxu0 0.0
        %1787 = vmatmul.mubr.f32.gmra.mrb[0].mxu0 %v1586
        %v1788 = vpop.f32.mrb[0].mxu0
        %v1789 = vadd.f32 0.0, %v1788
        %v1790 = vpop.f32.mrb[0].mxu0
        %1791 = vmatprep.mubr.f32.mxu0 0.0
        %1792 = vmatmul.mubr.f32.gmra.mrb[0].mxu0 %v1589
        %v1793 = vpop.f32.mrb[0].mxu0
        %v1794 = vadd.f32 0.0, %v1793
        %v1795 = vpop.f32.mrb[0].mxu0
        %1796 = vmatprep.mubr.f32.mxu0 0.0
        %1797 = vmatmul.mubr.f32.gmra.mrb[0].mxu0 %v1592
        %v1798 = vpop.f32.mrb[0].mxu0
        %v1799 = vadd.f32 0.0, %v1798
        %v1800 = vpop.f32.mrb[0].mxu0
        %1801 = vmatprep.mubr.f32.mxu0 0.0
        %1802 = vmatmul.mubr.f32.gmra.mrb[0].mxu0 %v1595
        %v1803 = vpop.f32.mrb[0].mxu0
        %v1804 = vadd.f32 0.0, %v1803
        %v1805 = vpop.f32.mrb[0].mxu0
        %1806 = vmatprep.mubr.f32.mxu0 0.0
        %1807 = vmatmul.mubr.f32.gmra.mrb[0].mxu0 %v1598
        %v1808 = vpop.f32.mrb[0].mxu0
        %v1809 = vadd.f32 0.0, %v1808
        %v1810 = vpop.f32.mrb[0].mxu0
        %1811 = vmatprep.mubr.f32.mxu0 0.0
        %1812 = vmatmul.mubr.f32.gmra.mrb[0].mxu0 %v1601
        %v1813 = vpop.f32.mrb[0].mxu0
        %v1814 = vadd.f32 0.0, %v1813
        %v1815 = vpop.f32.mrb[0].mxu0
        %1816 = vmatprep.mubr.f32.mxu0 0.0
        %1817 = vmatmul.mubr.f32.gmra.mrb[0].mxu0 %v1604
        %v1818 = vpop.f32.mrb[0].mxu0
        %v1819 = vadd.f32 0.0, %v1818
        %v1820 = vpop.f32.mrb[0].mxu0
        %1821 = vmatprep.mubr.f32.mxu0 0.0
        %1822 = vmatmul.mubr.f32.gmra.mrb[0].mxu0 %v1607
        %v1823 = vpop.f32.mrb[0].mxu0
        %v1824 = vadd.f32 0.0, %v1823
        %v1825 = vpop.f32.mrb[0].mxu0
        %1826 = vmatprep.mubr.f32.mxu0 0.0
        %1827 = vmatmul.mubr.f32.gmra.mrb[0].mxu0 %v1610
        %v1828 = vpop.f32.mrb[0].mxu0
        %v1829 = vadd.f32 0.0, %v1828
        %v1830 = vpop.f32.mrb[0].mxu0
        %1831 = vmatprep.mubr.f32.mxu0 0.0
        %1832 = vmatmul.mubr.f32.gmra.mrb[0].mxu0 %v1613
        %v1833 = vpop.f32.mrb[0].mxu0
        %v1834 = vadd.f32 0.0, %v1833
        %v1835 = vpop.f32.mrb[0].mxu0
        %1836 = vmatprep.mubr.f32.mxu0 0.0
        %1837 = vmatmul.mubr.f32.gmra.mrb[0].mxu0 %v1616
        %v1838 = vpop.f32.mrb[0].mxu0
        %v1839 = vadd.f32 0.0, %v1838
        %v1840 = vpop.f32.mrb[0].mxu0
        %1841 = vmatprep.mubr.f32.mxu0 0.0
        %1842 = vmatmul.mubr.f32.gmra.mrb[0].mxu0 %v1619
        %v1843 = vpop.f32.mrb[0].mxu0
        %v1844 = vadd.f32 0.0, %v1843
        %v1845 = vpop.f32.mrb[0].mxu0
        %1846 = vmatprep.mubr.f32.mxu0 0.0
        %1847 = vmatmul.mubr.f32.gmra.mrb[0].mxu0 %v1622
        %v1848 = vpop.f32.mrb[0].mxu0
        %v1849 = vadd.f32 0.0, %v1848
        %v1850 = vpop.f32.mrb[0].mxu0
        %1851 = vdwg.mxu0
        %v1852 = vadd.f32 %v1462, %v1694
        %v1853 = vadd.f32 %v1463, %v1699
        %v1854 = vadd.f32 %v1464, %v1704
        %v1855 = vadd.f32 %v1465, %v1709
        %v1856 = vadd.f32 %v1466, %v1714
        %v1857 = vadd.f32 %v1467, %v1719
        %v1858 = vadd.f32 %v1468, %v1724
        %v1859 = vadd.f32 %v1469, %v1729
        %v1860 = vadd.f32 %v1470, %v1734
        %v1861 = vadd.f32 %v1471, %v1739
        %v1862 = vadd.f32 %v1472, %v1744
        %v1863 = vadd.f32 %v1473, %v1749
        %v1864 = vadd.f32 %v1474, %v1754
        %v1865 = vadd.f32 %v1475, %v1759
        %v1866 = vadd.f32 %v1476, %v1764
        %v1867 = vadd.f32 %v1477, %v1769
        %v1868 = vadd.f32 %v1478, %v1774
        %v1869 = vadd.f32 %v1479, %v1779
        %v1870 = vadd.f32 %v1480, %v1784
        %v1871 = vadd.f32 %v1481, %v1789
        %v1872 = vadd.f32 %v1482, %v1794
        %v1873 = vadd.f32 %v1483, %v1799
        %v1874 = vadd.f32 %v1484, %v1804
        %v1875 = vadd.f32 %v1485, %v1809
        %v1876 = vadd.f32 %v1486, %v1814
        %v1877 = vadd.f32 %v1487, %v1819
        %v1878 = vadd.f32 %v1488, %v1824
        %v1879 = vadd.f32 %v1489, %v1829
        %v1880 = vadd.f32 %v1490, %v1834
        %v1881 = vadd.f32 %v1491, %v1839
        %v1882 = vadd.f32 %v1492, %v1844
        %v1883 = vadd.f32 %v1493, %v1849
        %v1884 = vld [vmem:[%s355 + $0x1] sm:$0xff]
        %v1885 = vld [vmem:[%s355 + $0x9] sm:$0xff]
        %v1886 = vld [vmem:[%s355 + $0x19] sm:$0xff]
        %v1887 = vld [vmem:[%s355 + $0x21] sm:$0xff]
        %v1888 = vld [vmem:[%s355 + $0x31] sm:$0xff]
        %v1889 = vld [vmem:[%s355 + $0x39] sm:$0xff]
        %v1890 = vld [vmem:[%s355 + $0x49] sm:$0xff]
        %v1891 = vld [vmem:[%s355 + $0x51] sm:$0xff]
        %v1892 = vld [vmem:[%s355 + $0x61] sm:$0xff]
        %v1893 = vld [vmem:[%s355 + $0x69] sm:$0xff]
        %v1894 = vld [vmem:[%s355 + $0x79] sm:$0xff]
        %v1895 = vld [vmem:[%s355 + $0x81] sm:$0xff]
        %v1896 = vld [vmem:[%s355 + $0x91] sm:$0xff]
        %v1897 = vld [vmem:[%s355 + $0x99] sm:$0xff]
        %v1898 = vld [vmem:[%s355 + $0xa9] sm:$0xff]
        %v1899 = vld [vmem:[%s355 + $0xb1] sm:$0xff]
        %v1900 = vld [vmem:[%s355 + $0xc1] sm:$0xff]
        %v1901 = vld [vmem:[%s355 + $0xc9] sm:$0xff]
        %v1902 = vld [vmem:[%s355 + $0xd9] sm:$0xff]
        %v1903 = vld [vmem:[%s355 + $0xe1] sm:$0xff]
        %v1904 = vld [vmem:[%s355 + $0xf1] sm:$0xff]
        %v1905 = vld [vmem:[%s355 + $0xf9] sm:$0xff]
        %v1906 = vld [vmem:[%s355 + $0x109] sm:$0xff]
        %v1907 = vld [vmem:[%s355 + $0x111] sm:$0xff]
        %v1908 = vld [vmem:[%s355 + $0x121] sm:$0xff]
        %v1909 = vld [vmem:[%s355 + $0x129] sm:$0xff]
        %v1910 = vld [vmem:[%s355 + $0x139] sm:$0xff]
        %v1911 = vld [vmem:[%s355 + $0x141] sm:$0xff]
        %v1912 = vld [vmem:[%s355 + $0x151] sm:$0xff]
        %v1913 = vld [vmem:[%s355 + $0x159] sm:$0xff]
        %v1914 = vld [vmem:[%s355 + $0x169] sm:$0xff]
        %v1915 = vld [vmem:[%s355 + $0x171] sm:$0xff]
        %s1916 = scalar_lea.vmem %s1, 16
        %v1917 = vld [vmem:[%s1916] sm:$0xf]
        %v1919 = vsel %vm277, %v1884, 0
        %v1922 = vsel %vm277, %v1885, 0
        %v1925 = vsel %vm277, %v1886, 0
        %v1928 = vsel %vm277, %v1887, 0
        %v1931 = vsel %vm277, %v1888, 0
        %v1934 = vsel %vm277, %v1889, 0
        %v1937 = vsel %vm277, %v1890, 0
        %v1940 = vsel %vm277, %v1891, 0
        %v1943 = vsel %vm277, %v1892, 0
        %v1946 = vsel %vm277, %v1893, 0
        %v1949 = vsel %vm277, %v1894, 0
        %v1952 = vsel %vm277, %v1895, 0
        %v1955 = vsel %vm277, %v1896, 0
        %v1958 = vsel %vm277, %v1897, 0
        %v1961 = vsel %vm277, %v1898, 0
        %v1964 = vsel %vm277, %v1899, 0
        %v1967 = vsel %vm277, %v1900, 0
        %v1970 = vsel %vm277, %v1901, 0
        %v1973 = vsel %vm277, %v1902, 0
        %v1976 = vsel %vm277, %v1903, 0
        %v1979 = vsel %vm277, %v1904, 0
        %v1982 = vsel %vm277, %v1905, 0
        %v1985 = vsel %vm277, %v1906, 0
        %v1988 = vsel %vm277, %v1907, 0
        %v1991 = vsel %vm277, %v1908, 0
        %v1994 = vsel %vm277, %v1909, 0
        %v1997 = vsel %vm277, %v1910, 0
        %v2000 = vsel %vm277, %v1911, 0
        %v2003 = vsel %vm277, %v1912, 0
        %v2006 = vsel %vm277, %v1913, 0
        %v2009 = vsel %vm277, %v1914, 0
        %v2012 = vsel %vm277, %v1915, 0
        %v2015 = vsel %vm551, %v1917, 0
        %2017 = vmatprep.subr.mxu0 0.0
        %2018 = vmatpush1.msra.mxu0 %v2015
        %2019 = vmatprep.subr.mxu0 0.0
        %2020 = vmatpush1.msra.mxu0 0.0
        %2021 = vmatprep.subr.mxu0 0.0
        %2022 = vmatpush1.msra.mxu0 0.0
        %2023 = vmatprep.subr.mxu0 0.0
        %2024 = vmatpush1.msra.mxu0 0.0
        %2025 = vmatprep.subr.mxu0 0.0
        %2026 = vmatpush1.msra.mxu0 0.0
        %2027 = vmatprep.subr.mxu0 0.0
        %2028 = vmatpush1.msra.mxu0 0.0
        %2029 = vmatprep.subr.mxu0 0.0
        %2030 = vmatpush1.msra.mxu0 0.0
        %2031 = vmatprep.subr.mxu0 0.0
        %2032 = vmatpush1.msra.mxu0 0.0
        %2033 = vmatprep.subr.mxu0 0.0
        %2034 = vmatpush1.msra.mxu0 0.0
        %2035 = vmatprep.subr.mxu0 0.0
        %2036 = vmatpush1.msra.mxu0 0.0
        %2037 = vmatprep.subr.mxu0 0.0
        %2038 = vmatpush1.msra.mxu0 0.0
        %2039 = vmatprep.subr.mxu0 0.0
        %2040 = vmatpush1.msra.mxu0 0.0
        %2041 = vmatprep.subr.mxu0 0.0
        %2042 = vmatpush1.msra.mxu0 0.0
        %2043 = vmatprep.subr.mxu0 0.0
        %2044 = vmatpush1.msra.mxu0 0.0
        %2045 = vmatprep.subr.mxu0 0.0
        %2046 = vmatpush1.msra.mxu0 0.0
        %2047 = vmatprep.subr.mxu0 0.0
        %2048 = vmatpush1.msra.mxu0 0.0
        %2049 = vmatprep.subr.mxu0 0.0
        %2050 = vmatpush1.msra.mxu0 0.0
        %2051 = vmatprep.subr.mxu0 0.0
        %2052 = vmatpush1.msra.mxu0 0.0
        %2053 = vmatprep.subr.mxu0 0.0
        %2054 = vmatpush1.msra.mxu0 0.0
        %2055 = vmatprep.subr.mxu0 0.0
        %2056 = vmatpush1.msra.mxu0 0.0
        %2057 = vmatprep.subr.mxu0 0.0
        %2058 = vmatpush1.msra.mxu0 0.0
        %2059 = vmatprep.subr.mxu0 0.0
        %2060 = vmatpush1.msra.mxu0 0.0
        %2061 = vmatprep.subr.mxu0 0.0
        %2062 = vmatpush1.msra.mxu0 0.0
        %2063 = vmatprep.subr.mxu0 0.0
        %2064 = vmatpush1.msra.mxu0 0.0
        %2065 = vmatprep.subr.mxu0 0.0
        %2066 = vmatpush1.msra.mxu0 0.0
        %2067 = vmatprep.subr.mxu0 0.0
        %2068 = vmatpush1.msra.mxu0 0.0
        %2069 = vmatprep.subr.mxu0 0.0
        %2070 = vmatpush1.msra.mxu0 0.0
        %2071 = vmatprep.subr.mxu0 0.0
        %2072 = vmatpush1.msra.mxu0 0.0
        %2073 = vmatprep.subr.mxu0 0.0
        %2074 = vmatpush1.msra.mxu0 0.0
        %2075 = vmatprep.subr.mxu0 0.0
        %2076 = vmatpush1.msra.mxu0 0.0
        %2077 = vmatprep.subr.mxu0 0.0
        %2078 = vmatpush1.msra.mxu0 0.0
        %2079 = vmatprep.subr.mxu0 0.0
        %2080 = vmatpush1.msra.mxu0 0.0
        %2081 = vmatprep.mubr.f32.mxu0 0.0
        %2082 = vmatmul.mubr.f32.gmra.mrb[0].mxu0 %v1919
        %v2083 = vpop.f32.mrb[0].mxu0
        %v2084 = vadd.f32 0.0, %v2083
        %v2085 = vpop.f32.mrb[0].mxu0
        %2086 = vmatprep.mubr.f32.mxu0 0.0
        %2087 = vmatmul.mubr.f32.gmra.mrb[0].mxu0 %v1922
        %v2088 = vpop.f32.mrb[0].mxu0
        %v2089 = vadd.f32 0.0, %v2088
        %v2090 = vpop.f32.mrb[0].mxu0
        %2091 = vmatprep.mubr.f32.mxu0 0.0
        %2092 = vmatmul.mubr.f32.gmra.mrb[0].mxu0 %v1925
        %v2093 = vpop.f32.mrb[0].mxu0
        %v2094 = vadd.f32 0.0, %v2093
        %v2095 = vpop.f32.mrb[0].mxu0
        %2096 = vmatprep.mubr.f32.mxu0 0.0
        %2097 = vmatmul.mubr.f32.gmra.mrb[0].mxu0 %v1928
        %v2098 = vpop.f32.mrb[0].mxu0
        %v2099 = vadd.f32 0.0, %v2098
        %v2100 = vpop.f32.mrb[0].mxu0
        %2101 = vmatprep.mubr.f32.mxu0 0.0
        %2102 = vmatmul.mubr.f32.gmra.mrb[0].mxu0 %v1931
        %v2103 = vpop.f32.mrb[0].mxu0
        %v2104 = vadd.f32 0.0, %v2103
        %v2105 = vpop.f32.mrb[0].mxu0
        %2106 = vmatprep.mubr.f32.mxu0 0.0
        %2107 = vmatmul.mubr.f32.gmra.mrb[0].mxu0 %v1934
        %v2108 = vpop.f32.mrb[0].mxu0
        %v2109 = vadd.f32 0.0, %v2108
        %v2110 = vpop.f32.mrb[0].mxu0
        %2111 = vmatprep.mubr.f32.mxu0 0.0
        %2112 = vmatmul.mubr.f32.gmra.mrb[0].mxu0 %v1937
        %v2113 = vpop.f32.mrb[0].mxu0
        %v2114 = vadd.f32 0.0, %v2113
        %v2115 = vpop.f32.mrb[0].mxu0
        %2116 = vmatprep.mubr.f32.mxu0 0.0
        %2117 = vmatmul.mubr.f32.gmra.mrb[0].mxu0 %v1940
        %v2118 = vpop.f32.mrb[0].mxu0
        %v2119 = vadd.f32 0.0, %v2118
        %v2120 = vpop.f32.mrb[0].mxu0
        %2121 = vmatprep.mubr.f32.mxu0 0.0
        %2122 = vmatmul.mubr.f32.gmra.mrb[0].mxu0 %v1943
        %v2123 = vpop.f32.mrb[0].mxu0
        %v2124 = vadd.f32 0.0, %v2123
        %v2125 = vpop.f32.mrb[0].mxu0
        %2126 = vmatprep.mubr.f32.mxu0 0.0
        %2127 = vmatmul.mubr.f32.gmra.mrb[0].mxu0 %v1946
        %v2128 = vpop.f32.mrb[0].mxu0
        %v2129 = vadd.f32 0.0, %v2128
        %v2130 = vpop.f32.mrb[0].mxu0
        %2131 = vmatprep.mubr.f32.mxu0 0.0
        %2132 = vmatmul.mubr.f32.gmra.mrb[0].mxu0 %v1949
        %v2133 = vpop.f32.mrb[0].mxu0
        %v2134 = vadd.f32 0.0, %v2133
        %v2135 = vpop.f32.mrb[0].mxu0
        %2136 = vmatprep.mubr.f32.mxu0 0.0
        %2137 = vmatmul.mubr.f32.gmra.mrb[0].mxu0 %v1952
        %v2138 = vpop.f32.mrb[0].mxu0
        %v2139 = vadd.f32 0.0, %v2138
        %v2140 = vpop.f32.mrb[0].mxu0
        %2141 = vmatprep.mubr.f32.mxu0 0.0
        %2142 = vmatmul.mubr.f32.gmra.mrb[0].mxu0 %v1955
        %v2143 = vpop.f32.mrb[0].mxu0
        %v2144 = vadd.f32 0.0, %v2143
        %v2145 = vpop.f32.mrb[0].mxu0
        %2146 = vmatprep.mubr.f32.mxu0 0.0
        %2147 = vmatmul.mubr.f32.gmra.mrb[0].mxu0 %v1958
        %v2148 = vpop.f32.mrb[0].mxu0
        %v2149 = vadd.f32 0.0, %v2148
        %v2150 = vpop.f32.mrb[0].mxu0
        %2151 = vmatprep.mubr.f32.mxu0 0.0
        %2152 = vmatmul.mubr.f32.gmra.mrb[0].mxu0 %v1961
        %v2153 = vpop.f32.mrb[0].mxu0
        %v2154 = vadd.f32 0.0, %v2153
        %v2155 = vpop.f32.mrb[0].mxu0
        %2156 = vmatprep.mubr.f32.mxu0 0.0
        %2157 = vmatmul.mubr.f32.gmra.mrb[0].mxu0 %v1964
        %v2158 = vpop.f32.mrb[0].mxu0
        %v2159 = vadd.f32 0.0, %v2158
        %v2160 = vpop.f32.mrb[0].mxu0
        %2161 = vmatprep.mubr.f32.mxu0 0.0
        %2162 = vmatmul.mubr.f32.gmra.mrb[0].mxu0 %v1967
        %v2163 = vpop.f32.mrb[0].mxu0
        %v2164 = vadd.f32 0.0, %v2163
        %v2165 = vpop.f32.mrb[0].mxu0
        %2166 = vmatprep.mubr.f32.mxu0 0.0
        %2167 = vmatmul.mubr.f32.gmra.mrb[0].mxu0 %v1970
        %v2168 = vpop.f32.mrb[0].mxu0
        %v2169 = vadd.f32 0.0, %v2168
        %v2170 = vpop.f32.mrb[0].mxu0
        %2171 = vmatprep.mubr.f32.mxu0 0.0
        %2172 = vmatmul.mubr.f32.gmra.mrb[0].mxu0 %v1973
        %v2173 = vpop.f32.mrb[0].mxu0
        %v2174 = vadd.f32 0.0, %v2173
        %v2175 = vpop.f32.mrb[0].mxu0
        %2176 = vmatprep.mubr.f32.mxu0 0.0
        %2177 = vmatmul.mubr.f32.gmra.mrb[0].mxu0 %v1976
        %v2178 = vpop.f32.mrb[0].mxu0
        %v2179 = vadd.f32 0.0, %v2178
        %v2180 = vpop.f32.mrb[0].mxu0
        %2181 = vmatprep.mubr.f32.mxu0 0.0
        %2182 = vmatmul.mubr.f32.gmra.mrb[0].mxu0 %v1979
        %v2183 = vpop.f32.mrb[0].mxu0
        %v2184 = vadd.f32 0.0, %v2183
        %v2185 = vpop.f32.mrb[0].mxu0
        %2186 = vmatprep.mubr.f32.mxu0 0.0
        %2187 = vmatmul.mubr.f32.gmra.mrb[0].mxu0 %v1982
        %v2188 = vpop.f32.mrb[0].mxu0
        %v2189 = vadd.f32 0.0, %v2188
        %v2190 = vpop.f32.mrb[0].mxu0
        %2191 = vmatprep.mubr.f32.mxu0 0.0
        %2192 = vmatmul.mubr.f32.gmra.mrb[0].mxu0 %v1985
        %v2193 = vpop.f32.mrb[0].mxu0
        %v2194 = vadd.f32 0.0, %v2193
        %v2195 = vpop.f32.mrb[0].mxu0
        %2196 = vmatprep.mubr.f32.mxu0 0.0
        %2197 = vmatmul.mubr.f32.gmra.mrb[0].mxu0 %v1988
        %v2198 = vpop.f32.mrb[0].mxu0
        %v2199 = vadd.f32 0.0, %v2198
        %v2200 = vpop.f32.mrb[0].mxu0
        %2201 = vmatprep.mubr.f32.mxu0 0.0
        %2202 = vmatmul.mubr.f32.gmra.mrb[0].mxu0 %v1991
        %v2203 = vpop.f32.mrb[0].mxu0
        %v2204 = vadd.f32 0.0, %v2203
        %v2205 = vpop.f32.mrb[0].mxu0
        %2206 = vmatprep.mubr.f32.mxu0 0.0
        %2207 = vmatmul.mubr.f32.gmra.mrb[0].mxu0 %v1994
        %v2208 = vpop.f32.mrb[0].mxu0
        %v2209 = vadd.f32 0.0, %v2208
        %v2210 = vpop.f32.mrb[0].mxu0
        %2211 = vmatprep.mubr.f32.mxu0 0.0
        %2212 = vmatmul.mubr.f32.gmra.mrb[0].mxu0 %v1997
        %v2213 = vpop.f32.mrb[0].mxu0
        %v2214 = vadd.f32 0.0, %v2213
        %v2215 = vpop.f32.mrb[0].mxu0
        %2216 = vmatprep.mubr.f32.mxu0 0.0
        %2217 = vmatmul.mubr.f32.gmra.mrb[0].mxu0 %v2000
        %v2218 = vpop.f32.mrb[0].mxu0
        %v2219 = vadd.f32 0.0, %v2218
        %v2220 = vpop.f32.mrb[0].mxu0
        %2221 = vmatprep.mubr.f32.mxu0 0.0
        %2222 = vmatmul.mubr.f32.gmra.mrb[0].mxu0 %v2003
        %v2223 = vpop.f32.mrb[0].mxu0
        %v2224 = vadd.f32 0.0, %v2223
        %v2225 = vpop.f32.mrb[0].mxu0
        %2226 = vmatprep.mubr.f32.mxu0 0.0
        %2227 = vmatmul.mubr.f32.gmra.mrb[0].mxu0 %v2006
        %v2228 = vpop.f32.mrb[0].mxu0
        %v2229 = vadd.f32 0.0, %v2228
        %v2230 = vpop.f32.mrb[0].mxu0
        %2231 = vmatprep.mubr.f32.mxu0 0.0
        %2232 = vmatmul.mubr.f32.gmra.mrb[0].mxu0 %v2009
        %v2233 = vpop.f32.mrb[0].mxu0
        %v2234 = vadd.f32 0.0, %v2233
        %v2235 = vpop.f32.mrb[0].mxu0
        %2236 = vmatprep.mubr.f32.mxu0 0.0
        %2237 = vmatmul.mubr.f32.gmra.mrb[0].mxu0 %v2012
        %v2238 = vpop.f32.mrb[0].mxu0
        %v2239 = vadd.f32 0.0, %v2238
        %v2240 = vpop.f32.mrb[0].mxu0
        %2241 = vdwg.mxu0
        %v2242 = vadd.f32 %v1852, %v2084
        %v2243 = vadd.f32 %v1853, %v2089
        %v2244 = vadd.f32 %v1854, %v2094
        %v2245 = vadd.f32 %v1855, %v2099
        %v2246 = vadd.f32 %v1856, %v2104
        %v2247 = vadd.f32 %v1857, %v2109
        %v2248 = vadd.f32 %v1858, %v2114
        %v2249 = vadd.f32 %v1859, %v2119
        %v2250 = vadd.f32 %v1860, %v2124
        %v2251 = vadd.f32 %v1861, %v2129
        %v2252 = vadd.f32 %v1862, %v2134
        %v2253 = vadd.f32 %v1863, %v2139
        %v2254 = vadd.f32 %v1864, %v2144
        %v2255 = vadd.f32 %v1865, %v2149
        %v2256 = vadd.f32 %v1866, %v2154
        %v2257 = vadd.f32 %v1867, %v2159
        %v2258 = vadd.f32 %v1868, %v2164
        %v2259 = vadd.f32 %v1869, %v2169
        %v2260 = vadd.f32 %v1870, %v2174
        %v2261 = vadd.f32 %v1871, %v2179
        %v2262 = vadd.f32 %v1872, %v2184
        %v2263 = vadd.f32 %v1873, %v2189
        %v2264 = vadd.f32 %v1874, %v2194
        %v2265 = vadd.f32 %v1875, %v2199
        %v2266 = vadd.f32 %v1876, %v2204
        %v2267 = vadd.f32 %v1877, %v2209
        %v2268 = vadd.f32 %v1878, %v2214
        %v2269 = vadd.f32 %v1879, %v2219
        %v2270 = vadd.f32 %v1880, %v2224
        %v2271 = vadd.f32 %v1881, %v2229
        %v2272 = vadd.f32 %v1882, %v2234
        %v2273 = vadd.f32 %v1883, %v2239
        %v2274 = vld [vmem:[%s355 + $0x2] sm:$0xff]
        %v2275 = vld [vmem:[%s355 + $0xa] sm:$0xff]
        %v2276 = vld [vmem:[%s355 + $0x1a] sm:$0xff]
        %v2277 = vld [vmem:[%s355 + $0x22] sm:$0xff]
        %v2278 = vld [vmem:[%s355 + $0x32] sm:$0xff]
        %v2279 = vld [vmem:[%s355 + $0x3a] sm:$0xff]
        %v2280 = vld [vmem:[%s355 + $0x4a] sm:$0xff]
        %v2281 = vld [vmem:[%s355 + $0x52] sm:$0xff]
        %v2282 = vld [vmem:[%s355 + $0x62] sm:$0xff]
        %v2283 = vld [vmem:[%s355 + $0x6a] sm:$0xff]
        %v2284 = vld [vmem:[%s355 + $0x7a] sm:$0xff]
        %v2285 = vld [vmem:[%s355 + $0x82] sm:$0xff]
        %v2286 = vld [vmem:[%s355 + $0x92] sm:$0xff]
        %v2287 = vld [vmem:[%s355 + $0x9a] sm:$0xff]
        %v2288 = vld [vmem:[%s355 + $0xaa] sm:$0xff]
        %v2289 = vld [vmem:[%s355 + $0xb2] sm:$0xff]
        %v2290 = vld [vmem:[%s355 + $0xc2] sm:$0xff]
        %v2291 = vld [vmem:[%s355 + $0xca] sm:$0xff]
        %v2292 = vld [vmem:[%s355 + $0xda] sm:$0xff]
        %v2293 = vld [vmem:[%s355 + $0xe2] sm:$0xff]
        %v2294 = vld [vmem:[%s355 + $0xf2] sm:$0xff]
        %v2295 = vld [vmem:[%s355 + $0xfa] sm:$0xff]
        %v2296 = vld [vmem:[%s355 + $0x10a] sm:$0xff]
        %v2297 = vld [vmem:[%s355 + $0x112] sm:$0xff]
        %v2298 = vld [vmem:[%s355 + $0x122] sm:$0xff]
        %v2299 = vld [vmem:[%s355 + $0x12a] sm:$0xff]
        %v2300 = vld [vmem:[%s355 + $0x13a] sm:$0xff]
        %v2301 = vld [vmem:[%s355 + $0x142] sm:$0xff]
        %v2302 = vld [vmem:[%s355 + $0x152] sm:$0xff]
        %v2303 = vld [vmem:[%s355 + $0x15a] sm:$0xff]
        %v2304 = vld [vmem:[%s355 + $0x16a] sm:$0xff]
        %v2305 = vld [vmem:[%s355 + $0x172] sm:$0xff]
        %s2306 = scalar_lea.vmem %s1, 20
        %v2307 = vld [vmem:[%s2306] sm:$0xf]
        %v2309 = vsel %vm277, %v2274, 0
        %v2312 = vsel %vm277, %v2275, 0
        %v2315 = vsel %vm277, %v2276, 0
        %v2318 = vsel %vm277, %v2277, 0
        %v2321 = vsel %vm277, %v2278, 0
        %v2324 = vsel %vm277, %v2279, 0
        %v2327 = vsel %vm277, %v2280, 0
        %v2330 = vsel %vm277, %v2281, 0
        %v2333 = vsel %vm277, %v2282, 0
        %v2336 = vsel %vm277, %v2283, 0
        %v2339 = vsel %vm277, %v2284, 0
        %v2342 = vsel %vm277, %v2285, 0
        %v2345 = vsel %vm277, %v2286, 0
        %v2348 = vsel %vm277, %v2287, 0
        %v2351 = vsel %vm277, %v2288, 0
        %v2354 = vsel %vm277, %v2289, 0
        %v2357 = vsel %vm277, %v2290, 0
        %v2360 = vsel %vm277, %v2291, 0
        %v2363 = vsel %vm277, %v2292, 0
        %v2366 = vsel %vm277, %v2293, 0
        %v2369 = vsel %vm277, %v2294, 0
        %v2372 = vsel %vm277, %v2295, 0
        %v2375 = vsel %vm277, %v2296, 0
        %v2378 = vsel %vm277, %v2297, 0
        %v2381 = vsel %vm277, %v2298, 0
        %v2384 = vsel %vm277, %v2299, 0
        %v2387 = vsel %vm277, %v2300, 0
        %v2390 = vsel %vm277, %v2301, 0
        %v2393 = vsel %vm277, %v2302, 0
        %v2396 = vsel %vm277, %v2303, 0
        %v2399 = vsel %vm277, %v2304, 0
        %v2402 = vsel %vm277, %v2305, 0
        %v2405 = vsel %vm551, %v2307, 0
        %2407 = vmatprep.subr.mxu0 0.0
        %2408 = vmatpush1.msra.mxu0 %v2405
        %2409 = vmatprep.subr.mxu0 0.0
        %2410 = vmatpush1.msra.mxu0 0.0
        %2411 = vmatprep.subr.mxu0 0.0
        %2412 = vmatpush1.msra.mxu0 0.0
        %2413 = vmatprep.subr.mxu0 0.0
        %2414 = vmatpush1.msra.mxu0 0.0
        %2415 = vmatprep.subr.mxu0 0.0
        %2416 = vmatpush1.msra.mxu0 0.0
        %2417 = vmatprep.subr.mxu0 0.0
        %2418 = vmatpush1.msra.mxu0 0.0
        %2419 = vmatprep.subr.mxu0 0.0
        %2420 = vmatpush1.msra.mxu0 0.0
        %2421 = vmatprep.subr.mxu0 0.0
        %2422 = vmatpush1.msra.mxu0 0.0
        %2423 = vmatprep.subr.mxu0 0.0
        %2424 = vmatpush1.msra.mxu0 0.0
        %2425 = vmatprep.subr.mxu0 0.0
        %2426 = vmatpush1.msra.mxu0 0.0
        %2427 = vmatprep.subr.mxu0 0.0
        %2428 = vmatpush1.msra.mxu0 0.0
        %2429 = vmatprep.subr.mxu0 0.0
        %2430 = vmatpush1.msra.mxu0 0.0
        %2431 = vmatprep.subr.mxu0 0.0
        %2432 = vmatpush1.msra.mxu0 0.0
        %2433 = vmatprep.subr.mxu0 0.0
        %2434 = vmatpush1.msra.mxu0 0.0
        %2435 = vmatprep.subr.mxu0 0.0
        %2436 = vmatpush1.msra.mxu0 0.0
        %2437 = vmatprep.subr.mxu0 0.0
        %2438 = vmatpush1.msra.mxu0 0.0
        %2439 = vmatprep.subr.mxu0 0.0
        %2440 = vmatpush1.msra.mxu0 0.0
        %2441 = vmatprep.subr.mxu0 0.0
        %2442 = vmatpush1.msra.mxu0 0.0
        %2443 = vmatprep.subr.mxu0 0.0
        %2444 = vmatpush1.msra.mxu0 0.0
        %2445 = vmatprep.subr.mxu0 0.0
        %2446 = vmatpush1.msra.mxu0 0.0
        %2447 = vmatprep.subr.mxu0 0.0
        %2448 = vmatpush1.msra.mxu0 0.0
        %2449 = vmatprep.subr.mxu0 0.0
        %2450 = vmatpush1.msra.mxu0 0.0
        %2451 = vmatprep.subr.mxu0 0.0
        %2452 = vmatpush1.msra.mxu0 0.0
        %2453 = vmatprep.subr.mxu0 0.0
        %2454 = vmatpush1.msra.mxu0 0.0
        %2455 = vmatprep.subr.mxu0 0.0
        %2456 = vmatpush1.msra.mxu0 0.0
        %2457 = vmatprep.subr.mxu0 0.0
        %2458 = vmatpush1.msra.mxu0 0.0
        %2459 = vmatprep.subr.mxu0 0.0
        %2460 = vmatpush1.msra.mxu0 0.0
        %2461 = vmatprep.subr.mxu0 0.0
        %2462 = vmatpush1.msra.mxu0 0.0
        %2463 = vmatprep.subr.mxu0 0.0
        %2464 = vmatpush1.msra.mxu0 0.0
        %2465 = vmatprep.subr.mxu0 0.0
        %2466 = vmatpush1.msra.mxu0 0.0
        %2467 = vmatprep.subr.mxu0 0.0
        %2468 = vmatpush1.msra.mxu0 0.0
        %2469 = vmatprep.subr.mxu0 0.0
        %2470 = vmatpush1.msra.mxu0 0.0
        %2471 = vmatprep.mubr.f32.mxu0 0.0
        %2472 = vmatmul.mubr.f32.gmra.mrb[0].mxu0 %v2309
        %v2473 = vpop.f32.mrb[0].mxu0
        %v2474 = vadd.f32 0.0, %v2473
        %v2475 = vpop.f32.mrb[0].mxu0
        %2476 = vmatprep.mubr.f32.mxu0 0.0
        %2477 = vmatmul.mubr.f32.gmra.mrb[0].mxu0 %v2312
        %v2478 = vpop.f32.mrb[0].mxu0
        %v2479 = vadd.f32 0.0, %v2478
        %v2480 = vpop.f32.mrb[0].mxu0
        %2481 = vmatprep.mubr.f32.mxu0 0.0
        %2482 = vmatmul.mubr.f32.gmra.mrb[0].mxu0 %v2315
        %v2483 = vpop.f32.mrb[0].mxu0
        %v2484 = vadd.f32 0.0, %v2483
        %v2485 = vpop.f32.mrb[0].mxu0
        %2486 = vmatprep.mubr.f32.mxu0 0.0
        %2487 = vmatmul.mubr.f32.gmra.mrb[0].mxu0 %v2318
        %v2488 = vpop.f32.mrb[0].mxu0
        %v2489 = vadd.f32 0.0, %v2488
        %v2490 = vpop.f32.mrb[0].mxu0
        %2491 = vmatprep.mubr.f32.mxu0 0.0
        %2492 = vmatmul.mubr.f32.gmra.mrb[0].mxu0 %v2321
        %v2493 = vpop.f32.mrb[0].mxu0
        %v2494 = vadd.f32 0.0, %v2493
        %v2495 = vpop.f32.mrb[0].mxu0
        %2496 = vmatprep.mubr.f32.mxu0 0.0
        %2497 = vmatmul.mubr.f32.gmra.mrb[0].mxu0 %v2324
        %v2498 = vpop.f32.mrb[0].mxu0
        %v2499 = vadd.f32 0.0, %v2498
        %v2500 = vpop.f32.mrb[0].mxu0
        %2501 = vmatprep.mubr.f32.mxu0 0.0
        %2502 = vmatmul.mubr.f32.gmra.mrb[0].mxu0 %v2327
        %v2503 = vpop.f32.mrb[0].mxu0
        %v2504 = vadd.f32 0.0, %v2503
        %v2505 = vpop.f32.mrb[0].mxu0
        %2506 = vmatprep.mubr.f32.mxu0 0.0
        %2507 = vmatmul.mubr.f32.gmra.mrb[0].mxu0 %v2330
        %v2508 = vpop.f32.mrb[0].mxu0
        %v2509 = vadd.f32 0.0, %v2508
        %v2510 = vpop.f32.mrb[0].mxu0
        %2511 = vmatprep.mubr.f32.mxu0 0.0
        %2512 = vmatmul.mubr.f32.gmra.mrb[0].mxu0 %v2333
        %v2513 = vpop.f32.mrb[0].mxu0
        %v2514 = vadd.f32 0.0, %v2513
        %v2515 = vpop.f32.mrb[0].mxu0
        %2516 = vmatprep.mubr.f32.mxu0 0.0
        %2517 = vmatmul.mubr.f32.gmra.mrb[0].mxu0 %v2336
        %v2518 = vpop.f32.mrb[0].mxu0
        %v2519 = vadd.f32 0.0, %v2518
        %v2520 = vpop.f32.mrb[0].mxu0
        %2521 = vmatprep.mubr.f32.mxu0 0.0
        %2522 = vmatmul.mubr.f32.gmra.mrb[0].mxu0 %v2339
        %v2523 = vpop.f32.mrb[0].mxu0
        %v2524 = vadd.f32 0.0, %v2523
        %v2525 = vpop.f32.mrb[0].mxu0
        %2526 = vmatprep.mubr.f32.mxu0 0.0
        %2527 = vmatmul.mubr.f32.gmra.mrb[0].mxu0 %v2342
        %v2528 = vpop.f32.mrb[0].mxu0
        %v2529 = vadd.f32 0.0, %v2528
        %v2530 = vpop.f32.mrb[0].mxu0
        %2531 = vmatprep.mubr.f32.mxu0 0.0
        %2532 = vmatmul.mubr.f32.gmra.mrb[0].mxu0 %v2345
        %v2533 = vpop.f32.mrb[0].mxu0
        %v2534 = vadd.f32 0.0, %v2533
        %v2535 = vpop.f32.mrb[0].mxu0
        %2536 = vmatprep.mubr.f32.mxu0 0.0
        %2537 = vmatmul.mubr.f32.gmra.mrb[0].mxu0 %v2348
        %v2538 = vpop.f32.mrb[0].mxu0
        %v2539 = vadd.f32 0.0, %v2538
        %v2540 = vpop.f32.mrb[0].mxu0
        %2541 = vmatprep.mubr.f32.mxu0 0.0
        %2542 = vmatmul.mubr.f32.gmra.mrb[0].mxu0 %v2351
        %v2543 = vpop.f32.mrb[0].mxu0
        %v2544 = vadd.f32 0.0, %v2543
        %v2545 = vpop.f32.mrb[0].mxu0
        %2546 = vmatprep.mubr.f32.mxu0 0.0
        %2547 = vmatmul.mubr.f32.gmra.mrb[0].mxu0 %v2354
        %v2548 = vpop.f32.mrb[0].mxu0
        %v2549 = vadd.f32 0.0, %v2548
        %v2550 = vpop.f32.mrb[0].mxu0
        %2551 = vmatprep.mubr.f32.mxu0 0.0
        %2552 = vmatmul.mubr.f32.gmra.mrb[0].mxu0 %v2357
        %v2553 = vpop.f32.mrb[0].mxu0
        %v2554 = vadd.f32 0.0, %v2553
        %v2555 = vpop.f32.mrb[0].mxu0
        %2556 = vmatprep.mubr.f32.mxu0 0.0
        %2557 = vmatmul.mubr.f32.gmra.mrb[0].mxu0 %v2360
        %v2558 = vpop.f32.mrb[0].mxu0
        %v2559 = vadd.f32 0.0, %v2558
        %v2560 = vpop.f32.mrb[0].mxu0
        %2561 = vmatprep.mubr.f32.mxu0 0.0
        %2562 = vmatmul.mubr.f32.gmra.mrb[0].mxu0 %v2363
        %v2563 = vpop.f32.mrb[0].mxu0
        %v2564 = vadd.f32 0.0, %v2563
        %v2565 = vpop.f32.mrb[0].mxu0
        %2566 = vmatprep.mubr.f32.mxu0 0.0
        %2567 = vmatmul.mubr.f32.gmra.mrb[0].mxu0 %v2366
        %v2568 = vpop.f32.mrb[0].mxu0
        %v2569 = vadd.f32 0.0, %v2568
        %v2570 = vpop.f32.mrb[0].mxu0
        %2571 = vmatprep.mubr.f32.mxu0 0.0
        %2572 = vmatmul.mubr.f32.gmra.mrb[0].mxu0 %v2369
        %v2573 = vpop.f32.mrb[0].mxu0
        %v2574 = vadd.f32 0.0, %v2573
        %v2575 = vpop.f32.mrb[0].mxu0
        %2576 = vmatprep.mubr.f32.mxu0 0.0
        %2577 = vmatmul.mubr.f32.gmra.mrb[0].mxu0 %v2372
        %v2578 = vpop.f32.mrb[0].mxu0
        %v2579 = vadd.f32 0.0, %v2578
        %v2580 = vpop.f32.mrb[0].mxu0
        %2581 = vmatprep.mubr.f32.mxu0 0.0
        %2582 = vmatmul.mubr.f32.gmra.mrb[0].mxu0 %v2375
        %v2583 = vpop.f32.mrb[0].mxu0
        %v2584 = vadd.f32 0.0, %v2583
        %v2585 = vpop.f32.mrb[0].mxu0
        %2586 = vmatprep.mubr.f32.mxu0 0.0
        %2587 = vmatmul.mubr.f32.gmra.mrb[0].mxu0 %v2378
        %v2588 = vpop.f32.mrb[0].mxu0
        %v2589 = vadd.f32 0.0, %v2588
        %v2590 = vpop.f32.mrb[0].mxu0
        %2591 = vmatprep.mubr.f32.mxu0 0.0
        %2592 = vmatmul.mubr.f32.gmra.mrb[0].mxu0 %v2381
        %v2593 = vpop.f32.mrb[0].mxu0
        %v2594 = vadd.f32 0.0, %v2593
        %v2595 = vpop.f32.mrb[0].mxu0
        %2596 = vmatprep.mubr.f32.mxu0 0.0
        %2597 = vmatmul.mubr.f32.gmra.mrb[0].mxu0 %v2384
        %v2598 = vpop.f32.mrb[0].mxu0
        %v2599 = vadd.f32 0.0, %v2598
        %v2600 = vpop.f32.mrb[0].mxu0
        %2601 = vmatprep.mubr.f32.mxu0 0.0
        %2602 = vmatmul.mubr.f32.gmra.mrb[0].mxu0 %v2387
        %v2603 = vpop.f32.mrb[0].mxu0
        %v2604 = vadd.f32 0.0, %v2603
        %v2605 = vpop.f32.mrb[0].mxu0
        %2606 = vmatprep.mubr.f32.mxu0 0.0
        %2607 = vmatmul.mubr.f32.gmra.mrb[0].mxu0 %v2390
        %v2608 = vpop.f32.mrb[0].mxu0
        %v2609 = vadd.f32 0.0, %v2608
        %v2610 = vpop.f32.mrb[0].mxu0
        %2611 = vmatprep.mubr.f32.mxu0 0.0
        %2612 = vmatmul.mubr.f32.gmra.mrb[0].mxu0 %v2393
        %v2613 = vpop.f32.mrb[0].mxu0
        %v2614 = vadd.f32 0.0, %v2613
        %v2615 = vpop.f32.mrb[0].mxu0
        %2616 = vmatprep.mubr.f32.mxu0 0.0
        %2617 = vmatmul.mubr.f32.gmra.mrb[0].mxu0 %v2396
        %v2618 = vpop.f32.mrb[0].mxu0
        %v2619 = vadd.f32 0.0, %v2618
        %v2620 = vpop.f32.mrb[0].mxu0
        %2621 = vmatprep.mubr.f32.mxu0 0.0
        %2622 = vmatmul.mubr.f32.gmra.mrb[0].mxu0 %v2399
        %v2623 = vpop.f32.mrb[0].mxu0
        %v2624 = vadd.f32 0.0, %v2623
        %v2625 = vpop.f32.mrb[0].mxu0
        %2626 = vmatprep.mubr.f32.mxu0 0.0
        %2627 = vmatmul.mubr.f32.gmra.mrb[0].mxu0 %v2402
        %v2628 = vpop.f32.mrb[0].mxu0
        %v2629 = vadd.f32 0.0, %v2628
        %v2630 = vpop.f32.mrb[0].mxu0
        %2631 = vdwg.mxu0
        %v2632 = vadd.f32 %v2242, %v2474
        %v2633 = vadd.f32 %v2243, %v2479
        %v2634 = vadd.f32 %v2244, %v2484
        %v2635 = vadd.f32 %v2245, %v2489
        %v2636 = vadd.f32 %v2246, %v2494
        %v2637 = vadd.f32 %v2247, %v2499
        %v2638 = vadd.f32 %v2248, %v2504
        %v2639 = vadd.f32 %v2249, %v2509
        %v2640 = vadd.f32 %v2250, %v2514
        %v2641 = vadd.f32 %v2251, %v2519
        %v2642 = vadd.f32 %v2252, %v2524
        %v2643 = vadd.f32 %v2253, %v2529
        %v2644 = vadd.f32 %v2254, %v2534
        %v2645 = vadd.f32 %v2255, %v2539
        %v2646 = vadd.f32 %v2256, %v2544
        %v2647 = vadd.f32 %v2257, %v2549
        %v2648 = vadd.f32 %v2258, %v2554
        %v2649 = vadd.f32 %v2259, %v2559
        %v2650 = vadd.f32 %v2260, %v2564
        %v2651 = vadd.f32 %v2261, %v2569
        %v2652 = vadd.f32 %v2262, %v2574
        %v2653 = vadd.f32 %v2263, %v2579
        %v2654 = vadd.f32 %v2264, %v2584
        %v2655 = vadd.f32 %v2265, %v2589
        %v2656 = vadd.f32 %v2266, %v2594
        %v2657 = vadd.f32 %v2267, %v2599
        %v2658 = vadd.f32 %v2268, %v2604
        %v2659 = vadd.f32 %v2269, %v2609
        %v2660 = vadd.f32 %v2270, %v2614
        %v2661 = vadd.f32 %v2271, %v2619
        %v2662 = vadd.f32 %v2272, %v2624
        %v2663 = vadd.f32 %v2273, %v2629
        %s2664 = scalar_lea.vmem [#allocation2], 48
        %v2665 = vld [vmem:[%s2664] sm:$0xff]
        %v2666 = vld [vmem:[%s2664 + $0x8] sm:$0xff]
        %v2667 = vld [vmem:[%s2664 + $0x18] sm:$0xff]
        %v2668 = vld [vmem:[%s2664 + $0x20] sm:$0xff]
        %v2669 = vld [vmem:[%s2664 + $0x30] sm:$0xff]
        %v2670 = vld [vmem:[%s2664 + $0x38] sm:$0xff]
        %v2671 = vld [vmem:[%s2664 + $0x48] sm:$0xff]
        %v2672 = vld [vmem:[%s2664 + $0x50] sm:$0xff]
        %v2673 = vld [vmem:[%s2664 + $0x60] sm:$0xff]
        %v2674 = vld [vmem:[%s2664 + $0x68] sm:$0xff]
        %v2675 = vld [vmem:[%s2664 + $0x78] sm:$0xff]
        %v2676 = vld [vmem:[%s2664 + $0x80] sm:$0xff]
        %v2677 = vld [vmem:[%s2664 + $0x90] sm:$0xff]
        %v2678 = vld [vmem:[%s2664 + $0x98] sm:$0xff]
        %v2679 = vld [vmem:[%s2664 + $0xa8] sm:$0xff]
        %v2680 = vld [vmem:[%s2664 + $0xb0] sm:$0xff]
        %v2681 = vld [vmem:[%s2664 + $0xc0] sm:$0xff]
        %v2682 = vld [vmem:[%s2664 + $0xc8] sm:$0xff]
        %v2683 = vld [vmem:[%s2664 + $0xd8] sm:$0xff]
        %v2684 = vld [vmem:[%s2664 + $0xe0] sm:$0xff]
        %v2685 = vld [vmem:[%s2664 + $0xf0] sm:$0xff]
        %v2686 = vld [vmem:[%s2664 + $0xf8] sm:$0xff]
        %v2687 = vld [vmem:[%s2664 + $0x108] sm:$0xff]
        %v2688 = vld [vmem:[%s2664 + $0x110] sm:$0xff]
        %v2689 = vld [vmem:[%s2664 + $0x120] sm:$0xff]
        %v2690 = vld [vmem:[%s2664 + $0x128] sm:$0xff]
        %v2691 = vld [vmem:[%s2664 + $0x138] sm:$0xff]
        %v2692 = vld [vmem:[%s2664 + $0x140] sm:$0xff]
        %v2693 = vld [vmem:[%s2664 + $0x150] sm:$0xff]
        %v2694 = vld [vmem:[%s2664 + $0x158] sm:$0xff]
        %v2695 = vld [vmem:[%s2664 + $0x168] sm:$0xff]
        %v2696 = vld [vmem:[%s2664 + $0x170] sm:$0xff]
        %s2697 = scalar_lea.vmem %s1, 24
        %v2698 = vld [vmem:[%s2697] sm:$0xf]
        %v2700 = vsel %vm277, %v2665, 0
        %v2703 = vsel %vm277, %v2666, 0
        %v2706 = vsel %vm277, %v2667, 0
        %v2709 = vsel %vm277, %v2668, 0
        %v2712 = vsel %vm277, %v2669, 0
        %v2715 = vsel %vm277, %v2670, 0
        %v2718 = vsel %vm277, %v2671, 0
        %v2721 = vsel %vm277, %v2672, 0
        %v2724 = vsel %vm277, %v2673, 0
        %v2727 = vsel %vm277, %v2674, 0
        %v2730 = vsel %vm277, %v2675, 0
        %v2733 = vsel %vm277, %v2676, 0
        %v2736 = vsel %vm277, %v2677, 0
        %v2739 = vsel %vm277, %v2678, 0
        %v2742 = vsel %vm277, %v2679, 0
        %v2745 = vsel %vm277, %v2680, 0
        %v2748 = vsel %vm277, %v2681, 0
        %v2751 = vsel %vm277, %v2682, 0
        %v2754 = vsel %vm277, %v2683, 0
        %v2757 = vsel %vm277, %v2684, 0
        %v2760 = vsel %vm277, %v2685, 0
        %v2763 = vsel %vm277, %v2686, 0
        %v2766 = vsel %vm277, %v2687, 0
        %v2769 = vsel %vm277, %v2688, 0
        %v2772 = vsel %vm277, %v2689, 0
        %v2775 = vsel %vm277, %v2690, 0
        %v2778 = vsel %vm277, %v2691, 0
        %v2781 = vsel %vm277, %v2692, 0
        %v2784 = vsel %vm277, %v2693, 0
        %v2787 = vsel %vm277, %v2694, 0
        %v2790 = vsel %vm277, %v2695, 0
        %v2793 = vsel %vm277, %v2696, 0
        %v2796 = vsel %vm551, %v2698, 0
        %2798 = vmatprep.subr.mxu0 0.0
        %2799 = vmatpush1.msra.mxu0 %v2796
        %2800 = vmatprep.subr.mxu0 0.0
        %2801 = vmatpush1.msra.mxu0 0.0
        %2802 = vmatprep.subr.mxu0 0.0
        %2803 = vmatpush1.msra.mxu0 0.0
        %2804 = vmatprep.subr.mxu0 0.0
        %2805 = vmatpush1.msra.mxu0 0.0
        %2806 = vmatprep.subr.mxu0 0.0
        %2807 = vmatpush1.msra.mxu0 0.0
        %2808 = vmatprep.subr.mxu0 0.0
        %2809 = vmatpush1.msra.mxu0 0.0
        %2810 = vmatprep.subr.mxu0 0.0
        %2811 = vmatpush1.msra.mxu0 0.0
        %2812 = vmatprep.subr.mxu0 0.0
        %2813 = vmatpush1.msra.mxu0 0.0
        %2814 = vmatprep.subr.mxu0 0.0
        %2815 = vmatpush1.msra.mxu0 0.0
        %2816 = vmatprep.subr.mxu0 0.0
        %2817 = vmatpush1.msra.mxu0 0.0
        %2818 = vmatprep.subr.mxu0 0.0
        %2819 = vmatpush1.msra.mxu0 0.0
        %2820 = vmatprep.subr.mxu0 0.0
        %2821 = vmatpush1.msra.mxu0 0.0
        %2822 = vmatprep.subr.mxu0 0.0
        %2823 = vmatpush1.msra.mxu0 0.0
        %2824 = vmatprep.subr.mxu0 0.0
        %2825 = vmatpush1.msra.mxu0 0.0
        %2826 = vmatprep.subr.mxu0 0.0
        %2827 = vmatpush1.msra.mxu0 0.0
        %2828 = vmatprep.subr.mxu0 0.0
        %2829 = vmatpush1.msra.mxu0 0.0
        %2830 = vmatprep.subr.mxu0 0.0
        %2831 = vmatpush1.msra.mxu0 0.0
        %2832 = vmatprep.subr.mxu0 0.0
        %2833 = vmatpush1.msra.mxu0 0.0
        %2834 = vmatprep.subr.mxu0 0.0
        %2835 = vmatpush1.msra.mxu0 0.0
        %2836 = vmatprep.subr.mxu0 0.0
        %2837 = vmatpush1.msra.mxu0 0.0
        %2838 = vmatprep.subr.mxu0 0.0
        %2839 = vmatpush1.msra.mxu0 0.0
        %2840 = vmatprep.subr.mxu0 0.0
        %2841 = vmatpush1.msra.mxu0 0.0
        %2842 = vmatprep.subr.mxu0 0.0
        %2843 = vmatpush1.msra.mxu0 0.0
        %2844 = vmatprep.subr.mxu0 0.0
        %2845 = vmatpush1.msra.mxu0 0.0
        %2846 = vmatprep.subr.mxu0 0.0
        %2847 = vmatpush1.msra.mxu0 0.0
        %2848 = vmatprep.subr.mxu0 0.0
        %2849 = vmatpush1.msra.mxu0 0.0
        %2850 = vmatprep.subr.mxu0 0.0
        %2851 = vmatpush1.msra.mxu0 0.0
        %2852 = vmatprep.subr.mxu0 0.0
        %2853 = vmatpush1.msra.mxu0 0.0
        %2854 = vmatprep.subr.mxu0 0.0
        %2855 = vmatpush1.msra.mxu0 0.0
        %2856 = vmatprep.subr.mxu0 0.0
        %2857 = vmatpush1.msra.mxu0 0.0
        %2858 = vmatprep.subr.mxu0 0.0
        %2859 = vmatpush1.msra.mxu0 0.0
        %2860 = vmatprep.subr.mxu0 0.0
        %2861 = vmatpush1.msra.mxu0 0.0
        %2862 = vmatprep.mubr.f32.mxu0 0.0
        %2863 = vmatmul.mubr.f32.gmra.mrb[0].mxu0 %v2700
        %v2864 = vpop.f32.mrb[0].mxu0
        %v2865 = vadd.f32 0.0, %v2864
        %v2866 = vpop.f32.mrb[0].mxu0
        %2867 = vmatprep.mubr.f32.mxu0 0.0
        %2868 = vmatmul.mubr.f32.gmra.mrb[0].mxu0 %v2703
        %v2869 = vpop.f32.mrb[0].mxu0
        %v2870 = vadd.f32 0.0, %v2869
        %v2871 = vpop.f32.mrb[0].mxu0
        %2872 = vmatprep.mubr.f32.mxu0 0.0
        %2873 = vmatmul.mubr.f32.gmra.mrb[0].mxu0 %v2706
        %v2874 = vpop.f32.mrb[0].mxu0
        %v2875 = vadd.f32 0.0, %v2874
        %v2876 = vpop.f32.mrb[0].mxu0
        %2877 = vmatprep.mubr.f32.mxu0 0.0
        %2878 = vmatmul.mubr.f32.gmra.mrb[0].mxu0 %v2709
        %v2879 = vpop.f32.mrb[0].mxu0
        %v2880 = vadd.f32 0.0, %v2879
        %v2881 = vpop.f32.mrb[0].mxu0
        %2882 = vmatprep.mubr.f32.mxu0 0.0
        %2883 = vmatmul.mubr.f32.gmra.mrb[0].mxu0 %v2712
        %v2884 = vpop.f32.mrb[0].mxu0
        %v2885 = vadd.f32 0.0, %v2884
        %v2886 = vpop.f32.mrb[0].mxu0
        %2887 = vmatprep.mubr.f32.mxu0 0.0
        %2888 = vmatmul.mubr.f32.gmra.mrb[0].mxu0 %v2715
        %v2889 = vpop.f32.mrb[0].mxu0
        %v2890 = vadd.f32 0.0, %v2889
        %v2891 = vpop.f32.mrb[0].mxu0
        %2892 = vmatprep.mubr.f32.mxu0 0.0
        %2893 = vmatmul.mubr.f32.gmra.mrb[0].mxu0 %v2718
        %v2894 = vpop.f32.mrb[0].mxu0
        %v2895 = vadd.f32 0.0, %v2894
        %v2896 = vpop.f32.mrb[0].mxu0
        %2897 = vmatprep.mubr.f32.mxu0 0.0
        %2898 = vmatmul.mubr.f32.gmra.mrb[0].mxu0 %v2721
        %v2899 = vpop.f32.mrb[0].mxu0
        %v2900 = vadd.f32 0.0, %v2899
        %v2901 = vpop.f32.mrb[0].mxu0
        %2902 = vmatprep.mubr.f32.mxu0 0.0
        %2903 = vmatmul.mubr.f32.gmra.mrb[0].mxu0 %v2724
        %v2904 = vpop.f32.mrb[0].mxu0
        %v2905 = vadd.f32 0.0, %v2904
        %v2906 = vpop.f32.mrb[0].mxu0
        %2907 = vmatprep.mubr.f32.mxu0 0.0
        %2908 = vmatmul.mubr.f32.gmra.mrb[0].mxu0 %v2727
        %v2909 = vpop.f32.mrb[0].mxu0
        %v2910 = vadd.f32 0.0, %v2909
        %v2911 = vpop.f32.mrb[0].mxu0
        %2912 = vmatprep.mubr.f32.mxu0 0.0
        %2913 = vmatmul.mubr.f32.gmra.mrb[0].mxu0 %v2730
        %v2914 = vpop.f32.mrb[0].mxu0
        %v2915 = vadd.f32 0.0, %v2914
        %v2916 = vpop.f32.mrb[0].mxu0
        %2917 = vmatprep.mubr.f32.mxu0 0.0
        %2918 = vmatmul.mubr.f32.gmra.mrb[0].mxu0 %v2733
        %v2919 = vpop.f32.mrb[0].mxu0
        %v2920 = vadd.f32 0.0, %v2919
        %v2921 = vpop.f32.mrb[0].mxu0
        %2922 = vmatprep.mubr.f32.mxu0 0.0
        %2923 = vmatmul.mubr.f32.gmra.mrb[0].mxu0 %v2736
        %v2924 = vpop.f32.mrb[0].mxu0
        %v2925 = vadd.f32 0.0, %v2924
        %v2926 = vpop.f32.mrb[0].mxu0
        %2927 = vmatprep.mubr.f32.mxu0 0.0
        %2928 = vmatmul.mubr.f32.gmra.mrb[0].mxu0 %v2739
        %v2929 = vpop.f32.mrb[0].mxu0
        %v2930 = vadd.f32 0.0, %v2929
        %v2931 = vpop.f32.mrb[0].mxu0
        %2932 = vmatprep.mubr.f32.mxu0 0.0
        %2933 = vmatmul.mubr.f32.gmra.mrb[0].mxu0 %v2742
        %v2934 = vpop.f32.mrb[0].mxu0
        %v2935 = vadd.f32 0.0, %v2934
        %v2936 = vpop.f32.mrb[0].mxu0
        %2937 = vmatprep.mubr.f32.mxu0 0.0
        %2938 = vmatmul.mubr.f32.gmra.mrb[0].mxu0 %v2745
        %v2939 = vpop.f32.mrb[0].mxu0
        %v2940 = vadd.f32 0.0, %v2939
        %v2941 = vpop.f32.mrb[0].mxu0
        %2942 = vmatprep.mubr.f32.mxu0 0.0
        %2943 = vmatmul.mubr.f32.gmra.mrb[0].mxu0 %v2748
        %v2944 = vpop.f32.mrb[0].mxu0
        %v2945 = vadd.f32 0.0, %v2944
        %v2946 = vpop.f32.mrb[0].mxu0
        %2947 = vmatprep.mubr.f32.mxu0 0.0
        %2948 = vmatmul.mubr.f32.gmra.mrb[0].mxu0 %v2751
        %v2949 = vpop.f32.mrb[0].mxu0
        %v2950 = vadd.f32 0.0, %v2949
        %v2951 = vpop.f32.mrb[0].mxu0
        %2952 = vmatprep.mubr.f32.mxu0 0.0
        %2953 = vmatmul.mubr.f32.gmra.mrb[0].mxu0 %v2754
        %v2954 = vpop.f32.mrb[0].mxu0
        %v2955 = vadd.f32 0.0, %v2954
        %v2956 = vpop.f32.mrb[0].mxu0
        %2957 = vmatprep.mubr.f32.mxu0 0.0
        %2958 = vmatmul.mubr.f32.gmra.mrb[0].mxu0 %v2757
        %v2959 = vpop.f32.mrb[0].mxu0
        %v2960 = vadd.f32 0.0, %v2959
        %v2961 = vpop.f32.mrb[0].mxu0
        %2962 = vmatprep.mubr.f32.mxu0 0.0
        %2963 = vmatmul.mubr.f32.gmra.mrb[0].mxu0 %v2760
        %v2964 = vpop.f32.mrb[0].mxu0
        %v2965 = vadd.f32 0.0, %v2964
        %v2966 = vpop.f32.mrb[0].mxu0
        %2967 = vmatprep.mubr.f32.mxu0 0.0
        %2968 = vmatmul.mubr.f32.gmra.mrb[0].mxu0 %v2763
        %v2969 = vpop.f32.mrb[0].mxu0
        %v2970 = vadd.f32 0.0, %v2969
        %v2971 = vpop.f32.mrb[0].mxu0
        %2972 = vmatprep.mubr.f32.mxu0 0.0
        %2973 = vmatmul.mubr.f32.gmra.mrb[0].mxu0 %v2766
        %v2974 = vpop.f32.mrb[0].mxu0
        %v2975 = vadd.f32 0.0, %v2974
        %v2976 = vpop.f32.mrb[0].mxu0
        %2977 = vmatprep.mubr.f32.mxu0 0.0
        %2978 = vmatmul.mubr.f32.gmra.mrb[0].mxu0 %v2769
        %v2979 = vpop.f32.mrb[0].mxu0
        %v2980 = vadd.f32 0.0, %v2979
        %v2981 = vpop.f32.mrb[0].mxu0
        %2982 = vmatprep.mubr.f32.mxu0 0.0
        %2983 = vmatmul.mubr.f32.gmra.mrb[0].mxu0 %v2772
        %v2984 = vpop.f32.mrb[0].mxu0
        %v2985 = vadd.f32 0.0, %v2984
        %v2986 = vpop.f32.mrb[0].mxu0
        %2987 = vmatprep.mubr.f32.mxu0 0.0
        %2988 = vmatmul.mubr.f32.gmra.mrb[0].mxu0 %v2775
        %v2989 = vpop.f32.mrb[0].mxu0
        %v2990 = vadd.f32 0.0, %v2989
        %v2991 = vpop.f32.mrb[0].mxu0
        %2992 = vmatprep.mubr.f32.mxu0 0.0
        %2993 = vmatmul.mubr.f32.gmra.mrb[0].mxu0 %v2778
        %v2994 = vpop.f32.mrb[0].mxu0
        %v2995 = vadd.f32 0.0, %v2994
        %v2996 = vpop.f32.mrb[0].mxu0
        %2997 = vmatprep.mubr.f32.mxu0 0.0
        %2998 = vmatmul.mubr.f32.gmra.mrb[0].mxu0 %v2781
        %v2999 = vpop.f32.mrb[0].mxu0
        %v3000 = vadd.f32 0.0, %v2999
        %v3001 = vpop.f32.mrb[0].mxu0
        %3002 = vmatprep.mubr.f32.mxu0 0.0
        %3003 = vmatmul.mubr.f32.gmra.mrb[0].mxu0 %v2784
        %v3004 = vpop.f32.mrb[0].mxu0
        %v3005 = vadd.f32 0.0, %v3004
        %v3006 = vpop.f32.mrb[0].mxu0
        %3007 = vmatprep.mubr.f32.mxu0 0.0
        %3008 = vmatmul.mubr.f32.gmra.mrb[0].mxu0 %v2787
        %v3009 = vpop.f32.mrb[0].mxu0
        %v3010 = vadd.f32 0.0, %v3009
        %v3011 = vpop.f32.mrb[0].mxu0
        %3012 = vmatprep.mubr.f32.mxu0 0.0
        %3013 = vmatmul.mubr.f32.gmra.mrb[0].mxu0 %v2790
        %v3014 = vpop.f32.mrb[0].mxu0
        %v3015 = vadd.f32 0.0, %v3014
        %v3016 = vpop.f32.mrb[0].mxu0
        %3017 = vmatprep.mubr.f32.mxu0 0.0
        %3018 = vmatmul.mubr.f32.gmra.mrb[0].mxu0 %v2793
        %v3019 = vpop.f32.mrb[0].mxu0
        %v3020 = vadd.f32 0.0, %v3019
        %v3021 = vpop.f32.mrb[0].mxu0
        %3022 = vdwg.mxu0
        %v3023 = vadd.f32 %v2632, %v2865
        %v3024 = vadd.f32 %v2633, %v2870
        %v3025 = vadd.f32 %v2634, %v2875
        %v3026 = vadd.f32 %v2635, %v2880
        %v3027 = vadd.f32 %v2636, %v2885
        %v3028 = vadd.f32 %v2637, %v2890
        %v3029 = vadd.f32 %v2638, %v2895
        %v3030 = vadd.f32 %v2639, %v2900
        %v3031 = vadd.f32 %v2640, %v2905
        %v3032 = vadd.f32 %v2641, %v2910
        %v3033 = vadd.f32 %v2642, %v2915
        %v3034 = vadd.f32 %v2643, %v2920
        %v3035 = vadd.f32 %v2644, %v2925
        %v3036 = vadd.f32 %v2645, %v2930
        %v3037 = vadd.f32 %v2646, %v2935
        %v3038 = vadd.f32 %v2647, %v2940
        %v3039 = vadd.f32 %v2648, %v2945
        %v3040 = vadd.f32 %v2649, %v2950
        %v3041 = vadd.f32 %v2650, %v2955
        %v3042 = vadd.f32 %v2651, %v2960
        %v3043 = vadd.f32 %v2652, %v2965
        %v3044 = vadd.f32 %v2653, %v2970
        %v3045 = vadd.f32 %v2654, %v2975
        %v3046 = vadd.f32 %v2655, %v2980
        %v3047 = vadd.f32 %v2656, %v2985
        %v3048 = vadd.f32 %v2657, %v2990
        %v3049 = vadd.f32 %v2658, %v2995
        %v3050 = vadd.f32 %v2659, %v3000
        %v3051 = vadd.f32 %v2660, %v3005
        %v3052 = vadd.f32 %v2661, %v3010
        %v3053 = vadd.f32 %v2662, %v3015
        %v3054 = vadd.f32 %v2663, %v3020
        %v3055 = vld [vmem:[%s2664 + $0x1] sm:$0xff]
        %v3056 = vld [vmem:[%s2664 + $0x9] sm:$0xff]
        %v3057 = vld [vmem:[%s2664 + $0x19] sm:$0xff]
        %v3058 = vld [vmem:[%s2664 + $0x21] sm:$0xff]
        %v3059 = vld [vmem:[%s2664 + $0x31] sm:$0xff]
        %v3060 = vld [vmem:[%s2664 + $0x39] sm:$0xff]
        %v3061 = vld [vmem:[%s2664 + $0x49] sm:$0xff]
        %v3062 = vld [vmem:[%s2664 + $0x51] sm:$0xff]
        %v3063 = vld [vmem:[%s2664 + $0x61] sm:$0xff]
        %v3064 = vld [vmem:[%s2664 + $0x69] sm:$0xff]
        %v3065 = vld [vmem:[%s2664 + $0x79] sm:$0xff]
        %v3066 = vld [vmem:[%s2664 + $0x81] sm:$0xff]
        %v3067 = vld [vmem:[%s2664 + $0x91] sm:$0xff]
        %v3068 = vld [vmem:[%s2664 + $0x99] sm:$0xff]
        %v3069 = vld [vmem:[%s2664 + $0xa9] sm:$0xff]
        %v3070 = vld [vmem:[%s2664 + $0xb1] sm:$0xff]
        %v3071 = vld [vmem:[%s2664 + $0xc1] sm:$0xff]
        %v3072 = vld [vmem:[%s2664 + $0xc9] sm:$0xff]
        %v3073 = vld [vmem:[%s2664 + $0xd9] sm:$0xff]
        %v3074 = vld [vmem:[%s2664 + $0xe1] sm:$0xff]
        %v3075 = vld [vmem:[%s2664 + $0xf1] sm:$0xff]
        %v3076 = vld [vmem:[%s2664 + $0xf9] sm:$0xff]
        %v3077 = vld [vmem:[%s2664 + $0x109] sm:$0xff]
        %v3078 = vld [vmem:[%s2664 + $0x111] sm:$0xff]
        %v3079 = vld [vmem:[%s2664 + $0x121] sm:$0xff]
        %v3080 = vld [vmem:[%s2664 + $0x129] sm:$0xff]
        %v3081 = vld [vmem:[%s2664 + $0x139] sm:$0xff]
        %v3082 = vld [vmem:[%s2664 + $0x141] sm:$0xff]
        %v3083 = vld [vmem:[%s2664 + $0x151] sm:$0xff]
        %v3084 = vld [vmem:[%s2664 + $0x159] sm:$0xff]
        %v3085 = vld [vmem:[%s2664 + $0x169] sm:$0xff]
        %v3086 = vld [vmem:[%s2664 + $0x171] sm:$0xff]
        %s3087 = scalar_lea.vmem %s1, 28
        %v3088 = vld [vmem:[%s3087] sm:$0xf]
        %v3090 = vsel %vm277, %v3055, 0
        %v3093 = vsel %vm277, %v3056, 0
        %v3096 = vsel %vm277, %v3057, 0
        %v3099 = vsel %vm277, %v3058, 0
        %v3102 = vsel %vm277, %v3059, 0
        %v3105 = vsel %vm277, %v3060, 0
        %v3108 = vsel %vm277, %v3061, 0
        %v3111 = vsel %vm277, %v3062, 0
        %v3114 = vsel %vm277, %v3063, 0
        %v3117 = vsel %vm277, %v3064, 0
        %v3120 = vsel %vm277, %v3065, 0
        %v3123 = vsel %vm277, %v3066, 0
        %v3126 = vsel %vm277, %v3067, 0
        %v3129 = vsel %vm277, %v3068, 0
        %v3132 = vsel %vm277, %v3069, 0
        %v3135 = vsel %vm277, %v3070, 0
        %v3138 = vsel %vm277, %v3071, 0
        %v3141 = vsel %vm277, %v3072, 0
        %v3144 = vsel %vm277, %v3073, 0
        %v3147 = vsel %vm277, %v3074, 0
        %v3150 = vsel %vm277, %v3075, 0
        %v3153 = vsel %vm277, %v3076, 0
        %v3156 = vsel %vm277, %v3077, 0
        %v3159 = vsel %vm277, %v3078, 0
        %v3162 = vsel %vm277, %v3079, 0
        %v3165 = vsel %vm277, %v3080, 0
        %v3168 = vsel %vm277, %v3081, 0
        %v3171 = vsel %vm277, %v3082, 0
        %v3174 = vsel %vm277, %v3083, 0
        %v3177 = vsel %vm277, %v3084, 0
        %v3180 = vsel %vm277, %v3085, 0
        %v3183 = vsel %vm277, %v3086, 0
        %v3186 = vsel %vm551, %v3088, 0
        %3188 = vmatprep.subr.mxu0 0.0
        %3189 = vmatpush1.msra.mxu0 %v3186
        %3190 = vmatprep.subr.mxu0 0.0
        %3191 = vmatpush1.msra.mxu0 0.0
        %3192 = vmatprep.subr.mxu0 0.0
        %3193 = vmatpush1.msra.mxu0 0.0
        %3194 = vmatprep.subr.mxu0 0.0
        %3195 = vmatpush1.msra.mxu0 0.0
        %3196 = vmatprep.subr.mxu0 0.0
        %3197 = vmatpush1.msra.mxu0 0.0
        %3198 = vmatprep.subr.mxu0 0.0
        %3199 = vmatpush1.msra.mxu0 0.0
        %3200 = vmatprep.subr.mxu0 0.0
        %3201 = vmatpush1.msra.mxu0 0.0
        %3202 = vmatprep.subr.mxu0 0.0
        %3203 = vmatpush1.msra.mxu0 0.0
        %3204 = vmatprep.subr.mxu0 0.0
        %3205 = vmatpush1.msra.mxu0 0.0
        %3206 = vmatprep.subr.mxu0 0.0
        %3207 = vmatpush1.msra.mxu0 0.0
        %3208 = vmatprep.subr.mxu0 0.0
        %3209 = vmatpush1.msra.mxu0 0.0
        %3210 = vmatprep.subr.mxu0 0.0
        %3211 = vmatpush1.msra.mxu0 0.0
        %3212 = vmatprep.subr.mxu0 0.0
        %3213 = vmatpush1.msra.mxu0 0.0
        %3214 = vmatprep.subr.mxu0 0.0
        %3215 = vmatpush1.msra.mxu0 0.0
        %3216 = vmatprep.subr.mxu0 0.0
        %3217 = vmatpush1.msra.mxu0 0.0
        %3218 = vmatprep.subr.mxu0 0.0
        %3219 = vmatpush1.msra.mxu0 0.0
        %3220 = vmatprep.subr.mxu0 0.0
        %3221 = vmatpush1.msra.mxu0 0.0
        %3222 = vmatprep.subr.mxu0 0.0
        %3223 = vmatpush1.msra.mxu0 0.0
        %3224 = vmatprep.subr.mxu0 0.0
        %3225 = vmatpush1.msra.mxu0 0.0
        %3226 = vmatprep.subr.mxu0 0.0
        %3227 = vmatpush1.msra.mxu0 0.0
        %3228 = vmatprep.subr.mxu0 0.0
        %3229 = vmatpush1.msra.mxu0 0.0
        %3230 = vmatprep.subr.mxu0 0.0
        %3231 = vmatpush1.msra.mxu0 0.0
        %3232 = vmatprep.subr.mxu0 0.0
        %3233 = vmatpush1.msra.mxu0 0.0
        %3234 = vmatprep.subr.mxu0 0.0
        %3235 = vmatpush1.msra.mxu0 0.0
        %3236 = vmatprep.subr.mxu0 0.0
        %3237 = vmatpush1.msra.mxu0 0.0
        %3238 = vmatprep.subr.mxu0 0.0
        %3239 = vmatpush1.msra.mxu0 0.0
        %3240 = vmatprep.subr.mxu0 0.0
        %3241 = vmatpush1.msra.mxu0 0.0
        %3242 = vmatprep.subr.mxu0 0.0
        %3243 = vmatpush1.msra.mxu0 0.0
        %3244 = vmatprep.subr.mxu0 0.0
        %3245 = vmatpush1.msra.mxu0 0.0
        %3246 = vmatprep.subr.mxu0 0.0
        %3247 = vmatpush1.msra.mxu0 0.0
        %3248 = vmatprep.subr.mxu0 0.0
        %3249 = vmatpush1.msra.mxu0 0.0
        %3250 = vmatprep.subr.mxu0 0.0
        %3251 = vmatpush1.msra.mxu0 0.0
        %3252 = vmatprep.mubr.f32.mxu0 0.0
        %3253 = vmatmul.mubr.f32.gmra.mrb[0].mxu0 %v3090
        %v3254 = vpop.f32.mrb[0].mxu0
        %v3255 = vadd.f32 0.0, %v3254
        %v3256 = vpop.f32.mrb[0].mxu0
        %3257 = vmatprep.mubr.f32.mxu0 0.0
        %3258 = vmatmul.mubr.f32.gmra.mrb[0].mxu0 %v3093
        %v3259 = vpop.f32.mrb[0].mxu0
        %v3260 = vadd.f32 0.0, %v3259
        %v3261 = vpop.f32.mrb[0].mxu0
        %3262 = vmatprep.mubr.f32.mxu0 0.0
        %3263 = vmatmul.mubr.f32.gmra.mrb[0].mxu0 %v3096
        %v3264 = vpop.f32.mrb[0].mxu0
        %v3265 = vadd.f32 0.0, %v3264
        %v3266 = vpop.f32.mrb[0].mxu0
        %3267 = vmatprep.mubr.f32.mxu0 0.0
        %3268 = vmatmul.mubr.f32.gmra.mrb[0].mxu0 %v3099
        %v3269 = vpop.f32.mrb[0].mxu0
        %v3270 = vadd.f32 0.0, %v3269
        %v3271 = vpop.f32.mrb[0].mxu0
        %3272 = vmatprep.mubr.f32.mxu0 0.0
        %3273 = vmatmul.mubr.f32.gmra.mrb[0].mxu0 %v3102
        %v3274 = vpop.f32.mrb[0].mxu0
        %v3275 = vadd.f32 0.0, %v3274
        %v3276 = vpop.f32.mrb[0].mxu0
        %3277 = vmatprep.mubr.f32.mxu0 0.0
        %3278 = vmatmul.mubr.f32.gmra.mrb[0].mxu0 %v3105
        %v3279 = vpop.f32.mrb[0].mxu0
        %v3280 = vadd.f32 0.0, %v3279
        %v3281 = vpop.f32.mrb[0].mxu0
        %3282 = vmatprep.mubr.f32.mxu0 0.0
        %3283 = vmatmul.mubr.f32.gmra.mrb[0].mxu0 %v3108
        %v3284 = vpop.f32.mrb[0].mxu0
        %v3285 = vadd.f32 0.0, %v3284
        %v3286 = vpop.f32.mrb[0].mxu0
        %3287 = vmatprep.mubr.f32.mxu0 0.0
        %3288 = vmatmul.mubr.f32.gmra.mrb[0].mxu0 %v3111
        %v3289 = vpop.f32.mrb[0].mxu0
        %v3290 = vadd.f32 0.0, %v3289
        %v3291 = vpop.f32.mrb[0].mxu0
        %3292 = vmatprep.mubr.f32.mxu0 0.0
        %3293 = vmatmul.mubr.f32.gmra.mrb[0].mxu0 %v3114
        %v3294 = vpop.f32.mrb[0].mxu0
        %v3295 = vadd.f32 0.0, %v3294
        %v3296 = vpop.f32.mrb[0].mxu0
        %3297 = vmatprep.mubr.f32.mxu0 0.0
        %3298 = vmatmul.mubr.f32.gmra.mrb[0].mxu0 %v3117
        %v3299 = vpop.f32.mrb[0].mxu0
        %v3300 = vadd.f32 0.0, %v3299
        %v3301 = vpop.f32.mrb[0].mxu0
        %3302 = vmatprep.mubr.f32.mxu0 0.0
        %3303 = vmatmul.mubr.f32.gmra.mrb[0].mxu0 %v3120
        %v3304 = vpop.f32.mrb[0].mxu0
        %v3305 = vadd.f32 0.0, %v3304
        %v3306 = vpop.f32.mrb[0].mxu0
        %3307 = vmatprep.mubr.f32.mxu0 0.0
        %3308 = vmatmul.mubr.f32.gmra.mrb[0].mxu0 %v3123
        %v3309 = vpop.f32.mrb[0].mxu0
        %v3310 = vadd.f32 0.0, %v3309
        %v3311 = vpop.f32.mrb[0].mxu0
        %3312 = vmatprep.mubr.f32.mxu0 0.0
        %3313 = vmatmul.mubr.f32.gmra.mrb[0].mxu0 %v3126
        %v3314 = vpop.f32.mrb[0].mxu0
        %v3315 = vadd.f32 0.0, %v3314
        %v3316 = vpop.f32.mrb[0].mxu0
        %3317 = vmatprep.mubr.f32.mxu0 0.0
        %3318 = vmatmul.mubr.f32.gmra.mrb[0].mxu0 %v3129
        %v3319 = vpop.f32.mrb[0].mxu0
        %v3320 = vadd.f32 0.0, %v3319
        %v3321 = vpop.f32.mrb[0].mxu0
        %3322 = vmatprep.mubr.f32.mxu0 0.0
        %3323 = vmatmul.mubr.f32.gmra.mrb[0].mxu0 %v3132
        %v3324 = vpop.f32.mrb[0].mxu0
        %v3325 = vadd.f32 0.0, %v3324
        %v3326 = vpop.f32.mrb[0].mxu0
        %3327 = vmatprep.mubr.f32.mxu0 0.0
        %3328 = vmatmul.mubr.f32.gmra.mrb[0].mxu0 %v3135
        %v3329 = vpop.f32.mrb[0].mxu0
        %v3330 = vadd.f32 0.0, %v3329
        %v3331 = vpop.f32.mrb[0].mxu0
        %3332 = vmatprep.mubr.f32.mxu0 0.0
        %3333 = vmatmul.mubr.f32.gmra.mrb[0].mxu0 %v3138
        %v3334 = vpop.f32.mrb[0].mxu0
        %v3335 = vadd.f32 0.0, %v3334
        %v3336 = vpop.f32.mrb[0].mxu0
        %3337 = vmatprep.mubr.f32.mxu0 0.0
        %3338 = vmatmul.mubr.f32.gmra.mrb[0].mxu0 %v3141
        %v3339 = vpop.f32.mrb[0].mxu0
        %v3340 = vadd.f32 0.0, %v3339
        %v3341 = vpop.f32.mrb[0].mxu0
        %3342 = vmatprep.mubr.f32.mxu0 0.0
        %3343 = vmatmul.mubr.f32.gmra.mrb[0].mxu0 %v3144
        %v3344 = vpop.f32.mrb[0].mxu0
        %v3345 = vadd.f32 0.0, %v3344
        %v3346 = vpop.f32.mrb[0].mxu0
        %3347 = vmatprep.mubr.f32.mxu0 0.0
        %3348 = vmatmul.mubr.f32.gmra.mrb[0].mxu0 %v3147
        %v3349 = vpop.f32.mrb[0].mxu0
        %v3350 = vadd.f32 0.0, %v3349
        %v3351 = vpop.f32.mrb[0].mxu0
        %3352 = vmatprep.mubr.f32.mxu0 0.0
        %3353 = vmatmul.mubr.f32.gmra.mrb[0].mxu0 %v3150
        %v3354 = vpop.f32.mrb[0].mxu0
        %v3355 = vadd.f32 0.0, %v3354
        %v3356 = vpop.f32.mrb[0].mxu0
        %3357 = vmatprep.mubr.f32.mxu0 0.0
        %3358 = vmatmul.mubr.f32.gmra.mrb[0].mxu0 %v3153
        %v3359 = vpop.f32.mrb[0].mxu0
        %v3360 = vadd.f32 0.0, %v3359
        %v3361 = vpop.f32.mrb[0].mxu0
        %3362 = vmatprep.mubr.f32.mxu0 0.0
        %3363 = vmatmul.mubr.f32.gmra.mrb[0].mxu0 %v3156
        %v3364 = vpop.f32.mrb[0].mxu0
        %v3365 = vadd.f32 0.0, %v3364
        %v3366 = vpop.f32.mrb[0].mxu0
        %3367 = vmatprep.mubr.f32.mxu0 0.0
        %3368 = vmatmul.mubr.f32.gmra.mrb[0].mxu0 %v3159
        %v3369 = vpop.f32.mrb[0].mxu0
        %v3370 = vadd.f32 0.0, %v3369
        %v3371 = vpop.f32.mrb[0].mxu0
        %3372 = vmatprep.mubr.f32.mxu0 0.0
        %3373 = vmatmul.mubr.f32.gmra.mrb[0].mxu0 %v3162
        %v3374 = vpop.f32.mrb[0].mxu0
        %v3375 = vadd.f32 0.0, %v3374
        %v3376 = vpop.f32.mrb[0].mxu0
        %3377 = vmatprep.mubr.f32.mxu0 0.0
        %3378 = vmatmul.mubr.f32.gmra.mrb[0].mxu0 %v3165
        %v3379 = vpop.f32.mrb[0].mxu0
        %v3380 = vadd.f32 0.0, %v3379
        %v3381 = vpop.f32.mrb[0].mxu0
        %3382 = vmatprep.mubr.f32.mxu0 0.0
        %3383 = vmatmul.mubr.f32.gmra.mrb[0].mxu0 %v3168
        %v3384 = vpop.f32.mrb[0].mxu0
        %v3385 = vadd.f32 0.0, %v3384
        %v3386 = vpop.f32.mrb[0].mxu0
        %3387 = vmatprep.mubr.f32.mxu0 0.0
        %3388 = vmatmul.mubr.f32.gmra.mrb[0].mxu0 %v3171
        %v3389 = vpop.f32.mrb[0].mxu0
        %v3390 = vadd.f32 0.0, %v3389
        %v3391 = vpop.f32.mrb[0].mxu0
        %3392 = vmatprep.mubr.f32.mxu0 0.0
        %3393 = vmatmul.mubr.f32.gmra.mrb[0].mxu0 %v3174
        %v3394 = vpop.f32.mrb[0].mxu0
        %v3395 = vadd.f32 0.0, %v3394
        %v3396 = vpop.f32.mrb[0].mxu0
        %3397 = vmatprep.mubr.f32.mxu0 0.0
        %3398 = vmatmul.mubr.f32.gmra.mrb[0].mxu0 %v3177
        %v3399 = vpop.f32.mrb[0].mxu0
        %v3400 = vadd.f32 0.0, %v3399
        %v3401 = vpop.f32.mrb[0].mxu0
        %3402 = vmatprep.mubr.f32.mxu0 0.0
        %3403 = vmatmul.mubr.f32.gmra.mrb[0].mxu0 %v3180
        %v3404 = vpop.f32.mrb[0].mxu0
        %v3405 = vadd.f32 0.0, %v3404
        %v3406 = vpop.f32.mrb[0].mxu0
        %3407 = vmatprep.mubr.f32.mxu0 0.0
        %3408 = vmatmul.mubr.f32.gmra.mrb[0].mxu0 %v3183
        %v3409 = vpop.f32.mrb[0].mxu0
        %v3410 = vadd.f32 0.0, %v3409
        %v3411 = vpop.f32.mrb[0].mxu0
        %3412 = vdwg.mxu0
        %v3413 = vadd.f32 %v3023, %v3255
        %v3414 = vadd.f32 %v3024, %v3260
        %v3415 = vadd.f32 %v3025, %v3265
        %v3416 = vadd.f32 %v3026, %v3270
        %v3417 = vadd.f32 %v3027, %v3275
        %v3418 = vadd.f32 %v3028, %v3280
        %v3419 = vadd.f32 %v3029, %v3285
        %v3420 = vadd.f32 %v3030, %v3290
        %v3421 = vadd.f32 %v3031, %v3295
        %v3422 = vadd.f32 %v3032, %v3300
        %v3423 = vadd.f32 %v3033, %v3305
        %v3424 = vadd.f32 %v3034, %v3310
        %v3425 = vadd.f32 %v3035, %v3315
        %v3426 = vadd.f32 %v3036, %v3320
        %v3427 = vadd.f32 %v3037, %v3325
        %v3428 = vadd.f32 %v3038, %v3330
        %v3429 = vadd.f32 %v3039, %v3335
        %v3430 = vadd.f32 %v3040, %v3340
        %v3431 = vadd.f32 %v3041, %v3345
        %v3432 = vadd.f32 %v3042, %v3350
        %v3433 = vadd.f32 %v3043, %v3355
        %v3434 = vadd.f32 %v3044, %v3360
        %v3435 = vadd.f32 %v3045, %v3365
        %v3436 = vadd.f32 %v3046, %v3370
        %v3437 = vadd.f32 %v3047, %v3375
        %v3438 = vadd.f32 %v3048, %v3380
        %v3439 = vadd.f32 %v3049, %v3385
        %v3440 = vadd.f32 %v3050, %v3390
        %v3441 = vadd.f32 %v3051, %v3395
        %v3442 = vadd.f32 %v3052, %v3400
        %v3443 = vadd.f32 %v3053, %v3405
        %v3444 = vadd.f32 %v3054, %v3410
        %v3445 = vld [vmem:[%s2664 + $0x2] sm:$0xff]
        %v3446 = vld [vmem:[%s2664 + $0xa] sm:$0xff]
        %v3447 = vld [vmem:[%s2664 + $0x1a] sm:$0xff]
        %v3448 = vld [vmem:[%s2664 + $0x22] sm:$0xff]
        %v3449 = vld [vmem:[%s2664 + $0x32] sm:$0xff]
        %v3450 = vld [vmem:[%s2664 + $0x3a] sm:$0xff]
        %v3451 = vld [vmem:[%s2664 + $0x4a] sm:$0xff]
        %v3452 = vld [vmem:[%s2664 + $0x52] sm:$0xff]
        %v3453 = vld [vmem:[%s2664 + $0x62] sm:$0xff]
        %v3454 = vld [vmem:[%s2664 + $0x6a] sm:$0xff]
        %v3455 = vld [vmem:[%s2664 + $0x7a] sm:$0xff]
        %v3456 = vld [vmem:[%s2664 + $0x82] sm:$0xff]
        %v3457 = vld [vmem:[%s2664 + $0x92] sm:$0xff]
        %v3458 = vld [vmem:[%s2664 + $0x9a] sm:$0xff]
        %v3459 = vld [vmem:[%s2664 + $0xaa] sm:$0xff]
        %v3460 = vld [vmem:[%s2664 + $0xb2] sm:$0xff]
        %v3461 = vld [vmem:[%s2664 + $0xc2] sm:$0xff]
        %v3462 = vld [vmem:[%s2664 + $0xca] sm:$0xff]
        %v3463 = vld [vmem:[%s2664 + $0xda] sm:$0xff]
        %v3464 = vld [vmem:[%s2664 + $0xe2] sm:$0xff]
        %v3465 = vld [vmem:[%s2664 + $0xf2] sm:$0xff]
        %v3466 = vld [vmem:[%s2664 + $0xfa] sm:$0xff]
        %v3467 = vld [vmem:[%s2664 + $0x10a] sm:$0xff]
        %v3468 = vld [vmem:[%s2664 + $0x112] sm:$0xff]
        %v3469 = vld [vmem:[%s2664 + $0x122] sm:$0xff]
        %v3470 = vld [vmem:[%s2664 + $0x12a] sm:$0xff]
        %v3471 = vld [vmem:[%s2664 + $0x13a] sm:$0xff]
        %v3472 = vld [vmem:[%s2664 + $0x142] sm:$0xff]
        %v3473 = vld [vmem:[%s2664 + $0x152] sm:$0xff]
        %v3474 = vld [vmem:[%s2664 + $0x15a] sm:$0xff]
        %v3475 = vld [vmem:[%s2664 + $0x16a] sm:$0xff]
        %v3476 = vld [vmem:[%s2664 + $0x172] sm:$0xff]
        %s3477 = scalar_lea.vmem %s1, 32
        %v3478 = vld [vmem:[%s3477] sm:$0xf]
        %v3480 = vsel %vm277, %v3445, 0
        %v3483 = vsel %vm277, %v3446, 0
        %v3486 = vsel %vm277, %v3447, 0
        %v3489 = vsel %vm277, %v3448, 0
        %v3492 = vsel %vm277, %v3449, 0
        %v3495 = vsel %vm277, %v3450, 0
        %v3498 = vsel %vm277, %v3451, 0
        %v3501 = vsel %vm277, %v3452, 0
        %v3504 = vsel %vm277, %v3453, 0
        %v3507 = vsel %vm277, %v3454, 0
        %v3510 = vsel %vm277, %v3455, 0
        %v3513 = vsel %vm277, %v3456, 0
        %v3516 = vsel %vm277, %v3457, 0
        %v3519 = vsel %vm277, %v3458, 0
        %v3522 = vsel %vm277, %v3459, 0
        %v3525 = vsel %vm277, %v3460, 0
        %v3528 = vsel %vm277, %v3461, 0
        %v3531 = vsel %vm277, %v3462, 0
        %v3534 = vsel %vm277, %v3463, 0
        %v3537 = vsel %vm277, %v3464, 0
        %v3540 = vsel %vm277, %v3465, 0
        %v3543 = vsel %vm277, %v3466, 0
        %v3546 = vsel %vm277, %v3467, 0
        %v3549 = vsel %vm277, %v3468, 0
        %v3552 = vsel %vm277, %v3469, 0
        %v3555 = vsel %vm277, %v3470, 0
        %v3558 = vsel %vm277, %v3471, 0
        %v3561 = vsel %vm277, %v3472, 0
        %v3564 = vsel %vm277, %v3473, 0
        %v3567 = vsel %vm277, %v3474, 0
        %v3570 = vsel %vm277, %v3475, 0
        %v3573 = vsel %vm277, %v3476, 0
        %v3576 = vsel %vm551, %v3478, 0
        %3578 = vmatprep.subr.mxu0 0.0
        %3579 = vmatpush1.msra.mxu0 %v3576
        %3580 = vmatprep.subr.mxu0 0.0
        %3581 = vmatpush1.msra.mxu0 0.0
        %3582 = vmatprep.subr.mxu0 0.0
        %3583 = vmatpush1.msra.mxu0 0.0
        %3584 = vmatprep.subr.mxu0 0.0
        %3585 = vmatpush1.msra.mxu0 0.0
        %3586 = vmatprep.subr.mxu0 0.0
        %3587 = vmatpush1.msra.mxu0 0.0
        %3588 = vmatprep.subr.mxu0 0.0
        %3589 = vmatpush1.msra.mxu0 0.0
        %3590 = vmatprep.subr.mxu0 0.0
        %3591 = vmatpush1.msra.mxu0 0.0
        %3592 = vmatprep.subr.mxu0 0.0
        %3593 = vmatpush1.msra.mxu0 0.0
        %3594 = vmatprep.subr.mxu0 0.0
        %3595 = vmatpush1.msra.mxu0 0.0
        %3596 = vmatprep.subr.mxu0 0.0
        %3597 = vmatpush1.msra.mxu0 0.0
        %3598 = vmatprep.subr.mxu0 0.0
        %3599 = vmatpush1.msra.mxu0 0.0
        %3600 = vmatprep.subr.mxu0 0.0
        %3601 = vmatpush1.msra.mxu0 0.0
        %3602 = vmatprep.subr.mxu0 0.0
        %3603 = vmatpush1.msra.mxu0 0.0
        %3604 = vmatprep.subr.mxu0 0.0
        %3605 = vmatpush1.msra.mxu0 0.0
        %3606 = vmatprep.subr.mxu0 0.0
        %3607 = vmatpush1.msra.mxu0 0.0
        %3608 = vmatprep.subr.mxu0 0.0
        %3609 = vmatpush1.msra.mxu0 0.0
        %3610 = vmatprep.subr.mxu0 0.0
        %3611 = vmatpush1.msra.mxu0 0.0
        %3612 = vmatprep.subr.mxu0 0.0
        %3613 = vmatpush1.msra.mxu0 0.0
        %3614 = vmatprep.subr.mxu0 0.0
        %3615 = vmatpush1.msra.mxu0 0.0
        %3616 = vmatprep.subr.mxu0 0.0
        %3617 = vmatpush1.msra.mxu0 0.0
        %3618 = vmatprep.subr.mxu0 0.0
        %3619 = vmatpush1.msra.mxu0 0.0
        %3620 = vmatprep.subr.mxu0 0.0
        %3621 = vmatpush1.msra.mxu0 0.0
        %3622 = vmatprep.subr.mxu0 0.0
        %3623 = vmatpush1.msra.mxu0 0.0
        %3624 = vmatprep.subr.mxu0 0.0
        %3625 = vmatpush1.msra.mxu0 0.0
        %3626 = vmatprep.subr.mxu0 0.0
        %3627 = vmatpush1.msra.mxu0 0.0
        %3628 = vmatprep.subr.mxu0 0.0
        %3629 = vmatpush1.msra.mxu0 0.0
        %3630 = vmatprep.subr.mxu0 0.0
        %3631 = vmatpush1.msra.mxu0 0.0
        %3632 = vmatprep.subr.mxu0 0.0
        %3633 = vmatpush1.msra.mxu0 0.0
        %3634 = vmatprep.subr.mxu0 0.0
        %3635 = vmatpush1.msra.mxu0 0.0
        %3636 = vmatprep.subr.mxu0 0.0
        %3637 = vmatpush1.msra.mxu0 0.0
        %3638 = vmatprep.subr.mxu0 0.0
        %3639 = vmatpush1.msra.mxu0 0.0
        %3640 = vmatprep.subr.mxu0 0.0
        %3641 = vmatpush1.msra.mxu0 0.0
        %3642 = vmatprep.mubr.f32.mxu0 0.0
        %3643 = vmatmul.mubr.f32.gmra.mrb[0].mxu0 %v3480
        %v3644 = vpop.f32.mrb[0].mxu0
        %v3645 = vadd.f32 0.0, %v3644
        %v3646 = vpop.f32.mrb[0].mxu0
        %3647 = vmatprep.mubr.f32.mxu0 0.0
        %3648 = vmatmul.mubr.f32.gmra.mrb[0].mxu0 %v3483
        %v3649 = vpop.f32.mrb[0].mxu0
        %v3650 = vadd.f32 0.0, %v3649
        %v3651 = vpop.f32.mrb[0].mxu0
        %3652 = vmatprep.mubr.f32.mxu0 0.0
        %3653 = vmatmul.mubr.f32.gmra.mrb[0].mxu0 %v3486
        %v3654 = vpop.f32.mrb[0].mxu0
        %v3655 = vadd.f32 0.0, %v3654
        %v3656 = vpop.f32.mrb[0].mxu0
        %3657 = vmatprep.mubr.f32.mxu0 0.0
        %3658 = vmatmul.mubr.f32.gmra.mrb[0].mxu0 %v3489
        %v3659 = vpop.f32.mrb[0].mxu0
        %v3660 = vadd.f32 0.0, %v3659
        %v3661 = vpop.f32.mrb[0].mxu0
        %3662 = vmatprep.mubr.f32.mxu0 0.0
        %3663 = vmatmul.mubr.f32.gmra.mrb[0].mxu0 %v3492
        %v3664 = vpop.f32.mrb[0].mxu0
        %v3665 = vadd.f32 0.0, %v3664
        %v3666 = vpop.f32.mrb[0].mxu0
        %3667 = vmatprep.mubr.f32.mxu0 0.0
        %3668 = vmatmul.mubr.f32.gmra.mrb[0].mxu0 %v3495
        %v3669 = vpop.f32.mrb[0].mxu0
        %v3670 = vadd.f32 0.0, %v3669
        %v3671 = vpop.f32.mrb[0].mxu0
        %3672 = vmatprep.mubr.f32.mxu0 0.0
        %3673 = vmatmul.mubr.f32.gmra.mrb[0].mxu0 %v3498
        %v3674 = vpop.f32.mrb[0].mxu0
        %v3675 = vadd.f32 0.0, %v3674
        %v3676 = vpop.f32.mrb[0].mxu0
        %3677 = vmatprep.mubr.f32.mxu0 0.0
        %3678 = vmatmul.mubr.f32.gmra.mrb[0].mxu0 %v3501
        %v3679 = vpop.f32.mrb[0].mxu0
        %v3680 = vadd.f32 0.0, %v3679
        %v3681 = vpop.f32.mrb[0].mxu0
        %3682 = vmatprep.mubr.f32.mxu0 0.0
        %3683 = vmatmul.mubr.f32.gmra.mrb[0].mxu0 %v3504
        %v3684 = vpop.f32.mrb[0].mxu0
        %v3685 = vadd.f32 0.0, %v3684
        %v3686 = vpop.f32.mrb[0].mxu0
        %3687 = vmatprep.mubr.f32.mxu0 0.0
        %3688 = vmatmul.mubr.f32.gmra.mrb[0].mxu0 %v3507
        %v3689 = vpop.f32.mrb[0].mxu0
        %v3690 = vadd.f32 0.0, %v3689
        %v3691 = vpop.f32.mrb[0].mxu0
        %3692 = vmatprep.mubr.f32.mxu0 0.0
        %3693 = vmatmul.mubr.f32.gmra.mrb[0].mxu0 %v3510
        %v3694 = vpop.f32.mrb[0].mxu0
        %v3695 = vadd.f32 0.0, %v3694
        %v3696 = vpop.f32.mrb[0].mxu0
        %3697 = vmatprep.mubr.f32.mxu0 0.0
        %3698 = vmatmul.mubr.f32.gmra.mrb[0].mxu0 %v3513
        %v3699 = vpop.f32.mrb[0].mxu0
        %v3700 = vadd.f32 0.0, %v3699
        %v3701 = vpop.f32.mrb[0].mxu0
        %3702 = vmatprep.mubr.f32.mxu0 0.0
        %3703 = vmatmul.mubr.f32.gmra.mrb[0].mxu0 %v3516
        %v3704 = vpop.f32.mrb[0].mxu0
        %v3705 = vadd.f32 0.0, %v3704
        %v3706 = vpop.f32.mrb[0].mxu0
        %3707 = vmatprep.mubr.f32.mxu0 0.0
        %3708 = vmatmul.mubr.f32.gmra.mrb[0].mxu0 %v3519
        %v3709 = vpop.f32.mrb[0].mxu0
        %v3710 = vadd.f32 0.0, %v3709
        %v3711 = vpop.f32.mrb[0].mxu0
        %3712 = vmatprep.mubr.f32.mxu0 0.0
        %3713 = vmatmul.mubr.f32.gmra.mrb[0].mxu0 %v3522
        %v3714 = vpop.f32.mrb[0].mxu0
        %v3715 = vadd.f32 0.0, %v3714
        %v3716 = vpop.f32.mrb[0].mxu0
        %3717 = vmatprep.mubr.f32.mxu0 0.0
        %3718 = vmatmul.mubr.f32.gmra.mrb[0].mxu0 %v3525
        %v3719 = vpop.f32.mrb[0].mxu0
        %v3720 = vadd.f32 0.0, %v3719
        %v3721 = vpop.f32.mrb[0].mxu0
        %3722 = vmatprep.mubr.f32.mxu0 0.0
        %3723 = vmatmul.mubr.f32.gmra.mrb[0].mxu0 %v3528
        %v3724 = vpop.f32.mrb[0].mxu0
        %v3725 = vadd.f32 0.0, %v3724
        %v3726 = vpop.f32.mrb[0].mxu0
        %3727 = vmatprep.mubr.f32.mxu0 0.0
        %3728 = vmatmul.mubr.f32.gmra.mrb[0].mxu0 %v3531
        %v3729 = vpop.f32.mrb[0].mxu0
        %v3730 = vadd.f32 0.0, %v3729
        %v3731 = vpop.f32.mrb[0].mxu0
        %3732 = vmatprep.mubr.f32.mxu0 0.0
        %3733 = vmatmul.mubr.f32.gmra.mrb[0].mxu0 %v3534
        %v3734 = vpop.f32.mrb[0].mxu0
        %v3735 = vadd.f32 0.0, %v3734
        %v3736 = vpop.f32.mrb[0].mxu0
        %3737 = vmatprep.mubr.f32.mxu0 0.0
        %3738 = vmatmul.mubr.f32.gmra.mrb[0].mxu0 %v3537
        %v3739 = vpop.f32.mrb[0].mxu0
        %v3740 = vadd.f32 0.0, %v3739
        %v3741 = vpop.f32.mrb[0].mxu0
        %3742 = vmatprep.mubr.f32.mxu0 0.0
        %3743 = vmatmul.mubr.f32.gmra.mrb[0].mxu0 %v3540
        %v3744 = vpop.f32.mrb[0].mxu0
        %v3745 = vadd.f32 0.0, %v3744
        %v3746 = vpop.f32.mrb[0].mxu0
        %3747 = vmatprep.mubr.f32.mxu0 0.0
        %3748 = vmatmul.mubr.f32.gmra.mrb[0].mxu0 %v3543
        %v3749 = vpop.f32.mrb[0].mxu0
        %v3750 = vadd.f32 0.0, %v3749
        %v3751 = vpop.f32.mrb[0].mxu0
        %3752 = vmatprep.mubr.f32.mxu0 0.0
        %3753 = vmatmul.mubr.f32.gmra.mrb[0].mxu0 %v3546
        %v3754 = vpop.f32.mrb[0].mxu0
        %v3755 = vadd.f32 0.0, %v3754
        %v3756 = vpop.f32.mrb[0].mxu0
        %3757 = vmatprep.mubr.f32.mxu0 0.0
        %3758 = vmatmul.mubr.f32.gmra.mrb[0].mxu0 %v3549
        %v3759 = vpop.f32.mrb[0].mxu0
        %v3760 = vadd.f32 0.0, %v3759
        %v3761 = vpop.f32.mrb[0].mxu0
        %3762 = vmatprep.mubr.f32.mxu0 0.0
        %3763 = vmatmul.mubr.f32.gmra.mrb[0].mxu0 %v3552
        %v3764 = vpop.f32.mrb[0].mxu0
        %v3765 = vadd.f32 0.0, %v3764
        %v3766 = vpop.f32.mrb[0].mxu0
        %3767 = vmatprep.mubr.f32.mxu0 0.0
        %3768 = vmatmul.mubr.f32.gmra.mrb[0].mxu0 %v3555
        %v3769 = vpop.f32.mrb[0].mxu0
        %v3770 = vadd.f32 0.0, %v3769
        %v3771 = vpop.f32.mrb[0].mxu0
        %3772 = vmatprep.mubr.f32.mxu0 0.0
        %3773 = vmatmul.mubr.f32.gmra.mrb[0].mxu0 %v3558
        %v3774 = vpop.f32.mrb[0].mxu0
        %v3775 = vadd.f32 0.0, %v3774
        %v3776 = vpop.f32.mrb[0].mxu0
        %3777 = vmatprep.mubr.f32.mxu0 0.0
        %3778 = vmatmul.mubr.f32.gmra.mrb[0].mxu0 %v3561
        %v3779 = vpop.f32.mrb[0].mxu0
        %v3780 = vadd.f32 0.0, %v3779
        %v3781 = vpop.f32.mrb[0].mxu0
        %3782 = vmatprep.mubr.f32.mxu0 0.0
        %3783 = vmatmul.mubr.f32.gmra.mrb[0].mxu0 %v3564
        %v3784 = vpop.f32.mrb[0].mxu0
        %v3785 = vadd.f32 0.0, %v3784
        %v3786 = vpop.f32.mrb[0].mxu0
        %3787 = vmatprep.mubr.f32.mxu0 0.0
        %3788 = vmatmul.mubr.f32.gmra.mrb[0].mxu0 %v3567
        %v3789 = vpop.f32.mrb[0].mxu0
        %v3790 = vadd.f32 0.0, %v3789
        %v3791 = vpop.f32.mrb[0].mxu0
        %3792 = vmatprep.mubr.f32.mxu0 0.0
        %3793 = vmatmul.mubr.f32.gmra.mrb[0].mxu0 %v3570
        %v3794 = vpop.f32.mrb[0].mxu0
        %v3795 = vadd.f32 0.0, %v3794
        %v3796 = vpop.f32.mrb[0].mxu0
        %3797 = vmatprep.mubr.f32.mxu0 0.0
        %3798 = vmatmul.mubr.f32.gmra.mrb[0].mxu0 %v3573
        %v3799 = vpop.f32.mrb[0].mxu0
        %v3800 = vadd.f32 0.0, %v3799
        %v3801 = vpop.f32.mrb[0].mxu0
        %3802 = vdwg.mxu0
        %v3803 = vadd.f32 %v3413, %v3645
        %v3804 = vadd.f32 %v3414, %v3650
        %v3805 = vadd.f32 %v3415, %v3655
        %v3806 = vadd.f32 %v3416, %v3660
        %v3807 = vadd.f32 %v3417, %v3665
        %v3808 = vadd.f32 %v3418, %v3670
        %v3809 = vadd.f32 %v3419, %v3675
        %v3810 = vadd.f32 %v3420, %v3680
        %v3811 = vadd.f32 %v3421, %v3685
        %v3812 = vadd.f32 %v3422, %v3690
        %v3813 = vadd.f32 %v3423, %v3695
        %v3814 = vadd.f32 %v3424, %v3700
        %v3815 = vadd.f32 %v3425, %v3705
        %v3816 = vadd.f32 %v3426, %v3710
        %v3817 = vadd.f32 %v3427, %v3715
        %v3818 = vadd.f32 %v3428, %v3720
        %v3819 = vadd.f32 %v3429, %v3725
        %v3820 = vadd.f32 %v3430, %v3730
        %v3821 = vadd.f32 %v3431, %v3735
        %v3822 = vadd.f32 %v3432, %v3740
        %v3823 = vadd.f32 %v3433, %v3745
        %v3824 = vadd.f32 %v3434, %v3750
        %v3825 = vadd.f32 %v3435, %v3755
        %v3826 = vadd.f32 %v3436, %v3760
        %v3827 = vadd.f32 %v3437, %v3765
        %v3828 = vadd.f32 %v3438, %v3770
        %v3829 = vadd.f32 %v3439, %v3775
        %v3830 = vadd.f32 %v3440, %v3780
        %v3831 = vadd.f32 %v3441, %v3785
        %v3832 = vadd.f32 %v3442, %v3790
        %v3833 = vadd.f32 %v3443, %v3795
        %v3834 = vadd.f32 %v3444, %v3800
        %v3835 = vld [vmem:[%s2] sm:$0x1]
        %v3837 = vlaneseq
        %v3838 = vshrl.u32 %v3837, 7
        %v3839 = vsub.s32 0, %v3838
        %v3840 = vrot.slane %v3835, %v3839
        %v3842 = vadd.f32 %v3803, %v3840
        %v3843 = vadd.f32 %v3804, %v3840
        %v3844 = vadd.f32 %v3805, %v3840
        %v3845 = vadd.f32 %v3806, %v3840
        %v3846 = vadd.f32 %v3807, %v3840
        %v3847 = vadd.f32 %v3808, %v3840
        %v3848 = vadd.f32 %v3809, %v3840
        %v3849 = vadd.f32 %v3810, %v3840
        %v3850 = vadd.f32 %v3811, %v3840
        %v3851 = vadd.f32 %v3812, %v3840
        %v3852 = vadd.f32 %v3813, %v3840
        %v3853 = vadd.f32 %v3814, %v3840
        %v3854 = vadd.f32 %v3815, %v3840
        %v3855 = vadd.f32 %v3816, %v3840
        %v3856 = vadd.f32 %v3817, %v3840
        %v3857 = vadd.f32 %v3818, %v3840
        %v3858 = vadd.f32 %v3819, %v3840
        %v3859 = vadd.f32 %v3820, %v3840
        %v3860 = vadd.f32 %v3821, %v3840
        %v3861 = vadd.f32 %v3822, %v3840
        %v3862 = vadd.f32 %v3823, %v3840
        %v3863 = vadd.f32 %v3824, %v3840
        %v3864 = vadd.f32 %v3825, %v3840
        %v3865 = vadd.f32 %v3826, %v3840
        %v3866 = vadd.f32 %v3827, %v3840
        %v3867 = vadd.f32 %v3828, %v3840
        %v3868 = vadd.f32 %v3829, %v3840
        %v3869 = vadd.f32 %v3830, %v3840
        %v3870 = vadd.f32 %v3831, %v3840
        %v3871 = vadd.f32 %v3832, %v3840
        %v3872 = vadd.f32 %v3833, %v3840
        %v3873 = vadd.f32 %v3834, %v3840
        %vm3874 = vcmp.gt.f32.partialorder %v3842, 0.0
        %vm3875 = vcmp.gt.f32.partialorder %v3843, 0.0
        %vm3876 = vcmp.gt.f32.partialorder %v3844, 0.0
        %vm3877 = vcmp.gt.f32.partialorder %v3845, 0.0
        %vm3878 = vcmp.gt.f32.partialorder %v3846, 0.0
        %vm3879 = vcmp.gt.f32.partialorder %v3847, 0.0
        %vm3880 = vcmp.gt.f32.partialorder %v3848, 0.0
        %vm3881 = vcmp.gt.f32.partialorder %v3849, 0.0
        %vm3882 = vcmp.gt.f32.partialorder %v3850, 0.0
        %vm3883 = vcmp.gt.f32.partialorder %v3851, 0.0
        %vm3884 = vcmp.gt.f32.partialorder %v3852, 0.0
        %vm3885 = vcmp.gt.f32.partialorder %v3853, 0.0
        %vm3886 = vcmp.gt.f32.partialorder %v3854, 0.0
        %vm3887 = vcmp.gt.f32.partialorder %v3855, 0.0
        %vm3888 = vcmp.gt.f32.partialorder %v3856, 0.0
        %vm3889 = vcmp.gt.f32.partialorder %v3857, 0.0
        %vm3890 = vcmp.gt.f32.partialorder %v3858, 0.0
        %vm3891 = vcmp.gt.f32.partialorder %v3859, 0.0
        %vm3892 = vcmp.gt.f32.partialorder %v3860, 0.0
        %vm3893 = vcmp.gt.f32.partialorder %v3861, 0.0
        %vm3894 = vcmp.gt.f32.partialorder %v3862, 0.0
        %vm3895 = vcmp.gt.f32.partialorder %v3863, 0.0
        %vm3896 = vcmp.gt.f32.partialorder %v3864, 0.0
        %vm3897 = vcmp.gt.f32.partialorder %v3865, 0.0
        %vm3898 = vcmp.gt.f32.partialorder %v3866, 0.0
        %vm3899 = vcmp.gt.f32.partialorder %v3867, 0.0
        %vm3900 = vcmp.gt.f32.partialorder %v3868, 0.0
        %vm3901 = vcmp.gt.f32.partialorder %v3869, 0.0
        %vm3902 = vcmp.gt.f32.partialorder %v3870, 0.0
        %vm3903 = vcmp.gt.f32.partialorder %v3871, 0.0
        %vm3904 = vcmp.gt.f32.partialorder %v3872, 0.0
        %vm3905 = vcmp.gt.f32.partialorder %v3873, 0.0
        %v3906 = vmul.f32 %v3842, 0.2
        %v3907 = vmul.f32 %v3843, 0.2
        %v3908 = vmul.f32 %v3844, 0.2
        %v3909 = vmul.f32 %v3845, 0.2
        %v3910 = vmul.f32 %v3846, 0.2
        %v3911 = vmul.f32 %v3847, 0.2
        %v3912 = vmul.f32 %v3848, 0.2
        %v3913 = vmul.f32 %v3849, 0.2
        %v3914 = vmul.f32 %v3850, 0.2
        %v3915 = vmul.f32 %v3851, 0.2
        %v3916 = vmul.f32 %v3852, 0.2
        %v3917 = vmul.f32 %v3853, 0.2
        %v3918 = vmul.f32 %v3854, 0.2
        %v3919 = vmul.f32 %v3855, 0.2
        %v3920 = vmul.f32 %v3856, 0.2
        %v3921 = vmul.f32 %v3857, 0.2
        %v3922 = vmul.f32 %v3858, 0.2
        %v3923 = vmul.f32 %v3859, 0.2
        %v3924 = vmul.f32 %v3860, 0.2
        %v3925 = vmul.f32 %v3861, 0.2
        %v3926 = vmul.f32 %v3862, 0.2
        %v3927 = vmul.f32 %v3863, 0.2
        %v3928 = vmul.f32 %v3864, 0.2
        %v3929 = vmul.f32 %v3865, 0.2
        %v3930 = vmul.f32 %v3866, 0.2
        %v3931 = vmul.f32 %v3867, 0.2
        %v3932 = vmul.f32 %v3868, 0.2
        %v3933 = vmul.f32 %v3869, 0.2
        %v3934 = vmul.f32 %v3870, 0.2
        %v3935 = vmul.f32 %v3871, 0.2
        %v3936 = vmul.f32 %v3872, 0.2
        %v3937 = vmul.f32 %v3873, 0.2
        %v3938 = vsel %vm3874, %v3842, %v3906
        %v3939 = vsel %vm3875, %v3843, %v3907
        %v3940 = vsel %vm3876, %v3844, %v3908
        %v3941 = vsel %vm3877, %v3845, %v3909
        %v3942 = vsel %vm3878, %v3846, %v3910
        %v3943 = vsel %vm3879, %v3847, %v3911
        %v3944 = vsel %vm3880, %v3848, %v3912
        %v3945 = vsel %vm3881, %v3849, %v3913
        %v3946 = vsel %vm3882, %v3850, %v3914
        %v3947 = vsel %vm3883, %v3851, %v3915
        %v3948 = vsel %vm3884, %v3852, %v3916
        %v3949 = vsel %vm3885, %v3853, %v3917
        %v3950 = vsel %vm3886, %v3854, %v3918
        %v3951 = vsel %vm3887, %v3855, %v3919
        %v3952 = vsel %vm3888, %v3856, %v3920
        %v3953 = vsel %vm3889, %v3857, %v3921
        %v3954 = vsel %vm3890, %v3858, %v3922
        %v3955 = vsel %vm3891, %v3859, %v3923
        %v3956 = vsel %vm3892, %v3860, %v3924
        %v3957 = vsel %vm3893, %v3861, %v3925
        %v3958 = vsel %vm3894, %v3862, %v3926
        %v3959 = vsel %vm3895, %v3863, %v3927
        %v3960 = vsel %vm3896, %v3864, %v3928
        %v3961 = vsel %vm3897, %v3865, %v3929
        %v3962 = vsel %vm3898, %v3866, %v3930
        %v3963 = vsel %vm3899, %v3867, %v3931
        %v3964 = vsel %vm3900, %v3868, %v3932
        %v3965 = vsel %vm3901, %v3869, %v3933
        %v3966 = vsel %vm3902, %v3870, %v3934
        %v3967 = vsel %vm3903, %v3871, %v3935
        %v3968 = vsel %vm3904, %v3872, %v3936
        %v3969 = vsel %vm3905, %v3873, %v3937
        %v3970 = vld [vmem:[%s5] sm:$0xf]
        %v3971 = vld [vmem:[%s6] sm:$0x1]
        %v3973 = vlaneseq
        %v3974 = vshrl.u32 %v3973, 7
        %v3975 = vsub.s32 0, %v3974
        %v3976 = vrot.slane %v3971, %v3975
        %v3979 = vsel %vm551, %v3970, 0
        %3981 = vmatprep.subr.mxu0 0.0
        %3982 = vmatpush1.msra.mxu0 %v3979
        %3983 = vmatprep.subr.mxu0 0.0
        %3984 = vmatpush1.msra.mxu0 0.0
        %3985 = vmatprep.subr.mxu0 0.0
        %3986 = vmatpush1.msra.mxu0 0.0
        %3987 = vmatprep.subr.mxu0 0.0
        %3988 = vmatpush1.msra.mxu0 0.0
        %3989 = vmatprep.subr.mxu0 0.0
        %3990 = vmatpush1.msra.mxu0 0.0
        %3991 = vmatprep.subr.mxu0 0.0
        %3992 = vmatpush1.msra.mxu0 0.0
        %3993 = vmatprep.subr.mxu0 0.0
        %3994 = vmatpush1.msra.mxu0 0.0
        %3995 = vmatprep.subr.mxu0 0.0
        %3996 = vmatpush1.msra.mxu0 0.0
        %3997 = vmatprep.subr.mxu0 0.0
        %3998 = vmatpush1.msra.mxu0 0.0
        %3999 = vmatprep.subr.mxu0 0.0
        %4000 = vmatpush1.msra.mxu0 0.0
        %4001 = vmatprep.subr.mxu0 0.0
        %4002 = vmatpush1.msra.mxu0 0.0
        %4003 = vmatprep.subr.mxu0 0.0
        %4004 = vmatpush1.msra.mxu0 0.0
        %4005 = vmatprep.subr.mxu0 0.0
        %4006 = vmatpush1.msra.mxu0 0.0
        %4007 = vmatprep.subr.mxu0 0.0
        %4008 = vmatpush1.msra.mxu0 0.0
        %4009 = vmatprep.subr.mxu0 0.0
        %4010 = vmatpush1.msra.mxu0 0.0
        %4011 = vmatprep.subr.mxu0 0.0
        %4012 = vmatpush1.msra.mxu0 0.0
        %4013 = vmatprep.subr.mxu0 0.0
        %4014 = vmatpush1.msra.mxu0 0.0
        %4015 = vmatprep.subr.mxu0 0.0
        %4016 = vmatpush1.msra.mxu0 0.0
        %4017 = vmatprep.subr.mxu0 0.0
        %4018 = vmatpush1.msra.mxu0 0.0
        %4019 = vmatprep.subr.mxu0 0.0
        %4020 = vmatpush1.msra.mxu0 0.0
        %4021 = vmatprep.subr.mxu0 0.0
        %4022 = vmatpush1.msra.mxu0 0.0
        %4023 = vmatprep.subr.mxu0 0.0
        %4024 = vmatpush1.msra.mxu0 0.0
        %4025 = vmatprep.subr.mxu0 0.0
        %4026 = vmatpush1.msra.mxu0 0.0
        %4027 = vmatprep.subr.mxu0 0.0
        %4028 = vmatpush1.msra.mxu0 0.0
        %4029 = vmatprep.subr.mxu0 0.0
        %4030 = vmatpush1.msra.mxu0 0.0
        %4031 = vmatprep.subr.mxu0 0.0
        %4032 = vmatpush1.msra.mxu0 0.0
        %4033 = vmatprep.subr.mxu0 0.0
        %4034 = vmatpush1.msra.mxu0 0.0
        %4035 = vmatprep.subr.mxu0 0.0
        %4036 = vmatpush1.msra.mxu0 0.0
        %4037 = vmatprep.subr.mxu0 0.0
        %4038 = vmatpush1.msra.mxu0 0.0
        %4039 = vmatprep.subr.mxu0 0.0
        %4040 = vmatpush1.msra.mxu0 0.0
        %4041 = vmatprep.subr.mxu0 0.0
        %4042 = vmatpush1.msra.mxu0 0.0
        %4043 = vmatprep.subr.mxu0 0.0
        %4044 = vmatpush1.msra.mxu0 0.0
        %4045 = vmatprep.mubr.f32.mxu0 0.0
        %4046 = vmatmul.mubr.f32.gmra.mrb[0].mxu0 %v1919
        %v4047 = vpop.f32.mrb[0].mxu0
        %v4048 = vadd.f32 %v3976, %v4047
        %v4049 = vpop.f32.mrb[0].mxu0
        %4050 = vmatprep.mubr.f32.mxu0 0.0
        %4051 = vmatmul.mubr.f32.gmra.mrb[0].mxu0 %v1922
        %v4052 = vpop.f32.mrb[0].mxu0
        %v4053 = vadd.f32 %v3976, %v4052
        %v4054 = vpop.f32.mrb[0].mxu0
        %4055 = vmatprep.mubr.f32.mxu0 0.0
        %4056 = vmatmul.mubr.f32.gmra.mrb[0].mxu0 %v1925
        %v4057 = vpop.f32.mrb[0].mxu0
        %v4058 = vadd.f32 %v3976, %v4057
        %v4059 = vpop.f32.mrb[0].mxu0
        %4060 = vmatprep.mubr.f32.mxu0 0.0
        %4061 = vmatmul.mubr.f32.gmra.mrb[0].mxu0 %v1928
        %v4062 = vpop.f32.mrb[0].mxu0
        %v4063 = vadd.f32 %v3976, %v4062
        %v4064 = vpop.f32.mrb[0].mxu0
        %4065 = vmatprep.mubr.f32.mxu0 0.0
        %4066 = vmatmul.mubr.f32.gmra.mrb[0].mxu0 %v1931
        %v4067 = vpop.f32.mrb[0].mxu0
        %v4068 = vadd.f32 %v3976, %v4067
        %v4069 = vpop.f32.mrb[0].mxu0
        %4070 = vmatprep.mubr.f32.mxu0 0.0
        %4071 = vmatmul.mubr.f32.gmra.mrb[0].mxu0 %v1934
        %v4072 = vpop.f32.mrb[0].mxu0
        %v4073 = vadd.f32 %v3976, %v4072
        %v4074 = vpop.f32.mrb[0].mxu0
        %4075 = vmatprep.mubr.f32.mxu0 0.0
        %4076 = vmatmul.mubr.f32.gmra.mrb[0].mxu0 %v1937
        %v4077 = vpop.f32.mrb[0].mxu0
        %v4078 = vadd.f32 %v3976, %v4077
        %v4079 = vpop.f32.mrb[0].mxu0
        %4080 = vmatprep.mubr.f32.mxu0 0.0
        %4081 = vmatmul.mubr.f32.gmra.mrb[0].mxu0 %v1940
        %v4082 = vpop.f32.mrb[0].mxu0
        %v4083 = vadd.f32 %v3976, %v4082
        %v4084 = vpop.f32.mrb[0].mxu0
        %4085 = vmatprep.mubr.f32.mxu0 0.0
        %4086 = vmatmul.mubr.f32.gmra.mrb[0].mxu0 %v1943
        %v4087 = vpop.f32.mrb[0].mxu0
        %v4088 = vadd.f32 %v3976, %v4087
        %v4089 = vpop.f32.mrb[0].mxu0
        %4090 = vmatprep.mubr.f32.mxu0 0.0
        %4091 = vmatmul.mubr.f32.gmra.mrb[0].mxu0 %v1946
        %v4092 = vpop.f32.mrb[0].mxu0
        %v4093 = vadd.f32 %v3976, %v4092
        %v4094 = vpop.f32.mrb[0].mxu0
        %4095 = vmatprep.mubr.f32.mxu0 0.0
        %4096 = vmatmul.mubr.f32.gmra.mrb[0].mxu0 %v1949
        %v4097 = vpop.f32.mrb[0].mxu0
        %v4098 = vadd.f32 %v3976, %v4097
        %v4099 = vpop.f32.mrb[0].mxu0
        %4100 = vmatprep.mubr.f32.mxu0 0.0
        %4101 = vmatmul.mubr.f32.gmra.mrb[0].mxu0 %v1952
        %v4102 = vpop.f32.mrb[0].mxu0
        %v4103 = vadd.f32 %v3976, %v4102
        %v4104 = vpop.f32.mrb[0].mxu0
        %4105 = vmatprep.mubr.f32.mxu0 0.0
        %4106 = vmatmul.mubr.f32.gmra.mrb[0].mxu0 %v1955
        %v4107 = vpop.f32.mrb[0].mxu0
        %v4108 = vadd.f32 %v3976, %v4107
        %v4109 = vpop.f32.mrb[0].mxu0
        %4110 = vmatprep.mubr.f32.mxu0 0.0
        %4111 = vmatmul.mubr.f32.gmra.mrb[0].mxu0 %v1958
        %v4112 = vpop.f32.mrb[0].mxu0
        %v4113 = vadd.f32 %v3976, %v4112
        %v4114 = vpop.f32.mrb[0].mxu0
        %4115 = vmatprep.mubr.f32.mxu0 0.0
        %4116 = vmatmul.mubr.f32.gmra.mrb[0].mxu0 %v1961
        %v4117 = vpop.f32.mrb[0].mxu0
        %v4118 = vadd.f32 %v3976, %v4117
        %v4119 = vpop.f32.mrb[0].mxu0
        %4120 = vmatprep.mubr.f32.mxu0 0.0
        %4121 = vmatmul.mubr.f32.gmra.mrb[0].mxu0 %v1964
        %v4122 = vpop.f32.mrb[0].mxu0
        %v4123 = vadd.f32 %v3976, %v4122
        %v4124 = vpop.f32.mrb[0].mxu0
        %4125 = vmatprep.mubr.f32.mxu0 0.0
        %4126 = vmatmul.mubr.f32.gmra.mrb[0].mxu0 %v1967
        %v4127 = vpop.f32.mrb[0].mxu0
        %v4128 = vadd.f32 %v3976, %v4127
        %v4129 = vpop.f32.mrb[0].mxu0
        %4130 = vmatprep.mubr.f32.mxu0 0.0
        %4131 = vmatmul.mubr.f32.gmra.mrb[0].mxu0 %v1970
        %v4132 = vpop.f32.mrb[0].mxu0
        %v4133 = vadd.f32 %v3976, %v4132
        %v4134 = vpop.f32.mrb[0].mxu0
        %4135 = vmatprep.mubr.f32.mxu0 0.0
        %4136 = vmatmul.mubr.f32.gmra.mrb[0].mxu0 %v1973
        %v4137 = vpop.f32.mrb[0].mxu0
        %v4138 = vadd.f32 %v3976, %v4137
        %v4139 = vpop.f32.mrb[0].mxu0
        %4140 = vmatprep.mubr.f32.mxu0 0.0
        %4141 = vmatmul.mubr.f32.gmra.mrb[0].mxu0 %v1976
        %v4142 = vpop.f32.mrb[0].mxu0
        %v4143 = vadd.f32 %v3976, %v4142
        %v4144 = vpop.f32.mrb[0].mxu0
        %4145 = vmatprep.mubr.f32.mxu0 0.0
        %4146 = vmatmul.mubr.f32.gmra.mrb[0].mxu0 %v1979
        %v4147 = vpop.f32.mrb[0].mxu0
        %v4148 = vadd.f32 %v3976, %v4147
        %v4149 = vpop.f32.mrb[0].mxu0
        %4150 = vmatprep.mubr.f32.mxu0 0.0
        %4151 = vmatmul.mubr.f32.gmra.mrb[0].mxu0 %v1982
        %v4152 = vpop.f32.mrb[0].mxu0
        %v4153 = vadd.f32 %v3976, %v4152
        %v4154 = vpop.f32.mrb[0].mxu0
        %4155 = vmatprep.mubr.f32.mxu0 0.0
        %4156 = vmatmul.mubr.f32.gmra.mrb[0].mxu0 %v1985
        %v4157 = vpop.f32.mrb[0].mxu0
        %v4158 = vadd.f32 %v3976, %v4157
        %v4159 = vpop.f32.mrb[0].mxu0
        %4160 = vmatprep.mubr.f32.mxu0 0.0
        %4161 = vmatmul.mubr.f32.gmra.mrb[0].mxu0 %v1988
        %v4162 = vpop.f32.mrb[0].mxu0
        %v4163 = vadd.f32 %v3976, %v4162
        %v4164 = vpop.f32.mrb[0].mxu0
        %4165 = vmatprep.mubr.f32.mxu0 0.0
        %4166 = vmatmul.mubr.f32.gmra.mrb[0].mxu0 %v1991
        %v4167 = vpop.f32.mrb[0].mxu0
        %v4168 = vadd.f32 %v3976, %v4167
        %v4169 = vpop.f32.mrb[0].mxu0
        %4170 = vmatprep.mubr.f32.mxu0 0.0
        %4171 = vmatmul.mubr.f32.gmra.mrb[0].mxu0 %v1994
        %v4172 = vpop.f32.mrb[0].mxu0
        %v4173 = vadd.f32 %v3976, %v4172
        %v4174 = vpop.f32.mrb[0].mxu0
        %4175 = vmatprep.mubr.f32.mxu0 0.0
        %4176 = vmatmul.mubr.f32.gmra.mrb[0].mxu0 %v1997
        %v4177 = vpop.f32.mrb[0].mxu0
        %v4178 = vadd.f32 %v3976, %v4177
        %v4179 = vpop.f32.mrb[0].mxu0
        %4180 = vmatprep.mubr.f32.mxu0 0.0
        %4181 = vmatmul.mubr.f32.gmra.mrb[0].mxu0 %v2000
        %v4182 = vpop.f32.mrb[0].mxu0
        %v4183 = vadd.f32 %v3976, %v4182
        %v4184 = vpop.f32.mrb[0].mxu0
        %4185 = vmatprep.mubr.f32.mxu0 0.0
        %4186 = vmatmul.mubr.f32.gmra.mrb[0].mxu0 %v2003
        %v4187 = vpop.f32.mrb[0].mxu0
        %v4188 = vadd.f32 %v3976, %v4187
        %v4189 = vpop.f32.mrb[0].mxu0
        %4190 = vmatprep.mubr.f32.mxu0 0.0
        %4191 = vmatmul.mubr.f32.gmra.mrb[0].mxu0 %v2006
        %v4192 = vpop.f32.mrb[0].mxu0
        %v4193 = vadd.f32 %v3976, %v4192
        %v4194 = vpop.f32.mrb[0].mxu0
        %4195 = vmatprep.mubr.f32.mxu0 0.0
        %4196 = vmatmul.mubr.f32.gmra.mrb[0].mxu0 %v2009
        %v4197 = vpop.f32.mrb[0].mxu0
        %v4198 = vadd.f32 %v3976, %v4197
        %v4199 = vpop.f32.mrb[0].mxu0
        %4200 = vmatprep.mubr.f32.mxu0 0.0
        %4201 = vmatmul.mubr.f32.gmra.mrb[0].mxu0 %v2012
        %v4202 = vpop.f32.mrb[0].mxu0
        %v4203 = vadd.f32 %v3976, %v4202
        %v4204 = vpop.f32.mrb[0].mxu0
        %4205 = vdwg.mxu0
        %4206 = vst.msk [vmem:[#allocation3] sm:$0xff] %vm277, 0.0
        %4207 = vst.msk [vmem:[#allocation3 + $0x8] sm:$0xff] %vm277, 0.0
        %4208 = vst.msk [vmem:[#allocation3 + $0x10] sm:$0x3] %vm280, 0.0
        %s4209 = scalar_lea.vmem [#allocation3], 408
        %4210 = vst.msk [vmem:[%s4209] sm:$0xff] %vm277, 0.0
        %4211 = vst.msk [vmem:[%s4209 + $0x8] sm:$0xff] %vm277, 0.0
        %4212 = vst.msk [vmem:[%s4209 + $0x10] sm:$0x3] %vm280, 0.0
        %4213 = vst.msk [vmem:[#allocation3] sm:$0x1] %vm286, 0.0
        %4214 = vst.msk [vmem:[#allocation3 + $0x18] sm:$0x1] %vm286, 0.0
        %4215 = vst.msk [vmem:[#allocation3 + $0x30] sm:$0x1] %vm286, 0.0
        %4216 = vst.msk [vmem:[#allocation3 + $0x48] sm:$0x1] %vm286, 0.0
        %4217 = vst.msk [vmem:[#allocation3 + $0x60] sm:$0x1] %vm286, 0.0
        %4218 = vst.msk [vmem:[#allocation3 + $0x78] sm:$0x1] %vm286, 0.0
        %4219 = vst.msk [vmem:[#allocation3 + $0x90] sm:$0x1] %vm286, 0.0
        %4220 = vst.msk [vmem:[#allocation3 + $0xa8] sm:$0x1] %vm286, 0.0
        %4221 = vst.msk [vmem:[#allocation3 + $0xc0] sm:$0x1] %vm286, 0.0
        %4222 = vst.msk [vmem:[#allocation3 + $0xd8] sm:$0x1] %vm286, 0.0
        %4223 = vst.msk [vmem:[#allocation3 + $0xf0] sm:$0x1] %vm286, 0.0
        %4224 = vst.msk [vmem:[#allocation3 + $0x108] sm:$0x1] %vm286, 0.0
        %4225 = vst.msk [vmem:[#allocation3 + $0x120] sm:$0x1] %vm286, 0.0
        %4226 = vst.msk [vmem:[#allocation3 + $0x138] sm:$0x1] %vm286, 0.0
        %4227 = vst.msk [vmem:[#allocation3 + $0x150] sm:$0x1] %vm286, 0.0
        %4228 = vst.msk [vmem:[#allocation3 + $0x168] sm:$0x1] %vm286, 0.0
        %4229 = vst.msk [vmem:[#allocation3 + $0x180] sm:$0x1] %vm286, 0.0
        %4230 = vst.msk [vmem:[#allocation3 + $0x198] sm:$0x1] %vm286, 0.0
        %4231 = vst.msk [vmem:[#allocation3 + $0x11] sm:$0x1] %vm286, 0.0
        %4232 = vst.msk [vmem:[#allocation3 + $0x29] sm:$0x1] %vm286, 0.0
        %4233 = vst.msk [vmem:[#allocation3 + $0x41] sm:$0x1] %vm286, 0.0
        %4234 = vst.msk [vmem:[#allocation3 + $0x59] sm:$0x1] %vm286, 0.0
        %4235 = vst.msk [vmem:[#allocation3 + $0x71] sm:$0x1] %vm286, 0.0
        %4236 = vst.msk [vmem:[#allocation3 + $0x89] sm:$0x1] %vm286, 0.0
        %4237 = vst.msk [vmem:[#allocation3 + $0xa1] sm:$0x1] %vm286, 0.0
        %4238 = vst.msk [vmem:[#allocation3 + $0xb9] sm:$0x1] %vm286, 0.0
        %4239 = vst.msk [vmem:[#allocation3 + $0xd1] sm:$0x1] %vm286, 0.0
        %4240 = vst.msk [vmem:[#allocation3 + $0xe9] sm:$0x1] %vm286, 0.0
        %4241 = vst.msk [vmem:[#allocation3 + $0x101] sm:$0x1] %vm286, 0.0
        %4242 = vst.msk [vmem:[#allocation3 + $0x119] sm:$0x1] %vm286, 0.0
        %4243 = vst.msk [vmem:[#allocation3 + $0x131] sm:$0x1] %vm286, 0.0
        %4244 = vst.msk [vmem:[#allocation3 + $0x149] sm:$0x1] %vm286, 0.0
        %4245 = vst.msk [vmem:[#allocation3 + $0x161] sm:$0x1] %vm286, 0.0
        %4246 = vst.msk [vmem:[#allocation3 + $0x179] sm:$0x1] %vm286, 0.0
        %4247 = vst.msk [vmem:[#allocation3 + $0x191] sm:$0x1] %vm286, 0.0
        %4248 = vst.msk [vmem:[#allocation3 + $0x1a9] sm:$0x1] %vm286, 0.0
        %s4249 = scalar_lea.vmem [#allocation3], 24
        %4250 = vst.msk [vmem:[%s4249 + $0x1] sm:$0xff] %vm277, %v3938
        %4251 = vst.msk [vmem:[%s4249 + $0x9] sm:$0xff] %vm277, %v3939
        %4252 = vst.msk [vmem:[%s4249 + $0x19] sm:$0xff] %vm277, %v3940
        %4253 = vst.msk [vmem:[%s4249 + $0x21] sm:$0xff] %vm277, %v3941
        %4254 = vst.msk [vmem:[%s4249 + $0x31] sm:$0xff] %vm277, %v3942
        %4255 = vst.msk [vmem:[%s4249 + $0x39] sm:$0xff] %vm277, %v3943
        %4256 = vst.msk [vmem:[%s4249 + $0x49] sm:$0xff] %vm277, %v3944
        %4257 = vst.msk [vmem:[%s4249 + $0x51] sm:$0xff] %vm277, %v3945
        %4258 = vst.msk [vmem:[%s4249 + $0x61] sm:$0xff] %vm277, %v3946
        %4259 = vst.msk [vmem:[%s4249 + $0x69] sm:$0xff] %vm277, %v3947
        %4260 = vst.msk [vmem:[%s4249 + $0x79] sm:$0xff] %vm277, %v3948
        %4261 = vst.msk [vmem:[%s4249 + $0x81] sm:$0xff] %vm277, %v3949
        %4262 = vst.msk [vmem:[%s4249 + $0x91] sm:$0xff] %vm277, %v3950
        %4263 = vst.msk [vmem:[%s4249 + $0x99] sm:$0xff] %vm277, %v3951
        %4264 = vst.msk [vmem:[%s4249 + $0xa9] sm:$0xff] %vm277, %v3952
        %4265 = vst.msk [vmem:[%s4249 + $0xb1] sm:$0xff] %vm277, %v3953
        %4266 = vst.msk [vmem:[%s4249 + $0xc1] sm:$0xff] %vm277, %v3954
        %4267 = vst.msk [vmem:[%s4249 + $0xc9] sm:$0xff] %vm277, %v3955
        %4268 = vst.msk [vmem:[%s4249 + $0xd9] sm:$0xff] %vm277, %v3956
        %4269 = vst.msk [vmem:[%s4249 + $0xe1] sm:$0xff] %vm277, %v3957
        %4270 = vst.msk [vmem:[%s4249 + $0xf1] sm:$0xff] %vm277, %v3958
        %4271 = vst.msk [vmem:[%s4249 + $0xf9] sm:$0xff] %vm277, %v3959
        %4272 = vst.msk [vmem:[%s4249 + $0x109] sm:$0xff] %vm277, %v3960
        %4273 = vst.msk [vmem:[%s4249 + $0x111] sm:$0xff] %vm277, %v3961
        %4274 = vst.msk [vmem:[%s4249 + $0x121] sm:$0xff] %vm277, %v3962
        %4275 = vst.msk [vmem:[%s4249 + $0x129] sm:$0xff] %vm277, %v3963
        %4276 = vst.msk [vmem:[%s4249 + $0x139] sm:$0xff] %vm277, %v3964
        %4277 = vst.msk [vmem:[%s4249 + $0x141] sm:$0xff] %vm277, %v3965
        %4278 = vst.msk [vmem:[%s4249 + $0x151] sm:$0xff] %vm277, %v3966
        %4279 = vst.msk [vmem:[%s4249 + $0x159] sm:$0xff] %vm277, %v3967
        %4280 = vst.msk [vmem:[%s4249 + $0x169] sm:$0xff] %vm277, %v3968
        %4281 = vst.msk [vmem:[%s4249 + $0x171] sm:$0xff] %vm277, %v3969
        %v4282 = vld [vmem:[#allocation3] sm:$0xff]
        %v4283 = vld [vmem:[#allocation3 + $0x8] sm:$0xff]
        %v4284 = vld [vmem:[#allocation3 + $0x18] sm:$0xff]
        %v4285 = vld [vmem:[#allocation3 + $0x20] sm:$0xff]
        %v4286 = vld [vmem:[#allocation3 + $0x30] sm:$0xff]
        %v4287 = vld [vmem:[#allocation3 + $0x38] sm:$0xff]
        %v4288 = vld [vmem:[#allocation3 + $0x48] sm:$0xff]
        %v4289 = vld [vmem:[#allocation3 + $0x50] sm:$0xff]
        %v4290 = vld [vmem:[#allocation3 + $0x60] sm:$0xff]
        %v4291 = vld [vmem:[#allocation3 + $0x68] sm:$0xff]
        %v4292 = vld [vmem:[#allocation3 + $0x78] sm:$0xff]
        %v4293 = vld [vmem:[#allocation3 + $0x80] sm:$0xff]
        %v4294 = vld [vmem:[#allocation3 + $0x90] sm:$0xff]
        %v4295 = vld [vmem:[#allocation3 + $0x98] sm:$0xff]
        %v4296 = vld [vmem:[#allocation3 + $0xa8] sm:$0xff]
        %v4297 = vld [vmem:[#allocation3 + $0xb0] sm:$0xff]
        %v4298 = vld [vmem:[#allocation3 + $0xc0] sm:$0xff]
        %v4299 = vld [vmem:[#allocation3 + $0xc8] sm:$0xff]
        %v4300 = vld [vmem:[#allocation3 + $0xd8] sm:$0xff]
        %v4301 = vld [vmem:[#allocation3 + $0xe0] sm:$0xff]
        %v4302 = vld [vmem:[#allocation3 + $0xf0] sm:$0xff]
        %v4303 = vld [vmem:[#allocation3 + $0xf8] sm:$0xff]
        %v4304 = vld [vmem:[#allocation3 + $0x108] sm:$0xff]
        %v4305 = vld [vmem:[#allocation3 + $0x110] sm:$0xff]
        %v4306 = vld [vmem:[#allocation3 + $0x120] sm:$0xff]
        %v4307 = vld [vmem:[#allocation3 + $0x128] sm:$0xff]
        %v4308 = vld [vmem:[#allocation3 + $0x138] sm:$0xff]
        %v4309 = vld [vmem:[#allocation3 + $0x140] sm:$0xff]
        %v4310 = vld [vmem:[#allocation3 + $0x150] sm:$0xff]
        %v4311 = vld [vmem:[#allocation3 + $0x158] sm:$0xff]
        %v4312 = vld [vmem:[#allocation3 + $0x168] sm:$0xff]
        %v4313 = vld [vmem:[#allocation3 + $0x170] sm:$0xff]
        %v4314 = vld [vmem:[%s3] sm:$0xf]
        %v4315 = vld [vmem:[#allocation3 + $0x1] sm:$0xff]
        %v4316 = vld [vmem:[#allocation3 + $0x9] sm:$0xff]
        %v4317 = vld [vmem:[#allocation3 + $0x19] sm:$0xff]
        %v4318 = vld [vmem:[#allocation3 + $0x21] sm:$0xff]
        %v4319 = vld [vmem:[#allocation3 + $0x31] sm:$0xff]
        %v4320 = vld [vmem:[#allocation3 + $0x39] sm:$0xff]
        %v4321 = vld [vmem:[#allocation3 + $0x49] sm:$0xff]
        %v4322 = vld [vmem:[#allocation3 + $0x51] sm:$0xff]
        %v4323 = vld [vmem:[#allocation3 + $0x61] sm:$0xff]
        %v4324 = vld [vmem:[#allocation3 + $0x69] sm:$0xff]
        %v4325 = vld [vmem:[#allocation3 + $0x79] sm:$0xff]
        %v4326 = vld [vmem:[#allocation3 + $0x81] sm:$0xff]
        %v4327 = vld [vmem:[#allocation3 + $0x91] sm:$0xff]
        %v4328 = vld [vmem:[#allocation3 + $0x99] sm:$0xff]
        %v4329 = vld [vmem:[#allocation3 + $0xa9] sm:$0xff]
        %v4330 = vld [vmem:[#allocation3 + $0xb1] sm:$0xff]
        %v4331 = vld [vmem:[#allocation3 + $0xc1] sm:$0xff]
        %v4332 = vld [vmem:[#allocation3 + $0xc9] sm:$0xff]
        %v4333 = vld [vmem:[#allocation3 + $0xd9] sm:$0xff]
        %v4334 = vld [vmem:[#allocation3 + $0xe1] sm:$0xff]
        %v4335 = vld [vmem:[#allocation3 + $0xf1] sm:$0xff]
        %v4336 = vld [vmem:[#allocation3 + $0xf9] sm:$0xff]
        %v4337 = vld [vmem:[#allocation3 + $0x109] sm:$0xff]
        %v4338 = vld [vmem:[#allocation3 + $0x111] sm:$0xff]
        %v4339 = vld [vmem:[#allocation3 + $0x121] sm:$0xff]
        %v4340 = vld [vmem:[#allocation3 + $0x129] sm:$0xff]
        %v4341 = vld [vmem:[#allocation3 + $0x139] sm:$0xff]
        %v4342 = vld [vmem:[#allocation3 + $0x141] sm:$0xff]
        %v4343 = vld [vmem:[#allocation3 + $0x151] sm:$0xff]
        %v4344 = vld [vmem:[#allocation3 + $0x159] sm:$0xff]
        %v4345 = vld [vmem:[#allocation3 + $0x169] sm:$0xff]
        %v4346 = vld [vmem:[#allocation3 + $0x171] sm:$0xff]
        %s4347 = scalar_lea.vmem %s3, 4
        %v4348 = vld [vmem:[%s4347] sm:$0xf]
        %v4350 = vsel %vm277, %v4315, 0
        %v4353 = vsel %vm277, %v4316, 0
        %v4356 = vsel %vm277, %v4317, 0
        %v4359 = vsel %vm277, %v4318, 0
        %v4362 = vsel %vm277, %v4319, 0
        %v4365 = vsel %vm277, %v4320, 0
        %v4368 = vsel %vm277, %v4321, 0
        %v4371 = vsel %vm277, %v4322, 0
        %v4374 = vsel %vm277, %v4323, 0
        %v4377 = vsel %vm277, %v4324, 0
        %v4380 = vsel %vm277, %v4325, 0
        %v4383 = vsel %vm277, %v4326, 0
        %v4386 = vsel %vm277, %v4327, 0
        %v4389 = vsel %vm277, %v4328, 0
        %v4392 = vsel %vm277, %v4329, 0
        %v4395 = vsel %vm277, %v4330, 0
        %v4398 = vsel %vm277, %v4331, 0
        %v4401 = vsel %vm277, %v4332, 0
        %v4404 = vsel %vm277, %v4333, 0
        %v4407 = vsel %vm277, %v4334, 0
        %v4410 = vsel %vm277, %v4335, 0
        %v4413 = vsel %vm277, %v4336, 0
        %v4416 = vsel %vm277, %v4337, 0
        %v4419 = vsel %vm277, %v4338, 0
        %v4422 = vsel %vm277, %v4339, 0
        %v4425 = vsel %vm277, %v4340, 0
        %v4428 = vsel %vm277, %v4341, 0
        %v4431 = vsel %vm277, %v4342, 0
        %v4434 = vsel %vm277, %v4343, 0
        %v4437 = vsel %vm277, %v4344, 0
        %v4440 = vsel %vm277, %v4345, 0
        %v4443 = vsel %vm277, %v4346, 0
        %v4446 = vsel %vm551, %v4348, 0
        %4448 = vmatprep.subr.mxu0 0.0
        %4449 = vmatpush1.msra.mxu0 %v4446
        %4450 = vmatprep.subr.mxu0 0.0
        %4451 = vmatpush1.msra.mxu0 0.0
        %4452 = vmatprep.subr.mxu0 0.0
        %4453 = vmatpush1.msra.mxu0 0.0
        %4454 = vmatprep.subr.mxu0 0.0
        %4455 = vmatpush1.msra.mxu0 0.0
        %4456 = vmatprep.subr.mxu0 0.0
        %4457 = vmatpush1.msra.mxu0 0.0
        %4458 = vmatprep.subr.mxu0 0.0
        %4459 = vmatpush1.msra.mxu0 0.0
        %4460 = vmatprep.subr.mxu0 0.0
        %4461 = vmatpush1.msra.mxu0 0.0
        %4462 = vmatprep.subr.mxu0 0.0
        %4463 = vmatpush1.msra.mxu0 0.0
        %4464 = vmatprep.subr.mxu0 0.0
        %4465 = vmatpush1.msra.mxu0 0.0
        %4466 = vmatprep.subr.mxu0 0.0
        %4467 = vmatpush1.msra.mxu0 0.0
        %4468 = vmatprep.subr.mxu0 0.0
        %4469 = vmatpush1.msra.mxu0 0.0
        %4470 = vmatprep.subr.mxu0 0.0
        %4471 = vmatpush1.msra.mxu0 0.0
        %4472 = vmatprep.subr.mxu0 0.0
        %4473 = vmatpush1.msra.mxu0 0.0
        %4474 = vmatprep.subr.mxu0 0.0
        %4475 = vmatpush1.msra.mxu0 0.0
        %4476 = vmatprep.subr.mxu0 0.0
        %4477 = vmatpush1.msra.mxu0 0.0
        %4478 = vmatprep.subr.mxu0 0.0
        %4479 = vmatpush1.msra.mxu0 0.0
        %4480 = vmatprep.subr.mxu0 0.0
        %4481 = vmatpush1.msra.mxu0 0.0
        %4482 = vmatprep.subr.mxu0 0.0
        %4483 = vmatpush1.msra.mxu0 0.0
        %4484 = vmatprep.subr.mxu0 0.0
        %4485 = vmatpush1.msra.mxu0 0.0
        %4486 = vmatprep.subr.mxu0 0.0
        %4487 = vmatpush1.msra.mxu0 0.0
        %4488 = vmatprep.subr.mxu0 0.0
        %4489 = vmatpush1.msra.mxu0 0.0
        %4490 = vmatprep.subr.mxu0 0.0
        %4491 = vmatpush1.msra.mxu0 0.0
        %4492 = vmatprep.subr.mxu0 0.0
        %4493 = vmatpush1.msra.mxu0 0.0
        %4494 = vmatprep.subr.mxu0 0.0
        %4495 = vmatpush1.msra.mxu0 0.0
        %4496 = vmatprep.subr.mxu0 0.0
        %4497 = vmatpush1.msra.mxu0 0.0
        %4498 = vmatprep.subr.mxu0 0.0
        %4499 = vmatpush1.msra.mxu0 0.0
        %4500 = vmatprep.subr.mxu0 0.0
        %4501 = vmatpush1.msra.mxu0 0.0
        %4502 = vmatprep.subr.mxu0 0.0
        %4503 = vmatpush1.msra.mxu0 0.0
        %4504 = vmatprep.subr.mxu0 0.0
        %4505 = vmatpush1.msra.mxu0 0.0
        %4506 = vmatprep.subr.mxu0 0.0
        %4507 = vmatpush1.msra.mxu0 0.0
        %4508 = vmatprep.subr.mxu0 0.0
        %4509 = vmatpush1.msra.mxu0 0.0
        %4510 = vmatprep.subr.mxu0 0.0
        %4511 = vmatpush1.msra.mxu0 0.0
        %4512 = vmatprep.mubr.f32.mxu0 0.0
        %4513 = vmatmul.mubr.f32.gmra.mrb[0].mxu0 %v4350
        %v4514 = vpop.f32.mrb[0].mxu0
        %v4515 = vadd.f32 0.0, %v4514
        %v4516 = vpop.f32.mrb[0].mxu0
        %4517 = vmatprep.mubr.f32.mxu0 0.0
        %4518 = vmatmul.mubr.f32.gmra.mrb[0].mxu0 %v4353
        %v4519 = vpop.f32.mrb[0].mxu0
        %v4520 = vadd.f32 0.0, %v4519
        %v4521 = vpop.f32.mrb[0].mxu0
        %4522 = vmatprep.mubr.f32.mxu0 0.0
        %4523 = vmatmul.mubr.f32.gmra.mrb[0].mxu0 %v4356
        %v4524 = vpop.f32.mrb[0].mxu0
        %v4525 = vadd.f32 0.0, %v4524
        %v4526 = vpop.f32.mrb[0].mxu0
        %4527 = vmatprep.mubr.f32.mxu0 0.0
        %4528 = vmatmul.mubr.f32.gmra.mrb[0].mxu0 %v4359
        %v4529 = vpop.f32.mrb[0].mxu0
        %v4530 = vadd.f32 0.0, %v4529
        %v4531 = vpop.f32.mrb[0].mxu0
        %4532 = vmatprep.mubr.f32.mxu0 0.0
        %4533 = vmatmul.mubr.f32.gmra.mrb[0].mxu0 %v4362
        %v4534 = vpop.f32.mrb[0].mxu0
        %v4535 = vadd.f32 0.0, %v4534
        %v4536 = vpop.f32.mrb[0].mxu0
        %4537 = vmatprep.mubr.f32.mxu0 0.0
        %4538 = vmatmul.mubr.f32.gmra.mrb[0].mxu0 %v4365
        %v4539 = vpop.f32.mrb[0].mxu0
        %v4540 = vadd.f32 0.0, %v4539
        %v4541 = vpop.f32.mrb[0].mxu0
        %4542 = vmatprep.mubr.f32.mxu0 0.0
        %4543 = vmatmul.mubr.f32.gmra.mrb[0].mxu0 %v4368
        %v4544 = vpop.f32.mrb[0].mxu0
        %v4545 = vadd.f32 0.0, %v4544
        %v4546 = vpop.f32.mrb[0].mxu0
        %4547 = vmatprep.mubr.f32.mxu0 0.0
        %4548 = vmatmul.mubr.f32.gmra.mrb[0].mxu0 %v4371
        %v4549 = vpop.f32.mrb[0].mxu0
        %v4550 = vadd.f32 0.0, %v4549
        %v4551 = vpop.f32.mrb[0].mxu0
        %4552 = vmatprep.mubr.f32.mxu0 0.0
        %4553 = vmatmul.mubr.f32.gmra.mrb[0].mxu0 %v4374
        %v4554 = vpop.f32.mrb[0].mxu0
        %v4555 = vadd.f32 0.0, %v4554
        %v4556 = vpop.f32.mrb[0].mxu0
        %4557 = vmatprep.mubr.f32.mxu0 0.0
        %4558 = vmatmul.mubr.f32.gmra.mrb[0].mxu0 %v4377
        %v4559 = vpop.f32.mrb[0].mxu0
        %v4560 = vadd.f32 0.0, %v4559
        %v4561 = vpop.f32.mrb[0].mxu0
        %4562 = vmatprep.mubr.f32.mxu0 0.0
        %4563 = vmatmul.mubr.f32.gmra.mrb[0].mxu0 %v4380
        %v4564 = vpop.f32.mrb[0].mxu0
        %v4565 = vadd.f32 0.0, %v4564
        %v4566 = vpop.f32.mrb[0].mxu0
        %4567 = vmatprep.mubr.f32.mxu0 0.0
        %4568 = vmatmul.mubr.f32.gmra.mrb[0].mxu0 %v4383
        %v4569 = vpop.f32.mrb[0].mxu0
        %v4570 = vadd.f32 0.0, %v4569
        %v4571 = vpop.f32.mrb[0].mxu0
        %4572 = vmatprep.mubr.f32.mxu0 0.0
        %4573 = vmatmul.mubr.f32.gmra.mrb[0].mxu0 %v4386
        %v4574 = vpop.f32.mrb[0].mxu0
        %v4575 = vadd.f32 0.0, %v4574
        %v4576 = vpop.f32.mrb[0].mxu0
        %4577 = vmatprep.mubr.f32.mxu0 0.0
        %4578 = vmatmul.mubr.f32.gmra.mrb[0].mxu0 %v4389
        %v4579 = vpop.f32.mrb[0].mxu0
        %v4580 = vadd.f32 0.0, %v4579
        %v4581 = vpop.f32.mrb[0].mxu0
        %4582 = vmatprep.mubr.f32.mxu0 0.0
        %4583 = vmatmul.mubr.f32.gmra.mrb[0].mxu0 %v4392
        %v4584 = vpop.f32.mrb[0].mxu0
        %v4585 = vadd.f32 0.0, %v4584
        %v4586 = vpop.f32.mrb[0].mxu0
        %4587 = vmatprep.mubr.f32.mxu0 0.0
        %4588 = vmatmul.mubr.f32.gmra.mrb[0].mxu0 %v4395
        %v4589 = vpop.f32.mrb[0].mxu0
        %v4590 = vadd.f32 0.0, %v4589
        %v4591 = vpop.f32.mrb[0].mxu0
        %4592 = vmatprep.mubr.f32.mxu0 0.0
        %4593 = vmatmul.mubr.f32.gmra.mrb[0].mxu0 %v4398
        %v4594 = vpop.f32.mrb[0].mxu0
        %v4595 = vadd.f32 0.0, %v4594
        %v4596 = vpop.f32.mrb[0].mxu0
        %4597 = vmatprep.mubr.f32.mxu0 0.0
        %4598 = vmatmul.mubr.f32.gmra.mrb[0].mxu0 %v4401
        %v4599 = vpop.f32.mrb[0].mxu0
        %v4600 = vadd.f32 0.0, %v4599
        %v4601 = vpop.f32.mrb[0].mxu0
        %4602 = vmatprep.mubr.f32.mxu0 0.0
        %4603 = vmatmul.mubr.f32.gmra.mrb[0].mxu0 %v4404
        %v4604 = vpop.f32.mrb[0].mxu0
        %v4605 = vadd.f32 0.0, %v4604
        %v4606 = vpop.f32.mrb[0].mxu0
        %4607 = vmatprep.mubr.f32.mxu0 0.0
        %4608 = vmatmul.mubr.f32.gmra.mrb[0].mxu0 %v4407
        %v4609 = vpop.f32.mrb[0].mxu0
        %v4610 = vadd.f32 0.0, %v4609
        %v4611 = vpop.f32.mrb[0].mxu0
        %4612 = vmatprep.mubr.f32.mxu0 0.0
        %4613 = vmatmul.mubr.f32.gmra.mrb[0].mxu0 %v4410
        %v4614 = vpop.f32.mrb[0].mxu0
        %v4615 = vadd.f32 0.0, %v4614
        %v4616 = vpop.f32.mrb[0].mxu0
        %4617 = vmatprep.mubr.f32.mxu0 0.0
        %4618 = vmatmul.mubr.f32.gmra.mrb[0].mxu0 %v4413
        %v4619 = vpop.f32.mrb[0].mxu0
        %v4620 = vadd.f32 0.0, %v4619
        %v4621 = vpop.f32.mrb[0].mxu0
        %4622 = vmatprep.mubr.f32.mxu0 0.0
        %4623 = vmatmul.mubr.f32.gmra.mrb[0].mxu0 %v4416
        %v4624 = vpop.f32.mrb[0].mxu0
        %v4625 = vadd.f32 0.0, %v4624
        %v4626 = vpop.f32.mrb[0].mxu0
        %4627 = vmatprep.mubr.f32.mxu0 0.0
        %4628 = vmatmul.mubr.f32.gmra.mrb[0].mxu0 %v4419
        %v4629 = vpop.f32.mrb[0].mxu0
        %v4630 = vadd.f32 0.0, %v4629
        %v4631 = vpop.f32.mrb[0].mxu0
        %4632 = vmatprep.mubr.f32.mxu0 0.0
        %4633 = vmatmul.mubr.f32.gmra.mrb[0].mxu0 %v4422
        %v4634 = vpop.f32.mrb[0].mxu0
        %v4635 = vadd.f32 0.0, %v4634
        %v4636 = vpop.f32.mrb[0].mxu0
        %4637 = vmatprep.mubr.f32.mxu0 0.0
        %4638 = vmatmul.mubr.f32.gmra.mrb[0].mxu0 %v4425
        %v4639 = vpop.f32.mrb[0].mxu0
        %v4640 = vadd.f32 0.0, %v4639
        %v4641 = vpop.f32.mrb[0].mxu0
        %4642 = vmatprep.mubr.f32.mxu0 0.0
        %4643 = vmatmul.mubr.f32.gmra.mrb[0].mxu0 %v4428
        %v4644 = vpop.f32.mrb[0].mxu0
        %v4645 = vadd.f32 0.0, %v4644
        %v4646 = vpop.f32.mrb[0].mxu0
        %4647 = vmatprep.mubr.f32.mxu0 0.0
        %4648 = vmatmul.mubr.f32.gmra.mrb[0].mxu0 %v4431
        %v4649 = vpop.f32.mrb[0].mxu0
        %v4650 = vadd.f32 0.0, %v4649
        %v4651 = vpop.f32.mrb[0].mxu0
        %4652 = vmatprep.mubr.f32.mxu0 0.0
        %4653 = vmatmul.mubr.f32.gmra.mrb[0].mxu0 %v4434
        %v4654 = vpop.f32.mrb[0].mxu0
        %v4655 = vadd.f32 0.0, %v4654
        %v4656 = vpop.f32.mrb[0].mxu0
        %4657 = vmatprep.mubr.f32.mxu0 0.0
        %4658 = vmatmul.mubr.f32.gmra.mrb[0].mxu0 %v4437
        %v4659 = vpop.f32.mrb[0].mxu0
        %v4660 = vadd.f32 0.0, %v4659
        %v4661 = vpop.f32.mrb[0].mxu0
        %4662 = vmatprep.mubr.f32.mxu0 0.0
        %4663 = vmatmul.mubr.f32.gmra.mrb[0].mxu0 %v4440
        %v4664 = vpop.f32.mrb[0].mxu0
        %v4665 = vadd.f32 0.0, %v4664
        %v4666 = vpop.f32.mrb[0].mxu0
        %4667 = vmatprep.mubr.f32.mxu0 0.0
        %4668 = vmatmul.mubr.f32.gmra.mrb[0].mxu0 %v4443
        %v4669 = vpop.f32.mrb[0].mxu0
        %v4670 = vadd.f32 0.0, %v4669
        %v4671 = vpop.f32.mrb[0].mxu0
        %4672 = vdwg.mxu0
        %v4674 = vsel %vm277, %v4282, 0
        %v4677 = vsel %vm277, %v4283, 0
        %v4680 = vsel %vm277, %v4284, 0
        %v4683 = vsel %vm277, %v4285, 0
        %v4686 = vsel %vm277, %v4286, 0
        %v4689 = vsel %vm277, %v4287, 0
        %v4692 = vsel %vm277, %v4288, 0
        %v4695 = vsel %vm277, %v4289, 0
        %v4698 = vsel %vm277, %v4290, 0
        %v4701 = vsel %vm277, %v4291, 0
        %v4704 = vsel %vm277, %v4292, 0
        %v4707 = vsel %vm277, %v4293, 0
        %v4710 = vsel %vm277, %v4294, 0
        %v4713 = vsel %vm277, %v4295, 0
        %v4716 = vsel %vm277, %v4296, 0
        %v4719 = vsel %vm277, %v4297, 0
        %v4722 = vsel %vm277, %v4298, 0
        %v4725 = vsel %vm277, %v4299, 0
        %v4728 = vsel %vm277, %v4300, 0
        %v4731 = vsel %vm277, %v4301, 0
        %v4734 = vsel %vm277, %v4302, 0
        %v4737 = vsel %vm277, %v4303, 0
        %v4740 = vsel %vm277, %v4304, 0
        %v4743 = vsel %vm277, %v4305, 0
        %v4746 = vsel %vm277, %v4306, 0
        %v4749 = vsel %vm277, %v4307, 0
        %v4752 = vsel %vm277, %v4308, 0
        %v4755 = vsel %vm277, %v4309, 0
        %v4758 = vsel %vm277, %v4310, 0
        %v4761 = vsel %vm277, %v4311, 0
        %v4764 = vsel %vm277, %v4312, 0
        %v4767 = vsel %vm277, %v4313, 0
        %v4770 = vsel %vm551, %v4314, 0
        %4772 = vmatprep.subr.mxu0 0.0
        %4773 = vmatpush1.msra.mxu0 %v4770
        %4774 = vmatprep.subr.mxu0 0.0
        %4775 = vmatpush1.msra.mxu0 0.0
        %4776 = vmatprep.subr.mxu0 0.0
        %4777 = vmatpush1.msra.mxu0 0.0
        %4778 = vmatprep.subr.mxu0 0.0
        %4779 = vmatpush1.msra.mxu0 0.0
        %4780 = vmatprep.subr.mxu0 0.0
        %4781 = vmatpush1.msra.mxu0 0.0
        %4782 = vmatprep.subr.mxu0 0.0
        %4783 = vmatpush1.msra.mxu0 0.0
        %4784 = vmatprep.subr.mxu0 0.0
        %4785 = vmatpush1.msra.mxu0 0.0
        %4786 = vmatprep.subr.mxu0 0.0
        %4787 = vmatpush1.msra.mxu0 0.0
        %4788 = vmatprep.subr.mxu0 0.0
        %4789 = vmatpush1.msra.mxu0 0.0
        %4790 = vmatprep.subr.mxu0 0.0
        %4791 = vmatpush1.msra.mxu0 0.0
        %4792 = vmatprep.subr.mxu0 0.0
        %4793 = vmatpush1.msra.mxu0 0.0
        %4794 = vmatprep.subr.mxu0 0.0
        %4795 = vmatpush1.msra.mxu0 0.0
        %4796 = vmatprep.subr.mxu0 0.0
        %4797 = vmatpush1.msra.mxu0 0.0
        %4798 = vmatprep.subr.mxu0 0.0
        %4799 = vmatpush1.msra.mxu0 0.0
        %4800 = vmatprep.subr.mxu0 0.0
        %4801 = vmatpush1.msra.mxu0 0.0
        %4802 = vmatprep.subr.mxu0 0.0
        %4803 = vmatpush1.msra.mxu0 0.0
        %4804 = vmatprep.subr.mxu0 0.0
        %4805 = vmatpush1.msra.mxu0 0.0
        %4806 = vmatprep.subr.mxu0 0.0
        %4807 = vmatpush1.msra.mxu0 0.0
        %4808 = vmatprep.subr.mxu0 0.0
        %4809 = vmatpush1.msra.mxu0 0.0
        %4810 = vmatprep.subr.mxu0 0.0
        %4811 = vmatpush1.msra.mxu0 0.0
        %4812 = vmatprep.subr.mxu0 0.0
        %4813 = vmatpush1.msra.mxu0 0.0
        %4814 = vmatprep.subr.mxu0 0.0
        %4815 = vmatpush1.msra.mxu0 0.0
        %4816 = vmatprep.subr.mxu0 0.0
        %4817 = vmatpush1.msra.mxu0 0.0
        %4818 = vmatprep.subr.mxu0 0.0
        %4819 = vmatpush1.msra.mxu0 0.0
        %4820 = vmatprep.subr.mxu0 0.0
        %4821 = vmatpush1.msra.mxu0 0.0
        %4822 = vmatprep.subr.mxu0 0.0
        %4823 = vmatpush1.msra.mxu0 0.0
        %4824 = vmatprep.subr.mxu0 0.0
        %4825 = vmatpush1.msra.mxu0 0.0
        %4826 = vmatprep.subr.mxu0 0.0
        %4827 = vmatpush1.msra.mxu0 0.0
        %4828 = vmatprep.subr.mxu0 0.0
        %4829 = vmatpush1.msra.mxu0 0.0
        %4830 = vmatprep.subr.mxu0 0.0
        %4831 = vmatpush1.msra.mxu0 0.0
        %4832 = vmatprep.subr.mxu0 0.0
        %4833 = vmatpush1.msra.mxu0 0.0
        %4834 = vmatprep.subr.mxu0 0.0
        %4835 = vmatpush1.msra.mxu0 0.0
        %4836 = vmatprep.mubr.f32.mxu0 0.0
        %4837 = vmatmul.mubr.f32.gmra.mrb[0].mxu0 %v4674
        %v4838 = vpop.f32.mrb[0].mxu0
        %v4839 = vadd.f32 %v4515, %v4838
        %v4840 = vpop.f32.mrb[0].mxu0
        %4841 = vmatprep.mubr.f32.mxu0 0.0
        %4842 = vmatmul.mubr.f32.gmra.mrb[0].mxu0 %v4677
        %v4843 = vpop.f32.mrb[0].mxu0
        %v4844 = vadd.f32 %v4520, %v4843
        %v4845 = vpop.f32.mrb[0].mxu0
        %4846 = vmatprep.mubr.f32.mxu0 0.0
        %4847 = vmatmul.mubr.f32.gmra.mrb[0].mxu0 %v4680
        %v4848 = vpop.f32.mrb[0].mxu0
        %v4849 = vadd.f32 %v4525, %v4848
        %v4850 = vpop.f32.mrb[0].mxu0
        %4851 = vmatprep.mubr.f32.mxu0 0.0
        %4852 = vmatmul.mubr.f32.gmra.mrb[0].mxu0 %v4683
        %v4853 = vpop.f32.mrb[0].mxu0
        %v4854 = vadd.f32 %v4530, %v4853
        %v4855 = vpop.f32.mrb[0].mxu0
        %4856 = vmatprep.mubr.f32.mxu0 0.0
        %4857 = vmatmul.mubr.f32.gmra.mrb[0].mxu0 %v4686
        %v4858 = vpop.f32.mrb[0].mxu0
        %v4859 = vadd.f32 %v4535, %v4858
        %v4860 = vpop.f32.mrb[0].mxu0
        %4861 = vmatprep.mubr.f32.mxu0 0.0
        %4862 = vmatmul.mubr.f32.gmra.mrb[0].mxu0 %v4689
        %v4863 = vpop.f32.mrb[0].mxu0
        %v4864 = vadd.f32 %v4540, %v4863
        %v4865 = vpop.f32.mrb[0].mxu0
        %4866 = vmatprep.mubr.f32.mxu0 0.0
        %4867 = vmatmul.mubr.f32.gmra.mrb[0].mxu0 %v4692
        %v4868 = vpop.f32.mrb[0].mxu0
        %v4869 = vadd.f32 %v4545, %v4868
        %v4870 = vpop.f32.mrb[0].mxu0
        %4871 = vmatprep.mubr.f32.mxu0 0.0
        %4872 = vmatmul.mubr.f32.gmra.mrb[0].mxu0 %v4695
        %v4873 = vpop.f32.mrb[0].mxu0
        %v4874 = vadd.f32 %v4550, %v4873
        %v4875 = vpop.f32.mrb[0].mxu0
        %4876 = vmatprep.mubr.f32.mxu0 0.0
        %4877 = vmatmul.mubr.f32.gmra.mrb[0].mxu0 %v4698
        %v4878 = vpop.f32.mrb[0].mxu0
        %v4879 = vadd.f32 %v4555, %v4878
        %v4880 = vpop.f32.mrb[0].mxu0
        %4881 = vmatprep.mubr.f32.mxu0 0.0
        %4882 = vmatmul.mubr.f32.gmra.mrb[0].mxu0 %v4701
        %v4883 = vpop.f32.mrb[0].mxu0
        %v4884 = vadd.f32 %v4560, %v4883
        %v4885 = vpop.f32.mrb[0].mxu0
        %4886 = vmatprep.mubr.f32.mxu0 0.0
        %4887 = vmatmul.mubr.f32.gmra.mrb[0].mxu0 %v4704
        %v4888 = vpop.f32.mrb[0].mxu0
        %v4889 = vadd.f32 %v4565, %v4888
        %v4890 = vpop.f32.mrb[0].mxu0
        %4891 = vmatprep.mubr.f32.mxu0 0.0
        %4892 = vmatmul.mubr.f32.gmra.mrb[0].mxu0 %v4707
        %v4893 = vpop.f32.mrb[0].mxu0
        %v4894 = vadd.f32 %v4570, %v4893
        %v4895 = vpop.f32.mrb[0].mxu0
        %4896 = vmatprep.mubr.f32.mxu0 0.0
        %4897 = vmatmul.mubr.f32.gmra.mrb[0].mxu0 %v4710
        %v4898 = vpop.f32.mrb[0].mxu0
        %v4899 = vadd.f32 %v4575, %v4898
        %v4900 = vpop.f32.mrb[0].mxu0
        %4901 = vmatprep.mubr.f32.mxu0 0.0
        %4902 = vmatmul.mubr.f32.gmra.mrb[0].mxu0 %v4713
        %v4903 = vpop.f32.mrb[0].mxu0
        %v4904 = vadd.f32 %v4580, %v4903
        %v4905 = vpop.f32.mrb[0].mxu0
        %4906 = vmatprep.mubr.f32.mxu0 0.0
        %4907 = vmatmul.mubr.f32.gmra.mrb[0].mxu0 %v4716
        %v4908 = vpop.f32.mrb[0].mxu0
        %v4909 = vadd.f32 %v4585, %v4908
        %v4910 = vpop.f32.mrb[0].mxu0
        %4911 = vmatprep.mubr.f32.mxu0 0.0
        %4912 = vmatmul.mubr.f32.gmra.mrb[0].mxu0 %v4719
        %v4913 = vpop.f32.mrb[0].mxu0
        %v4914 = vadd.f32 %v4590, %v4913
        %v4915 = vpop.f32.mrb[0].mxu0
        %4916 = vmatprep.mubr.f32.mxu0 0.0
        %4917 = vmatmul.mubr.f32.gmra.mrb[0].mxu0 %v4722
        %v4918 = vpop.f32.mrb[0].mxu0
        %v4919 = vadd.f32 %v4595, %v4918
        %v4920 = vpop.f32.mrb[0].mxu0
        %4921 = vmatprep.mubr.f32.mxu0 0.0
        %4922 = vmatmul.mubr.f32.gmra.mrb[0].mxu0 %v4725
        %v4923 = vpop.f32.mrb[0].mxu0
        %v4924 = vadd.f32 %v4600, %v4923
        %v4925 = vpop.f32.mrb[0].mxu0
        %4926 = vmatprep.mubr.f32.mxu0 0.0
        %4927 = vmatmul.mubr.f32.gmra.mrb[0].mxu0 %v4728
        %v4928 = vpop.f32.mrb[0].mxu0
        %v4929 = vadd.f32 %v4605, %v4928
        %v4930 = vpop.f32.mrb[0].mxu0
        %4931 = vmatprep.mubr.f32.mxu0 0.0
        %4932 = vmatmul.mubr.f32.gmra.mrb[0].mxu0 %v4731
        %v4933 = vpop.f32.mrb[0].mxu0
        %v4934 = vadd.f32 %v4610, %v4933
        %v4935 = vpop.f32.mrb[0].mxu0
        %4936 = vmatprep.mubr.f32.mxu0 0.0
        %4937 = vmatmul.mubr.f32.gmra.mrb[0].mxu0 %v4734
        %v4938 = vpop.f32.mrb[0].mxu0
        %v4939 = vadd.f32 %v4615, %v4938
        %v4940 = vpop.f32.mrb[0].mxu0
        %4941 = vmatprep.mubr.f32.mxu0 0.0
        %4942 = vmatmul.mubr.f32.gmra.mrb[0].mxu0 %v4737
        %v4943 = vpop.f32.mrb[0].mxu0
        %v4944 = vadd.f32 %v4620, %v4943
        %v4945 = vpop.f32.mrb[0].mxu0
        %4946 = vmatprep.mubr.f32.mxu0 0.0
        %4947 = vmatmul.mubr.f32.gmra.mrb[0].mxu0 %v4740
        %v4948 = vpop.f32.mrb[0].mxu0
        %v4949 = vadd.f32 %v4625, %v4948
        %v4950 = vpop.f32.mrb[0].mxu0
        %4951 = vmatprep.mubr.f32.mxu0 0.0
        %4952 = vmatmul.mubr.f32.gmra.mrb[0].mxu0 %v4743
        %v4953 = vpop.f32.mrb[0].mxu0
        %v4954 = vadd.f32 %v4630, %v4953
        %v4955 = vpop.f32.mrb[0].mxu0
        %4956 = vmatprep.mubr.f32.mxu0 0.0
        %4957 = vmatmul.mubr.f32.gmra.mrb[0].mxu0 %v4746
        %v4958 = vpop.f32.mrb[0].mxu0
        %v4959 = vadd.f32 %v4635, %v4958
        %v4960 = vpop.f32.mrb[0].mxu0
        %4961 = vmatprep.mubr.f32.mxu0 0.0
        %4962 = vmatmul.mubr.f32.gmra.mrb[0].mxu0 %v4749
        %v4963 = vpop.f32.mrb[0].mxu0
        %v4964 = vadd.f32 %v4640, %v4963
        %v4965 = vpop.f32.mrb[0].mxu0
        %4966 = vmatprep.mubr.f32.mxu0 0.0
        %4967 = vmatmul.mubr.f32.gmra.mrb[0].mxu0 %v4752
        %v4968 = vpop.f32.mrb[0].mxu0
        %v4969 = vadd.f32 %v4645, %v4968
        %v4970 = vpop.f32.mrb[0].mxu0
        %4971 = vmatprep.mubr.f32.mxu0 0.0
        %4972 = vmatmul.mubr.f32.gmra.mrb[0].mxu0 %v4755
        %v4973 = vpop.f32.mrb[0].mxu0
        %v4974 = vadd.f32 %v4650, %v4973
        %v4975 = vpop.f32.mrb[0].mxu0
        %4976 = vmatprep.mubr.f32.mxu0 0.0
        %4977 = vmatmul.mubr.f32.gmra.mrb[0].mxu0 %v4758
        %v4978 = vpop.f32.mrb[0].mxu0
        %v4979 = vadd.f32 %v4655, %v4978
        %v4980 = vpop.f32.mrb[0].mxu0
        %4981 = vmatprep.mubr.f32.mxu0 0.0
        %4982 = vmatmul.mubr.f32.gmra.mrb[0].mxu0 %v4761
        %v4983 = vpop.f32.mrb[0].mxu0
        %v4984 = vadd.f32 %v4660, %v4983
        %v4985 = vpop.f32.mrb[0].mxu0
        %4986 = vmatprep.mubr.f32.mxu0 0.0
        %4987 = vmatmul.mubr.f32.gmra.mrb[0].mxu0 %v4764
        %v4988 = vpop.f32.mrb[0].mxu0
        %v4989 = vadd.f32 %v4665, %v4988
        %v4990 = vpop.f32.mrb[0].mxu0
        %4991 = vmatprep.mubr.f32.mxu0 0.0
        %4992 = vmatmul.mubr.f32.gmra.mrb[0].mxu0 %v4767
        %v4993 = vpop.f32.mrb[0].mxu0
        %v4994 = vadd.f32 %v4670, %v4993
        %v4995 = vpop.f32.mrb[0].mxu0
        %4996 = vdwg.mxu0
        %v4997 = vld [vmem:[#allocation3 + $0x2] sm:$0xff]
        %v4998 = vld [vmem:[#allocation3 + $0xa] sm:$0xff]
        %v4999 = vld [vmem:[#allocation3 + $0x1a] sm:$0xff]
        %v5000 = vld [vmem:[#allocation3 + $0x22] sm:$0xff]
        %v5001 = vld [vmem:[#allocation3 + $0x32] sm:$0xff]
        %v5002 = vld [vmem:[#allocation3 + $0x3a] sm:$0xff]
        %v5003 = vld [vmem:[#allocation3 + $0x4a] sm:$0xff]
        %v5004 = vld [vmem:[#allocation3 + $0x52] sm:$0xff]
        %v5005 = vld [vmem:[#allocation3 + $0x62] sm:$0xff]
        %v5006 = vld [vmem:[#allocation3 + $0x6a] sm:$0xff]
        %v5007 = vld [vmem:[#allocation3 + $0x7a] sm:$0xff]
        %v5008 = vld [vmem:[#allocation3 + $0x82] sm:$0xff]
        %v5009 = vld [vmem:[#allocation3 + $0x92] sm:$0xff]
        %v5010 = vld [vmem:[#allocation3 + $0x9a] sm:$0xff]
        %v5011 = vld [vmem:[#allocation3 + $0xaa] sm:$0xff]
        %v5012 = vld [vmem:[#allocation3 + $0xb2] sm:$0xff]
        %v5013 = vld [vmem:[#allocation3 + $0xc2] sm:$0xff]
        %v5014 = vld [vmem:[#allocation3 + $0xca] sm:$0xff]
        %v5015 = vld [vmem:[#allocation3 + $0xda] sm:$0xff]
        %v5016 = vld [vmem:[#allocation3 + $0xe2] sm:$0xff]
        %v5017 = vld [vmem:[#allocation3 + $0xf2] sm:$0xff]
        %v5018 = vld [vmem:[#allocation3 + $0xfa] sm:$0xff]
        %v5019 = vld [vmem:[#allocation3 + $0x10a] sm:$0xff]
        %v5020 = vld [vmem:[#allocation3 + $0x112] sm:$0xff]
        %v5021 = vld [vmem:[#allocation3 + $0x122] sm:$0xff]
        %v5022 = vld [vmem:[#allocation3 + $0x12a] sm:$0xff]
        %v5023 = vld [vmem:[#allocation3 + $0x13a] sm:$0xff]
        %v5024 = vld [vmem:[#allocation3 + $0x142] sm:$0xff]
        %v5025 = vld [vmem:[#allocation3 + $0x152] sm:$0xff]
        %v5026 = vld [vmem:[#allocation3 + $0x15a] sm:$0xff]
        %v5027 = vld [vmem:[#allocation3 + $0x16a] sm:$0xff]
        %v5028 = vld [vmem:[#allocation3 + $0x172] sm:$0xff]
        %s5029 = scalar_lea.vmem %s3, 8
        %v5030 = vld [vmem:[%s5029] sm:$0xf]
        %v5032 = vsel %vm277, %v4997, 0
        %v5035 = vsel %vm277, %v4998, 0
        %v5038 = vsel %vm277, %v4999, 0
        %v5041 = vsel %vm277, %v5000, 0
        %v5044 = vsel %vm277, %v5001, 0
        %v5047 = vsel %vm277, %v5002, 0
        %v5050 = vsel %vm277, %v5003, 0
        %v5053 = vsel %vm277, %v5004, 0
        %v5056 = vsel %vm277, %v5005, 0
        %v5059 = vsel %vm277, %v5006, 0
        %v5062 = vsel %vm277, %v5007, 0
        %v5065 = vsel %vm277, %v5008, 0
        %v5068 = vsel %vm277, %v5009, 0
        %v5071 = vsel %vm277, %v5010, 0
        %v5074 = vsel %vm277, %v5011, 0
        %v5077 = vsel %vm277, %v5012, 0
        %v5080 = vsel %vm277, %v5013, 0
        %v5083 = vsel %vm277, %v5014, 0
        %v5086 = vsel %vm277, %v5015, 0
        %v5089 = vsel %vm277, %v5016, 0
        %v5092 = vsel %vm277, %v5017, 0
        %v5095 = vsel %vm277, %v5018, 0
        %v5098 = vsel %vm277, %v5019, 0
        %v5101 = vsel %vm277, %v5020, 0
        %v5104 = vsel %vm277, %v5021, 0
        %v5107 = vsel %vm277, %v5022, 0
        %v5110 = vsel %vm277, %v5023, 0
        %v5113 = vsel %vm277, %v5024, 0
        %v5116 = vsel %vm277, %v5025, 0
        %v5119 = vsel %vm277, %v5026, 0
        %v5122 = vsel %vm277, %v5027, 0
        %v5125 = vsel %vm277, %v5028, 0
        %v5128 = vsel %vm551, %v5030, 0
        %5130 = vmatprep.subr.mxu0 0.0
        %5131 = vmatpush1.msra.mxu0 %v5128
        %5132 = vmatprep.subr.mxu0 0.0
        %5133 = vmatpush1.msra.mxu0 0.0
        %5134 = vmatprep.subr.mxu0 0.0
        %5135 = vmatpush1.msra.mxu0 0.0
        %5136 = vmatprep.subr.mxu0 0.0
        %5137 = vmatpush1.msra.mxu0 0.0
        %5138 = vmatprep.subr.mxu0 0.0
        %5139 = vmatpush1.msra.mxu0 0.0
        %5140 = vmatprep.subr.mxu0 0.0
        %5141 = vmatpush1.msra.mxu0 0.0
        %5142 = vmatprep.subr.mxu0 0.0
        %5143 = vmatpush1.msra.mxu0 0.0
        %5144 = vmatprep.subr.mxu0 0.0
        %5145 = vmatpush1.msra.mxu0 0.0
        %5146 = vmatprep.subr.mxu0 0.0
        %5147 = vmatpush1.msra.mxu0 0.0
        %5148 = vmatprep.subr.mxu0 0.0
        %5149 = vmatpush1.msra.mxu0 0.0
        %5150 = vmatprep.subr.mxu0 0.0
        %5151 = vmatpush1.msra.mxu0 0.0
        %5152 = vmatprep.subr.mxu0 0.0
        %5153 = vmatpush1.msra.mxu0 0.0
        %5154 = vmatprep.subr.mxu0 0.0
        %5155 = vmatpush1.msra.mxu0 0.0
        %5156 = vmatprep.subr.mxu0 0.0
        %5157 = vmatpush1.msra.mxu0 0.0
        %5158 = vmatprep.subr.mxu0 0.0
        %5159 = vmatpush1.msra.mxu0 0.0
        %5160 = vmatprep.subr.mxu0 0.0
        %5161 = vmatpush1.msra.mxu0 0.0
        %5162 = vmatprep.subr.mxu0 0.0
        %5163 = vmatpush1.msra.mxu0 0.0
        %5164 = vmatprep.subr.mxu0 0.0
        %5165 = vmatpush1.msra.mxu0 0.0
        %5166 = vmatprep.subr.mxu0 0.0
        %5167 = vmatpush1.msra.mxu0 0.0
        %5168 = vmatprep.subr.mxu0 0.0
        %5169 = vmatpush1.msra.mxu0 0.0
        %5170 = vmatprep.subr.mxu0 0.0
        %5171 = vmatpush1.msra.mxu0 0.0
        %5172 = vmatprep.subr.mxu0 0.0
        %5173 = vmatpush1.msra.mxu0 0.0
        %5174 = vmatprep.subr.mxu0 0.0
        %5175 = vmatpush1.msra.mxu0 0.0
        %5176 = vmatprep.subr.mxu0 0.0
        %5177 = vmatpush1.msra.mxu0 0.0
        %5178 = vmatprep.subr.mxu0 0.0
        %5179 = vmatpush1.msra.mxu0 0.0
        %5180 = vmatprep.subr.mxu0 0.0
        %5181 = vmatpush1.msra.mxu0 0.0
        %5182 = vmatprep.subr.mxu0 0.0
        %5183 = vmatpush1.msra.mxu0 0.0
        %5184 = vmatprep.subr.mxu0 0.0
        %5185 = vmatpush1.msra.mxu0 0.0
        %5186 = vmatprep.subr.mxu0 0.0
        %5187 = vmatpush1.msra.mxu0 0.0
        %5188 = vmatprep.subr.mxu0 0.0
        %5189 = vmatpush1.msra.mxu0 0.0
        %5190 = vmatprep.subr.mxu0 0.0
        %5191 = vmatpush1.msra.mxu0 0.0
        %5192 = vmatprep.subr.mxu0 0.0
        %5193 = vmatpush1.msra.mxu0 0.0
        %5194 = vmatprep.mubr.f32.mxu0 0.0
        %5195 = vmatmul.mubr.f32.gmra.mrb[0].mxu0 %v5032
        %v5196 = vpop.f32.mrb[0].mxu0
        %v5197 = vadd.f32 0.0, %v5196
        %v5198 = vpop.f32.mrb[0].mxu0
        %5199 = vmatprep.mubr.f32.mxu0 0.0
        %5200 = vmatmul.mubr.f32.gmra.mrb[0].mxu0 %v5035
        %v5201 = vpop.f32.mrb[0].mxu0
        %v5202 = vadd.f32 0.0, %v5201
        %v5203 = vpop.f32.mrb[0].mxu0
        %5204 = vmatprep.mubr.f32.mxu0 0.0
        %5205 = vmatmul.mubr.f32.gmra.mrb[0].mxu0 %v5038
        %v5206 = vpop.f32.mrb[0].mxu0
        %v5207 = vadd.f32 0.0, %v5206
        %v5208 = vpop.f32.mrb[0].mxu0
        %5209 = vmatprep.mubr.f32.mxu0 0.0
        %5210 = vmatmul.mubr.f32.gmra.mrb[0].mxu0 %v5041
        %v5211 = vpop.f32.mrb[0].mxu0
        %v5212 = vadd.f32 0.0, %v5211
        %v5213 = vpop.f32.mrb[0].mxu0
        %5214 = vmatprep.mubr.f32.mxu0 0.0
        %5215 = vmatmul.mubr.f32.gmra.mrb[0].mxu0 %v5044
        %v5216 = vpop.f32.mrb[0].mxu0
        %v5217 = vadd.f32 0.0, %v5216
        %v5218 = vpop.f32.mrb[0].mxu0
        %5219 = vmatprep.mubr.f32.mxu0 0.0
        %5220 = vmatmul.mubr.f32.gmra.mrb[0].mxu0 %v5047
        %v5221 = vpop.f32.mrb[0].mxu0
        %v5222 = vadd.f32 0.0, %v5221
        %v5223 = vpop.f32.mrb[0].mxu0
        %5224 = vmatprep.mubr.f32.mxu0 0.0
        %5225 = vmatmul.mubr.f32.gmra.mrb[0].mxu0 %v5050
        %v5226 = vpop.f32.mrb[0].mxu0
        %v5227 = vadd.f32 0.0, %v5226
        %v5228 = vpop.f32.mrb[0].mxu0
        %5229 = vmatprep.mubr.f32.mxu0 0.0
        %5230 = vmatmul.mubr.f32.gmra.mrb[0].mxu0 %v5053
        %v5231 = vpop.f32.mrb[0].mxu0
        %v5232 = vadd.f32 0.0, %v5231
        %v5233 = vpop.f32.mrb[0].mxu0
        %5234 = vmatprep.mubr.f32.mxu0 0.0
        %5235 = vmatmul.mubr.f32.gmra.mrb[0].mxu0 %v5056
        %v5236 = vpop.f32.mrb[0].mxu0
        %v5237 = vadd.f32 0.0, %v5236
        %v5238 = vpop.f32.mrb[0].mxu0
        %5239 = vmatprep.mubr.f32.mxu0 0.0
        %5240 = vmatmul.mubr.f32.gmra.mrb[0].mxu0 %v5059
        %v5241 = vpop.f32.mrb[0].mxu0
        %v5242 = vadd.f32 0.0, %v5241
        %v5243 = vpop.f32.mrb[0].mxu0
        %5244 = vmatprep.mubr.f32.mxu0 0.0
        %5245 = vmatmul.mubr.f32.gmra.mrb[0].mxu0 %v5062
        %v5246 = vpop.f32.mrb[0].mxu0
        %v5247 = vadd.f32 0.0, %v5246
        %v5248 = vpop.f32.mrb[0].mxu0
        %5249 = vmatprep.mubr.f32.mxu0 0.0
        %5250 = vmatmul.mubr.f32.gmra.mrb[0].mxu0 %v5065
        %v5251 = vpop.f32.mrb[0].mxu0
        %v5252 = vadd.f32 0.0, %v5251
        %v5253 = vpop.f32.mrb[0].mxu0
        %5254 = vmatprep.mubr.f32.mxu0 0.0
        %5255 = vmatmul.mubr.f32.gmra.mrb[0].mxu0 %v5068
        %v5256 = vpop.f32.mrb[0].mxu0
        %v5257 = vadd.f32 0.0, %v5256
        %v5258 = vpop.f32.mrb[0].mxu0
        %5259 = vmatprep.mubr.f32.mxu0 0.0
        %5260 = vmatmul.mubr.f32.gmra.mrb[0].mxu0 %v5071
        %v5261 = vpop.f32.mrb[0].mxu0
        %v5262 = vadd.f32 0.0, %v5261
        %v5263 = vpop.f32.mrb[0].mxu0
        %5264 = vmatprep.mubr.f32.mxu0 0.0
        %5265 = vmatmul.mubr.f32.gmra.mrb[0].mxu0 %v5074
        %v5266 = vpop.f32.mrb[0].mxu0
        %v5267 = vadd.f32 0.0, %v5266
        %v5268 = vpop.f32.mrb[0].mxu0
        %5269 = vmatprep.mubr.f32.mxu0 0.0
        %5270 = vmatmul.mubr.f32.gmra.mrb[0].mxu0 %v5077
        %v5271 = vpop.f32.mrb[0].mxu0
        %v5272 = vadd.f32 0.0, %v5271
        %v5273 = vpop.f32.mrb[0].mxu0
        %5274 = vmatprep.mubr.f32.mxu0 0.0
        %5275 = vmatmul.mubr.f32.gmra.mrb[0].mxu0 %v5080
        %v5276 = vpop.f32.mrb[0].mxu0
        %v5277 = vadd.f32 0.0, %v5276
        %v5278 = vpop.f32.mrb[0].mxu0
        %5279 = vmatprep.mubr.f32.mxu0 0.0
        %5280 = vmatmul.mubr.f32.gmra.mrb[0].mxu0 %v5083
        %v5281 = vpop.f32.mrb[0].mxu0
        %v5282 = vadd.f32 0.0, %v5281
        %v5283 = vpop.f32.mrb[0].mxu0
        %5284 = vmatprep.mubr.f32.mxu0 0.0
        %5285 = vmatmul.mubr.f32.gmra.mrb[0].mxu0 %v5086
        %v5286 = vpop.f32.mrb[0].mxu0
        %v5287 = vadd.f32 0.0, %v5286
        %v5288 = vpop.f32.mrb[0].mxu0
        %5289 = vmatprep.mubr.f32.mxu0 0.0
        %5290 = vmatmul.mubr.f32.gmra.mrb[0].mxu0 %v5089
        %v5291 = vpop.f32.mrb[0].mxu0
        %v5292 = vadd.f32 0.0, %v5291
        %v5293 = vpop.f32.mrb[0].mxu0
        %5294 = vmatprep.mubr.f32.mxu0 0.0
        %5295 = vmatmul.mubr.f32.gmra.mrb[0].mxu0 %v5092
        %v5296 = vpop.f32.mrb[0].mxu0
        %v5297 = vadd.f32 0.0, %v5296
        %v5298 = vpop.f32.mrb[0].mxu0
        %5299 = vmatprep.mubr.f32.mxu0 0.0
        %5300 = vmatmul.mubr.f32.gmra.mrb[0].mxu0 %v5095
        %v5301 = vpop.f32.mrb[0].mxu0
        %v5302 = vadd.f32 0.0, %v5301
        %v5303 = vpop.f32.mrb[0].mxu0
        %5304 = vmatprep.mubr.f32.mxu0 0.0
        %5305 = vmatmul.mubr.f32.gmra.mrb[0].mxu0 %v5098
        %v5306 = vpop.f32.mrb[0].mxu0
        %v5307 = vadd.f32 0.0, %v5306
        %v5308 = vpop.f32.mrb[0].mxu0
        %5309 = vmatprep.mubr.f32.mxu0 0.0
        %5310 = vmatmul.mubr.f32.gmra.mrb[0].mxu0 %v5101
        %v5311 = vpop.f32.mrb[0].mxu0
        %v5312 = vadd.f32 0.0, %v5311
        %v5313 = vpop.f32.mrb[0].mxu0
        %5314 = vmatprep.mubr.f32.mxu0 0.0
        %5315 = vmatmul.mubr.f32.gmra.mrb[0].mxu0 %v5104
        %v5316 = vpop.f32.mrb[0].mxu0
        %v5317 = vadd.f32 0.0, %v5316
        %v5318 = vpop.f32.mrb[0].mxu0
        %5319 = vmatprep.mubr.f32.mxu0 0.0
        %5320 = vmatmul.mubr.f32.gmra.mrb[0].mxu0 %v5107
        %v5321 = vpop.f32.mrb[0].mxu0
        %v5322 = vadd.f32 0.0, %v5321
        %v5323 = vpop.f32.mrb[0].mxu0
        %5324 = vmatprep.mubr.f32.mxu0 0.0
        %5325 = vmatmul.mubr.f32.gmra.mrb[0].mxu0 %v5110
        %v5326 = vpop.f32.mrb[0].mxu0
        %v5327 = vadd.f32 0.0, %v5326
        %v5328 = vpop.f32.mrb[0].mxu0
        %5329 = vmatprep.mubr.f32.mxu0 0.0
        %5330 = vmatmul.mubr.f32.gmra.mrb[0].mxu0 %v5113
        %v5331 = vpop.f32.mrb[0].mxu0
        %v5332 = vadd.f32 0.0, %v5331
        %v5333 = vpop.f32.mrb[0].mxu0
        %5334 = vmatprep.mubr.f32.mxu0 0.0
        %5335 = vmatmul.mubr.f32.gmra.mrb[0].mxu0 %v5116
        %v5336 = vpop.f32.mrb[0].mxu0
        %v5337 = vadd.f32 0.0, %v5336
        %v5338 = vpop.f32.mrb[0].mxu0
        %5339 = vmatprep.mubr.f32.mxu0 0.0
        %5340 = vmatmul.mubr.f32.gmra.mrb[0].mxu0 %v5119
        %v5341 = vpop.f32.mrb[0].mxu0
        %v5342 = vadd.f32 0.0, %v5341
        %v5343 = vpop.f32.mrb[0].mxu0
        %5344 = vmatprep.mubr.f32.mxu0 0.0
        %5345 = vmatmul.mubr.f32.gmra.mrb[0].mxu0 %v5122
        %v5346 = vpop.f32.mrb[0].mxu0
        %v5347 = vadd.f32 0.0, %v5346
        %v5348 = vpop.f32.mrb[0].mxu0
        %5349 = vmatprep.mubr.f32.mxu0 0.0
        %5350 = vmatmul.mubr.f32.gmra.mrb[0].mxu0 %v5125
        %v5351 = vpop.f32.mrb[0].mxu0
        %v5352 = vadd.f32 0.0, %v5351
        %v5353 = vpop.f32.mrb[0].mxu0
        %5354 = vdwg.mxu0
        %v5355 = vadd.f32 %v4839, %v5197
        %v5356 = vadd.f32 %v4844, %v5202
        %v5357 = vadd.f32 %v4849, %v5207
        %v5358 = vadd.f32 %v4854, %v5212
        %v5359 = vadd.f32 %v4859, %v5217
        %v5360 = vadd.f32 %v4864, %v5222
        %v5361 = vadd.f32 %v4869, %v5227
        %v5362 = vadd.f32 %v4874, %v5232
        %v5363 = vadd.f32 %v4879, %v5237
        %v5364 = vadd.f32 %v4884, %v5242
        %v5365 = vadd.f32 %v4889, %v5247
        %v5366 = vadd.f32 %v4894, %v5252
        %v5367 = vadd.f32 %v4899, %v5257
        %v5368 = vadd.f32 %v4904, %v5262
        %v5369 = vadd.f32 %v4909, %v5267
        %v5370 = vadd.f32 %v4914, %v5272
        %v5371 = vadd.f32 %v4919, %v5277
        %v5372 = vadd.f32 %v4924, %v5282
        %v5373 = vadd.f32 %v4929, %v5287
        %v5374 = vadd.f32 %v4934, %v5292
        %v5375 = vadd.f32 %v4939, %v5297
        %v5376 = vadd.f32 %v4944, %v5302
        %v5377 = vadd.f32 %v4949, %v5307
        %v5378 = vadd.f32 %v4954, %v5312
        %v5379 = vadd.f32 %v4959, %v5317
        %v5380 = vadd.f32 %v4964, %v5322
        %v5381 = vadd.f32 %v4969, %v5327
        %v5382 = vadd.f32 %v4974, %v5332
        %v5383 = vadd.f32 %v4979, %v5337
        %v5384 = vadd.f32 %v4984, %v5342
        %v5385 = vadd.f32 %v4989, %v5347
        %v5386 = vadd.f32 %v4994, %v5352
        %v5387 = vld [vmem:[%s4249] sm:$0xff]
        %v5388 = vld [vmem:[%s4249 + $0x8] sm:$0xff]
        %v5389 = vld [vmem:[%s4249 + $0x18] sm:$0xff]
        %v5390 = vld [vmem:[%s4249 + $0x20] sm:$0xff]
        %v5391 = vld [vmem:[%s4249 + $0x30] sm:$0xff]
        %v5392 = vld [vmem:[%s4249 + $0x38] sm:$0xff]
        %v5393 = vld [vmem:[%s4249 + $0x48] sm:$0xff]
        %v5394 = vld [vmem:[%s4249 + $0x50] sm:$0xff]
        %v5395 = vld [vmem:[%s4249 + $0x60] sm:$0xff]
        %v5396 = vld [vmem:[%s4249 + $0x68] sm:$0xff]
        %v5397 = vld [vmem:[%s4249 + $0x78] sm:$0xff]
        %v5398 = vld [vmem:[%s4249 + $0x80] sm:$0xff]
        %v5399 = vld [vmem:[%s4249 + $0x90] sm:$0xff]
        %v5400 = vld [vmem:[%s4249 + $0x98] sm:$0xff]
        %v5401 = vld [vmem:[%s4249 + $0xa8] sm:$0xff]
        %v5402 = vld [vmem:[%s4249 + $0xb0] sm:$0xff]
        %v5403 = vld [vmem:[%s4249 + $0xc0] sm:$0xff]
        %v5404 = vld [vmem:[%s4249 + $0xc8] sm:$0xff]
        %v5405 = vld [vmem:[%s4249 + $0xd8] sm:$0xff]
        %v5406 = vld [vmem:[%s4249 + $0xe0] sm:$0xff]
        %v5407 = vld [vmem:[%s4249 + $0xf0] sm:$0xff]
        %v5408 = vld [vmem:[%s4249 + $0xf8] sm:$0xff]
        %v5409 = vld [vmem:[%s4249 + $0x108] sm:$0xff]
        %v5410 = vld [vmem:[%s4249 + $0x110] sm:$0xff]
        %v5411 = vld [vmem:[%s4249 + $0x120] sm:$0xff]
        %v5412 = vld [vmem:[%s4249 + $0x128] sm:$0xff]
        %v5413 = vld [vmem:[%s4249 + $0x138] sm:$0xff]
        %v5414 = vld [vmem:[%s4249 + $0x140] sm:$0xff]
        %v5415 = vld [vmem:[%s4249 + $0x150] sm:$0xff]
        %v5416 = vld [vmem:[%s4249 + $0x158] sm:$0xff]
        %v5417 = vld [vmem:[%s4249 + $0x168] sm:$0xff]
        %v5418 = vld [vmem:[%s4249 + $0x170] sm:$0xff]
        %s5419 = scalar_lea.vmem %s3, 12
        %v5420 = vld [vmem:[%s5419] sm:$0xf]
        %v5422 = vsel %vm277, %v5387, 0
        %v5425 = vsel %vm277, %v5388, 0
        %v5428 = vsel %vm277, %v5389, 0
        %v5431 = vsel %vm277, %v5390, 0
        %v5434 = vsel %vm277, %v5391, 0
        %v5437 = vsel %vm277, %v5392, 0
        %v5440 = vsel %vm277, %v5393, 0
        %v5443 = vsel %vm277, %v5394, 0
        %v5446 = vsel %vm277, %v5395, 0
        %v5449 = vsel %vm277, %v5396, 0
        %v5452 = vsel %vm277, %v5397, 0
        %v5455 = vsel %vm277, %v5398, 0
        %v5458 = vsel %vm277, %v5399, 0
        %v5461 = vsel %vm277, %v5400, 0
        %v5464 = vsel %vm277, %v5401, 0
        %v5467 = vsel %vm277, %v5402, 0
        %v5470 = vsel %vm277, %v5403, 0
        %v5473 = vsel %vm277, %v5404, 0
        %v5476 = vsel %vm277, %v5405, 0
        %v5479 = vsel %vm277, %v5406, 0
        %v5482 = vsel %vm277, %v5407, 0
        %v5485 = vsel %vm277, %v5408, 0
        %v5488 = vsel %vm277, %v5409, 0
        %v5491 = vsel %vm277, %v5410, 0
        %v5494 = vsel %vm277, %v5411, 0
        %v5497 = vsel %vm277, %v5412, 0
        %v5500 = vsel %vm277, %v5413, 0
        %v5503 = vsel %vm277, %v5414, 0
        %v5506 = vsel %vm277, %v5415, 0
        %v5509 = vsel %vm277, %v5416, 0
        %v5512 = vsel %vm277, %v5417, 0
        %v5515 = vsel %vm277, %v5418, 0
        %v5518 = vsel %vm551, %v5420, 0
        %5520 = vmatprep.subr.mxu0 0.0
        %5521 = vmatpush1.msra.mxu0 %v5518
        %5522 = vmatprep.subr.mxu0 0.0
        %5523 = vmatpush1.msra.mxu0 0.0
        %5524 = vmatprep.subr.mxu0 0.0
        %5525 = vmatpush1.msra.mxu0 0.0
        %5526 = vmatprep.subr.mxu0 0.0
        %5527 = vmatpush1.msra.mxu0 0.0
        %5528 = vmatprep.subr.mxu0 0.0
        %5529 = vmatpush1.msra.mxu0 0.0
        %5530 = vmatprep.subr.mxu0 0.0
        %5531 = vmatpush1.msra.mxu0 0.0
        %5532 = vmatprep.subr.mxu0 0.0
        %5533 = vmatpush1.msra.mxu0 0.0
        %5534 = vmatprep.subr.mxu0 0.0
        %5535 = vmatpush1.msra.mxu0 0.0
        %5536 = vmatprep.subr.mxu0 0.0
        %5537 = vmatpush1.msra.mxu0 0.0
        %5538 = vmatprep.subr.mxu0 0.0
        %5539 = vmatpush1.msra.mxu0 0.0
        %5540 = vmatprep.subr.mxu0 0.0
        %5541 = vmatpush1.msra.mxu0 0.0
        %5542 = vmatprep.subr.mxu0 0.0
        %5543 = vmatpush1.msra.mxu0 0.0
        %5544 = vmatprep.subr.mxu0 0.0
        %5545 = vmatpush1.msra.mxu0 0.0
        %5546 = vmatprep.subr.mxu0 0.0
        %5547 = vmatpush1.msra.mxu0 0.0
        %5548 = vmatprep.subr.mxu0 0.0
        %5549 = vmatpush1.msra.mxu0 0.0
        %5550 = vmatprep.subr.mxu0 0.0
        %5551 = vmatpush1.msra.mxu0 0.0
        %5552 = vmatprep.subr.mxu0 0.0
        %5553 = vmatpush1.msra.mxu0 0.0
        %5554 = vmatprep.subr.mxu0 0.0
        %5555 = vmatpush1.msra.mxu0 0.0
        %5556 = vmatprep.subr.mxu0 0.0
        %5557 = vmatpush1.msra.mxu0 0.0
        %5558 = vmatprep.subr.mxu0 0.0
        %5559 = vmatpush1.msra.mxu0 0.0
        %5560 = vmatprep.subr.mxu0 0.0
        %5561 = vmatpush1.msra.mxu0 0.0
        %5562 = vmatprep.subr.mxu0 0.0
        %5563 = vmatpush1.msra.mxu0 0.0
        %5564 = vmatprep.subr.mxu0 0.0
        %5565 = vmatpush1.msra.mxu0 0.0
        %5566 = vmatprep.subr.mxu0 0.0
        %5567 = vmatpush1.msra.mxu0 0.0
        %5568 = vmatprep.subr.mxu0 0.0
        %5569 = vmatpush1.msra.mxu0 0.0
        %5570 = vmatprep.subr.mxu0 0.0
        %5571 = vmatpush1.msra.mxu0 0.0
        %5572 = vmatprep.subr.mxu0 0.0
        %5573 = vmatpush1.msra.mxu0 0.0
        %5574 = vmatprep.subr.mxu0 0.0
        %5575 = vmatpush1.msra.mxu0 0.0
        %5576 = vmatprep.subr.mxu0 0.0
        %5577 = vmatpush1.msra.mxu0 0.0
        %5578 = vmatprep.subr.mxu0 0.0
        %5579 = vmatpush1.msra.mxu0 0.0
        %5580 = vmatprep.subr.mxu0 0.0
        %5581 = vmatpush1.msra.mxu0 0.0
        %5582 = vmatprep.subr.mxu0 0.0
        %5583 = vmatpush1.msra.mxu0 0.0
        %5584 = vmatprep.mubr.f32.mxu0 0.0
        %5585 = vmatmul.mubr.f32.gmra.mrb[0].mxu0 %v5422
        %v5586 = vpop.f32.mrb[0].mxu0
        %v5587 = vadd.f32 0.0, %v5586
        %v5588 = vpop.f32.mrb[0].mxu0
        %5589 = vmatprep.mubr.f32.mxu0 0.0
        %5590 = vmatmul.mubr.f32.gmra.mrb[0].mxu0 %v5425
        %v5591 = vpop.f32.mrb[0].mxu0
        %v5592 = vadd.f32 0.0, %v5591
        %v5593 = vpop.f32.mrb[0].mxu0
        %5594 = vmatprep.mubr.f32.mxu0 0.0
        %5595 = vmatmul.mubr.f32.gmra.mrb[0].mxu0 %v5428
        %v5596 = vpop.f32.mrb[0].mxu0
        %v5597 = vadd.f32 0.0, %v5596
        %v5598 = vpop.f32.mrb[0].mxu0
        %5599 = vmatprep.mubr.f32.mxu0 0.0
        %5600 = vmatmul.mubr.f32.gmra.mrb[0].mxu0 %v5431
        %v5601 = vpop.f32.mrb[0].mxu0
        %v5602 = vadd.f32 0.0, %v5601
        %v5603 = vpop.f32.mrb[0].mxu0
        %5604 = vmatprep.mubr.f32.mxu0 0.0
        %5605 = vmatmul.mubr.f32.gmra.mrb[0].mxu0 %v5434
        %v5606 = vpop.f32.mrb[0].mxu0
        %v5607 = vadd.f32 0.0, %v5606
        %v5608 = vpop.f32.mrb[0].mxu0
        %5609 = vmatprep.mubr.f32.mxu0 0.0
        %5610 = vmatmul.mubr.f32.gmra.mrb[0].mxu0 %v5437
        %v5611 = vpop.f32.mrb[0].mxu0
        %v5612 = vadd.f32 0.0, %v5611
        %v5613 = vpop.f32.mrb[0].mxu0
        %5614 = vmatprep.mubr.f32.mxu0 0.0
        %5615 = vmatmul.mubr.f32.gmra.mrb[0].mxu0 %v5440
        %v5616 = vpop.f32.mrb[0].mxu0
        %v5617 = vadd.f32 0.0, %v5616
        %v5618 = vpop.f32.mrb[0].mxu0
        %5619 = vmatprep.mubr.f32.mxu0 0.0
        %5620 = vmatmul.mubr.f32.gmra.mrb[0].mxu0 %v5443
        %v5621 = vpop.f32.mrb[0].mxu0
        %v5622 = vadd.f32 0.0, %v5621
        %v5623 = vpop.f32.mrb[0].mxu0
        %5624 = vmatprep.mubr.f32.mxu0 0.0
        %5625 = vmatmul.mubr.f32.gmra.mrb[0].mxu0 %v5446
        %v5626 = vpop.f32.mrb[0].mxu0
        %v5627 = vadd.f32 0.0, %v5626
        %v5628 = vpop.f32.mrb[0].mxu0
        %5629 = vmatprep.mubr.f32.mxu0 0.0
        %5630 = vmatmul.mubr.f32.gmra.mrb[0].mxu0 %v5449
        %v5631 = vpop.f32.mrb[0].mxu0
        %v5632 = vadd.f32 0.0, %v5631
        %v5633 = vpop.f32.mrb[0].mxu0
        %5634 = vmatprep.mubr.f32.mxu0 0.0
        %5635 = vmatmul.mubr.f32.gmra.mrb[0].mxu0 %v5452
        %v5636 = vpop.f32.mrb[0].mxu0
        %v5637 = vadd.f32 0.0, %v5636
        %v5638 = vpop.f32.mrb[0].mxu0
        %5639 = vmatprep.mubr.f32.mxu0 0.0
        %5640 = vmatmul.mubr.f32.gmra.mrb[0].mxu0 %v5455
        %v5641 = vpop.f32.mrb[0].mxu0
        %v5642 = vadd.f32 0.0, %v5641
        %v5643 = vpop.f32.mrb[0].mxu0
        %5644 = vmatprep.mubr.f32.mxu0 0.0
        %5645 = vmatmul.mubr.f32.gmra.mrb[0].mxu0 %v5458
        %v5646 = vpop.f32.mrb[0].mxu0
        %v5647 = vadd.f32 0.0, %v5646
        %v5648 = vpop.f32.mrb[0].mxu0
        %5649 = vmatprep.mubr.f32.mxu0 0.0
        %5650 = vmatmul.mubr.f32.gmra.mrb[0].mxu0 %v5461
        %v5651 = vpop.f32.mrb[0].mxu0
        %v5652 = vadd.f32 0.0, %v5651
        %v5653 = vpop.f32.mrb[0].mxu0
        %5654 = vmatprep.mubr.f32.mxu0 0.0
        %5655 = vmatmul.mubr.f32.gmra.mrb[0].mxu0 %v5464
        %v5656 = vpop.f32.mrb[0].mxu0
        %v5657 = vadd.f32 0.0, %v5656
        %v5658 = vpop.f32.mrb[0].mxu0
        %5659 = vmatprep.mubr.f32.mxu0 0.0
        %5660 = vmatmul.mubr.f32.gmra.mrb[0].mxu0 %v5467
        %v5661 = vpop.f32.mrb[0].mxu0
        %v5662 = vadd.f32 0.0, %v5661
        %v5663 = vpop.f32.mrb[0].mxu0
        %5664 = vmatprep.mubr.f32.mxu0 0.0
        %5665 = vmatmul.mubr.f32.gmra.mrb[0].mxu0 %v5470
        %v5666 = vpop.f32.mrb[0].mxu0
        %v5667 = vadd.f32 0.0, %v5666
        %v5668 = vpop.f32.mrb[0].mxu0
        %5669 = vmatprep.mubr.f32.mxu0 0.0
        %5670 = vmatmul.mubr.f32.gmra.mrb[0].mxu0 %v5473
        %v5671 = vpop.f32.mrb[0].mxu0
        %v5672 = vadd.f32 0.0, %v5671
        %v5673 = vpop.f32.mrb[0].mxu0
        %5674 = vmatprep.mubr.f32.mxu0 0.0
        %5675 = vmatmul.mubr.f32.gmra.mrb[0].mxu0 %v5476
        %v5676 = vpop.f32.mrb[0].mxu0
        %v5677 = vadd.f32 0.0, %v5676
        %v5678 = vpop.f32.mrb[0].mxu0
        %5679 = vmatprep.mubr.f32.mxu0 0.0
        %5680 = vmatmul.mubr.f32.gmra.mrb[0].mxu0 %v5479
        %v5681 = vpop.f32.mrb[0].mxu0
        %v5682 = vadd.f32 0.0, %v5681
        %v5683 = vpop.f32.mrb[0].mxu0
        %5684 = vmatprep.mubr.f32.mxu0 0.0
        %5685 = vmatmul.mubr.f32.gmra.mrb[0].mxu0 %v5482
        %v5686 = vpop.f32.mrb[0].mxu0
        %v5687 = vadd.f32 0.0, %v5686
        %v5688 = vpop.f32.mrb[0].mxu0
        %5689 = vmatprep.mubr.f32.mxu0 0.0
        %5690 = vmatmul.mubr.f32.gmra.mrb[0].mxu0 %v5485
        %v5691 = vpop.f32.mrb[0].mxu0
        %v5692 = vadd.f32 0.0, %v5691
        %v5693 = vpop.f32.mrb[0].mxu0
        %5694 = vmatprep.mubr.f32.mxu0 0.0
        %5695 = vmatmul.mubr.f32.gmra.mrb[0].mxu0 %v5488
        %v5696 = vpop.f32.mrb[0].mxu0
        %v5697 = vadd.f32 0.0, %v5696
        %v5698 = vpop.f32.mrb[0].mxu0
        %5699 = vmatprep.mubr.f32.mxu0 0.0
        %5700 = vmatmul.mubr.f32.gmra.mrb[0].mxu0 %v5491
        %v5701 = vpop.f32.mrb[0].mxu0
        %v5702 = vadd.f32 0.0, %v5701
        %v5703 = vpop.f32.mrb[0].mxu0
        %5704 = vmatprep.mubr.f32.mxu0 0.0
        %5705 = vmatmul.mubr.f32.gmra.mrb[0].mxu0 %v5494
        %v5706 = vpop.f32.mrb[0].mxu0
        %v5707 = vadd.f32 0.0, %v5706
        %v5708 = vpop.f32.mrb[0].mxu0
        %5709 = vmatprep.mubr.f32.mxu0 0.0
        %5710 = vmatmul.mubr.f32.gmra.mrb[0].mxu0 %v5497
        %v5711 = vpop.f32.mrb[0].mxu0
        %v5712 = vadd.f32 0.0, %v5711
        %v5713 = vpop.f32.mrb[0].mxu0
        %5714 = vmatprep.mubr.f32.mxu0 0.0
        %5715 = vmatmul.mubr.f32.gmra.mrb[0].mxu0 %v5500
        %v5716 = vpop.f32.mrb[0].mxu0
        %v5717 = vadd.f32 0.0, %v5716
        %v5718 = vpop.f32.mrb[0].mxu0
        %5719 = vmatprep.mubr.f32.mxu0 0.0
        %5720 = vmatmul.mubr.f32.gmra.mrb[0].mxu0 %v5503
        %v5721 = vpop.f32.mrb[0].mxu0
        %v5722 = vadd.f32 0.0, %v5721
        %v5723 = vpop.f32.mrb[0].mxu0
        %5724 = vmatprep.mubr.f32.mxu0 0.0
        %5725 = vmatmul.mubr.f32.gmra.mrb[0].mxu0 %v5506
        %v5726 = vpop.f32.mrb[0].mxu0
        %v5727 = vadd.f32 0.0, %v5726
        %v5728 = vpop.f32.mrb[0].mxu0
        %5729 = vmatprep.mubr.f32.mxu0 0.0
        %5730 = vmatmul.mubr.f32.gmra.mrb[0].mxu0 %v5509
        %v5731 = vpop.f32.mrb[0].mxu0
        %v5732 = vadd.f32 0.0, %v5731
        %v5733 = vpop.f32.mrb[0].mxu0
        %5734 = vmatprep.mubr.f32.mxu0 0.0
        %5735 = vmatmul.mubr.f32.gmra.mrb[0].mxu0 %v5512
        %v5736 = vpop.f32.mrb[0].mxu0
        %v5737 = vadd.f32 0.0, %v5736
        %v5738 = vpop.f32.mrb[0].mxu0
        %5739 = vmatprep.mubr.f32.mxu0 0.0
        %5740 = vmatmul.mubr.f32.gmra.mrb[0].mxu0 %v5515
        %v5741 = vpop.f32.mrb[0].mxu0
        %v5742 = vadd.f32 0.0, %v5741
        %v5743 = vpop.f32.mrb[0].mxu0
        %5744 = vdwg.mxu0
        %v5745 = vadd.f32 %v5355, %v5587
        %v5746 = vadd.f32 %v5356, %v5592
        %v5747 = vadd.f32 %v5357, %v5597
        %v5748 = vadd.f32 %v5358, %v5602
        %v5749 = vadd.f32 %v5359, %v5607
        %v5750 = vadd.f32 %v5360, %v5612
        %v5751 = vadd.f32 %v5361, %v5617
        %v5752 = vadd.f32 %v5362, %v5622
        %v5753 = vadd.f32 %v5363, %v5627
        %v5754 = vadd.f32 %v5364, %v5632
        %v5755 = vadd.f32 %v5365, %v5637
        %v5756 = vadd.f32 %v5366, %v5642
        %v5757 = vadd.f32 %v5367, %v5647
        %v5758 = vadd.f32 %v5368, %v5652
        %v5759 = vadd.f32 %v5369, %v5657
        %v5760 = vadd.f32 %v5370, %v5662
        %v5761 = vadd.f32 %v5371, %v5667
        %v5762 = vadd.f32 %v5372, %v5672
        %v5763 = vadd.f32 %v5373, %v5677
        %v5764 = vadd.f32 %v5374, %v5682
        %v5765 = vadd.f32 %v5375, %v5687
        %v5766 = vadd.f32 %v5376, %v5692
        %v5767 = vadd.f32 %v5377, %v5697
        %v5768 = vadd.f32 %v5378, %v5702
        %v5769 = vadd.f32 %v5379, %v5707
        %v5770 = vadd.f32 %v5380, %v5712
        %v5771 = vadd.f32 %v5381, %v5717
        %v5772 = vadd.f32 %v5382, %v5722
        %v5773 = vadd.f32 %v5383, %v5727
        %v5774 = vadd.f32 %v5384, %v5732
        %v5775 = vadd.f32 %v5385, %v5737
        %v5776 = vadd.f32 %v5386, %v5742
        %v5777 = vld [vmem:[%s4249 + $0x1] sm:$0xff]
        %v5778 = vld [vmem:[%s4249 + $0x9] sm:$0xff]
        %v5779 = vld [vmem:[%s4249 + $0x19] sm:$0xff]
        %v5780 = vld [vmem:[%s4249 + $0x21] sm:$0xff]
        %v5781 = vld [vmem:[%s4249 + $0x31] sm:$0xff]
        %v5782 = vld [vmem:[%s4249 + $0x39] sm:$0xff]
        %v5783 = vld [vmem:[%s4249 + $0x49] sm:$0xff]
        %v5784 = vld [vmem:[%s4249 + $0x51] sm:$0xff]
        %v5785 = vld [vmem:[%s4249 + $0x61] sm:$0xff]
        %v5786 = vld [vmem:[%s4249 + $0x69] sm:$0xff]
        %v5787 = vld [vmem:[%s4249 + $0x79] sm:$0xff]
        %v5788 = vld [vmem:[%s4249 + $0x81] sm:$0xff]
        %v5789 = vld [vmem:[%s4249 + $0x91] sm:$0xff]
        %v5790 = vld [vmem:[%s4249 + $0x99] sm:$0xff]
        %v5791 = vld [vmem:[%s4249 + $0xa9] sm:$0xff]
        %v5792 = vld [vmem:[%s4249 + $0xb1] sm:$0xff]
        %v5793 = vld [vmem:[%s4249 + $0xc1] sm:$0xff]
        %v5794 = vld [vmem:[%s4249 + $0xc9] sm:$0xff]
        %v5795 = vld [vmem:[%s4249 + $0xd9] sm:$0xff]
        %v5796 = vld [vmem:[%s4249 + $0xe1] sm:$0xff]
        %v5797 = vld [vmem:[%s4249 + $0xf1] sm:$0xff]
        %v5798 = vld [vmem:[%s4249 + $0xf9] sm:$0xff]
        %v5799 = vld [vmem:[%s4249 + $0x109] sm:$0xff]
        %v5800 = vld [vmem:[%s4249 + $0x111] sm:$0xff]
        %v5801 = vld [vmem:[%s4249 + $0x121] sm:$0xff]
        %v5802 = vld [vmem:[%s4249 + $0x129] sm:$0xff]
        %v5803 = vld [vmem:[%s4249 + $0x139] sm:$0xff]
        %v5804 = vld [vmem:[%s4249 + $0x141] sm:$0xff]
        %v5805 = vld [vmem:[%s4249 + $0x151] sm:$0xff]
        %v5806 = vld [vmem:[%s4249 + $0x159] sm:$0xff]
        %v5807 = vld [vmem:[%s4249 + $0x169] sm:$0xff]
        %v5808 = vld [vmem:[%s4249 + $0x171] sm:$0xff]
        %s5809 = scalar_lea.vmem %s3, 16
        %v5810 = vld [vmem:[%s5809] sm:$0xf]
        %v5812 = vsel %vm277, %v5777, 0
        %v5815 = vsel %vm277, %v5778, 0
        %v5818 = vsel %vm277, %v5779, 0
        %v5821 = vsel %vm277, %v5780, 0
        %v5824 = vsel %vm277, %v5781, 0
        %v5827 = vsel %vm277, %v5782, 0
        %v5830 = vsel %vm277, %v5783, 0
        %v5833 = vsel %vm277, %v5784, 0
        %v5836 = vsel %vm277, %v5785, 0
        %v5839 = vsel %vm277, %v5786, 0
        %v5842 = vsel %vm277, %v5787, 0
        %v5845 = vsel %vm277, %v5788, 0
        %v5848 = vsel %vm277, %v5789, 0
        %v5851 = vsel %vm277, %v5790, 0
        %v5854 = vsel %vm277, %v5791, 0
        %v5857 = vsel %vm277, %v5792, 0
        %v5860 = vsel %vm277, %v5793, 0
        %v5863 = vsel %vm277, %v5794, 0
        %v5866 = vsel %vm277, %v5795, 0
        %v5869 = vsel %vm277, %v5796, 0
        %v5872 = vsel %vm277, %v5797, 0
        %v5875 = vsel %vm277, %v5798, 0
        %v5878 = vsel %vm277, %v5799, 0
        %v5881 = vsel %vm277, %v5800, 0
        %v5884 = vsel %vm277, %v5801, 0
        %v5887 = vsel %vm277, %v5802, 0
        %v5890 = vsel %vm277, %v5803, 0
        %v5893 = vsel %vm277, %v5804, 0
        %v5896 = vsel %vm277, %v5805, 0
        %v5899 = vsel %vm277, %v5806, 0
        %v5902 = vsel %vm277, %v5807, 0
        %v5905 = vsel %vm277, %v5808, 0
        %v5908 = vsel %vm551, %v5810, 0
        %5910 = vmatprep.subr.mxu0 0.0
        %5911 = vmatpush1.msra.mxu0 %v5908
        %5912 = vmatprep.subr.mxu0 0.0
        %5913 = vmatpush1.msra.mxu0 0.0
        %5914 = vmatprep.subr.mxu0 0.0
        %5915 = vmatpush1.msra.mxu0 0.0
        %5916 = vmatprep.subr.mxu0 0.0
        %5917 = vmatpush1.msra.mxu0 0.0
        %5918 = vmatprep.subr.mxu0 0.0
        %5919 = vmatpush1.msra.mxu0 0.0
        %5920 = vmatprep.subr.mxu0 0.0
        %5921 = vmatpush1.msra.mxu0 0.0
        %5922 = vmatprep.subr.mxu0 0.0
        %5923 = vmatpush1.msra.mxu0 0.0
        %5924 = vmatprep.subr.mxu0 0.0
        %5925 = vmatpush1.msra.mxu0 0.0
        %5926 = vmatprep.subr.mxu0 0.0
        %5927 = vmatpush1.msra.mxu0 0.0
        %5928 = vmatprep.subr.mxu0 0.0
        %5929 = vmatpush1.msra.mxu0 0.0
        %5930 = vmatprep.subr.mxu0 0.0
        %5931 = vmatpush1.msra.mxu0 0.0
        %5932 = vmatprep.subr.mxu0 0.0
        %5933 = vmatpush1.msra.mxu0 0.0
        %5934 = vmatprep.subr.mxu0 0.0
        %5935 = vmatpush1.msra.mxu0 0.0
        %5936 = vmatprep.subr.mxu0 0.0
        %5937 = vmatpush1.msra.mxu0 0.0
        %5938 = vmatprep.subr.mxu0 0.0
        %5939 = vmatpush1.msra.mxu0 0.0
        %5940 = vmatprep.subr.mxu0 0.0
        %5941 = vmatpush1.msra.mxu0 0.0
        %5942 = vmatprep.subr.mxu0 0.0
        %5943 = vmatpush1.msra.mxu0 0.0
        %5944 = vmatprep.subr.mxu0 0.0
        %5945 = vmatpush1.msra.mxu0 0.0
        %5946 = vmatprep.subr.mxu0 0.0
        %5947 = vmatpush1.msra.mxu0 0.0
        %5948 = vmatprep.subr.mxu0 0.0
        %5949 = vmatpush1.msra.mxu0 0.0
        %5950 = vmatprep.subr.mxu0 0.0
        %5951 = vmatpush1.msra.mxu0 0.0
        %5952 = vmatprep.subr.mxu0 0.0
        %5953 = vmatpush1.msra.mxu0 0.0
        %5954 = vmatprep.subr.mxu0 0.0
        %5955 = vmatpush1.msra.mxu0 0.0
        %5956 = vmatprep.subr.mxu0 0.0
        %5957 = vmatpush1.msra.mxu0 0.0
        %5958 = vmatprep.subr.mxu0 0.0
        %5959 = vmatpush1.msra.mxu0 0.0
        %5960 = vmatprep.subr.mxu0 0.0
        %5961 = vmatpush1.msra.mxu0 0.0
        %5962 = vmatprep.subr.mxu0 0.0
        %5963 = vmatpush1.msra.mxu0 0.0
        %5964 = vmatprep.subr.mxu0 0.0
        %5965 = vmatpush1.msra.mxu0 0.0
        %5966 = vmatprep.subr.mxu0 0.0
        %5967 = vmatpush1.msra.mxu0 0.0
        %5968 = vmatprep.subr.mxu0 0.0
        %5969 = vmatpush1.msra.mxu0 0.0
        %5970 = vmatprep.subr.mxu0 0.0
        %5971 = vmatpush1.msra.mxu0 0.0
        %5972 = vmatprep.subr.mxu0 0.0
        %5973 = vmatpush1.msra.mxu0 0.0
        %5974 = vmatprep.mubr.f32.mxu0 0.0
        %5975 = vmatmul.mubr.f32.gmra.mrb[0].mxu0 %v5812
        %v5976 = vpop.f32.mrb[0].mxu0
        %v5977 = vadd.f32 0.0, %v5976
        %v5978 = vpop.f32.mrb[0].mxu0
        %5979 = vmatprep.mubr.f32.mxu0 0.0
        %5980 = vmatmul.mubr.f32.gmra.mrb[0].mxu0 %v5815
        %v5981 = vpop.f32.mrb[0].mxu0
        %v5982 = vadd.f32 0.0, %v5981
        %v5983 = vpop.f32.mrb[0].mxu0
        %5984 = vmatprep.mubr.f32.mxu0 0.0
        %5985 = vmatmul.mubr.f32.gmra.mrb[0].mxu0 %v5818
        %v5986 = vpop.f32.mrb[0].mxu0
        %v5987 = vadd.f32 0.0, %v5986
        %v5988 = vpop.f32.mrb[0].mxu0
        %5989 = vmatprep.mubr.f32.mxu0 0.0
        %5990 = vmatmul.mubr.f32.gmra.mrb[0].mxu0 %v5821
        %v5991 = vpop.f32.mrb[0].mxu0
        %v5992 = vadd.f32 0.0, %v5991
        %v5993 = vpop.f32.mrb[0].mxu0
        %5994 = vmatprep.mubr.f32.mxu0 0.0
        %5995 = vmatmul.mubr.f32.gmra.mrb[0].mxu0 %v5824
        %v5996 = vpop.f32.mrb[0].mxu0
        %v5997 = vadd.f32 0.0, %v5996
        %v5998 = vpop.f32.mrb[0].mxu0
        %5999 = vmatprep.mubr.f32.mxu0 0.0
        %6000 = vmatmul.mubr.f32.gmra.mrb[0].mxu0 %v5827
        %v6001 = vpop.f32.mrb[0].mxu0
        %v6002 = vadd.f32 0.0, %v6001
        %v6003 = vpop.f32.mrb[0].mxu0
        %6004 = vmatprep.mubr.f32.mxu0 0.0
        %6005 = vmatmul.mubr.f32.gmra.mrb[0].mxu0 %v5830
        %v6006 = vpop.f32.mrb[0].mxu0
        %v6007 = vadd.f32 0.0, %v6006
        %v6008 = vpop.f32.mrb[0].mxu0
        %6009 = vmatprep.mubr.f32.mxu0 0.0
        %6010 = vmatmul.mubr.f32.gmra.mrb[0].mxu0 %v5833
        %v6011 = vpop.f32.mrb[0].mxu0
        %v6012 = vadd.f32 0.0, %v6011
        %v6013 = vpop.f32.mrb[0].mxu0
        %6014 = vmatprep.mubr.f32.mxu0 0.0
        %6015 = vmatmul.mubr.f32.gmra.mrb[0].mxu0 %v5836
        %v6016 = vpop.f32.mrb[0].mxu0
        %v6017 = vadd.f32 0.0, %v6016
        %v6018 = vpop.f32.mrb[0].mxu0
        %6019 = vmatprep.mubr.f32.mxu0 0.0
        %6020 = vmatmul.mubr.f32.gmra.mrb[0].mxu0 %v5839
        %v6021 = vpop.f32.mrb[0].mxu0
        %v6022 = vadd.f32 0.0, %v6021
        %v6023 = vpop.f32.mrb[0].mxu0
        %6024 = vmatprep.mubr.f32.mxu0 0.0
        %6025 = vmatmul.mubr.f32.gmra.mrb[0].mxu0 %v5842
        %v6026 = vpop.f32.mrb[0].mxu0
        %v6027 = vadd.f32 0.0, %v6026
        %v6028 = vpop.f32.mrb[0].mxu0
        %6029 = vmatprep.mubr.f32.mxu0 0.0
        %6030 = vmatmul.mubr.f32.gmra.mrb[0].mxu0 %v5845
        %v6031 = vpop.f32.mrb[0].mxu0
        %v6032 = vadd.f32 0.0, %v6031
        %v6033 = vpop.f32.mrb[0].mxu0
        %6034 = vmatprep.mubr.f32.mxu0 0.0
        %6035 = vmatmul.mubr.f32.gmra.mrb[0].mxu0 %v5848
        %v6036 = vpop.f32.mrb[0].mxu0
        %v6037 = vadd.f32 0.0, %v6036
        %v6038 = vpop.f32.mrb[0].mxu0
        %6039 = vmatprep.mubr.f32.mxu0 0.0
        %6040 = vmatmul.mubr.f32.gmra.mrb[0].mxu0 %v5851
        %v6041 = vpop.f32.mrb[0].mxu0
        %v6042 = vadd.f32 0.0, %v6041
        %v6043 = vpop.f32.mrb[0].mxu0
        %6044 = vmatprep.mubr.f32.mxu0 0.0
        %6045 = vmatmul.mubr.f32.gmra.mrb[0].mxu0 %v5854
        %v6046 = vpop.f32.mrb[0].mxu0
        %v6047 = vadd.f32 0.0, %v6046
        %v6048 = vpop.f32.mrb[0].mxu0
        %6049 = vmatprep.mubr.f32.mxu0 0.0
        %6050 = vmatmul.mubr.f32.gmra.mrb[0].mxu0 %v5857
        %v6051 = vpop.f32.mrb[0].mxu0
        %v6052 = vadd.f32 0.0, %v6051
        %v6053 = vpop.f32.mrb[0].mxu0
        %6054 = vmatprep.mubr.f32.mxu0 0.0
        %6055 = vmatmul.mubr.f32.gmra.mrb[0].mxu0 %v5860
        %v6056 = vpop.f32.mrb[0].mxu0
        %v6057 = vadd.f32 0.0, %v6056
        %v6058 = vpop.f32.mrb[0].mxu0
        %6059 = vmatprep.mubr.f32.mxu0 0.0
        %6060 = vmatmul.mubr.f32.gmra.mrb[0].mxu0 %v5863
        %v6061 = vpop.f32.mrb[0].mxu0
        %v6062 = vadd.f32 0.0, %v6061
        %v6063 = vpop.f32.mrb[0].mxu0
        %6064 = vmatprep.mubr.f32.mxu0 0.0
        %6065 = vmatmul.mubr.f32.gmra.mrb[0].mxu0 %v5866
        %v6066 = vpop.f32.mrb[0].mxu0
        %v6067 = vadd.f32 0.0, %v6066
        %v6068 = vpop.f32.mrb[0].mxu0
        %6069 = vmatprep.mubr.f32.mxu0 0.0
        %6070 = vmatmul.mubr.f32.gmra.mrb[0].mxu0 %v5869
        %v6071 = vpop.f32.mrb[0].mxu0
        %v6072 = vadd.f32 0.0, %v6071
        %v6073 = vpop.f32.mrb[0].mxu0
        %6074 = vmatprep.mubr.f32.mxu0 0.0
        %6075 = vmatmul.mubr.f32.gmra.mrb[0].mxu0 %v5872
        %v6076 = vpop.f32.mrb[0].mxu0
        %v6077 = vadd.f32 0.0, %v6076
        %v6078 = vpop.f32.mrb[0].mxu0
        %6079 = vmatprep.mubr.f32.mxu0 0.0
        %6080 = vmatmul.mubr.f32.gmra.mrb[0].mxu0 %v5875
        %v6081 = vpop.f32.mrb[0].mxu0
        %v6082 = vadd.f32 0.0, %v6081
        %v6083 = vpop.f32.mrb[0].mxu0
        %6084 = vmatprep.mubr.f32.mxu0 0.0
        %6085 = vmatmul.mubr.f32.gmra.mrb[0].mxu0 %v5878
        %v6086 = vpop.f32.mrb[0].mxu0
        %v6087 = vadd.f32 0.0, %v6086
        %v6088 = vpop.f32.mrb[0].mxu0
        %6089 = vmatprep.mubr.f32.mxu0 0.0
        %6090 = vmatmul.mubr.f32.gmra.mrb[0].mxu0 %v5881
        %v6091 = vpop.f32.mrb[0].mxu0
        %v6092 = vadd.f32 0.0, %v6091
        %v6093 = vpop.f32.mrb[0].mxu0
        %6094 = vmatprep.mubr.f32.mxu0 0.0
        %6095 = vmatmul.mubr.f32.gmra.mrb[0].mxu0 %v5884
        %v6096 = vpop.f32.mrb[0].mxu0
        %v6097 = vadd.f32 0.0, %v6096
        %v6098 = vpop.f32.mrb[0].mxu0
        %6099 = vmatprep.mubr.f32.mxu0 0.0
        %6100 = vmatmul.mubr.f32.gmra.mrb[0].mxu0 %v5887
        %v6101 = vpop.f32.mrb[0].mxu0
        %v6102 = vadd.f32 0.0, %v6101
        %v6103 = vpop.f32.mrb[0].mxu0
        %6104 = vmatprep.mubr.f32.mxu0 0.0
        %6105 = vmatmul.mubr.f32.gmra.mrb[0].mxu0 %v5890
        %v6106 = vpop.f32.mrb[0].mxu0
        %v6107 = vadd.f32 0.0, %v6106
        %v6108 = vpop.f32.mrb[0].mxu0
        %6109 = vmatprep.mubr.f32.mxu0 0.0
        %6110 = vmatmul.mubr.f32.gmra.mrb[0].mxu0 %v5893
        %v6111 = vpop.f32.mrb[0].mxu0
        %v6112 = vadd.f32 0.0, %v6111
        %v6113 = vpop.f32.mrb[0].mxu0
        %6114 = vmatprep.mubr.f32.mxu0 0.0
        %6115 = vmatmul.mubr.f32.gmra.mrb[0].mxu0 %v5896
        %v6116 = vpop.f32.mrb[0].mxu0
        %v6117 = vadd.f32 0.0, %v6116
        %v6118 = vpop.f32.mrb[0].mxu0
        %6119 = vmatprep.mubr.f32.mxu0 0.0
        %6120 = vmatmul.mubr.f32.gmra.mrb[0].mxu0 %v5899
        %v6121 = vpop.f32.mrb[0].mxu0
        %v6122 = vadd.f32 0.0, %v6121
        %v6123 = vpop.f32.mrb[0].mxu0
        %6124 = vmatprep.mubr.f32.mxu0 0.0
        %6125 = vmatmul.mubr.f32.gmra.mrb[0].mxu0 %v5902
        %v6126 = vpop.f32.mrb[0].mxu0
        %v6127 = vadd.f32 0.0, %v6126
        %v6128 = vpop.f32.mrb[0].mxu0
        %6129 = vmatprep.mubr.f32.mxu0 0.0
        %6130 = vmatmul.mubr.f32.gmra.mrb[0].mxu0 %v5905
        %v6131 = vpop.f32.mrb[0].mxu0
        %v6132 = vadd.f32 0.0, %v6131
        %v6133 = vpop.f32.mrb[0].mxu0
        %6134 = vdwg.mxu0
        %v6135 = vadd.f32 %v5745, %v5977
        %v6136 = vadd.f32 %v5746, %v5982
        %v6137 = vadd.f32 %v5747, %v5987
        %v6138 = vadd.f32 %v5748, %v5992
        %v6139 = vadd.f32 %v5749, %v5997
        %v6140 = vadd.f32 %v5750, %v6002
        %v6141 = vadd.f32 %v5751, %v6007
        %v6142 = vadd.f32 %v5752, %v6012
        %v6143 = vadd.f32 %v5753, %v6017
        %v6144 = vadd.f32 %v5754, %v6022
        %v6145 = vadd.f32 %v5755, %v6027
        %v6146 = vadd.f32 %v5756, %v6032
        %v6147 = vadd.f32 %v5757, %v6037
        %v6148 = vadd.f32 %v5758, %v6042
        %v6149 = vadd.f32 %v5759, %v6047
        %v6150 = vadd.f32 %v5760, %v6052
        %v6151 = vadd.f32 %v5761, %v6057
        %v6152 = vadd.f32 %v5762, %v6062
        %v6153 = vadd.f32 %v5763, %v6067
        %v6154 = vadd.f32 %v5764, %v6072
        %v6155 = vadd.f32 %v5765, %v6077
        %v6156 = vadd.f32 %v5766, %v6082
        %v6157 = vadd.f32 %v5767, %v6087
        %v6158 = vadd.f32 %v5768, %v6092
        %v6159 = vadd.f32 %v5769, %v6097
        %v6160 = vadd.f32 %v5770, %v6102
        %v6161 = vadd.f32 %v5771, %v6107
        %v6162 = vadd.f32 %v5772, %v6112
        %v6163 = vadd.f32 %v5773, %v6117
        %v6164 = vadd.f32 %v5774, %v6122
        %v6165 = vadd.f32 %v5775, %v6127
        %v6166 = vadd.f32 %v5776, %v6132
        %v6167 = vld [vmem:[%s4249 + $0x2] sm:$0xff]
        %v6168 = vld [vmem:[%s4249 + $0xa] sm:$0xff]
        %v6169 = vld [vmem:[%s4249 + $0x1a] sm:$0xff]
        %v6170 = vld [vmem:[%s4249 + $0x22] sm:$0xff]
        %v6171 = vld [vmem:[%s4249 + $0x32] sm:$0xff]
        %v6172 = vld [vmem:[%s4249 + $0x3a] sm:$0xff]
        %v6173 = vld [vmem:[%s4249 + $0x4a] sm:$0xff]
        %v6174 = vld [vmem:[%s4249 + $0x52] sm:$0xff]
        %v6175 = vld [vmem:[%s4249 + $0x62] sm:$0xff]
        %v6176 = vld [vmem:[%s4249 + $0x6a] sm:$0xff]
        %v6177 = vld [vmem:[%s4249 + $0x7a] sm:$0xff]
        %v6178 = vld [vmem:[%s4249 + $0x82] sm:$0xff]
        %v6179 = vld [vmem:[%s4249 + $0x92] sm:$0xff]
        %v6180 = vld [vmem:[%s4249 + $0x9a] sm:$0xff]
        %v6181 = vld [vmem:[%s4249 + $0xaa] sm:$0xff]
        %v6182 = vld [vmem:[%s4249 + $0xb2] sm:$0xff]
        %v6183 = vld [vmem:[%s4249 + $0xc2] sm:$0xff]
        %v6184 = vld [vmem:[%s4249 + $0xca] sm:$0xff]
        %v6185 = vld [vmem:[%s4249 + $0xda] sm:$0xff]
        %v6186 = vld [vmem:[%s4249 + $0xe2] sm:$0xff]
        %v6187 = vld [vmem:[%s4249 + $0xf2] sm:$0xff]
        %v6188 = vld [vmem:[%s4249 + $0xfa] sm:$0xff]
        %v6189 = vld [vmem:[%s4249 + $0x10a] sm:$0xff]
        %v6190 = vld [vmem:[%s4249 + $0x112] sm:$0xff]
        %v6191 = vld [vmem:[%s4249 + $0x122] sm:$0xff]
        %v6192 = vld [vmem:[%s4249 + $0x12a] sm:$0xff]
        %v6193 = vld [vmem:[%s4249 + $0x13a] sm:$0xff]
        %v6194 = vld [vmem:[%s4249 + $0x142] sm:$0xff]
        %v6195 = vld [vmem:[%s4249 + $0x152] sm:$0xff]
        %v6196 = vld [vmem:[%s4249 + $0x15a] sm:$0xff]
        %v6197 = vld [vmem:[%s4249 + $0x16a] sm:$0xff]
        %v6198 = vld [vmem:[%s4249 + $0x172] sm:$0xff]
        %s6199 = scalar_lea.vmem %s3, 20
        %v6200 = vld [vmem:[%s6199] sm:$0xf]
        %v6202 = vsel %vm277, %v6167, 0
        %v6205 = vsel %vm277, %v6168, 0
        %v6208 = vsel %vm277, %v6169, 0
        %v6211 = vsel %vm277, %v6170, 0
        %v6214 = vsel %vm277, %v6171, 0
        %v6217 = vsel %vm277, %v6172, 0
        %v6220 = vsel %vm277, %v6173, 0
        %v6223 = vsel %vm277, %v6174, 0
        %v6226 = vsel %vm277, %v6175, 0
        %v6229 = vsel %vm277, %v6176, 0
        %v6232 = vsel %vm277, %v6177, 0
        %v6235 = vsel %vm277, %v6178, 0
        %v6238 = vsel %vm277, %v6179, 0
        %v6241 = vsel %vm277, %v6180, 0
        %v6244 = vsel %vm277, %v6181, 0
        %v6247 = vsel %vm277, %v6182, 0
        %v6250 = vsel %vm277, %v6183, 0
        %v6253 = vsel %vm277, %v6184, 0
        %v6256 = vsel %vm277, %v6185, 0
        %v6259 = vsel %vm277, %v6186, 0
        %v6262 = vsel %vm277, %v6187, 0
        %v6265 = vsel %vm277, %v6188, 0
        %v6268 = vsel %vm277, %v6189, 0
        %v6271 = vsel %vm277, %v6190, 0
        %v6274 = vsel %vm277, %v6191, 0
        %v6277 = vsel %vm277, %v6192, 0
        %v6280 = vsel %vm277, %v6193, 0
        %v6283 = vsel %vm277, %v6194, 0
        %v6286 = vsel %vm277, %v6195, 0
        %v6289 = vsel %vm277, %v6196, 0
        %v6292 = vsel %vm277, %v6197, 0
        %v6295 = vsel %vm277, %v6198, 0
        %v6298 = vsel %vm551, %v6200, 0
        %6300 = vmatprep.subr.mxu0 0.0
        %6301 = vmatpush1.msra.mxu0 %v6298
        %6302 = vmatprep.subr.mxu0 0.0
        %6303 = vmatpush1.msra.mxu0 0.0
        %6304 = vmatprep.subr.mxu0 0.0
        %6305 = vmatpush1.msra.mxu0 0.0
        %6306 = vmatprep.subr.mxu0 0.0
        %6307 = vmatpush1.msra.mxu0 0.0
        %6308 = vmatprep.subr.mxu0 0.0
        %6309 = vmatpush1.msra.mxu0 0.0
        %6310 = vmatprep.subr.mxu0 0.0
        %6311 = vmatpush1.msra.mxu0 0.0
        %6312 = vmatprep.subr.mxu0 0.0
        %6313 = vmatpush1.msra.mxu0 0.0
        %6314 = vmatprep.subr.mxu0 0.0
        %6315 = vmatpush1.msra.mxu0 0.0
        %6316 = vmatprep.subr.mxu0 0.0
        %6317 = vmatpush1.msra.mxu0 0.0
        %6318 = vmatprep.subr.mxu0 0.0
        %6319 = vmatpush1.msra.mxu0 0.0
        %6320 = vmatprep.subr.mxu0 0.0
        %6321 = vmatpush1.msra.mxu0 0.0
        %6322 = vmatprep.subr.mxu0 0.0
        %6323 = vmatpush1.msra.mxu0 0.0
        %6324 = vmatprep.subr.mxu0 0.0
        %6325 = vmatpush1.msra.mxu0 0.0
        %6326 = vmatprep.subr.mxu0 0.0
        %6327 = vmatpush1.msra.mxu0 0.0
        %6328 = vmatprep.subr.mxu0 0.0
        %6329 = vmatpush1.msra.mxu0 0.0
        %6330 = vmatprep.subr.mxu0 0.0
        %6331 = vmatpush1.msra.mxu0 0.0
        %6332 = vmatprep.subr.mxu0 0.0
        %6333 = vmatpush1.msra.mxu0 0.0
        %6334 = vmatprep.subr.mxu0 0.0
        %6335 = vmatpush1.msra.mxu0 0.0
        %6336 = vmatprep.subr.mxu0 0.0
        %6337 = vmatpush1.msra.mxu0 0.0
        %6338 = vmatprep.subr.mxu0 0.0
        %6339 = vmatpush1.msra.mxu0 0.0
        %6340 = vmatprep.subr.mxu0 0.0
        %6341 = vmatpush1.msra.mxu0 0.0
        %6342 = vmatprep.subr.mxu0 0.0
        %6343 = vmatpush1.msra.mxu0 0.0
        %6344 = vmatprep.subr.mxu0 0.0
        %6345 = vmatpush1.msra.mxu0 0.0
        %6346 = vmatprep.subr.mxu0 0.0
        %6347 = vmatpush1.msra.mxu0 0.0
        %6348 = vmatprep.subr.mxu0 0.0
        %6349 = vmatpush1.msra.mxu0 0.0
        %6350 = vmatprep.subr.mxu0 0.0
        %6351 = vmatpush1.msra.mxu0 0.0
        %6352 = vmatprep.subr.mxu0 0.0
        %6353 = vmatpush1.msra.mxu0 0.0
        %6354 = vmatprep.subr.mxu0 0.0
        %6355 = vmatpush1.msra.mxu0 0.0
        %6356 = vmatprep.subr.mxu0 0.0
        %6357 = vmatpush1.msra.mxu0 0.0
        %6358 = vmatprep.subr.mxu0 0.0
        %6359 = vmatpush1.msra.mxu0 0.0
        %6360 = vmatprep.subr.mxu0 0.0
        %6361 = vmatpush1.msra.mxu0 0.0
        %6362 = vmatprep.subr.mxu0 0.0
        %6363 = vmatpush1.msra.mxu0 0.0
        %6364 = vmatprep.mubr.f32.mxu0 0.0
        %6365 = vmatmul.mubr.f32.gmra.mrb[0].mxu0 %v6202
        %v6366 = vpop.f32.mrb[0].mxu0
        %v6367 = vadd.f32 0.0, %v6366
        %v6368 = vpop.f32.mrb[0].mxu0
        %6369 = vmatprep.mubr.f32.mxu0 0.0
        %6370 = vmatmul.mubr.f32.gmra.mrb[0].mxu0 %v6205
        %v6371 = vpop.f32.mrb[0].mxu0
        %v6372 = vadd.f32 0.0, %v6371
        %v6373 = vpop.f32.mrb[0].mxu0
        %6374 = vmatprep.mubr.f32.mxu0 0.0
        %6375 = vmatmul.mubr.f32.gmra.mrb[0].mxu0 %v6208
        %v6376 = vpop.f32.mrb[0].mxu0
        %v6377 = vadd.f32 0.0, %v6376
        %v6378 = vpop.f32.mrb[0].mxu0
        %6379 = vmatprep.mubr.f32.mxu0 0.0
        %6380 = vmatmul.mubr.f32.gmra.mrb[0].mxu0 %v6211
        %v6381 = vpop.f32.mrb[0].mxu0
        %v6382 = vadd.f32 0.0, %v6381
        %v6383 = vpop.f32.mrb[0].mxu0
        %6384 = vmatprep.mubr.f32.mxu0 0.0
        %6385 = vmatmul.mubr.f32.gmra.mrb[0].mxu0 %v6214
        %v6386 = vpop.f32.mrb[0].mxu0
        %v6387 = vadd.f32 0.0, %v6386
        %v6388 = vpop.f32.mrb[0].mxu0
        %6389 = vmatprep.mubr.f32.mxu0 0.0
        %6390 = vmatmul.mubr.f32.gmra.mrb[0].mxu0 %v6217
        %v6391 = vpop.f32.mrb[0].mxu0
        %v6392 = vadd.f32 0.0, %v6391
        %v6393 = vpop.f32.mrb[0].mxu0
        %6394 = vmatprep.mubr.f32.mxu0 0.0
        %6395 = vmatmul.mubr.f32.gmra.mrb[0].mxu0 %v6220
        %v6396 = vpop.f32.mrb[0].mxu0
        %v6397 = vadd.f32 0.0, %v6396
        %v6398 = vpop.f32.mrb[0].mxu0
        %6399 = vmatprep.mubr.f32.mxu0 0.0
        %6400 = vmatmul.mubr.f32.gmra.mrb[0].mxu0 %v6223
        %v6401 = vpop.f32.mrb[0].mxu0
        %v6402 = vadd.f32 0.0, %v6401
        %v6403 = vpop.f32.mrb[0].mxu0
        %6404 = vmatprep.mubr.f32.mxu0 0.0
        %6405 = vmatmul.mubr.f32.gmra.mrb[0].mxu0 %v6226
        %v6406 = vpop.f32.mrb[0].mxu0
        %v6407 = vadd.f32 0.0, %v6406
        %v6408 = vpop.f32.mrb[0].mxu0
        %6409 = vmatprep.mubr.f32.mxu0 0.0
        %6410 = vmatmul.mubr.f32.gmra.mrb[0].mxu0 %v6229
        %v6411 = vpop.f32.mrb[0].mxu0
        %v6412 = vadd.f32 0.0, %v6411
        %v6413 = vpop.f32.mrb[0].mxu0
        %6414 = vmatprep.mubr.f32.mxu0 0.0
        %6415 = vmatmul.mubr.f32.gmra.mrb[0].mxu0 %v6232
        %v6416 = vpop.f32.mrb[0].mxu0
        %v6417 = vadd.f32 0.0, %v6416
        %v6418 = vpop.f32.mrb[0].mxu0
        %6419 = vmatprep.mubr.f32.mxu0 0.0
        %6420 = vmatmul.mubr.f32.gmra.mrb[0].mxu0 %v6235
        %v6421 = vpop.f32.mrb[0].mxu0
        %v6422 = vadd.f32 0.0, %v6421
        %v6423 = vpop.f32.mrb[0].mxu0
        %6424 = vmatprep.mubr.f32.mxu0 0.0
        %6425 = vmatmul.mubr.f32.gmra.mrb[0].mxu0 %v6238
        %v6426 = vpop.f32.mrb[0].mxu0
        %v6427 = vadd.f32 0.0, %v6426
        %v6428 = vpop.f32.mrb[0].mxu0
        %6429 = vmatprep.mubr.f32.mxu0 0.0
        %6430 = vmatmul.mubr.f32.gmra.mrb[0].mxu0 %v6241
        %v6431 = vpop.f32.mrb[0].mxu0
        %v6432 = vadd.f32 0.0, %v6431
        %v6433 = vpop.f32.mrb[0].mxu0
        %6434 = vmatprep.mubr.f32.mxu0 0.0
        %6435 = vmatmul.mubr.f32.gmra.mrb[0].mxu0 %v6244
        %v6436 = vpop.f32.mrb[0].mxu0
        %v6437 = vadd.f32 0.0, %v6436
        %v6438 = vpop.f32.mrb[0].mxu0
        %6439 = vmatprep.mubr.f32.mxu0 0.0
        %6440 = vmatmul.mubr.f32.gmra.mrb[0].mxu0 %v6247
        %v6441 = vpop.f32.mrb[0].mxu0
        %v6442 = vadd.f32 0.0, %v6441
        %v6443 = vpop.f32.mrb[0].mxu0
        %6444 = vmatprep.mubr.f32.mxu0 0.0
        %6445 = vmatmul.mubr.f32.gmra.mrb[0].mxu0 %v6250
        %v6446 = vpop.f32.mrb[0].mxu0
        %v6447 = vadd.f32 0.0, %v6446
        %v6448 = vpop.f32.mrb[0].mxu0
        %6449 = vmatprep.mubr.f32.mxu0 0.0
        %6450 = vmatmul.mubr.f32.gmra.mrb[0].mxu0 %v6253
        %v6451 = vpop.f32.mrb[0].mxu0
        %v6452 = vadd.f32 0.0, %v6451
        %v6453 = vpop.f32.mrb[0].mxu0
        %6454 = vmatprep.mubr.f32.mxu0 0.0
        %6455 = vmatmul.mubr.f32.gmra.mrb[0].mxu0 %v6256
        %v6456 = vpop.f32.mrb[0].mxu0
        %v6457 = vadd.f32 0.0, %v6456
        %v6458 = vpop.f32.mrb[0].mxu0
        %6459 = vmatprep.mubr.f32.mxu0 0.0
        %6460 = vmatmul.mubr.f32.gmra.mrb[0].mxu0 %v6259
        %v6461 = vpop.f32.mrb[0].mxu0
        %v6462 = vadd.f32 0.0, %v6461
        %v6463 = vpop.f32.mrb[0].mxu0
        %6464 = vmatprep.mubr.f32.mxu0 0.0
        %6465 = vmatmul.mubr.f32.gmra.mrb[0].mxu0 %v6262
        %v6466 = vpop.f32.mrb[0].mxu0
        %v6467 = vadd.f32 0.0, %v6466
        %v6468 = vpop.f32.mrb[0].mxu0
        %6469 = vmatprep.mubr.f32.mxu0 0.0
        %6470 = vmatmul.mubr.f32.gmra.mrb[0].mxu0 %v6265
        %v6471 = vpop.f32.mrb[0].mxu0
        %v6472 = vadd.f32 0.0, %v6471
        %v6473 = vpop.f32.mrb[0].mxu0
        %6474 = vmatprep.mubr.f32.mxu0 0.0
        %6475 = vmatmul.mubr.f32.gmra.mrb[0].mxu0 %v6268
        %v6476 = vpop.f32.mrb[0].mxu0
        %v6477 = vadd.f32 0.0, %v6476
        %v6478 = vpop.f32.mrb[0].mxu0
        %6479 = vmatprep.mubr.f32.mxu0 0.0
        %6480 = vmatmul.mubr.f32.gmra.mrb[0].mxu0 %v6271
        %v6481 = vpop.f32.mrb[0].mxu0
        %v6482 = vadd.f32 0.0, %v6481
        %v6483 = vpop.f32.mrb[0].mxu0
        %6484 = vmatprep.mubr.f32.mxu0 0.0
        %6485 = vmatmul.mubr.f32.gmra.mrb[0].mxu0 %v6274
        %v6486 = vpop.f32.mrb[0].mxu0
        %v6487 = vadd.f32 0.0, %v6486
        %v6488 = vpop.f32.mrb[0].mxu0
        %6489 = vmatprep.mubr.f32.mxu0 0.0
        %6490 = vmatmul.mubr.f32.gmra.mrb[0].mxu0 %v6277
        %v6491 = vpop.f32.mrb[0].mxu0
        %v6492 = vadd.f32 0.0, %v6491
        %v6493 = vpop.f32.mrb[0].mxu0
        %6494 = vmatprep.mubr.f32.mxu0 0.0
        %6495 = vmatmul.mubr.f32.gmra.mrb[0].mxu0 %v6280
        %v6496 = vpop.f32.mrb[0].mxu0
        %v6497 = vadd.f32 0.0, %v6496
        %v6498 = vpop.f32.mrb[0].mxu0
        %6499 = vmatprep.mubr.f32.mxu0 0.0
        %6500 = vmatmul.mubr.f32.gmra.mrb[0].mxu0 %v6283
        %v6501 = vpop.f32.mrb[0].mxu0
        %v6502 = vadd.f32 0.0, %v6501
        %v6503 = vpop.f32.mrb[0].mxu0
        %6504 = vmatprep.mubr.f32.mxu0 0.0
        %6505 = vmatmul.mubr.f32.gmra.mrb[0].mxu0 %v6286
        %v6506 = vpop.f32.mrb[0].mxu0
        %v6507 = vadd.f32 0.0, %v6506
        %v6508 = vpop.f32.mrb[0].mxu0
        %6509 = vmatprep.mubr.f32.mxu0 0.0
        %6510 = vmatmul.mubr.f32.gmra.mrb[0].mxu0 %v6289
        %v6511 = vpop.f32.mrb[0].mxu0
        %v6512 = vadd.f32 0.0, %v6511
        %v6513 = vpop.f32.mrb[0].mxu0
        %6514 = vmatprep.mubr.f32.mxu0 0.0
        %6515 = vmatmul.mubr.f32.gmra.mrb[0].mxu0 %v6292
        %v6516 = vpop.f32.mrb[0].mxu0
        %v6517 = vadd.f32 0.0, %v6516
        %v6518 = vpop.f32.mrb[0].mxu0
        %6519 = vmatprep.mubr.f32.mxu0 0.0
        %6520 = vmatmul.mubr.f32.gmra.mrb[0].mxu0 %v6295
        %v6521 = vpop.f32.mrb[0].mxu0
        %v6522 = vadd.f32 0.0, %v6521
        %v6523 = vpop.f32.mrb[0].mxu0
        %6524 = vdwg.mxu0
        %v6525 = vadd.f32 %v6135, %v6367
        %v6526 = vadd.f32 %v6136, %v6372
        %v6527 = vadd.f32 %v6137, %v6377
        %v6528 = vadd.f32 %v6138, %v6382
        %v6529 = vadd.f32 %v6139, %v6387
        %v6530 = vadd.f32 %v6140, %v6392
        %v6531 = vadd.f32 %v6141, %v6397
        %v6532 = vadd.f32 %v6142, %v6402
        %v6533 = vadd.f32 %v6143, %v6407
        %v6534 = vadd.f32 %v6144, %v6412
        %v6535 = vadd.f32 %v6145, %v6417
        %v6536 = vadd.f32 %v6146, %v6422
        %v6537 = vadd.f32 %v6147, %v6427
        %v6538 = vadd.f32 %v6148, %v6432
        %v6539 = vadd.f32 %v6149, %v6437
        %v6540 = vadd.f32 %v6150, %v6442
        %v6541 = vadd.f32 %v6151, %v6447
        %v6542 = vadd.f32 %v6152, %v6452
        %v6543 = vadd.f32 %v6153, %v6457
        %v6544 = vadd.f32 %v6154, %v6462
        %v6545 = vadd.f32 %v6155, %v6467
        %v6546 = vadd.f32 %v6156, %v6472
        %v6547 = vadd.f32 %v6157, %v6477
        %v6548 = vadd.f32 %v6158, %v6482
        %v6549 = vadd.f32 %v6159, %v6487
        %v6550 = vadd.f32 %v6160, %v6492
        %v6551 = vadd.f32 %v6161, %v6497
        %v6552 = vadd.f32 %v6162, %v6502
        %v6553 = vadd.f32 %v6163, %v6507
        %v6554 = vadd.f32 %v6164, %v6512
        %v6555 = vadd.f32 %v6165, %v6517
        %v6556 = vadd.f32 %v6166, %v6522
        %s6557 = scalar_lea.vmem [#allocation3], 48
        %v6558 = vld [vmem:[%s6557] sm:$0xff]
        %v6559 = vld [vmem:[%s6557 + $0x8] sm:$0xff]
        %v6560 = vld [vmem:[%s6557 + $0x18] sm:$0xff]
        %v6561 = vld [vmem:[%s6557 + $0x20] sm:$0xff]
        %v6562 = vld [vmem:[%s6557 + $0x30] sm:$0xff]
        %v6563 = vld [vmem:[%s6557 + $0x38] sm:$0xff]
        %v6564 = vld [vmem:[%s6557 + $0x48] sm:$0xff]
        %v6565 = vld [vmem:[%s6557 + $0x50] sm:$0xff]
        %v6566 = vld [vmem:[%s6557 + $0x60] sm:$0xff]
        %v6567 = vld [vmem:[%s6557 + $0x68] sm:$0xff]
        %v6568 = vld [vmem:[%s6557 + $0x78] sm:$0xff]
        %v6569 = vld [vmem:[%s6557 + $0x80] sm:$0xff]
        %v6570 = vld [vmem:[%s6557 + $0x90] sm:$0xff]
        %v6571 = vld [vmem:[%s6557 + $0x98] sm:$0xff]
        %v6572 = vld [vmem:[%s6557 + $0xa8] sm:$0xff]
        %v6573 = vld [vmem:[%s6557 + $0xb0] sm:$0xff]
        %v6574 = vld [vmem:[%s6557 + $0xc0] sm:$0xff]
        %v6575 = vld [vmem:[%s6557 + $0xc8] sm:$0xff]
        %v6576 = vld [vmem:[%s6557 + $0xd8] sm:$0xff]
        %v6577 = vld [vmem:[%s6557 + $0xe0] sm:$0xff]
        %v6578 = vld [vmem:[%s6557 + $0xf0] sm:$0xff]
        %v6579 = vld [vmem:[%s6557 + $0xf8] sm:$0xff]
        %v6580 = vld [vmem:[%s6557 + $0x108] sm:$0xff]
        %v6581 = vld [vmem:[%s6557 + $0x110] sm:$0xff]
        %v6582 = vld [vmem:[%s6557 + $0x120] sm:$0xff]
        %v6583 = vld [vmem:[%s6557 + $0x128] sm:$0xff]
        %v6584 = vld [vmem:[%s6557 + $0x138] sm:$0xff]
        %v6585 = vld [vmem:[%s6557 + $0x140] sm:$0xff]
        %v6586 = vld [vmem:[%s6557 + $0x150] sm:$0xff]
        %v6587 = vld [vmem:[%s6557 + $0x158] sm:$0xff]
        %v6588 = vld [vmem:[%s6557 + $0x168] sm:$0xff]
        %v6589 = vld [vmem:[%s6557 + $0x170] sm:$0xff]
        %s6590 = scalar_lea.vmem %s3, 24
        %v6591 = vld [vmem:[%s6590] sm:$0xf]
        %v6593 = vsel %vm277, %v6558, 0
        %v6596 = vsel %vm277, %v6559, 0
        %v6599 = vsel %vm277, %v6560, 0
        %v6602 = vsel %vm277, %v6561, 0
        %v6605 = vsel %vm277, %v6562, 0
        %v6608 = vsel %vm277, %v6563, 0
        %v6611 = vsel %vm277, %v6564, 0
        %v6614 = vsel %vm277, %v6565, 0
        %v6617 = vsel %vm277, %v6566, 0
        %v6620 = vsel %vm277, %v6567, 0
        %v6623 = vsel %vm277, %v6568, 0
        %v6626 = vsel %vm277, %v6569, 0
        %v6629 = vsel %vm277, %v6570, 0
        %v6632 = vsel %vm277, %v6571, 0
        %v6635 = vsel %vm277, %v6572, 0
        %v6638 = vsel %vm277, %v6573, 0
        %v6641 = vsel %vm277, %v6574, 0
        %v6644 = vsel %vm277, %v6575, 0
        %v6647 = vsel %vm277, %v6576, 0
        %v6650 = vsel %vm277, %v6577, 0
        %v6653 = vsel %vm277, %v6578, 0
        %v6656 = vsel %vm277, %v6579, 0
        %v6659 = vsel %vm277, %v6580, 0
        %v6662 = vsel %vm277, %v6581, 0
        %v6665 = vsel %vm277, %v6582, 0
        %v6668 = vsel %vm277, %v6583, 0
        %v6671 = vsel %vm277, %v6584, 0
        %v6674 = vsel %vm277, %v6585, 0
        %v6677 = vsel %vm277, %v6586, 0
        %v6680 = vsel %vm277, %v6587, 0
        %v6683 = vsel %vm277, %v6588, 0
        %v6686 = vsel %vm277, %v6589, 0
        %v6689 = vsel %vm551, %v6591, 0
        %6691 = vmatprep.subr.mxu0 0.0
        %6692 = vmatpush1.msra.mxu0 %v6689
        %6693 = vmatprep.subr.mxu0 0.0
        %6694 = vmatpush1.msra.mxu0 0.0
        %6695 = vmatprep.subr.mxu0 0.0
        %6696 = vmatpush1.msra.mxu0 0.0
        %6697 = vmatprep.subr.mxu0 0.0
        %6698 = vmatpush1.msra.mxu0 0.0
        %6699 = vmatprep.subr.mxu0 0.0
        %6700 = vmatpush1.msra.mxu0 0.0
        %6701 = vmatprep.subr.mxu0 0.0
        %6702 = vmatpush1.msra.mxu0 0.0
        %6703 = vmatprep.subr.mxu0 0.0
        %6704 = vmatpush1.msra.mxu0 0.0
        %6705 = vmatprep.subr.mxu0 0.0
        %6706 = vmatpush1.msra.mxu0 0.0
        %6707 = vmatprep.subr.mxu0 0.0
        %6708 = vmatpush1.msra.mxu0 0.0
        %6709 = vmatprep.subr.mxu0 0.0
        %6710 = vmatpush1.msra.mxu0 0.0
        %6711 = vmatprep.subr.mxu0 0.0
        %6712 = vmatpush1.msra.mxu0 0.0
        %6713 = vmatprep.subr.mxu0 0.0
        %6714 = vmatpush1.msra.mxu0 0.0
        %6715 = vmatprep.subr.mxu0 0.0
        %6716 = vmatpush1.msra.mxu0 0.0
        %6717 = vmatprep.subr.mxu0 0.0
        %6718 = vmatpush1.msra.mxu0 0.0
        %6719 = vmatprep.subr.mxu0 0.0
        %6720 = vmatpush1.msra.mxu0 0.0
        %6721 = vmatprep.subr.mxu0 0.0
        %6722 = vmatpush1.msra.mxu0 0.0
        %6723 = vmatprep.subr.mxu0 0.0
        %6724 = vmatpush1.msra.mxu0 0.0
        %6725 = vmatprep.subr.mxu0 0.0
        %6726 = vmatpush1.msra.mxu0 0.0
        %6727 = vmatprep.subr.mxu0 0.0
        %6728 = vmatpush1.msra.mxu0 0.0
        %6729 = vmatprep.subr.mxu0 0.0
        %6730 = vmatpush1.msra.mxu0 0.0
        %6731 = vmatprep.subr.mxu0 0.0
        %6732 = vmatpush1.msra.mxu0 0.0
        %6733 = vmatprep.subr.mxu0 0.0
        %6734 = vmatpush1.msra.mxu0 0.0
        %6735 = vmatprep.subr.mxu0 0.0
        %6736 = vmatpush1.msra.mxu0 0.0
        %6737 = vmatprep.subr.mxu0 0.0
        %6738 = vmatpush1.msra.mxu0 0.0
        %6739 = vmatprep.subr.mxu0 0.0
        %6740 = vmatpush1.msra.mxu0 0.0
        %6741 = vmatprep.subr.mxu0 0.0
        %6742 = vmatpush1.msra.mxu0 0.0
        %6743 = vmatprep.subr.mxu0 0.0
        %6744 = vmatpush1.msra.mxu0 0.0
        %6745 = vmatprep.subr.mxu0 0.0
        %6746 = vmatpush1.msra.mxu0 0.0
        %6747 = vmatprep.subr.mxu0 0.0
        %6748 = vmatpush1.msra.mxu0 0.0
        %6749 = vmatprep.subr.mxu0 0.0
        %6750 = vmatpush1.msra.mxu0 0.0
        %6751 = vmatprep.subr.mxu0 0.0
        %6752 = vmatpush1.msra.mxu0 0.0
        %6753 = vmatprep.subr.mxu0 0.0
        %6754 = vmatpush1.msra.mxu0 0.0
        %6755 = vmatprep.mubr.f32.mxu0 0.0
        %6756 = vmatmul.mubr.f32.gmra.mrb[0].mxu0 %v6593
        %v6757 = vpop.f32.mrb[0].mxu0
        %v6758 = vadd.f32 0.0, %v6757
        %v6759 = vpop.f32.mrb[0].mxu0
        %6760 = vmatprep.mubr.f32.mxu0 0.0
        %6761 = vmatmul.mubr.f32.gmra.mrb[0].mxu0 %v6596
        %v6762 = vpop.f32.mrb[0].mxu0
        %v6763 = vadd.f32 0.0, %v6762
        %v6764 = vpop.f32.mrb[0].mxu0
        %6765 = vmatprep.mubr.f32.mxu0 0.0
        %6766 = vmatmul.mubr.f32.gmra.mrb[0].mxu0 %v6599
        %v6767 = vpop.f32.mrb[0].mxu0
        %v6768 = vadd.f32 0.0, %v6767
        %v6769 = vpop.f32.mrb[0].mxu0
        %6770 = vmatprep.mubr.f32.mxu0 0.0
        %6771 = vmatmul.mubr.f32.gmra.mrb[0].mxu0 %v6602
        %v6772 = vpop.f32.mrb[0].mxu0
        %v6773 = vadd.f32 0.0, %v6772
        %v6774 = vpop.f32.mrb[0].mxu0
        %6775 = vmatprep.mubr.f32.mxu0 0.0
        %6776 = vmatmul.mubr.f32.gmra.mrb[0].mxu0 %v6605
        %v6777 = vpop.f32.mrb[0].mxu0
        %v6778 = vadd.f32 0.0, %v6777
        %v6779 = vpop.f32.mrb[0].mxu0
        %6780 = vmatprep.mubr.f32.mxu0 0.0
        %6781 = vmatmul.mubr.f32.gmra.mrb[0].mxu0 %v6608
        %v6782 = vpop.f32.mrb[0].mxu0
        %v6783 = vadd.f32 0.0, %v6782
        %v6784 = vpop.f32.mrb[0].mxu0
        %6785 = vmatprep.mubr.f32.mxu0 0.0
        %6786 = vmatmul.mubr.f32.gmra.mrb[0].mxu0 %v6611
        %v6787 = vpop.f32.mrb[0].mxu0
        %v6788 = vadd.f32 0.0, %v6787
        %v6789 = vpop.f32.mrb[0].mxu0
        %6790 = vmatprep.mubr.f32.mxu0 0.0
        %6791 = vmatmul.mubr.f32.gmra.mrb[0].mxu0 %v6614
        %v6792 = vpop.f32.mrb[0].mxu0
        %v6793 = vadd.f32 0.0, %v6792
        %v6794 = vpop.f32.mrb[0].mxu0
        %6795 = vmatprep.mubr.f32.mxu0 0.0
        %6796 = vmatmul.mubr.f32.gmra.mrb[0].mxu0 %v6617
        %v6797 = vpop.f32.mrb[0].mxu0
        %v6798 = vadd.f32 0.0, %v6797
        %v6799 = vpop.f32.mrb[0].mxu0
        %6800 = vmatprep.mubr.f32.mxu0 0.0
        %6801 = vmatmul.mubr.f32.gmra.mrb[0].mxu0 %v6620
        %v6802 = vpop.f32.mrb[0].mxu0
        %v6803 = vadd.f32 0.0, %v6802
        %v6804 = vpop.f32.mrb[0].mxu0
        %6805 = vmatprep.mubr.f32.mxu0 0.0
        %6806 = vmatmul.mubr.f32.gmra.mrb[0].mxu0 %v6623
        %v6807 = vpop.f32.mrb[0].mxu0
        %v6808 = vadd.f32 0.0, %v6807
        %v6809 = vpop.f32.mrb[0].mxu0
        %6810 = vmatprep.mubr.f32.mxu0 0.0
        %6811 = vmatmul.mubr.f32.gmra.mrb[0].mxu0 %v6626
        %v6812 = vpop.f32.mrb[0].mxu0
        %v6813 = vadd.f32 0.0, %v6812
        %v6814 = vpop.f32.mrb[0].mxu0
        %6815 = vmatprep.mubr.f32.mxu0 0.0
        %6816 = vmatmul.mubr.f32.gmra.mrb[0].mxu0 %v6629
        %v6817 = vpop.f32.mrb[0].mxu0
        %v6818 = vadd.f32 0.0, %v6817
        %v6819 = vpop.f32.mrb[0].mxu0
        %6820 = vmatprep.mubr.f32.mxu0 0.0
        %6821 = vmatmul.mubr.f32.gmra.mrb[0].mxu0 %v6632
        %v6822 = vpop.f32.mrb[0].mxu0
        %v6823 = vadd.f32 0.0, %v6822
        %v6824 = vpop.f32.mrb[0].mxu0
        %6825 = vmatprep.mubr.f32.mxu0 0.0
        %6826 = vmatmul.mubr.f32.gmra.mrb[0].mxu0 %v6635
        %v6827 = vpop.f32.mrb[0].mxu0
        %v6828 = vadd.f32 0.0, %v6827
        %v6829 = vpop.f32.mrb[0].mxu0
        %6830 = vmatprep.mubr.f32.mxu0 0.0
        %6831 = vmatmul.mubr.f32.gmra.mrb[0].mxu0 %v6638
        %v6832 = vpop.f32.mrb[0].mxu0
        %v6833 = vadd.f32 0.0, %v6832
        %v6834 = vpop.f32.mrb[0].mxu0
        %6835 = vmatprep.mubr.f32.mxu0 0.0
        %6836 = vmatmul.mubr.f32.gmra.mrb[0].mxu0 %v6641
        %v6837 = vpop.f32.mrb[0].mxu0
        %v6838 = vadd.f32 0.0, %v6837
        %v6839 = vpop.f32.mrb[0].mxu0
        %6840 = vmatprep.mubr.f32.mxu0 0.0
        %6841 = vmatmul.mubr.f32.gmra.mrb[0].mxu0 %v6644
        %v6842 = vpop.f32.mrb[0].mxu0
        %v6843 = vadd.f32 0.0, %v6842
        %v6844 = vpop.f32.mrb[0].mxu0
        %6845 = vmatprep.mubr.f32.mxu0 0.0
        %6846 = vmatmul.mubr.f32.gmra.mrb[0].mxu0 %v6647
        %v6847 = vpop.f32.mrb[0].mxu0
        %v6848 = vadd.f32 0.0, %v6847
        %v6849 = vpop.f32.mrb[0].mxu0
        %6850 = vmatprep.mubr.f32.mxu0 0.0
        %6851 = vmatmul.mubr.f32.gmra.mrb[0].mxu0 %v6650
        %v6852 = vpop.f32.mrb[0].mxu0
        %v6853 = vadd.f32 0.0, %v6852
        %v6854 = vpop.f32.mrb[0].mxu0
        %6855 = vmatprep.mubr.f32.mxu0 0.0
        %6856 = vmatmul.mubr.f32.gmra.mrb[0].mxu0 %v6653
        %v6857 = vpop.f32.mrb[0].mxu0
        %v6858 = vadd.f32 0.0, %v6857
        %v6859 = vpop.f32.mrb[0].mxu0
        %6860 = vmatprep.mubr.f32.mxu0 0.0
        %6861 = vmatmul.mubr.f32.gmra.mrb[0].mxu0 %v6656
        %v6862 = vpop.f32.mrb[0].mxu0
        %v6863 = vadd.f32 0.0, %v6862
        %v6864 = vpop.f32.mrb[0].mxu0
        %6865 = vmatprep.mubr.f32.mxu0 0.0
        %6866 = vmatmul.mubr.f32.gmra.mrb[0].mxu0 %v6659
        %v6867 = vpop.f32.mrb[0].mxu0
        %v6868 = vadd.f32 0.0, %v6867
        %v6869 = vpop.f32.mrb[0].mxu0
        %6870 = vmatprep.mubr.f32.mxu0 0.0
        %6871 = vmatmul.mubr.f32.gmra.mrb[0].mxu0 %v6662
        %v6872 = vpop.f32.mrb[0].mxu0
        %v6873 = vadd.f32 0.0, %v6872
        %v6874 = vpop.f32.mrb[0].mxu0
        %6875 = vmatprep.mubr.f32.mxu0 0.0
        %6876 = vmatmul.mubr.f32.gmra.mrb[0].mxu0 %v6665
        %v6877 = vpop.f32.mrb[0].mxu0
        %v6878 = vadd.f32 0.0, %v6877
        %v6879 = vpop.f32.mrb[0].mxu0
        %6880 = vmatprep.mubr.f32.mxu0 0.0
        %6881 = vmatmul.mubr.f32.gmra.mrb[0].mxu0 %v6668
        %v6882 = vpop.f32.mrb[0].mxu0
        %v6883 = vadd.f32 0.0, %v6882
        %v6884 = vpop.f32.mrb[0].mxu0
        %6885 = vmatprep.mubr.f32.mxu0 0.0
        %6886 = vmatmul.mubr.f32.gmra.mrb[0].mxu0 %v6671
        %v6887 = vpop.f32.mrb[0].mxu0
        %v6888 = vadd.f32 0.0, %v6887
        %v6889 = vpop.f32.mrb[0].mxu0
        %6890 = vmatprep.mubr.f32.mxu0 0.0
        %6891 = vmatmul.mubr.f32.gmra.mrb[0].mxu0 %v6674
        %v6892 = vpop.f32.mrb[0].mxu0
        %v6893 = vadd.f32 0.0, %v6892
        %v6894 = vpop.f32.mrb[0].mxu0
        %6895 = vmatprep.mubr.f32.mxu0 0.0
        %6896 = vmatmul.mubr.f32.gmra.mrb[0].mxu0 %v6677
        %v6897 = vpop.f32.mrb[0].mxu0
        %v6898 = vadd.f32 0.0, %v6897
        %v6899 = vpop.f32.mrb[0].mxu0
        %6900 = vmatprep.mubr.f32.mxu0 0.0
        %6901 = vmatmul.mubr.f32.gmra.mrb[0].mxu0 %v6680
        %v6902 = vpop.f32.mrb[0].mxu0
        %v6903 = vadd.f32 0.0, %v6902
        %v6904 = vpop.f32.mrb[0].mxu0
        %6905 = vmatprep.mubr.f32.mxu0 0.0
        %6906 = vmatmul.mubr.f32.gmra.mrb[0].mxu0 %v6683
        %v6907 = vpop.f32.mrb[0].mxu0
        %v6908 = vadd.f32 0.0, %v6907
        %v6909 = vpop.f32.mrb[0].mxu0
        %6910 = vmatprep.mubr.f32.mxu0 0.0
        %6911 = vmatmul.mubr.f32.gmra.mrb[0].mxu0 %v6686
        %v6912 = vpop.f32.mrb[0].mxu0
        %v6913 = vadd.f32 0.0, %v6912
        %v6914 = vpop.f32.mrb[0].mxu0
        %6915 = vdwg.mxu0
        %v6916 = vadd.f32 %v6525, %v6758
        %v6917 = vadd.f32 %v6526, %v6763
        %v6918 = vadd.f32 %v6527, %v6768
        %v6919 = vadd.f32 %v6528, %v6773
        %v6920 = vadd.f32 %v6529, %v6778
        %v6921 = vadd.f32 %v6530, %v6783
        %v6922 = vadd.f32 %v6531, %v6788
        %v6923 = vadd.f32 %v6532, %v6793
        %v6924 = vadd.f32 %v6533, %v6798
        %v6925 = vadd.f32 %v6534, %v6803
        %v6926 = vadd.f32 %v6535, %v6808
        %v6927 = vadd.f32 %v6536, %v6813
        %v6928 = vadd.f32 %v6537, %v6818
        %v6929 = vadd.f32 %v6538, %v6823
        %v6930 = vadd.f32 %v6539, %v6828
        %v6931 = vadd.f32 %v6540, %v6833
        %v6932 = vadd.f32 %v6541, %v6838
        %v6933 = vadd.f32 %v6542, %v6843
        %v6934 = vadd.f32 %v6543, %v6848
        %v6935 = vadd.f32 %v6544, %v6853
        %v6936 = vadd.f32 %v6545, %v6858
        %v6937 = vadd.f32 %v6546, %v6863
        %v6938 = vadd.f32 %v6547, %v6868
        %v6939 = vadd.f32 %v6548, %v6873
        %v6940 = vadd.f32 %v6549, %v6878
        %v6941 = vadd.f32 %v6550, %v6883
        %v6942 = vadd.f32 %v6551, %v6888
        %v6943 = vadd.f32 %v6552, %v6893
        %v6944 = vadd.f32 %v6553, %v6898
        %v6945 = vadd.f32 %v6554, %v6903
        %v6946 = vadd.f32 %v6555, %v6908
        %v6947 = vadd.f32 %v6556, %v6913
        %v6948 = vld [vmem:[%s6557 + $0x1] sm:$0xff]
        %v6949 = vld [vmem:[%s6557 + $0x9] sm:$0xff]
        %v6950 = vld [vmem:[%s6557 + $0x19] sm:$0xff]
        %v6951 = vld [vmem:[%s6557 + $0x21] sm:$0xff]
        %v6952 = vld [vmem:[%s6557 + $0x31] sm:$0xff]
        %v6953 = vld [vmem:[%s6557 + $0x39] sm:$0xff]
        %v6954 = vld [vmem:[%s6557 + $0x49] sm:$0xff]
        %v6955 = vld [vmem:[%s6557 + $0x51] sm:$0xff]
        %v6956 = vld [vmem:[%s6557 + $0x61] sm:$0xff]
        %v6957 = vld [vmem:[%s6557 + $0x69] sm:$0xff]
        %v6958 = vld [vmem:[%s6557 + $0x79] sm:$0xff]
        %v6959 = vld [vmem:[%s6557 + $0x81] sm:$0xff]
        %v6960 = vld [vmem:[%s6557 + $0x91] sm:$0xff]
        %v6961 = vld [vmem:[%s6557 + $0x99] sm:$0xff]
        %v6962 = vld [vmem:[%s6557 + $0xa9] sm:$0xff]
        %v6963 = vld [vmem:[%s6557 + $0xb1] sm:$0xff]
        %v6964 = vld [vmem:[%s6557 + $0xc1] sm:$0xff]
        %v6965 = vld [vmem:[%s6557 + $0xc9] sm:$0xff]
        %v6966 = vld [vmem:[%s6557 + $0xd9] sm:$0xff]
        %v6967 = vld [vmem:[%s6557 + $0xe1] sm:$0xff]
        %v6968 = vld [vmem:[%s6557 + $0xf1] sm:$0xff]
        %v6969 = vld [vmem:[%s6557 + $0xf9] sm:$0xff]
        %v6970 = vld [vmem:[%s6557 + $0x109] sm:$0xff]
        %v6971 = vld [vmem:[%s6557 + $0x111] sm:$0xff]
        %v6972 = vld [vmem:[%s6557 + $0x121] sm:$0xff]
        %v6973 = vld [vmem:[%s6557 + $0x129] sm:$0xff]
        %v6974 = vld [vmem:[%s6557 + $0x139] sm:$0xff]
        %v6975 = vld [vmem:[%s6557 + $0x141] sm:$0xff]
        %v6976 = vld [vmem:[%s6557 + $0x151] sm:$0xff]
        %v6977 = vld [vmem:[%s6557 + $0x159] sm:$0xff]
        %v6978 = vld [vmem:[%s6557 + $0x169] sm:$0xff]
        %v6979 = vld [vmem:[%s6557 + $0x171] sm:$0xff]
        %s6980 = scalar_lea.vmem %s3, 28
        %v6981 = vld [vmem:[%s6980] sm:$0xf]
        %v6983 = vsel %vm277, %v6948, 0
        %v6986 = vsel %vm277, %v6949, 0
        %v6989 = vsel %vm277, %v6950, 0
        %v6992 = vsel %vm277, %v6951, 0
        %v6995 = vsel %vm277, %v6952, 0
        %v6998 = vsel %vm277, %v6953, 0
        %v7001 = vsel %vm277, %v6954, 0
        %v7004 = vsel %vm277, %v6955, 0
        %v7007 = vsel %vm277, %v6956, 0
        %v7010 = vsel %vm277, %v6957, 0
        %v7013 = vsel %vm277, %v6958, 0
        %v7016 = vsel %vm277, %v6959, 0
        %v7019 = vsel %vm277, %v6960, 0
        %v7022 = vsel %vm277, %v6961, 0
        %v7025 = vsel %vm277, %v6962, 0
        %v7028 = vsel %vm277, %v6963, 0
        %v7031 = vsel %vm277, %v6964, 0
        %v7034 = vsel %vm277, %v6965, 0
        %v7037 = vsel %vm277, %v6966, 0
        %v7040 = vsel %vm277, %v6967, 0
        %v7043 = vsel %vm277, %v6968, 0
        %v7046 = vsel %vm277, %v6969, 0
        %v7049 = vsel %vm277, %v6970, 0
        %v7052 = vsel %vm277, %v6971, 0
        %v7055 = vsel %vm277, %v6972, 0
        %v7058 = vsel %vm277, %v6973, 0
        %v7061 = vsel %vm277, %v6974, 0
        %v7064 = vsel %vm277, %v6975, 0
        %v7067 = vsel %vm277, %v6976, 0
        %v7070 = vsel %vm277, %v6977, 0
        %v7073 = vsel %vm277, %v6978, 0
        %v7076 = vsel %vm277, %v6979, 0
        %v7079 = vsel %vm551, %v6981, 0
        %7081 = vmatprep.subr.mxu0 0.0
        %7082 = vmatpush1.msra.mxu0 %v7079
        %7083 = vmatprep.subr.mxu0 0.0
        %7084 = vmatpush1.msra.mxu0 0.0
        %7085 = vmatprep.subr.mxu0 0.0
        %7086 = vmatpush1.msra.mxu0 0.0
        %7087 = vmatprep.subr.mxu0 0.0
        %7088 = vmatpush1.msra.mxu0 0.0
        %7089 = vmatprep.subr.mxu0 0.0
        %7090 = vmatpush1.msra.mxu0 0.0
        %7091 = vmatprep.subr.mxu0 0.0
        %7092 = vmatpush1.msra.mxu0 0.0
        %7093 = vmatprep.subr.mxu0 0.0
        %7094 = vmatpush1.msra.mxu0 0.0
        %7095 = vmatprep.subr.mxu0 0.0
        %7096 = vmatpush1.msra.mxu0 0.0
        %7097 = vmatprep.subr.mxu0 0.0
        %7098 = vmatpush1.msra.mxu0 0.0
        %7099 = vmatprep.subr.mxu0 0.0
        %7100 = vmatpush1.msra.mxu0 0.0
        %7101 = vmatprep.subr.mxu0 0.0
        %7102 = vmatpush1.msra.mxu0 0.0
        %7103 = vmatprep.subr.mxu0 0.0
        %7104 = vmatpush1.msra.mxu0 0.0
        %7105 = vmatprep.subr.mxu0 0.0
        %7106 = vmatpush1.msra.mxu0 0.0
        %7107 = vmatprep.subr.mxu0 0.0
        %7108 = vmatpush1.msra.mxu0 0.0
        %7109 = vmatprep.subr.mxu0 0.0
        %7110 = vmatpush1.msra.mxu0 0.0
        %7111 = vmatprep.subr.mxu0 0.0
        %7112 = vmatpush1.msra.mxu0 0.0
        %7113 = vmatprep.subr.mxu0 0.0
        %7114 = vmatpush1.msra.mxu0 0.0
        %7115 = vmatprep.subr.mxu0 0.0
        %7116 = vmatpush1.msra.mxu0 0.0
        %7117 = vmatprep.subr.mxu0 0.0
        %7118 = vmatpush1.msra.mxu0 0.0
        %7119 = vmatprep.subr.mxu0 0.0
        %7120 = vmatpush1.msra.mxu0 0.0
        %7121 = vmatprep.subr.mxu0 0.0
        %7122 = vmatpush1.msra.mxu0 0.0
        %7123 = vmatprep.subr.mxu0 0.0
        %7124 = vmatpush1.msra.mxu0 0.0
        %7125 = vmatprep.subr.mxu0 0.0
        %7126 = vmatpush1.msra.mxu0 0.0
        %7127 = vmatprep.subr.mxu0 0.0
        %7128 = vmatpush1.msra.mxu0 0.0
        %7129 = vmatprep.subr.mxu0 0.0
        %7130 = vmatpush1.msra.mxu0 0.0
        %7131 = vmatprep.subr.mxu0 0.0
        %7132 = vmatpush1.msra.mxu0 0.0
        %7133 = vmatprep.subr.mxu0 0.0
        %7134 = vmatpush1.msra.mxu0 0.0
        %7135 = vmatprep.subr.mxu0 0.0
        %7136 = vmatpush1.msra.mxu0 0.0
        %7137 = vmatprep.subr.mxu0 0.0
        %7138 = vmatpush1.msra.mxu0 0.0
        %7139 = vmatprep.subr.mxu0 0.0
        %7140 = vmatpush1.msra.mxu0 0.0
        %7141 = vmatprep.subr.mxu0 0.0
        %7142 = vmatpush1.msra.mxu0 0.0
        %7143 = vmatprep.subr.mxu0 0.0
        %7144 = vmatpush1.msra.mxu0 0.0
        %7145 = vmatprep.mubr.f32.mxu0 0.0
        %7146 = vmatmul.mubr.f32.gmra.mrb[0].mxu0 %v6983
        %v7147 = vpop.f32.mrb[0].mxu0
        %v7148 = vadd.f32 0.0, %v7147
        %v7149 = vpop.f32.mrb[0].mxu0
        %7150 = vmatprep.mubr.f32.mxu0 0.0
        %7151 = vmatmul.mubr.f32.gmra.mrb[0].mxu0 %v6986
        %v7152 = vpop.f32.mrb[0].mxu0
        %v7153 = vadd.f32 0.0, %v7152
        %v7154 = vpop.f32.mrb[0].mxu0
        %7155 = vmatprep.mubr.f32.mxu0 0.0
        %7156 = vmatmul.mubr.f32.gmra.mrb[0].mxu0 %v6989
        %v7157 = vpop.f32.mrb[0].mxu0
        %v7158 = vadd.f32 0.0, %v7157
        %v7159 = vpop.f32.mrb[0].mxu0
        %7160 = vmatprep.mubr.f32.mxu0 0.0
        %7161 = vmatmul.mubr.f32.gmra.mrb[0].mxu0 %v6992
        %v7162 = vpop.f32.mrb[0].mxu0
        %v7163 = vadd.f32 0.0, %v7162
        %v7164 = vpop.f32.mrb[0].mxu0
        %7165 = vmatprep.mubr.f32.mxu0 0.0
        %7166 = vmatmul.mubr.f32.gmra.mrb[0].mxu0 %v6995
        %v7167 = vpop.f32.mrb[0].mxu0
        %v7168 = vadd.f32 0.0, %v7167
        %v7169 = vpop.f32.mrb[0].mxu0
        %7170 = vmatprep.mubr.f32.mxu0 0.0
        %7171 = vmatmul.mubr.f32.gmra.mrb[0].mxu0 %v6998
        %v7172 = vpop.f32.mrb[0].mxu0
        %v7173 = vadd.f32 0.0, %v7172
        %v7174 = vpop.f32.mrb[0].mxu0
        %7175 = vmatprep.mubr.f32.mxu0 0.0
        %7176 = vmatmul.mubr.f32.gmra.mrb[0].mxu0 %v7001
        %v7177 = vpop.f32.mrb[0].mxu0
        %v7178 = vadd.f32 0.0, %v7177
        %v7179 = vpop.f32.mrb[0].mxu0
        %7180 = vmatprep.mubr.f32.mxu0 0.0
        %7181 = vmatmul.mubr.f32.gmra.mrb[0].mxu0 %v7004
        %v7182 = vpop.f32.mrb[0].mxu0
        %v7183 = vadd.f32 0.0, %v7182
        %v7184 = vpop.f32.mrb[0].mxu0
        %7185 = vmatprep.mubr.f32.mxu0 0.0
        %7186 = vmatmul.mubr.f32.gmra.mrb[0].mxu0 %v7007
        %v7187 = vpop.f32.mrb[0].mxu0
        %v7188 = vadd.f32 0.0, %v7187
        %v7189 = vpop.f32.mrb[0].mxu0
        %7190 = vmatprep.mubr.f32.mxu0 0.0
        %7191 = vmatmul.mubr.f32.gmra.mrb[0].mxu0 %v7010
        %v7192 = vpop.f32.mrb[0].mxu0
        %v7193 = vadd.f32 0.0, %v7192
        %v7194 = vpop.f32.mrb[0].mxu0
        %7195 = vmatprep.mubr.f32.mxu0 0.0
        %7196 = vmatmul.mubr.f32.gmra.mrb[0].mxu0 %v7013
        %v7197 = vpop.f32.mrb[0].mxu0
        %v7198 = vadd.f32 0.0, %v7197
        %v7199 = vpop.f32.mrb[0].mxu0
        %7200 = vmatprep.mubr.f32.mxu0 0.0
        %7201 = vmatmul.mubr.f32.gmra.mrb[0].mxu0 %v7016
        %v7202 = vpop.f32.mrb[0].mxu0
        %v7203 = vadd.f32 0.0, %v7202
        %v7204 = vpop.f32.mrb[0].mxu0
        %7205 = vmatprep.mubr.f32.mxu0 0.0
        %7206 = vmatmul.mubr.f32.gmra.mrb[0].mxu0 %v7019
        %v7207 = vpop.f32.mrb[0].mxu0
        %v7208 = vadd.f32 0.0, %v7207
        %v7209 = vpop.f32.mrb[0].mxu0
        %7210 = vmatprep.mubr.f32.mxu0 0.0
        %7211 = vmatmul.mubr.f32.gmra.mrb[0].mxu0 %v7022
        %v7212 = vpop.f32.mrb[0].mxu0
        %v7213 = vadd.f32 0.0, %v7212
        %v7214 = vpop.f32.mrb[0].mxu0
        %7215 = vmatprep.mubr.f32.mxu0 0.0
        %7216 = vmatmul.mubr.f32.gmra.mrb[0].mxu0 %v7025
        %v7217 = vpop.f32.mrb[0].mxu0
        %v7218 = vadd.f32 0.0, %v7217
        %v7219 = vpop.f32.mrb[0].mxu0
        %7220 = vmatprep.mubr.f32.mxu0 0.0
        %7221 = vmatmul.mubr.f32.gmra.mrb[0].mxu0 %v7028
        %v7222 = vpop.f32.mrb[0].mxu0
        %v7223 = vadd.f32 0.0, %v7222
        %v7224 = vpop.f32.mrb[0].mxu0
        %7225 = vmatprep.mubr.f32.mxu0 0.0
        %7226 = vmatmul.mubr.f32.gmra.mrb[0].mxu0 %v7031
        %v7227 = vpop.f32.mrb[0].mxu0
        %v7228 = vadd.f32 0.0, %v7227
        %v7229 = vpop.f32.mrb[0].mxu0
        %7230 = vmatprep.mubr.f32.mxu0 0.0
        %7231 = vmatmul.mubr.f32.gmra.mrb[0].mxu0 %v7034
        %v7232 = vpop.f32.mrb[0].mxu0
        %v7233 = vadd.f32 0.0, %v7232
        %v7234 = vpop.f32.mrb[0].mxu0
        %7235 = vmatprep.mubr.f32.mxu0 0.0
        %7236 = vmatmul.mubr.f32.gmra.mrb[0].mxu0 %v7037
        %v7237 = vpop.f32.mrb[0].mxu0
        %v7238 = vadd.f32 0.0, %v7237
        %v7239 = vpop.f32.mrb[0].mxu0
        %7240 = vmatprep.mubr.f32.mxu0 0.0
        %7241 = vmatmul.mubr.f32.gmra.mrb[0].mxu0 %v7040
        %v7242 = vpop.f32.mrb[0].mxu0
        %v7243 = vadd.f32 0.0, %v7242
        %v7244 = vpop.f32.mrb[0].mxu0
        %7245 = vmatprep.mubr.f32.mxu0 0.0
        %7246 = vmatmul.mubr.f32.gmra.mrb[0].mxu0 %v7043
        %v7247 = vpop.f32.mrb[0].mxu0
        %v7248 = vadd.f32 0.0, %v7247
        %v7249 = vpop.f32.mrb[0].mxu0
        %7250 = vmatprep.mubr.f32.mxu0 0.0
        %7251 = vmatmul.mubr.f32.gmra.mrb[0].mxu0 %v7046
        %v7252 = vpop.f32.mrb[0].mxu0
        %v7253 = vadd.f32 0.0, %v7252
        %v7254 = vpop.f32.mrb[0].mxu0
        %7255 = vmatprep.mubr.f32.mxu0 0.0
        %7256 = vmatmul.mubr.f32.gmra.mrb[0].mxu0 %v7049
        %v7257 = vpop.f32.mrb[0].mxu0
        %v7258 = vadd.f32 0.0, %v7257
        %v7259 = vpop.f32.mrb[0].mxu0
        %7260 = vmatprep.mubr.f32.mxu0 0.0
        %7261 = vmatmul.mubr.f32.gmra.mrb[0].mxu0 %v7052
        %v7262 = vpop.f32.mrb[0].mxu0
        %v7263 = vadd.f32 0.0, %v7262
        %v7264 = vpop.f32.mrb[0].mxu0
        %7265 = vmatprep.mubr.f32.mxu0 0.0
        %7266 = vmatmul.mubr.f32.gmra.mrb[0].mxu0 %v7055
        %v7267 = vpop.f32.mrb[0].mxu0
        %v7268 = vadd.f32 0.0, %v7267
        %v7269 = vpop.f32.mrb[0].mxu0
        %7270 = vmatprep.mubr.f32.mxu0 0.0
        %7271 = vmatmul.mubr.f32.gmra.mrb[0].mxu0 %v7058
        %v7272 = vpop.f32.mrb[0].mxu0
        %v7273 = vadd.f32 0.0, %v7272
        %v7274 = vpop.f32.mrb[0].mxu0
        %7275 = vmatprep.mubr.f32.mxu0 0.0
        %7276 = vmatmul.mubr.f32.gmra.mrb[0].mxu0 %v7061
        %v7277 = vpop.f32.mrb[0].mxu0
        %v7278 = vadd.f32 0.0, %v7277
        %v7279 = vpop.f32.mrb[0].mxu0
        %7280 = vmatprep.mubr.f32.mxu0 0.0
        %7281 = vmatmul.mubr.f32.gmra.mrb[0].mxu0 %v7064
        %v7282 = vpop.f32.mrb[0].mxu0
        %v7283 = vadd.f32 0.0, %v7282
        %v7284 = vpop.f32.mrb[0].mxu0
        %7285 = vmatprep.mubr.f32.mxu0 0.0
        %7286 = vmatmul.mubr.f32.gmra.mrb[0].mxu0 %v7067
        %v7287 = vpop.f32.mrb[0].mxu0
        %v7288 = vadd.f32 0.0, %v7287
        %v7289 = vpop.f32.mrb[0].mxu0
        %7290 = vmatprep.mubr.f32.mxu0 0.0
        %7291 = vmatmul.mubr.f32.gmra.mrb[0].mxu0 %v7070
        %v7292 = vpop.f32.mrb[0].mxu0
        %v7293 = vadd.f32 0.0, %v7292
        %v7294 = vpop.f32.mrb[0].mxu0
        %7295 = vmatprep.mubr.f32.mxu0 0.0
        %7296 = vmatmul.mubr.f32.gmra.mrb[0].mxu0 %v7073
        %v7297 = vpop.f32.mrb[0].mxu0
        %v7298 = vadd.f32 0.0, %v7297
        %v7299 = vpop.f32.mrb[0].mxu0
        %7300 = vmatprep.mubr.f32.mxu0 0.0
        %7301 = vmatmul.mubr.f32.gmra.mrb[0].mxu0 %v7076
        %v7302 = vpop.f32.mrb[0].mxu0
        %v7303 = vadd.f32 0.0, %v7302
        %v7304 = vpop.f32.mrb[0].mxu0
        %7305 = vdwg.mxu0
        %v7306 = vadd.f32 %v6916, %v7148
        %v7307 = vadd.f32 %v6917, %v7153
        %v7308 = vadd.f32 %v6918, %v7158
        %v7309 = vadd.f32 %v6919, %v7163
        %v7310 = vadd.f32 %v6920, %v7168
        %v7311 = vadd.f32 %v6921, %v7173
        %v7312 = vadd.f32 %v6922, %v7178
        %v7313 = vadd.f32 %v6923, %v7183
        %v7314 = vadd.f32 %v6924, %v7188
        %v7315 = vadd.f32 %v6925, %v7193
        %v7316 = vadd.f32 %v6926, %v7198
        %v7317 = vadd.f32 %v6927, %v7203
        %v7318 = vadd.f32 %v6928, %v7208
        %v7319 = vadd.f32 %v6929, %v7213
        %v7320 = vadd.f32 %v6930, %v7218
        %v7321 = vadd.f32 %v6931, %v7223
        %v7322 = vadd.f32 %v6932, %v7228
        %v7323 = vadd.f32 %v6933, %v7233
        %v7324 = vadd.f32 %v6934, %v7238
        %v7325 = vadd.f32 %v6935, %v7243
        %v7326 = vadd.f32 %v6936, %v7248
        %v7327 = vadd.f32 %v6937, %v7253
        %v7328 = vadd.f32 %v6938, %v7258
        %v7329 = vadd.f32 %v6939, %v7263
        %v7330 = vadd.f32 %v6940, %v7268
        %v7331 = vadd.f32 %v6941, %v7273
        %v7332 = vadd.f32 %v6942, %v7278
        %v7333 = vadd.f32 %v6943, %v7283
        %v7334 = vadd.f32 %v6944, %v7288
        %v7335 = vadd.f32 %v6945, %v7293
        %v7336 = vadd.f32 %v6946, %v7298
        %v7337 = vadd.f32 %v6947, %v7303
        %v7338 = vld [vmem:[%s6557 + $0x2] sm:$0xff]
        %v7339 = vld [vmem:[%s6557 + $0xa] sm:$0xff]
        %v7340 = vld [vmem:[%s6557 + $0x1a] sm:$0xff]
        %v7341 = vld [vmem:[%s6557 + $0x22] sm:$0xff]
        %v7342 = vld [vmem:[%s6557 + $0x32] sm:$0xff]
        %v7343 = vld [vmem:[%s6557 + $0x3a] sm:$0xff]
        %v7344 = vld [vmem:[%s6557 + $0x4a] sm:$0xff]
        %v7345 = vld [vmem:[%s6557 + $0x52] sm:$0xff]
        %v7346 = vld [vmem:[%s6557 + $0x62] sm:$0xff]
        %v7347 = vld [vmem:[%s6557 + $0x6a] sm:$0xff]
        %v7348 = vld [vmem:[%s6557 + $0x7a] sm:$0xff]
        %v7349 = vld [vmem:[%s6557 + $0x82] sm:$0xff]
        %v7350 = vld [vmem:[%s6557 + $0x92] sm:$0xff]
        %v7351 = vld [vmem:[%s6557 + $0x9a] sm:$0xff]
        %v7352 = vld [vmem:[%s6557 + $0xaa] sm:$0xff]
        %v7353 = vld [vmem:[%s6557 + $0xb2] sm:$0xff]
        %v7354 = vld [vmem:[%s6557 + $0xc2] sm:$0xff]
        %v7355 = vld [vmem:[%s6557 + $0xca] sm:$0xff]
        %v7356 = vld [vmem:[%s6557 + $0xda] sm:$0xff]
        %v7357 = vld [vmem:[%s6557 + $0xe2] sm:$0xff]
        %v7358 = vld [vmem:[%s6557 + $0xf2] sm:$0xff]
        %v7359 = vld [vmem:[%s6557 + $0xfa] sm:$0xff]
        %v7360 = vld [vmem:[%s6557 + $0x10a] sm:$0xff]
        %v7361 = vld [vmem:[%s6557 + $0x112] sm:$0xff]
        %v7362 = vld [vmem:[%s6557 + $0x122] sm:$0xff]
        %v7363 = vld [vmem:[%s6557 + $0x12a] sm:$0xff]
        %v7364 = vld [vmem:[%s6557 + $0x13a] sm:$0xff]
        %v7365 = vld [vmem:[%s6557 + $0x142] sm:$0xff]
        %v7366 = vld [vmem:[%s6557 + $0x152] sm:$0xff]
        %v7367 = vld [vmem:[%s6557 + $0x15a] sm:$0xff]
        %v7368 = vld [vmem:[%s6557 + $0x16a] sm:$0xff]
        %v7369 = vld [vmem:[%s6557 + $0x172] sm:$0xff]
        %s7370 = scalar_lea.vmem %s3, 32
        %v7371 = vld [vmem:[%s7370] sm:$0xf]
        %v7373 = vsel %vm277, %v7338, 0
        %v7376 = vsel %vm277, %v7339, 0
        %v7379 = vsel %vm277, %v7340, 0
        %v7382 = vsel %vm277, %v7341, 0
        %v7385 = vsel %vm277, %v7342, 0
        %v7388 = vsel %vm277, %v7343, 0
        %v7391 = vsel %vm277, %v7344, 0
        %v7394 = vsel %vm277, %v7345, 0
        %v7397 = vsel %vm277, %v7346, 0
        %v7400 = vsel %vm277, %v7347, 0
        %v7403 = vsel %vm277, %v7348, 0
        %v7406 = vsel %vm277, %v7349, 0
        %v7409 = vsel %vm277, %v7350, 0
        %v7412 = vsel %vm277, %v7351, 0
        %v7415 = vsel %vm277, %v7352, 0
        %v7418 = vsel %vm277, %v7353, 0
        %v7421 = vsel %vm277, %v7354, 0
        %v7424 = vsel %vm277, %v7355, 0
        %v7427 = vsel %vm277, %v7356, 0
        %v7430 = vsel %vm277, %v7357, 0
        %v7433 = vsel %vm277, %v7358, 0
        %v7436 = vsel %vm277, %v7359, 0
        %v7439 = vsel %vm277, %v7360, 0
        %v7442 = vsel %vm277, %v7361, 0
        %v7445 = vsel %vm277, %v7362, 0
        %v7448 = vsel %vm277, %v7363, 0
        %v7451 = vsel %vm277, %v7364, 0
        %v7454 = vsel %vm277, %v7365, 0
        %v7457 = vsel %vm277, %v7366, 0
        %v7460 = vsel %vm277, %v7367, 0
        %v7463 = vsel %vm277, %v7368, 0
        %v7466 = vsel %vm277, %v7369, 0
        %v7469 = vsel %vm551, %v7371, 0
        %7471 = vmatprep.subr.mxu0 0.0
        %7472 = vmatpush1.msra.mxu0 %v7469
        %7473 = vmatprep.subr.mxu0 0.0
        %7474 = vmatpush1.msra.mxu0 0.0
        %7475 = vmatprep.subr.mxu0 0.0
        %7476 = vmatpush1.msra.mxu0 0.0
        %7477 = vmatprep.subr.mxu0 0.0
        %7478 = vmatpush1.msra.mxu0 0.0
        %7479 = vmatprep.subr.mxu0 0.0
        %7480 = vmatpush1.msra.mxu0 0.0
        %7481 = vmatprep.subr.mxu0 0.0
        %7482 = vmatpush1.msra.mxu0 0.0
        %7483 = vmatprep.subr.mxu0 0.0
        %7484 = vmatpush1.msra.mxu0 0.0
        %7485 = vmatprep.subr.mxu0 0.0
        %7486 = vmatpush1.msra.mxu0 0.0
        %7487 = vmatprep.subr.mxu0 0.0
        %7488 = vmatpush1.msra.mxu0 0.0
        %7489 = vmatprep.subr.mxu0 0.0
        %7490 = vmatpush1.msra.mxu0 0.0
        %7491 = vmatprep.subr.mxu0 0.0
        %7492 = vmatpush1.msra.mxu0 0.0
        %7493 = vmatprep.subr.mxu0 0.0
        %7494 = vmatpush1.msra.mxu0 0.0
        %7495 = vmatprep.subr.mxu0 0.0
        %7496 = vmatpush1.msra.mxu0 0.0
        %7497 = vmatprep.subr.mxu0 0.0
        %7498 = vmatpush1.msra.mxu0 0.0
        %7499 = vmatprep.subr.mxu0 0.0
        %7500 = vmatpush1.msra.mxu0 0.0
        %7501 = vmatprep.subr.mxu0 0.0
        %7502 = vmatpush1.msra.mxu0 0.0
        %7503 = vmatprep.subr.mxu0 0.0
        %7504 = vmatpush1.msra.mxu0 0.0
        %7505 = vmatprep.subr.mxu0 0.0
        %7506 = vmatpush1.msra.mxu0 0.0
        %7507 = vmatprep.subr.mxu0 0.0
        %7508 = vmatpush1.msra.mxu0 0.0
        %7509 = vmatprep.subr.mxu0 0.0
        %7510 = vmatpush1.msra.mxu0 0.0
        %7511 = vmatprep.subr.mxu0 0.0
        %7512 = vmatpush1.msra.mxu0 0.0
        %7513 = vmatprep.subr.mxu0 0.0
        %7514 = vmatpush1.msra.mxu0 0.0
        %7515 = vmatprep.subr.mxu0 0.0
        %7516 = vmatpush1.msra.mxu0 0.0
        %7517 = vmatprep.subr.mxu0 0.0
        %7518 = vmatpush1.msra.mxu0 0.0
        %7519 = vmatprep.subr.mxu0 0.0
        %7520 = vmatpush1.msra.mxu0 0.0
        %7521 = vmatprep.subr.mxu0 0.0
        %7522 = vmatpush1.msra.mxu0 0.0
        %7523 = vmatprep.subr.mxu0 0.0
        %7524 = vmatpush1.msra.mxu0 0.0
        %7525 = vmatprep.subr.mxu0 0.0
        %7526 = vmatpush1.msra.mxu0 0.0
        %7527 = vmatprep.subr.mxu0 0.0
        %7528 = vmatpush1.msra.mxu0 0.0
        %7529 = vmatprep.subr.mxu0 0.0
        %7530 = vmatpush1.msra.mxu0 0.0
        %7531 = vmatprep.subr.mxu0 0.0
        %7532 = vmatpush1.msra.mxu0 0.0
        %7533 = vmatprep.subr.mxu0 0.0
        %7534 = vmatpush1.msra.mxu0 0.0
        %7535 = vmatprep.mubr.f32.mxu0 0.0
        %7536 = vmatmul.mubr.f32.gmra.mrb[0].mxu0 %v7373
        %v7537 = vpop.f32.mrb[0].mxu0
        %v7538 = vadd.f32 0.0, %v7537
        %v7539 = vpop.f32.mrb[0].mxu0
        %7540 = vmatprep.mubr.f32.mxu0 0.0
        %7541 = vmatmul.mubr.f32.gmra.mrb[0].mxu0 %v7376
        %v7542 = vpop.f32.mrb[0].mxu0
        %v7543 = vadd.f32 0.0, %v7542
        %v7544 = vpop.f32.mrb[0].mxu0
        %7545 = vmatprep.mubr.f32.mxu0 0.0
        %7546 = vmatmul.mubr.f32.gmra.mrb[0].mxu0 %v7379
        %v7547 = vpop.f32.mrb[0].mxu0
        %v7548 = vadd.f32 0.0, %v7547
        %v7549 = vpop.f32.mrb[0].mxu0
        %7550 = vmatprep.mubr.f32.mxu0 0.0
        %7551 = vmatmul.mubr.f32.gmra.mrb[0].mxu0 %v7382
        %v7552 = vpop.f32.mrb[0].mxu0
        %v7553 = vadd.f32 0.0, %v7552
        %v7554 = vpop.f32.mrb[0].mxu0
        %7555 = vmatprep.mubr.f32.mxu0 0.0
        %7556 = vmatmul.mubr.f32.gmra.mrb[0].mxu0 %v7385
        %v7557 = vpop.f32.mrb[0].mxu0
        %v7558 = vadd.f32 0.0, %v7557
        %v7559 = vpop.f32.mrb[0].mxu0
        %7560 = vmatprep.mubr.f32.mxu0 0.0
        %7561 = vmatmul.mubr.f32.gmra.mrb[0].mxu0 %v7388
        %v7562 = vpop.f32.mrb[0].mxu0
        %v7563 = vadd.f32 0.0, %v7562
        %v7564 = vpop.f32.mrb[0].mxu0
        %7565 = vmatprep.mubr.f32.mxu0 0.0
        %7566 = vmatmul.mubr.f32.gmra.mrb[0].mxu0 %v7391
        %v7567 = vpop.f32.mrb[0].mxu0
        %v7568 = vadd.f32 0.0, %v7567
        %v7569 = vpop.f32.mrb[0].mxu0
        %7570 = vmatprep.mubr.f32.mxu0 0.0
        %7571 = vmatmul.mubr.f32.gmra.mrb[0].mxu0 %v7394
        %v7572 = vpop.f32.mrb[0].mxu0
        %v7573 = vadd.f32 0.0, %v7572
        %v7574 = vpop.f32.mrb[0].mxu0
        %7575 = vmatprep.mubr.f32.mxu0 0.0
        %7576 = vmatmul.mubr.f32.gmra.mrb[0].mxu0 %v7397
        %v7577 = vpop.f32.mrb[0].mxu0
        %v7578 = vadd.f32 0.0, %v7577
        %v7579 = vpop.f32.mrb[0].mxu0
        %7580 = vmatprep.mubr.f32.mxu0 0.0
        %7581 = vmatmul.mubr.f32.gmra.mrb[0].mxu0 %v7400
        %v7582 = vpop.f32.mrb[0].mxu0
        %v7583 = vadd.f32 0.0, %v7582
        %v7584 = vpop.f32.mrb[0].mxu0
        %7585 = vmatprep.mubr.f32.mxu0 0.0
        %7586 = vmatmul.mubr.f32.gmra.mrb[0].mxu0 %v7403
        %v7587 = vpop.f32.mrb[0].mxu0
        %v7588 = vadd.f32 0.0, %v7587
        %v7589 = vpop.f32.mrb[0].mxu0
        %7590 = vmatprep.mubr.f32.mxu0 0.0
        %7591 = vmatmul.mubr.f32.gmra.mrb[0].mxu0 %v7406
        %v7592 = vpop.f32.mrb[0].mxu0
        %v7593 = vadd.f32 0.0, %v7592
        %v7594 = vpop.f32.mrb[0].mxu0
        %7595 = vmatprep.mubr.f32.mxu0 0.0
        %7596 = vmatmul.mubr.f32.gmra.mrb[0].mxu0 %v7409
        %v7597 = vpop.f32.mrb[0].mxu0
        %v7598 = vadd.f32 0.0, %v7597
        %v7599 = vpop.f32.mrb[0].mxu0
        %7600 = vmatprep.mubr.f32.mxu0 0.0
        %7601 = vmatmul.mubr.f32.gmra.mrb[0].mxu0 %v7412
        %v7602 = vpop.f32.mrb[0].mxu0
        %v7603 = vadd.f32 0.0, %v7602
        %v7604 = vpop.f32.mrb[0].mxu0
        %7605 = vmatprep.mubr.f32.mxu0 0.0
        %7606 = vmatmul.mubr.f32.gmra.mrb[0].mxu0 %v7415
        %v7607 = vpop.f32.mrb[0].mxu0
        %v7608 = vadd.f32 0.0, %v7607
        %v7609 = vpop.f32.mrb[0].mxu0
        %7610 = vmatprep.mubr.f32.mxu0 0.0
        %7611 = vmatmul.mubr.f32.gmra.mrb[0].mxu0 %v7418
        %v7612 = vpop.f32.mrb[0].mxu0
        %v7613 = vadd.f32 0.0, %v7612
        %v7614 = vpop.f32.mrb[0].mxu0
        %7615 = vmatprep.mubr.f32.mxu0 0.0
        %7616 = vmatmul.mubr.f32.gmra.mrb[0].mxu0 %v7421
        %v7617 = vpop.f32.mrb[0].mxu0
        %v7618 = vadd.f32 0.0, %v7617
        %v7619 = vpop.f32.mrb[0].mxu0
        %7620 = vmatprep.mubr.f32.mxu0 0.0
        %7621 = vmatmul.mubr.f32.gmra.mrb[0].mxu0 %v7424
        %v7622 = vpop.f32.mrb[0].mxu0
        %v7623 = vadd.f32 0.0, %v7622
        %v7624 = vpop.f32.mrb[0].mxu0
        %7625 = vmatprep.mubr.f32.mxu0 0.0
        %7626 = vmatmul.mubr.f32.gmra.mrb[0].mxu0 %v7427
        %v7627 = vpop.f32.mrb[0].mxu0
        %v7628 = vadd.f32 0.0, %v7627
        %v7629 = vpop.f32.mrb[0].mxu0
        %7630 = vmatprep.mubr.f32.mxu0 0.0
        %7631 = vmatmul.mubr.f32.gmra.mrb[0].mxu0 %v7430
        %v7632 = vpop.f32.mrb[0].mxu0
        %v7633 = vadd.f32 0.0, %v7632
        %v7634 = vpop.f32.mrb[0].mxu0
        %7635 = vmatprep.mubr.f32.mxu0 0.0
        %7636 = vmatmul.mubr.f32.gmra.mrb[0].mxu0 %v7433
        %v7637 = vpop.f32.mrb[0].mxu0
        %v7638 = vadd.f32 0.0, %v7637
        %v7639 = vpop.f32.mrb[0].mxu0
        %7640 = vmatprep.mubr.f32.mxu0 0.0
        %7641 = vmatmul.mubr.f32.gmra.mrb[0].mxu0 %v7436
        %v7642 = vpop.f32.mrb[0].mxu0
        %v7643 = vadd.f32 0.0, %v7642
        %v7644 = vpop.f32.mrb[0].mxu0
        %7645 = vmatprep.mubr.f32.mxu0 0.0
        %7646 = vmatmul.mubr.f32.gmra.mrb[0].mxu0 %v7439
        %v7647 = vpop.f32.mrb[0].mxu0
        %v7648 = vadd.f32 0.0, %v7647
        %v7649 = vpop.f32.mrb[0].mxu0
        %7650 = vmatprep.mubr.f32.mxu0 0.0
        %7651 = vmatmul.mubr.f32.gmra.mrb[0].mxu0 %v7442
        %v7652 = vpop.f32.mrb[0].mxu0
        %v7653 = vadd.f32 0.0, %v7652
        %v7654 = vpop.f32.mrb[0].mxu0
        %7655 = vmatprep.mubr.f32.mxu0 0.0
        %7656 = vmatmul.mubr.f32.gmra.mrb[0].mxu0 %v7445
        %v7657 = vpop.f32.mrb[0].mxu0
        %v7658 = vadd.f32 0.0, %v7657
        %v7659 = vpop.f32.mrb[0].mxu0
        %7660 = vmatprep.mubr.f32.mxu0 0.0
        %7661 = vmatmul.mubr.f32.gmra.mrb[0].mxu0 %v7448
        %v7662 = vpop.f32.mrb[0].mxu0
        %v7663 = vadd.f32 0.0, %v7662
        %v7664 = vpop.f32.mrb[0].mxu0
        %7665 = vmatprep.mubr.f32.mxu0 0.0
        %7666 = vmatmul.mubr.f32.gmra.mrb[0].mxu0 %v7451
        %v7667 = vpop.f32.mrb[0].mxu0
        %v7668 = vadd.f32 0.0, %v7667
        %v7669 = vpop.f32.mrb[0].mxu0
        %7670 = vmatprep.mubr.f32.mxu0 0.0
        %7671 = vmatmul.mubr.f32.gmra.mrb[0].mxu0 %v7454
        %v7672 = vpop.f32.mrb[0].mxu0
        %v7673 = vadd.f32 0.0, %v7672
        %v7674 = vpop.f32.mrb[0].mxu0
        %7675 = vmatprep.mubr.f32.mxu0 0.0
        %7676 = vmatmul.mubr.f32.gmra.mrb[0].mxu0 %v7457
        %v7677 = vpop.f32.mrb[0].mxu0
        %v7678 = vadd.f32 0.0, %v7677
        %v7679 = vpop.f32.mrb[0].mxu0
        %7680 = vmatprep.mubr.f32.mxu0 0.0
        %7681 = vmatmul.mubr.f32.gmra.mrb[0].mxu0 %v7460
        %v7682 = vpop.f32.mrb[0].mxu0
        %v7683 = vadd.f32 0.0, %v7682
        %v7684 = vpop.f32.mrb[0].mxu0
        %7685 = vmatprep.mubr.f32.mxu0 0.0
        %7686 = vmatmul.mubr.f32.gmra.mrb[0].mxu0 %v7463
        %v7687 = vpop.f32.mrb[0].mxu0
        %v7688 = vadd.f32 0.0, %v7687
        %v7689 = vpop.f32.mrb[0].mxu0
        %7690 = vmatprep.mubr.f32.mxu0 0.0
        %7691 = vmatmul.mubr.f32.gmra.mrb[0].mxu0 %v7466
        %v7692 = vpop.f32.mrb[0].mxu0
        %v7693 = vadd.f32 0.0, %v7692
        %v7694 = vpop.f32.mrb[0].mxu0
        %7695 = vdwg.mxu0
        %v7696 = vadd.f32 %v7306, %v7538
        %v7697 = vadd.f32 %v7307, %v7543
        %v7698 = vadd.f32 %v7308, %v7548
        %v7699 = vadd.f32 %v7309, %v7553
        %v7700 = vadd.f32 %v7310, %v7558
        %v7701 = vadd.f32 %v7311, %v7563
        %v7702 = vadd.f32 %v7312, %v7568
        %v7703 = vadd.f32 %v7313, %v7573
        %v7704 = vadd.f32 %v7314, %v7578
        %v7705 = vadd.f32 %v7315, %v7583
        %v7706 = vadd.f32 %v7316, %v7588
        %v7707 = vadd.f32 %v7317, %v7593
        %v7708 = vadd.f32 %v7318, %v7598
        %v7709 = vadd.f32 %v7319, %v7603
        %v7710 = vadd.f32 %v7320, %v7608
        %v7711 = vadd.f32 %v7321, %v7613
        %v7712 = vadd.f32 %v7322, %v7618
        %v7713 = vadd.f32 %v7323, %v7623
        %v7714 = vadd.f32 %v7324, %v7628
        %v7715 = vadd.f32 %v7325, %v7633
        %v7716 = vadd.f32 %v7326, %v7638
        %v7717 = vadd.f32 %v7327, %v7643
        %v7718 = vadd.f32 %v7328, %v7648
        %v7719 = vadd.f32 %v7329, %v7653
        %v7720 = vadd.f32 %v7330, %v7658
        %v7721 = vadd.f32 %v7331, %v7663
        %v7722 = vadd.f32 %v7332, %v7668
        %v7723 = vadd.f32 %v7333, %v7673
        %v7724 = vadd.f32 %v7334, %v7678
        %v7725 = vadd.f32 %v7335, %v7683
        %v7726 = vadd.f32 %v7336, %v7688
        %v7727 = vadd.f32 %v7337, %v7693
        %v7728 = vld [vmem:[%s4] sm:$0x1]
        %v7730 = vlaneseq
        %v7731 = vshrl.u32 %v7730, 7
        %v7732 = vsub.s32 0, %v7731
        %v7733 = vrot.slane %v7728, %v7732
        %v7735 = vadd.f32 %v7696, %v7733
        %v7736 = vadd.f32 %v7697, %v7733
        %v7737 = vadd.f32 %v7698, %v7733
        %v7738 = vadd.f32 %v7699, %v7733
        %v7739 = vadd.f32 %v7700, %v7733
        %v7740 = vadd.f32 %v7701, %v7733
        %v7741 = vadd.f32 %v7702, %v7733
        %v7742 = vadd.f32 %v7703, %v7733
        %v7743 = vadd.f32 %v7704, %v7733
        %v7744 = vadd.f32 %v7705, %v7733
        %v7745 = vadd.f32 %v7706, %v7733
        %v7746 = vadd.f32 %v7707, %v7733
        %v7747 = vadd.f32 %v7708, %v7733
        %v7748 = vadd.f32 %v7709, %v7733
        %v7749 = vadd.f32 %v7710, %v7733
        %v7750 = vadd.f32 %v7711, %v7733
        %v7751 = vadd.f32 %v7712, %v7733
        %v7752 = vadd.f32 %v7713, %v7733
        %v7753 = vadd.f32 %v7714, %v7733
        %v7754 = vadd.f32 %v7715, %v7733
        %v7755 = vadd.f32 %v7716, %v7733
        %v7756 = vadd.f32 %v7717, %v7733
        %v7757 = vadd.f32 %v7718, %v7733
        %v7758 = vadd.f32 %v7719, %v7733
        %v7759 = vadd.f32 %v7720, %v7733
        %v7760 = vadd.f32 %v7721, %v7733
        %v7761 = vadd.f32 %v7722, %v7733
        %v7762 = vadd.f32 %v7723, %v7733
        %v7763 = vadd.f32 %v7724, %v7733
        %v7764 = vadd.f32 %v7725, %v7733
        %v7765 = vadd.f32 %v7726, %v7733
        %v7766 = vadd.f32 %v7727, %v7733
        %vm7767 = vcmp.gt.f32.partialorder %v7735, 0.0
        %vm7768 = vcmp.gt.f32.partialorder %v7736, 0.0
        %vm7769 = vcmp.gt.f32.partialorder %v7737, 0.0
        %vm7770 = vcmp.gt.f32.partialorder %v7738, 0.0
        %vm7771 = vcmp.gt.f32.partialorder %v7739, 0.0
        %vm7772 = vcmp.gt.f32.partialorder %v7740, 0.0
        %vm7773 = vcmp.gt.f32.partialorder %v7741, 0.0
        %vm7774 = vcmp.gt.f32.partialorder %v7742, 0.0
        %vm7775 = vcmp.gt.f32.partialorder %v7743, 0.0
        %vm7776 = vcmp.gt.f32.partialorder %v7744, 0.0
        %vm7777 = vcmp.gt.f32.partialorder %v7745, 0.0
        %vm7778 = vcmp.gt.f32.partialorder %v7746, 0.0
        %vm7779 = vcmp.gt.f32.partialorder %v7747, 0.0
        %vm7780 = vcmp.gt.f32.partialorder %v7748, 0.0
        %vm7781 = vcmp.gt.f32.partialorder %v7749, 0.0
        %vm7782 = vcmp.gt.f32.partialorder %v7750, 0.0
        %vm7783 = vcmp.gt.f32.partialorder %v7751, 0.0
        %vm7784 = vcmp.gt.f32.partialorder %v7752, 0.0
        %vm7785 = vcmp.gt.f32.partialorder %v7753, 0.0
        %vm7786 = vcmp.gt.f32.partialorder %v7754, 0.0
        %vm7787 = vcmp.gt.f32.partialorder %v7755, 0.0
        %vm7788 = vcmp.gt.f32.partialorder %v7756, 0.0
        %vm7789 = vcmp.gt.f32.partialorder %v7757, 0.0
        %vm7790 = vcmp.gt.f32.partialorder %v7758, 0.0
        %vm7791 = vcmp.gt.f32.partialorder %v7759, 0.0
        %vm7792 = vcmp.gt.f32.partialorder %v7760, 0.0
        %vm7793 = vcmp.gt.f32.partialorder %v7761, 0.0
        %vm7794 = vcmp.gt.f32.partialorder %v7762, 0.0
        %vm7795 = vcmp.gt.f32.partialorder %v7763, 0.0
        %vm7796 = vcmp.gt.f32.partialorder %v7764, 0.0
        %vm7797 = vcmp.gt.f32.partialorder %v7765, 0.0
        %vm7798 = vcmp.gt.f32.partialorder %v7766, 0.0
        %v7799 = vmul.f32 %v7735, 0.2
        %v7800 = vmul.f32 %v7736, 0.2
        %v7801 = vmul.f32 %v7737, 0.2
        %v7802 = vmul.f32 %v7738, 0.2
        %v7803 = vmul.f32 %v7739, 0.2
        %v7804 = vmul.f32 %v7740, 0.2
        %v7805 = vmul.f32 %v7741, 0.2
        %v7806 = vmul.f32 %v7742, 0.2
        %v7807 = vmul.f32 %v7743, 0.2
        %v7808 = vmul.f32 %v7744, 0.2
        %v7809 = vmul.f32 %v7745, 0.2
        %v7810 = vmul.f32 %v7746, 0.2
        %v7811 = vmul.f32 %v7747, 0.2
        %v7812 = vmul.f32 %v7748, 0.2
        %v7813 = vmul.f32 %v7749, 0.2
        %v7814 = vmul.f32 %v7750, 0.2
        %v7815 = vmul.f32 %v7751, 0.2
        %v7816 = vmul.f32 %v7752, 0.2
        %v7817 = vmul.f32 %v7753, 0.2
        %v7818 = vmul.f32 %v7754, 0.2
        %v7819 = vmul.f32 %v7755, 0.2
        %v7820 = vmul.f32 %v7756, 0.2
        %v7821 = vmul.f32 %v7757, 0.2
        %v7822 = vmul.f32 %v7758, 0.2
        %v7823 = vmul.f32 %v7759, 0.2
        %v7824 = vmul.f32 %v7760, 0.2
        %v7825 = vmul.f32 %v7761, 0.2
        %v7826 = vmul.f32 %v7762, 0.2
        %v7827 = vmul.f32 %v7763, 0.2
        %v7828 = vmul.f32 %v7764, 0.2
        %v7829 = vmul.f32 %v7765, 0.2
        %v7830 = vmul.f32 %v7766, 0.2
        %v7831 = vsel %vm7767, %v7735, %v7799
        %v7832 = vsel %vm7768, %v7736, %v7800
        %v7833 = vsel %vm7769, %v7737, %v7801
        %v7834 = vsel %vm7770, %v7738, %v7802
        %v7835 = vsel %vm7771, %v7739, %v7803
        %v7836 = vsel %vm7772, %v7740, %v7804
        %v7837 = vsel %vm7773, %v7741, %v7805
        %v7838 = vsel %vm7774, %v7742, %v7806
        %v7839 = vsel %vm7775, %v7743, %v7807
        %v7840 = vsel %vm7776, %v7744, %v7808
        %v7841 = vsel %vm7777, %v7745, %v7809
        %v7842 = vsel %vm7778, %v7746, %v7810
        %v7843 = vsel %vm7779, %v7747, %v7811
        %v7844 = vsel %vm7780, %v7748, %v7812
        %v7845 = vsel %vm7781, %v7749, %v7813
        %v7846 = vsel %vm7782, %v7750, %v7814
        %v7847 = vsel %vm7783, %v7751, %v7815
        %v7848 = vsel %vm7784, %v7752, %v7816
        %v7849 = vsel %vm7785, %v7753, %v7817
        %v7850 = vsel %vm7786, %v7754, %v7818
        %v7851 = vsel %vm7787, %v7755, %v7819
        %v7852 = vsel %vm7788, %v7756, %v7820
        %v7853 = vsel %vm7789, %v7757, %v7821
        %v7854 = vsel %vm7790, %v7758, %v7822
        %v7855 = vsel %vm7791, %v7759, %v7823
        %v7856 = vsel %vm7792, %v7760, %v7824
        %v7857 = vsel %vm7793, %v7761, %v7825
        %v7858 = vsel %vm7794, %v7762, %v7826
        %v7859 = vsel %vm7795, %v7763, %v7827
        %v7860 = vsel %vm7796, %v7764, %v7828
        %v7861 = vsel %vm7797, %v7765, %v7829
        %v7862 = vsel %vm7798, %v7766, %v7830
        %v7863 = vadd.f32 %v7831, %v4048
        %v7864 = vadd.f32 %v7832, %v4053
        %v7865 = vadd.f32 %v7833, %v4058
        %v7866 = vadd.f32 %v7834, %v4063
        %v7867 = vadd.f32 %v7835, %v4068
        %v7868 = vadd.f32 %v7836, %v4073
        %v7869 = vadd.f32 %v7837, %v4078
        %v7870 = vadd.f32 %v7838, %v4083
        %v7871 = vadd.f32 %v7839, %v4088
        %v7872 = vadd.f32 %v7840, %v4093
        %v7873 = vadd.f32 %v7841, %v4098
        %v7874 = vadd.f32 %v7842, %v4103
        %v7875 = vadd.f32 %v7843, %v4108
        %v7876 = vadd.f32 %v7844, %v4113
        %v7877 = vadd.f32 %v7845, %v4118
        %v7878 = vadd.f32 %v7846, %v4123
        %v7879 = vadd.f32 %v7847, %v4128
        %v7880 = vadd.f32 %v7848, %v4133
        %v7881 = vadd.f32 %v7849, %v4138
        %v7882 = vadd.f32 %v7850, %v4143
        %v7883 = vadd.f32 %v7851, %v4148
        %v7884 = vadd.f32 %v7852, %v4153
        %v7885 = vadd.f32 %v7853, %v4158
        %v7886 = vadd.f32 %v7854, %v4163
        %v7887 = vadd.f32 %v7855, %v4168
        %v7888 = vadd.f32 %v7856, %v4173
        %v7889 = vadd.f32 %v7857, %v4178
        %v7890 = vadd.f32 %v7858, %v4183
        %v7891 = vadd.f32 %v7859, %v4188
        %v7892 = vadd.f32 %v7860, %v4193
        %v7893 = vadd.f32 %v7861, %v4198
        %v7894 = vadd.f32 %v7862, %v4203
        %v7895 = vadd.f32 %v7863, %v7865
        %v7896 = vadd.f32 %v7864, %v7866
        %v7897 = vadd.f32 %v7867, %v7869
        %v7898 = vadd.f32 %v7868, %v7870
        %v7899 = vadd.f32 %v7871, %v7873
        %v7900 = vadd.f32 %v7872, %v7874
        %v7901 = vadd.f32 %v7875, %v7877
        %v7902 = vadd.f32 %v7876, %v7878
        %v7903 = vadd.f32 %v7879, %v7881
        %v7904 = vadd.f32 %v7880, %v7882
        %v7905 = vadd.f32 %v7883, %v7885
        %v7906 = vadd.f32 %v7884, %v7886
        %v7907 = vadd.f32 %v7887, %v7889
        %v7908 = vadd.f32 %v7888, %v7890
        %v7909 = vadd.f32 %v7891, %v7893
        %v7910 = vadd.f32 %v7892, %v7894
        %vm7911 = vcmask 64512
        %7912 = vst.msk [vmem:[#allocation4] sm:$0xff] %vm7911, %v7895
        %7913 = vst.msk [vmem:[#allocation4 + $0x8] sm:$0xff] %vm7911, %v7896
        %7914 = vst.msk [vmem:[#allocation4 + $0x10] sm:$0xff] %vm7911, %v7897
        %7915 = vst.msk [vmem:[#allocation4 + $0x18] sm:$0xff] %vm7911, %v7898
        %7916 = vst.msk [vmem:[#allocation4 + $0x20] sm:$0xff] %vm7911, %v7899
        %7917 = vst.msk [vmem:[#allocation4 + $0x28] sm:$0xff] %vm7911, %v7900
        %7918 = vst.msk [vmem:[#allocation4 + $0x30] sm:$0xff] %vm7911, %v7901
        %7919 = vst.msk [vmem:[#allocation4 + $0x38] sm:$0xff] %vm7911, %v7902
        %7920 = vst.msk [vmem:[#allocation4 + $0x40] sm:$0xff] %vm7911, %v7903
        %7921 = vst.msk [vmem:[#allocation4 + $0x48] sm:$0xff] %vm7911, %v7904
        %7922 = vst.msk [vmem:[#allocation4 + $0x50] sm:$0xff] %vm7911, %v7905
        %7923 = vst.msk [vmem:[#allocation4 + $0x58] sm:$0xff] %vm7911, %v7906
        %7924 = vst.msk [vmem:[#allocation4 + $0x60] sm:$0xff] %vm7911, %v7907
        %7925 = vst.msk [vmem:[#allocation4 + $0x68] sm:$0xff] %vm7911, %v7908
        %7926 = vst.msk [vmem:[#allocation4 + $0x70] sm:$0xff] %vm7911, %v7909
        %7927 = vst.msk [vmem:[#allocation4 + $0x78] sm:$0xff] %vm7911, %v7910
        %v7928 = vld [vmem:[#allocation4] ss:$2 sm:$0xff]
        %s7929 = scalar_lea.vmem [#allocation4], 16
        %v7930 = vld [vmem:[%s7929] ss:$2 sm:$0xff]
        %s7931 = scalar_lea.vmem [#allocation4], 32
        %v7932 = vld [vmem:[%s7931] ss:$2 sm:$0xff]
        %s7933 = scalar_lea.vmem [#allocation4], 48
        %v7934 = vld [vmem:[%s7933] ss:$2 sm:$0xff]
        %s7935 = scalar_lea.vmem [#allocation4], 64
        %v7936 = vld [vmem:[%s7935] ss:$2 sm:$0xff]
        %s7937 = scalar_lea.vmem [#allocation4], 80
        %v7938 = vld [vmem:[%s7937] ss:$2 sm:$0xff]
        %s7939 = scalar_lea.vmem [#allocation4], 96
        %v7940 = vld [vmem:[%s7939] ss:$2 sm:$0xff]
        %s7941 = scalar_lea.vmem [#allocation4], 112
        %v7942 = vld [vmem:[%s7941] ss:$2 sm:$0xff]
        %s7943 = scalar_lea.vmem [#allocation4], 1
        %v7944 = vld [vmem:[%s7943] ss:$2 sm:$0xff]
        %s7945 = scalar_lea.vmem [#allocation4], 17
        %v7946 = vld [vmem:[%s7945] ss:$2 sm:$0xff]
        %s7947 = scalar_lea.vmem [#allocation4], 33
        %v7948 = vld [vmem:[%s7947] ss:$2 sm:$0xff]
        %s7949 = scalar_lea.vmem [#allocation4], 49
        %v7950 = vld [vmem:[%s7949] ss:$2 sm:$0xff]
        %s7951 = scalar_lea.vmem [#allocation4], 65
        %v7952 = vld [vmem:[%s7951] ss:$2 sm:$0xff]
        %s7953 = scalar_lea.vmem [#allocation4], 81
        %v7954 = vld [vmem:[%s7953] ss:$2 sm:$0xff]
        %s7955 = scalar_lea.vmem [#allocation4], 97
        %v7956 = vld [vmem:[%s7955] ss:$2 sm:$0xff]
        %s7957 = scalar_lea.vmem [#allocation4], 113
        %v7958 = vld [vmem:[%s7957] ss:$2 sm:$0xff]
        %v7959 = vadd.f32 %v7928, %v7944
        %v7960 = vadd.f32 %v7930, %v7946
        %v7961 = vadd.f32 %v7932, %v7948
        %v7962 = vadd.f32 %v7934, %v7950
        %v7963 = vadd.f32 %v7936, %v7952
        %v7964 = vadd.f32 %v7938, %v7954
        %v7965 = vadd.f32 %v7940, %v7956
        %v7966 = vadd.f32 %v7942, %v7958
        %v7967 = vmul.f32 %v7959, 0.17677714
        %v7968 = vmul.f32 %v7960, 0.17677714
        %v7969 = vmul.f32 %v7961, 0.17677714
        %v7970 = vmul.f32 %v7962, 0.17677714
        %v7971 = vmul.f32 %v7963, 0.17677714
        %v7972 = vmul.f32 %v7964, 0.17677714
        %v7973 = vmul.f32 %v7965, 0.17677714
        %v7974 = vmul.f32 %v7966, 0.17677714
        %7975 = vst.msk [vmem:[%s271] sm:$0xff] %vm7911, %v7967
        %7976 = vst.msk [vmem:[%s271 + $0x8] sm:$0xff] %vm7911, %v7968
        %7977 = vst.msk [vmem:[%s271 + $0x10] sm:$0xff] %vm7911, %v7969
        %7978 = vst.msk [vmem:[%s271 + $0x18] sm:$0xff] %vm7911, %v7970
        %7979 = vst.msk [vmem:[%s271 + $0x20] sm:$0xff] %vm7911, %v7971
        %7980 = vst.msk [vmem:[%s271 + $0x28] sm:$0xff] %vm7911, %v7972
        %7981 = vst.msk [vmem:[%s271 + $0x30] sm:$0xff] %vm7911, %v7973
        %7982 = vst.msk [vmem:[%s271 + $0x38] sm:$0xff] %vm7911, %v7974
        %s7983 = sand.u32 %s181, 1
        %s7984 = scalar_lea.sflag [#allocation6], %s7983
        %s7985 = sand.u32 %s181, 1
        %s7986 = smul.addr %s7985, 64
        %s7987 = scalar_lea.vmem [#allocation5], %s7986
        // Predicated region
        $region49: #{tpu_custom_call.1} parent=47 // pred_check
          %p7988 = pneg %p191
        $region50: #{tpu_custom_call.1} parent=47 // pred_check_branch
          %7990 = sbr.rel (%p7988) target = $region52
        $region51: #{tpu_custom_call.1} parent=47 // pred_region
          %s7992 = ssub.s32 1024, 1024
          %7993 = vsyncadd %s7984, %s7992
          %s7994 = smul.addr %s21, 8
          %s7995 = smul.addr %s7994, 128
          %s7996 = scalar_lea.hbm %s7, %s7995
          %s7997 = sshll.u32 %s7987, 4
          %s7998 = int_to_ptr.vmem [resolvable:$true] %s7997
          %8003 = dma.vmem_to_hbm [thread:$0]  %s7998, 1024, %s7996, %s7984, 128, 128, 8
        $region52: #{tpu_custom_call.1} parent=47 // pred_fallthru
          _
      $region48: #{tpu_custom_call.1} parent=5 // pred_fallthru
        _
      %p8004 = scmp.le.s32.totalorder 2, %s16
      // Predicated region
      $region53: #{tpu_custom_call.1} parent=5 // pred_check
        %p8005 = pneg %p8004
      $region54: #{tpu_custom_call.1} parent=5 // pred_check_branch
        %8007 = sbr.rel (%p8005) target = $region56
      $region55: #{tpu_custom_call.1} parent=5 // pred_region
        %s8008 = ssub.s32 %s16, 2
        // Predicated region
        $region57: #{tpu_custom_call.1} parent=55 // pred_check
          %p8009 = pneg %p197
        $region58: #{tpu_custom_call.1} parent=55 // pred_check_branch
          %8011 = sbr.rel (%p8009) target = $region60
        $region59: #{tpu_custom_call.1} parent=55 // pred_region
          %s8012 = sand.u32 %s182, 1
          %s8013 = scalar_lea.sflag [#allocation6], %s8012
          %s8014 = sand.u32 %s182, 1
          %s8015 = smul.addr %s8014, 64
          %s8016 = scalar_lea.vmem [#allocation5], %s8015
          %8017 = dma.done %s8013, 1024
        $region60: #{tpu_custom_call.1} parent=55 // pred_fallthru
          _
      $region56: #{tpu_custom_call.1} parent=5 // pred_fallthru
        _
    $region6: #{tpu_custom_call.1} parent=1 // loop_footer
      %s20 = sadd.s32 1, %s16
    $region7: #{tpu_custom_call.1} parent=1 // loop_footer_branch
      %15 = sbr.rel target = $region3
    $region8: #{tpu_custom_call.1} parent=1 // loop_exit
      _
    %8018 = vsyncpa [#allocation6], 1
    %s8019 = scalar_lea.sflag [#allocation6], 1
    %8020 = vsyncpa %s8019, 1

</llo_original>
